<compile_context>
chip_gen: v6e
topology: v6e:2x2x1
jax: 0.10.0
libtpu: 0.0.40
codegen_flags: <defaults>
</compile_context>

<pallas_src>
import functools

import jax
import jax.numpy as jnp
from jax.experimental import pallas as pl
from jax.experimental.pallas import tpu as pltpu


# ----------------------------------------------------------------------------- kernels

def _qkv_conv_kernel(x_ref, w_ref, o_ref):
    # channels-first 1x1x1 conv (bias-free): (9C, C) @ (C, S) -> (9C, S); lanes = S (dense).
    o_ref[0] = jnp.dot(w_ref[...], x_ref[0], preferred_element_type=jnp.float32)


def _axial_attn3_kernel(q0, k0, v0, q1, k1, v1, q2, k2, v2, o0, o1, o2, *, eps):
    # One grid step handles a block of groups for ALL THREE axes via batched einsums.
    # `scale` is already folded into q (weight-side), so scores need no extra multiply.
    # TODO(synk): add flash-style L-tiling (online softmax) before scaling to big volumes;
    #             the f32 (g, L, L) score tile would overflow v7x's 64 MiB VMEM near L ~ 4096.
    for q_ref, k_ref, v_ref, o_ref in (
        (q0, k0, v0, o0), (q1, k1, v1, o1), (q2, k2, v2, o2)
    ):
        q = q_ref[...]
        k = k_ref[...]
        v = v_ref[...]
        s = jnp.einsum("gla,gma->glm", q, k, preferred_element_type=jnp.float32)
        m = jnp.max(s, axis=-1, keepdims=True)
        e = jnp.exp(s - m)
        denom = jnp.sum(e, axis=-1, keepdims=True)
        p = e * pl.reciprocal(denom, approx=True) + eps          # softmax + eps
        o_ref[...] = jnp.einsum("glm,gma->gla", p, v, preferred_element_type=jnp.float32)


def _fused_out_kernel(a0_ref, a1_ref, a2_ref, x_ref, w_ref, b_ref, o_ref):
    # relu(sum_i Wc_i @ a_i + b_total + x), channels-first; lanes = S (dense).
    acc = jnp.dot(w_ref[0], a0_ref[0], preferred_element_type=jnp.float32)
    acc = acc + jnp.dot(w_ref[1], a1_ref[0], preferred_element_type=jnp.float32)
    acc = acc + jnp.dot(w_ref[2], a2_ref[0], preferred_element_type=jnp.float32)
    o_ref[0] = jnp.maximum(acc + b_ref[...] + x_ref[0], 0.0)


# ----------------------------------------------------------------------------- wrappers

def qkv_conv(x_cf, w_all):
    """x_cf: (B, C, S) channels-first, w_all: (9C, C) -> (B, 9C, S)."""
    B, C, S = x_cf.shape
    Cout = w_all.shape[0]
    return pl.pallas_call(
        _qkv_conv_kernel,
        out_shape=jax.ShapeDtypeStruct((B, Cout, S), jnp.float32),
        grid=(B,),
        in_specs=[
            pl.BlockSpec((1, C, S), lambda b: (b, 0, 0)),
            pl.BlockSpec((Cout, C), lambda b: (0, 0)),
        ],
        out_specs=pl.BlockSpec((1, Cout, S), lambda b: (b, 0, 0)),
        compiler_params=pltpu.CompilerParams(dimension_semantics=("parallel",)),
    )(x_cf, w_all)


def axial_attention3(triples, eps):
    """triples: 3 tuples (q, k, v) of (G, L_i, A_i) arrays -> 3 outputs (G, L_i, A_i)."""
    G = triples[0][0].shape[0]
    gb = G // 2 if (G % 2 == 0 and G >= 2) else G    # keep >=2 parallel steps (v7x megacore)
    grid = (G // gb,)
    inputs, in_specs, out_shapes, out_specs = [], [], [], []
    for q, k, v in triples:
        _, L, A = q.shape
        spec = pl.BlockSpec((gb, L, A), lambda g: (g, 0, 0))
        inputs += [q, k, v]
        in_specs += [spec, spec, spec]
        out_shapes.append(jax.ShapeDtypeStruct((G, L, A), jnp.float32))
        out_specs.append(spec)
    kernel = functools.partial(_axial_attn3_kernel, eps=eps)
    return pl.pallas_call(
        kernel,
        out_shape=tuple(out_shapes),
        grid=grid,
        in_specs=in_specs,
        out_specs=tuple(out_specs),
        compiler_params=pltpu.CompilerParams(dimension_semantics=("parallel",)),
    )(*inputs)


def fused_output(a0, a1, a2, x_cf, wc, b_total):
    """relu(sum_i wc[i] @ a_i + b_total + x); all activations (B, C, S) channels-first."""
    B, C, S = x_cf.shape
    a_spec = pl.BlockSpec((1, C, S), lambda b: (b, 0, 0))
    return pl.pallas_call(
        _fused_out_kernel,
        out_shape=jax.ShapeDtypeStruct((B, C, S), jnp.float32),
        grid=(B,),
        in_specs=[
            a_spec, a_spec, a_spec, a_spec,
            pl.BlockSpec((3, C, C), lambda b: (0, 0, 0)),
            pl.BlockSpec((C, 1), lambda b: (0, 0)),
        ],
        out_specs=a_spec,
        compiler_params=pltpu.CompilerParams(dimension_semantics=("parallel",)),
    )(a0, a1, a2, x_cf, wc, b_total.reshape(C, 1))


# ----------------------------------------------------------------------------- module forward

def _axis_meta(D, H, W, axis):
    if axis == 0:
        return (0, 1, 3, 4, 2), H * W, D
    if axis == 1:
        return (0, 1, 2, 4, 3), D * W, H
    return (0, 1, 2, 3, 4), D * H, W


def axial_attention_3d(x, params, heads=1, eps=1e-6):
    B, C, D, H, W = x.shape
    S = D * H * W
    Ch = C // heads
    scale = float(Ch) ** -0.5

    x_cf = x.reshape(B, C, S).astype(jnp.float32)       # channels-first, free reshape

    # --- single fused qkv conv for all three axes (scale folded into the q rows) ---
    w_parts = []
    for ax in range(3):
        w = params["axial"][ax]["w_qkv"].astype(jnp.float32)        # (3C, C)
        w_parts += [w[:C] * scale, w[C:2 * C], w[2 * C:]]
    w_all = jnp.concatenate(w_parts, axis=0)                        # (9C, C)
    qkv = qkv_conv(x_cf, w_all).reshape(B, 3, 3, C, D, H, W)

    # --- axial reshapes (tiny XLA permutes of the packed q/k/v tensors) ---
    triples = []
    for ax in range(3):
        perm, L, A = _axis_meta(D, H, W, ax)
        trip = tuple(
            jnp.transpose(qkv[:, ax, j], perm).reshape(B * C, L, A) for j in range(3)
        )
        triples.append(trip)

    # --- one batched attention call covering all three axes ---
    attn_outs = axial_attention3(triples, eps)

    # --- PyTorch's out.transpose(2, 3).reshape(B, C, D, H, W) semantics, back to (B, C, S) ---
    a_cf = []
    for ax in range(3):
        _, L, A = _axis_meta(D, H, W, ax)
        o = attn_outs[ax].reshape(B, heads, Ch, L, A)
        a_cf.append(jnp.swapaxes(o, 2, 3).reshape(B, C, S))

    # --- fold proj + fusion:  Wc_i = Wf_i @ Wp_i,  b_total = b_fusion + sum_i Wf_i @ bp_i ---
    w_fusion = params["w_fusion"].astype(jnp.float32)               # (C, 3C)
    b_total = params["b_fusion"].astype(jnp.float32)
    wc = []
    for ax in range(3):
        wf_i = w_fusion[:, ax * C:(ax + 1) * C]                     # (C, C)
        wp_i = params["axial"][ax]["w_proj"].astype(jnp.float32)    # (C, C)
        bp_i = params["axial"][ax]["b_proj"].astype(jnp.float32)    # (C,)
        wc.append(wf_i @ wp_i)
        b_total = b_total + wf_i @ bp_i
    wc = jnp.stack(wc, axis=0)                                      # (3, C, C)

    y = fused_output(a_cf[0], a_cf[1], a_cf[2], x_cf, wc, b_total)  # (B, C, S)
    return y.reshape(B, C, D, H, W)


# ----------------------------------------------------------------------------- reference (pure JAX)

def _ref_conv(x, w, b):
    return jnp.einsum("bcdhw,oc->bodhw", x, w) + b[None, :, None, None, None]


def reference_forward(x, params, heads=1, eps=1e-6):
    B, C, D, H, W = x.shape
    Ch = C // heads
    scale = float(Ch) ** -0.5
    outs = []
    for axis in range(3):
        p = params["axial"][axis]
        qkv = jnp.einsum("bcdhw,oc->bodhw", x, p["w_qkv"])
        q, k, v = jnp.split(qkv, 3, axis=1)
        perm, L, A = _axis_meta(D, H, W, axis)
        rs = lambda t: jnp.transpose(t, perm).reshape(B, heads, Ch, L, A)
        q, k, v = rs(q), rs(k), rs(v)
        attn = jnp.einsum("bhcla,bhcma->bhclm", q, k) * scale
        attn = jax.nn.softmax(attn, axis=-1) + eps
        o = jnp.einsum("bhclm,bhcma->bhcla", attn, v)
        o = jnp.swapaxes(o, 2, 3).reshape(B, C, D, H, W)
        outs.append(_ref_conv(o, p["w_proj"], p["b_proj"]))
    cat = jnp.concatenate(outs, axis=1)
    out = _ref_conv(cat, params["w_fusion"], params["b_fusion"]) + x
    return jnp.maximum(out, 0.0)


# ----------------------------------------------------------------------------- params

def init_params(key, in_ch):
    keys = jax.random.split(key, 11)
    params = {"axial": []}
    i = 0
    for _ in range(3):
        w_qkv = 0.2 * jax.random.normal(keys[i], (3 * in_ch, in_ch), jnp.float32); i += 1
        w_proj = 0.2 * jax.random.normal(keys[i], (in_ch, in_ch), jnp.float32); i += 1
        b_proj = 0.05 * jax.random.normal(keys[i], (in_ch,), jnp.float32); i += 1
        params["axial"].append({"w_qkv": w_qkv, "w_proj": w_proj, "b_proj": b_proj})
    params["w_fusion"] = 0.2 * jax.random.normal(keys[i], (in_ch, 3 * in_ch), jnp.float32); i += 1
    params["b_fusion"] = 0.05 * jax.random.normal(keys[i], (in_ch,), jnp.float32)
    return params


# ----------------------------------------------------------------------------- main

if __name__ == "__main__":
    key = jax.random.PRNGKey(0)
    kx, kp = jax.random.split(key)

    B, C, D, H, W = 2, 4, 8, 8, 8
    heads = 1  # AxialAttention3D default
    x = jax.random.normal(kx, (B, C, D, H, W), jnp.float32)
    params = init_params(kp, C)

    fwd = jax.jit(functools.partial(axial_attention_3d, heads=heads))
    out = jax.block_until_ready(fwd(x, params))

    assert out.shape == (B, C, D, H, W)
    ref = reference_forward(x, params, heads=heads)
    assert jnp.allclose(out, ref, atol=2e-2, rtol=2e-2), "mismatch vs pure-JAX reference"

    print("KERNEL_OK")
</pallas_src>

<mosaic_0001>
module attributes {stable_mosaic.version = 11 : i64} {
  func.func @_qkv_conv_kernel(%arg0: i32, %arg1: memref<1x4x512xf32, #tpu.memory_space<vmem>>, %arg2: memref<36x4xf32, #tpu.memory_space<vmem>>, %arg3: memref<1x36x512xf32, #tpu.memory_space<vmem>>) attributes {dimension_semantics = [#tpu.dimension_semantics<parallel>], iteration_bounds = array<i64: 2>, scalar_prefetch = 0 : i64, scratch_operands = 0 : i64, tpu.core_type = #tpu.core_type<tc>, window_params = [{transform_indices = @transform_0, window_bounds = array<i64: 1, 4, 512>}, {pipeline_mode = #tpu.pipeline_mode<synchronous>, transform_indices = @transform_1, window_bounds = array<i64: 36, 4>}, {transform_indices = @transform_2, window_bounds = array<i64: 1, 36, 512>}]} {
    %c0 = arith.constant 0 : index
    %c0_0 = arith.constant 0 : index
    %0 = vector.load %arg2[%c0, %c0_0] : memref<36x4xf32, #tpu.memory_space<vmem>>, vector<36x4xf32>
    %c0_1 = arith.constant 0 : index
    %c0_2 = arith.constant 0 : index
    %c0_3 = arith.constant 0 : index
    %1 = vector.load %arg1[%c0_1, %c0_2, %c0_3] : memref<1x4x512xf32, #tpu.memory_space<vmem>>, vector<1x4x512xf32>
    %2 = vector.shape_cast %1 : vector<1x4x512xf32> to vector<4x512xf32>
    %cst = arith.constant dense<0.000000e+00> : vector<36x512xf32>
    %3 = tpu.matmul %0, %2, %cst {dimension_numbers = #tpu.dot_dimension_numbers<[1], [0], [0], [1], [0, 0, 1, 1], [], []>} : vector<36x4xf32>, vector<4x512xf32>, vector<36x512xf32> -> vector<36x512xf32>
    %c0_4 = arith.constant 0 : index
    %c0_5 = arith.constant 0 : index
    %c0_6 = arith.constant 0 : index
    %4 = vector.load %arg3[%c0_4, %c0_5, %c0_6] : memref<1x36x512xf32, #tpu.memory_space<vmem>>, vector<1x36x512xf32>
    %5 = vector.shape_cast %4 : vector<1x36x512xf32> to vector<36x512xf32>
    %6 = vector.shape_cast %3 : vector<36x512xf32> to vector<1x36x512xf32>
    tpu.vector_store %arg3[%c0_4, %c0_5, %c0_6], %6 {strides = array<i32>} : memref<1x36x512xf32, #tpu.memory_space<vmem>>, vector<1x36x512xf32>,
    return
  }
  func.func @transform_0(%arg0: i32) -> (i32, i32, i32) {
    %c0_i32 = arith.constant 0 : i32
    %c0_i32_0 = arith.constant 0 : i32
    %c0_i32_1 = arith.constant 0 : i32
    return %arg0, %c0_i32, %c0_i32_0 : i32, i32, i32
  }
  func.func @transform_1(%arg0: i32) -> (i32, i32) {
    %c0_i32 = arith.constant 0 : i32
    %c0_i32_0 = arith.constant 0 : i32
    %c0_i32_1 = arith.constant 0 : i32
    return %c0_i32, %c0_i32_0 : i32, i32
  }
  func.func @transform_2(%arg0: i32) -> (i32, i32, i32) {
    %c0_i32 = arith.constant 0 : i32
    %c0_i32_0 = arith.constant 0 : i32
    %c0_i32_1 = arith.constant 0 : i32
    return %arg0, %c0_i32, %c0_i32_0 : i32, i32, i32
  }
}

module attributes {stable_mosaic.version = 11 : i64} {
  func.func @_axial_attn3_kernel(%arg0: i32, %arg1: memref<4x64x8xf32, #tpu.memory_space<vmem>>, %arg2: memref<4x64x8xf32, #tpu.memory_space<vmem>>, %arg3: memref<4x64x8xf32, #tpu.memory_space<vmem>>, %arg4: memref<4x64x8xf32, #tpu.memory_space<vmem>>, %arg5: memref<4x64x8xf32, #tpu.memory_space<vmem>>, %arg6: memref<4x64x8xf32, #tpu.memory_space<vmem>>, %arg7: memref<4x64x8xf32, #tpu.memory_space<vmem>>, %arg8: memref<4x64x8xf32, #tpu.memory_space<vmem>>, %arg9: memref<4x64x8xf32, #tpu.memory_space<vmem>>, %arg10: memref<4x64x8xf32, #tpu.memory_space<vmem>>, %arg11: memref<4x64x8xf32, #tpu.memory_space<vmem>>, %arg12: memref<4x64x8xf32, #tpu.memory_space<vmem>>) attributes {dimension_semantics = [#tpu.dimension_semantics<parallel>], iteration_bounds = array<i64: 2>, scalar_prefetch = 0 : i64, scratch_operands = 0 : i64, tpu.core_type = #tpu.core_type<tc>, window_params = [{transform_indices = @transform_0, window_bounds = array<i64: 4, 64, 8>}, {transform_indices = @transform_1, window_bounds = array<i64: 4, 64, 8>}, {transform_indices = @transform_2, window_bounds = array<i64: 4, 64, 8>}, {transform_indices = @transform_3, window_bounds = array<i64: 4, 64, 8>}, {transform_indices = @transform_4, window_bounds = array<i64: 4, 64, 8>}, {transform_indices = @transform_5, window_bounds = array<i64: 4, 64, 8>}, {transform_indices = @transform_6, window_bounds = array<i64: 4, 64, 8>}, {transform_indices = @transform_7, window_bounds = array<i64: 4, 64, 8>}, {transform_indices = @transform_8, window_bounds = array<i64: 4, 64, 8>}, {transform_indices = @transform_9, window_bounds = array<i64: 4, 64, 8>}, {transform_indices = @transform_10, window_bounds = array<i64: 4, 64, 8>}, {transform_indices = @transform_11, window_bounds = array<i64: 4, 64, 8>}]} {
    %c0 = arith.constant 0 : index
    %c0_0 = arith.constant 0 : index
    %c0_1 = arith.constant 0 : index
    %0 = vector.load %arg1[%c0, %c0_0, %c0_1] : memref<4x64x8xf32, #tpu.memory_space<vmem>>, vector<4x64x8xf32>
    %c0_2 = arith.constant 0 : index
    %c0_3 = arith.constant 0 : index
    %c0_4 = arith.constant 0 : index
    %1 = vector.load %arg2[%c0_2, %c0_3, %c0_4] : memref<4x64x8xf32, #tpu.memory_space<vmem>>, vector<4x64x8xf32>
    %c0_5 = arith.constant 0 : index
    %c0_6 = arith.constant 0 : index
    %c0_7 = arith.constant 0 : index
    %2 = vector.load %arg3[%c0_5, %c0_6, %c0_7] : memref<4x64x8xf32, #tpu.memory_space<vmem>>, vector<4x64x8xf32>
    "tpu.trace_start"() <{level = 10 : i32, message = "gla,gma->glm"}> : () -> ()
    %cst = arith.constant dense<0.000000e+00> : vector<4x64x64xf32>
    %3 = tpu.matmul %0, %1, %cst {dimension_numbers = #tpu.dot_dimension_numbers<[2], [2], [1], [1], [0, 0, 0, 1, 1, 1], [0], [0]>} : vector<4x64x8xf32>, vector<4x64x8xf32>, vector<4x64x64xf32> -> vector<4x64x64xf32>
    "tpu.trace_stop"() : () -> ()
    %cst_8 = arith.constant dense<0xFF800000> : vector<4x64xf32>
    %4 = vector.multi_reduction <maximumf>, %3, %cst_8 [2] : vector<4x64x64xf32> to vector<4x64xf32>
    %5 = vector.shape_cast %4 : vector<4x64xf32> to vector<4x64x1xf32>
    %6 = vector.broadcast %5 : vector<4x64x1xf32> to vector<4x64x64xf32>
    %7 = arith.subf %3, %6 : vector<4x64x64xf32>
    %8 = math.exp %7 : vector<4x64x64xf32>
    %cst_9 = arith.constant dense<0.000000e+00> : vector<4x64xf32>
    %9 = vector.multi_reduction <add>, %8, %cst_9 [2] : vector<4x64x64xf32> to vector<4x64xf32>
    %10 = vector.shape_cast %9 : vector<4x64xf32> to vector<4x64x1xf32>
    %11 = tpu.reciprocal %10 {approx = true} : vector<4x64x1xf32> -> vector<4x64x1xf32>
    %12 = vector.broadcast %11 : vector<4x64x1xf32> to vector<4x64x64xf32>
    %13 = arith.mulf %8, %12 : vector<4x64x64xf32>
    %cst_10 = arith.constant 9.99999997E-7 : f32
    %14 = vector.broadcast %cst_10 : f32 to vector<4x64x64xf32>
    %15 = arith.addf %13, %14 : vector<4x64x64xf32>
    "tpu.trace_start"() <{level = 10 : i32, message = "glm,gma->gla"}> : () -> ()
    %cst_11 = arith.constant dense<0.000000e+00> : vector<4x64x8xf32>
    %16 = tpu.matmul %15, %2, %cst_11 {dimension_numbers = #tpu.dot_dimension_numbers<[2], [1], [1], [2], [0, 0, 0, 1, 1, 2], [0], [0]>} : vector<4x64x64xf32>, vector<4x64x8xf32>, vector<4x64x8xf32> -> vector<4x64x8xf32>
    "tpu.trace_stop"() : () -> ()
    %c0_12 = arith.constant 0 : index
    %c0_13 = arith.constant 0 : index
    %c0_14 = arith.constant 0 : index
    %17 = vector.load %arg10[%c0_12, %c0_13, %c0_14] : memref<4x64x8xf32, #tpu.memory_space<vmem>>, vector<4x64x8xf32>
    tpu.vector_store %arg10[%c0_12, %c0_13, %c0_14], %16 {strides = array<i32>} : memref<4x64x8xf32, #tpu.memory_space<vmem>>, vector<4x64x8xf32>,
    %c0_15 = arith.constant 0 : index
    %c0_16 = arith.constant 0 : index
    %c0_17 = arith.constant 0 : index
    %18 = vector.load %arg4[%c0_15, %c0_16, %c0_17] : memref<4x64x8xf32, #tpu.memory_space<vmem>>, vector<4x64x8xf32>
    %c0_18 = arith.constant 0 : index
    %c0_19 = arith.constant 0 : index
    %c0_20 = arith.constant 0 : index
    %19 = vector.load %arg5[%c0_18, %c0_19, %c0_20] : memref<4x64x8xf32, #tpu.memory_space<vmem>>, vector<4x64x8xf32>
    %c0_21 = arith.constant 0 : index
    %c0_22 = arith.constant 0 : index
    %c0_23 = arith.constant 0 : index
    %20 = vector.load %arg6[%c0_21, %c0_22, %c0_23] : memref<4x64x8xf32, #tpu.memory_space<vmem>>, vector<4x64x8xf32>
    "tpu.trace_start"() <{level = 10 : i32, message = "gla,gma->glm"}> : () -> ()
    %cst_24 = arith.constant dense<0.000000e+00> : vector<4x64x64xf32>
    %21 = tpu.matmul %18, %19, %cst_24 {dimension_numbers = #tpu.dot_dimension_numbers<[2], [2], [1], [1], [0, 0, 0, 1, 1, 1], [0], [0]>} : vector<4x64x8xf32>, vector<4x64x8xf32>, vector<4x64x64xf32> -> vector<4x64x64xf32>
    "tpu.trace_stop"() : () -> ()
    %cst_25 = arith.constant dense<0xFF800000> : vector<4x64xf32>
    %22 = vector.multi_reduction <maximumf>, %21, %cst_25 [2] : vector<4x64x64xf32> to vector<4x64xf32>
    %23 = vector.shape_cast %22 : vector<4x64xf32> to vector<4x64x1xf32>
    %24 = vector.broadcast %23 : vector<4x64x1xf32> to vector<4x64x64xf32>
    %25 = arith.subf %21, %24 : vector<4x64x64xf32>
    %26 = math.exp %25 : vector<4x64x64xf32>
    %cst_26 = arith.constant dense<0.000000e+00> : vector<4x64xf32>
    %27 = vector.multi_reduction <add>, %26, %cst_26 [2] : vector<4x64x64xf32> to vector<4x64xf32>
    %28 = vector.shape_cast %27 : vector<4x64xf32> to vector<4x64x1xf32>
    %29 = tpu.reciprocal %28 {approx = true} : vector<4x64x1xf32> -> vector<4x64x1xf32>
    %30 = vector.broadcast %29 : vector<4x64x1xf32> to vector<4x64x64xf32>
    %31 = arith.mulf %26, %30 : vector<4x64x64xf32>
    %cst_27 = arith.constant 9.99999997E-7 : f32
    %32 = vector.broadcast %cst_27 : f32 to vector<4x64x64xf32>
    %33 = arith.addf %31, %32 : vector<4x64x64xf32>
    "tpu.trace_start"() <{level = 10 : i32, message = "glm,gma->gla"}> : () -> ()
    %cst_28 = arith.constant dense<0.000000e+00> : vector<4x64x8xf32>
    %34 = tpu.matmul %33, %20, %cst_28 {dimension_numbers = #tpu.dot_dimension_numbers<[2], [1], [1], [2], [0, 0, 0, 1, 1, 2], [0], [0]>} : vector<4x64x64xf32>, vector<4x64x8xf32>, vector<4x64x8xf32> -> vector<4x64x8xf32>
    "tpu.trace_stop"() : () -> ()
    %c0_29 = arith.constant 0 : index
    %c0_30 = arith.constant 0 : index
    %c0_31 = arith.constant 0 : index
    %35 = vector.load %arg11[%c0_29, %c0_30, %c0_31] : memref<4x64x8xf32, #tpu.memory_space<vmem>>, vector<4x64x8xf32>
    tpu.vector_store %arg11[%c0_29, %c0_30, %c0_31], %34 {strides = array<i32>} : memref<4x64x8xf32, #tpu.memory_space<vmem>>, vector<4x64x8xf32>,
    %c0_32 = arith.constant 0 : index
    %c0_33 = arith.constant 0 : index
    %c0_34 = arith.constant 0 : index
    %36 = vector.load %arg7[%c0_32, %c0_33, %c0_34] : memref<4x64x8xf32, #tpu.memory_space<vmem>>, vector<4x64x8xf32>
    %c0_35 = arith.constant 0 : index
    %c0_36 = arith.constant 0 : index
    %c0_37 = arith.constant 0 : index
    %37 = vector.load %arg8[%c0_35, %c0_36, %c0_37] : memref<4x64x8xf32, #tpu.memory_space<vmem>>, vector<4x64x8xf32>
    %c0_38 = arith.constant 0 : index
    %c0_39 = arith.constant 0 : index
    %c0_40 = arith.constant 0 : index
    %38 = vector.load %arg9[%c0_38, %c0_39, %c0_40] : memref<4x64x8xf32, #tpu.memory_space<vmem>>, vector<4x64x8xf32>
    "tpu.trace_start"() <{level = 10 : i32, message = "gla,gma->glm"}> : () -> ()
    %cst_41 = arith.constant dense<0.000000e+00> : vector<4x64x64xf32>
    %39 = tpu.matmul %36, %37, %cst_41 {dimension_numbers = #tpu.dot_dimension_numbers<[2], [2], [1], [1], [0, 0, 0, 1, 1, 1], [0], [0]>} : vector<4x64x8xf32>, vector<4x64x8xf32>, vector<4x64x64xf32> -> vector<4x64x64xf32>
    "tpu.trace_stop"() : () -> ()
    %cst_42 = arith.constant dense<0xFF800000> : vector<4x64xf32>
    %40 = vector.multi_reduction <maximumf>, %39, %cst_42 [2] : vector<4x64x64xf32> to vector<4x64xf32>
    %41 = vector.shape_cast %40 : vector<4x64xf32> to vector<4x64x1xf32>
    %42 = vector.broadcast %41 : vector<4x64x1xf32> to vector<4x64x64xf32>
    %43 = arith.subf %39, %42 : vector<4x64x64xf32>
    %44 = math.exp %43 : vector<4x64x64xf32>
    %cst_43 = arith.constant dense<0.000000e+00> : vector<4x64xf32>
    %45 = vector.multi_reduction <add>, %44, %cst_43 [2] : vector<4x64x64xf32> to vector<4x64xf32>
    %46 = vector.shape_cast %45 : vector<4x64xf32> to vector<4x64x1xf32>
    %47 = tpu.reciprocal %46 {approx = true} : vector<4x64x1xf32> -> vector<4x64x1xf32>
    %48 = vector.broadcast %47 : vector<4x64x1xf32> to vector<4x64x64xf32>
    %49 = arith.mulf %44, %48 : vector<4x64x64xf32>
    %cst_44 = arith.constant 9.99999997E-7 : f32
    %50 = vector.broadcast %cst_44 : f32 to vector<4x64x64xf32>
    %51 = arith.addf %49, %50 : vector<4x64x64xf32>
    "tpu.trace_start"() <{level = 10 : i32, message = "glm,gma->gla"}> : () -> ()
    %cst_45 = arith.constant dense<0.000000e+00> : vector<4x64x8xf32>
    %52 = tpu.matmul %51, %38, %cst_45 {dimension_numbers = #tpu.dot_dimension_numbers<[2], [1], [1], [2], [0, 0, 0, 1, 1, 2], [0], [0]>} : vector<4x64x64xf32>, vector<4x64x8xf32>, vector<4x64x8xf32> -> vector<4x64x8xf32>
    "tpu.trace_stop"() : () -> ()
    %c0_46 = arith.constant 0 : index
    %c0_47 = arith.constant 0 : index
    %c0_48 = arith.constant 0 : index
    %53 = vector.load %arg12[%c0_46, %c0_47, %c0_48] : memref<4x64x8xf32, #tpu.memory_space<vmem>>, vector<4x64x8xf32>
    tpu.vector_store %arg12[%c0_46, %c0_47, %c0_48], %52 {strides = array<i32>} : memref<4x64x8xf32, #tpu.memory_space<vmem>>, vector<4x64x8xf32>,
    return
  }
  func.func @transform_0(%arg0: i32) -> (i32, i32, i32) {
    %c0_i32 = arith.constant 0 : i32
    %c0_i32_0 = arith.constant 0 : i32
    %c0_i32_1 = arith.constant 0 : i32
    return %arg0, %c0_i32, %c0_i32_0 : i32, i32, i32
  }
  func.func @transform_1(%arg0: i32) -> (i32, i32, i32) {
    %c0_i32 = arith.constant 0 : i32
    %c0_i32_0 = arith.constant 0 : i32
    %c0_i32_1 = arith.constant 0 : i32
    return %arg0, %c0_i32, %c0_i32_0 : i32, i32, i32
  }
  func.func @transform_2(%arg0: i32) -> (i32, i32, i32) {
    %c0_i32 = arith.constant 0 : i32
    %c0_i32_0 = arith.constant 0 : i32
    %c0_i32_1 = arith.constant 0 : i32
    return %arg0, %c0_i32, %c0_i32_0 : i32, i32, i32
  }
  func.func @transform_3(%arg0: i32) -> (i32, i32, i32) {
    %c0_i32 = arith.constant 0 : i32
    %c0_i32_0 = arith.constant 0 : i32
    %c0_i32_1 = arith.constant 0 : i32
    return %arg0, %c0_i32, %c0_i32_0 : i32, i32, i32
  }
  func.func @transform_4(%arg0: i32) -> (i32, i32, i32) {
    %c0_i32 = arith.constant 0 : i32
    %c0_i32_0 = arith.constant 0 : i32
    %c0_i32_1 = arith.constant 0 : i32
    return %arg0, %c0_i32, %c0_i32_0 : i32, i32, i32
  }
  func.func @transform_5(%arg0: i32) -> (i32, i32, i32) {
    %c0_i32 = arith.constant 0 : i32
    %c0_i32_0 = arith.constant 0 : i32
    %c0_i32_1 = arith.constant 0 : i32
    return %arg0, %c0_i32, %c0_i32_0 : i32, i32, i32
  }
  func.func @transform_6(%arg0: i32) -> (i32, i32, i32) {
    %c0_i32 = arith.constant 0 : i32
    %c0_i32_0 = arith.constant 0 : i32
    %c0_i32_1 = arith.constant 0 : i32
    return %arg0, %c0_i32, %c0_i32_0 : i32, i32, i32
  }
  func.func @transform_7(%arg0: i32) -> (i32, i32, i32) {
    %c0_i32 = arith.constant 0 : i32
    %c0_i32_0 = arith.constant 0 : i32
    %c0_i32_1 = arith.constant 0 : i32
    return %arg0, %c0_i32, %c0_i32_0 : i32, i32, i32
  }
  func.func @transform_8(%arg0: i32) -> (i32, i32, i32) {
    %c0_i32 = arith.constant 0 : i32
    %c0_i32_0 = arith.constant 0 : i32
    %c0_i32_1 = arith.constant 0 : i32
    return %arg0, %c0_i32, %c0_i32_0 : i32, i32, i32
  }
  func.func @transform_9(%arg0: i32) -> (i32, i32, i32) {
    %c0_i32 = arith.constant 0 : i32
    %c0_i32_0 = arith.constant 0 : i32
    %c0_i32_1 = arith.constant 0 : i32
    return %arg0, %c0_i32, %c0_i32_0 : i32, i32, i32
  }
  func.func @transform_10(%arg0: i32) -> (i32, i32, i32) {
    %c0_i32 = arith.constant 0 : i32
    %c0_i32_0 = arith.constant 0 : i32
    %c0_i32_1 = arith.constant 0 : i32
    return %arg0, %c0_i32, %c0_i32_0 : i32, i32, i32
  }
  func.func @transform_11(%arg0: i32) -> (i32, i32, i32) {
    %c0_i32 = arith.constant 0 : i32
    %c0_i32_0 = arith.constant 0 : i32
    %c0_i32_1 = arith.constant 0 : i32
    return %arg0, %c0_i32, %c0_i32_0 : i32, i32, i32
  }
}

module attributes {stable_mosaic.version = 11 : i64} {
  func.func @_fused_out_kernel(%arg0: i32, %arg1: memref<1x4x512xf32, #tpu.memory_space<vmem>>, %arg2: memref<1x4x512xf32, #tpu.memory_space<vmem>>, %arg3: memref<1x4x512xf32, #tpu.memory_space<vmem>>, %arg4: memref<1x4x512xf32, #tpu.memory_space<vmem>>, %arg5: memref<3x4x4xf32, #tpu.memory_space<vmem>>, %arg6: memref<4x1xf32, #tpu.memory_space<vmem>>, %arg7: memref<1x4x512xf32, #tpu.memory_space<vmem>>) attributes {dimension_semantics = [#tpu.dimension_semantics<parallel>], iteration_bounds = array<i64: 2>, scalar_prefetch = 0 : i64, scratch_operands = 0 : i64, tpu.core_type = #tpu.core_type<tc>, window_params = [{transform_indices = @transform_0, window_bounds = array<i64: 1, 4, 512>}, {transform_indices = @transform_1, window_bounds = array<i64: 1, 4, 512>}, {transform_indices = @transform_2, window_bounds = array<i64: 1, 4, 512>}, {transform_indices = @transform_3, window_bounds = array<i64: 1, 4, 512>}, {pipeline_mode = #tpu.pipeline_mode<synchronous>, transform_indices = @transform_4, window_bounds = array<i64: 3, 4, 4>}, {pipeline_mode = #tpu.pipeline_mode<synchronous>, transform_indices = @transform_5, window_bounds = array<i64: 4, 1>}, {transform_indices = @transform_6, window_bounds = array<i64: 1, 4, 512>}]} {
    %c0 = arith.constant 0 : index
    %c0_0 = arith.constant 0 : index
    %c0_1 = arith.constant 0 : index
    %0 = vector.load %arg5[%c0, %c0_0, %c0_1] : memref<3x4x4xf32, #tpu.memory_space<vmem>>, vector<1x4x4xf32>
    %1 = vector.shape_cast %0 : vector<1x4x4xf32> to vector<4x4xf32>
    %c0_2 = arith.constant 0 : index
    %c0_3 = arith.constant 0 : index
    %c0_4 = arith.constant 0 : index
    %2 = vector.load %arg1[%c0_2, %c0_3, %c0_4] : memref<1x4x512xf32, #tpu.memory_space<vmem>>, vector<1x4x512xf32>
    %3 = vector.shape_cast %2 : vector<1x4x512xf32> to vector<4x512xf32>
    %cst = arith.constant dense<0.000000e+00> : vector<4x512xf32>
    %4 = tpu.matmul %1, %3, %cst {dimension_numbers = #tpu.dot_dimension_numbers<[1], [0], [0], [1], [0, 0, 1, 1], [], []>} : vector<4x4xf32>, vector<4x512xf32>, vector<4x512xf32> -> vector<4x512xf32>
    %c1 = arith.constant 1 : index
    %c0_5 = arith.constant 0 : index
    %c0_6 = arith.constant 0 : index
    %5 = vector.load %arg5[%c1, %c0_5, %c0_6] : memref<3x4x4xf32, #tpu.memory_space<vmem>>, vector<1x4x4xf32>
    %6 = vector.shape_cast %5 : vector<1x4x4xf32> to vector<4x4xf32>
    %c0_7 = arith.constant 0 : index
    %c0_8 = arith.constant 0 : index
    %c0_9 = arith.constant 0 : index
    %7 = vector.load %arg2[%c0_7, %c0_8, %c0_9] : memref<1x4x512xf32, #tpu.memory_space<vmem>>, vector<1x4x512xf32>
    %8 = vector.shape_cast %7 : vector<1x4x512xf32> to vector<4x512xf32>
    %cst_10 = arith.constant dense<0.000000e+00> : vector<4x512xf32>
    %9 = tpu.matmul %6, %8, %cst_10 {dimension_numbers = #tpu.dot_dimension_numbers<[1], [0], [0], [1], [0, 0, 1, 1], [], []>} : vector<4x4xf32>, vector<4x512xf32>, vector<4x512xf32> -> vector<4x512xf32>
    %10 = arith.addf %4, %9 : vector<4x512xf32>
    %c2 = arith.constant 2 : index
    %c0_11 = arith.constant 0 : index
    %c0_12 = arith.constant 0 : index
    %11 = vector.load %arg5[%c2, %c0_11, %c0_12] : memref<3x4x4xf32, #tpu.memory_space<vmem>>, vector<1x4x4xf32>
    %12 = vector.shape_cast %11 : vector<1x4x4xf32> to vector<4x4xf32>
    %c0_13 = arith.constant 0 : index
    %c0_14 = arith.constant 0 : index
    %c0_15 = arith.constant 0 : index
    %13 = vector.load %arg3[%c0_13, %c0_14, %c0_15] : memref<1x4x512xf32, #tpu.memory_space<vmem>>, vector<1x4x512xf32>
    %14 = vector.shape_cast %13 : vector<1x4x512xf32> to vector<4x512xf32>
    %cst_16 = arith.constant dense<0.000000e+00> : vector<4x512xf32>
    %15 = tpu.matmul %12, %14, %cst_16 {dimension_numbers = #tpu.dot_dimension_numbers<[1], [0], [0], [1], [0, 0, 1, 1], [], []>} : vector<4x4xf32>, vector<4x512xf32>, vector<4x512xf32> -> vector<4x512xf32>
    %16 = arith.addf %10, %15 : vector<4x512xf32>
    %c0_17 = arith.constant 0 : index
    %c0_18 = arith.constant 0 : index
    %17 = vector.load %arg6[%c0_17, %c0_18] : memref<4x1xf32, #tpu.memory_space<vmem>>, vector<4x1xf32>
    %18 = vector.broadcast %17 : vector<4x1xf32> to vector<4x512xf32>
    %19 = arith.addf %16, %18 : vector<4x512xf32>
    %c0_19 = arith.constant 0 : index
    %c0_20 = arith.constant 0 : index
    %c0_21 = arith.constant 0 : index
    %20 = vector.load %arg4[%c0_19, %c0_20, %c0_21] : memref<1x4x512xf32, #tpu.memory_space<vmem>>, vector<1x4x512xf32>
    %21 = vector.shape_cast %20 : vector<1x4x512xf32> to vector<4x512xf32>
    %22 = arith.addf %19, %21 : vector<4x512xf32>
    %cst_22 = arith.constant 0.000000e+00 : f32
    %23 = vector.broadcast %cst_22 : f32 to vector<4x512xf32>
    %24 = arith.maximumf %22, %23 : vector<4x512xf32>
    %c0_23 = arith.constant 0 : index
    %c0_24 = arith.constant 0 : index
    %c0_25 = arith.constant 0 : index
    %25 = vector.load %arg7[%c0_23, %c0_24, %c0_25] : memref<1x4x512xf32, #tpu.memory_space<vmem>>, vector<1x4x512xf32>
    %26 = vector.shape_cast %25 : vector<1x4x512xf32> to vector<4x512xf32>
    %27 = vector.shape_cast %24 : vector<4x512xf32> to vector<1x4x512xf32>
    tpu.vector_store %arg7[%c0_23, %c0_24, %c0_25], %27 {strides = array<i32>} : memref<1x4x512xf32, #tpu.memory_space<vmem>>, vector<1x4x512xf32>,
    return
  }
  func.func @transform_0(%arg0: i32) -> (i32, i32, i32) {
    %c0_i32 = arith.constant 0 : i32
    %c0_i32_0 = arith.constant 0 : i32
    %c0_i32_1 = arith.constant 0 : i32
    return %arg0, %c0_i32, %c0_i32_0 : i32, i32, i32
  }
  func.func @transform_1(%arg0: i32) -> (i32, i32, i32) {
    %c0_i32 = arith.constant 0 : i32
    %c0_i32_0 = arith.constant 0 : i32
    %c0_i32_1 = arith.constant 0 : i32
    return %arg0, %c0_i32, %c0_i32_0 : i32, i32, i32
  }
  func.func @transform_2(%arg0: i32) -> (i32, i32, i32) {
    %c0_i32 = arith.constant 0 : i32
    %c0_i32_0 = arith.constant 0 : i32
    %c0_i32_1 = arith.constant 0 : i32
    return %arg0, %c0_i32, %c0_i32_0 : i32, i32, i32
  }
  func.func @transform_3(%arg0: i32) -> (i32, i32, i32) {
    %c0_i32 = arith.constant 0 : i32
    %c0_i32_0 = arith.constant 0 : i32
    %c0_i32_1 = arith.constant 0 : i32
    return %arg0, %c0_i32, %c0_i32_0 : i32, i32, i32
  }
  func.func @transform_4(%arg0: i32) -> (i32, i32, i32) {
    %c0_i32 = arith.constant 0 : i32
    %c0_i32_0 = arith.constant 0 : i32
    %c0_i32_1 = arith.constant 0 : i32
    %c0_i32_2 = arith.constant 0 : i32
    return %c0_i32, %c0_i32_0, %c0_i32_1 : i32, i32, i32
  }
  func.func @transform_5(%arg0: i32) -> (i32, i32) {
    %c0_i32 = arith.constant 0 : i32
    %c0_i32_0 = arith.constant 0 : i32
    %c0_i32_1 = arith.constant 0 : i32
    return %c0_i32, %c0_i32_0 : i32, i32
  }
  func.func @transform_6(%arg0: i32) -> (i32, i32, i32) {
    %c0_i32 = arith.constant 0 : i32
    %c0_i32_0 = arith.constant 0 : i32
    %c0_i32_1 = arith.constant 0 : i32
    return %arg0, %c0_i32, %c0_i32_0 : i32, i32, i32
  }
}

</mosaic_0001>

<llo_original>
// kernel: axial_attention_3d.3
$region0: #{axial_attention_3d.3}
  #allocation0 [shape = 'u32[]', space=smem, size = 0x4, offset = 0x4, fixed_abs, tag = 'smem constant byte address 0x4 - core index']
  #allocation1 [shape = 'u32[144,128]{1,0:T(1,128)}', space=vmem, size = 0x12000, scoped, tag = 'internal scratch']
  %s0 = inlined_call_operand.vmem [shape: f32[2,4,512], index: 0, kind: input, shape index: {}]
  %s1 = inlined_call_operand.vmem [shape: f32[36,4], index: 1, kind: input, shape index: {}]
  %s2 = inlined_call_operand.vmem [shape: f32[2,36,512], index: 2, kind: output, shape index: {}]
  %s3 = sld [smem:[#allocation0]]
  $region41: #{axial_attention_3d.3} parent=0
    _
  %s5 = ssub.s32 1, %s3
  %s6 = scalar_select 0, %s5, %s3
  loop: start=0, step=1, limit=4
  $region2: #{axial_attention_3d.3} parent=0 // loop_pre_header
    _
  $region3: #{axial_attention_3d.3} parent=0 // loop_header
    %s8 = sphi 0, %s12
    %p9 = scmp.ge.s32.totalorder %s8, 4
    %s18 = sphi 0, %s20
    %s21 = sphi 0, %s18
    %s22 = sphi 0, %s21
    %s38 = sphi 0, %s22
    %s42 = sphi 0, %s42
    %s44 = sphi 0, %s42
    %s45 = sphi 0, %s44
    %s59 = sphi 0, %s45
    %s65 = sphi 0, %s67
    %s68 = sphi 0, %s65
    %s69 = sphi 0, %s68
    %s85 = sphi 0, %s69
  $region4: #{axial_attention_3d.3} parent=0 // loop_header_branch
    %11 = sbr.rel (%p9) target = $region8
  $region5: #{axial_attention_3d.3} parent=0 // loop_body
    %s13 = ssub.s32 %s8, 1
    %s14 = ssub.s32 %s8, 2
    %s15 = sadd.s32 %s8, 1
    %s16 = ssub.s32 %s8, %s15
    %p17 = scmp.eq.s32.totalorder %s16, 0
    %s19 = sadd.s32 %s18, 1
    %s20 = scalar_select %p17, %s18, %s19
    %p23 = pneg %p17
    %p24 = scmp.eq.s32.totalorder %s8, 1
    %p25 = por %p23, %p24
    %p26 = scmp.ne.s32.totalorder %s18, %s21
    %p27 = scmp.eq.s32.totalorder %s8, 0
    %p28 = por %p26, %p27
    %p29 = scmp.ne.s32.totalorder %s18, %s21
    %p30 = scmp.eq.s32.totalorder %s13, 1
    %p31 = por %p29, %p30
    %p32 = scmp.ne.s32.totalorder %s21, %s22
    %p33 = scmp.eq.s32.totalorder %s13, 0
    %p34 = por %p32, %p33
    %p35 = scmp.ne.s32.totalorder %s21, %s22
    %p36 = scmp.eq.s32.totalorder %s14, 1
    %p37 = por %p35, %p36
    %p39 = scmp.ne.s32.totalorder %s22, %s38
    %p40 = scmp.eq.s32.totalorder %s14, 0
    %p41 = por %p39, %p40
    %s43 = sadd.s32 %s42, 1
    %p46 = scmp.eq.s32.totalorder %s8, 1
    %p47 = scmp.ne.s32.totalorder %s42, %s44
    %p48 = scmp.eq.s32.totalorder %s8, 0
    %p49 = por %p47, %p48
    %p50 = scmp.ne.s32.totalorder %s42, %s44
    %p51 = scmp.eq.s32.totalorder %s13, 1
    %p52 = por %p50, %p51
    %p53 = scmp.ne.s32.totalorder %s44, %s45
    %p54 = scmp.eq.s32.totalorder %s13, 0
    %p55 = por %p53, %p54
    %p56 = scmp.ne.s32.totalorder %s44, %s45
    %p57 = scmp.eq.s32.totalorder %s14, 1
    %p58 = por %p56, %p57
    %p60 = scmp.ne.s32.totalorder %s45, %s59
    %p61 = scmp.eq.s32.totalorder %s14, 0
    %p62 = por %p60, %p61
    %s63 = ssub.s32 %s8, %s15
    %p64 = scmp.eq.s32.totalorder %s63, 0
    %s66 = sadd.s32 %s65, 1
    %s67 = scalar_select %p64, %s65, %s66
    %p70 = pneg %p64
    %p71 = scmp.eq.s32.totalorder %s8, 1
    %p72 = por %p70, %p71
    %p73 = scmp.ne.s32.totalorder %s65, %s68
    %p74 = scmp.eq.s32.totalorder %s8, 0
    %p75 = por %p73, %p74
    %p76 = scmp.ne.s32.totalorder %s65, %s68
    %p77 = scmp.eq.s32.totalorder %s13, 1
    %p78 = por %p76, %p77
    %p79 = scmp.ne.s32.totalorder %s68, %s69
    %p80 = scmp.eq.s32.totalorder %s13, 0
    %p81 = por %p79, %p80
    %p82 = scmp.ne.s32.totalorder %s68, %s69
    %p83 = scmp.eq.s32.totalorder %s14, 1
    %p84 = por %p82, %p83
    %p86 = scmp.ne.s32.totalorder %s69, %s85
    %p87 = scmp.eq.s32.totalorder %s14, 0
    %p88 = por %p86, %p87
    %p89 = scmp.le.s32.totalorder 1, %s8
    %p90 = scmp.lt.s32.totalorder %s8, 3
    %p91 = pnand %p89, %p90
    %p92 = pneg %p91
    // Predicated region
    $region9: #{axial_attention_3d.3} parent=5 // pred_check
      _
    $region10: #{axial_attention_3d.3} parent=5 // pred_check_branch
      %94 = sbr.rel (%p91) target = $region12
    $region11: #{axial_attention_3d.3} parent=5 // pred_region
      %s95 = ssub.s32 %s8, 1
      // Predicated region
      $region13: #{axial_attention_3d.3} parent=11 // pred_check
        %p96 = pneg %p55
      $region14: #{axial_attention_3d.3} parent=11 // pred_check_branch
        %98 = sbr.rel (%p96) target = $region16
      $region15: #{axial_attention_3d.3} parent=11 // pred_region
        _
      $region16: #{axial_attention_3d.3} parent=11 // pred_fallthru
        _
    $region12: #{axial_attention_3d.3} parent=5 // pred_fallthru
      _
    %p99 = scmp.lt.s32.totalorder %s8, 2
    // Predicated region
    $region17: #{axial_attention_3d.3} parent=5 // pred_check
      %p100 = pneg %p99
    $region18: #{axial_attention_3d.3} parent=5 // pred_check_branch
      %102 = sbr.rel (%p100) target = $region20
    $region19: #{axial_attention_3d.3} parent=5 // pred_region
      // Predicated region
      $region21: #{axial_attention_3d.3} parent=19 // pred_check
        %p103 = pneg %p28
      $region22: #{axial_attention_3d.3} parent=19 // pred_check_branch
        %105 = sbr.rel (%p103) target = $region24
      $region23: #{axial_attention_3d.3} parent=19 // pred_region
        %p106 = scmp.lt.s32.totalorder %s8, 1
        %s107 = scalar_select %p106, %s8, 1
        %s108 = smul.addr %s107, 4
        %s109 = smul.addr %s108, 4
        %s110 = scalar_lea.vmem %s0, %s109
      $region24: #{axial_attention_3d.3} parent=19 // pred_fallthru
        _
    $region20: #{axial_attention_3d.3} parent=5 // pred_fallthru
      _
    %p111 = scmp.le.s32.totalorder 1, %s8
    %p112 = scmp.lt.s32.totalorder %s8, 3
    %p113 = pnand %p111, %p112
    %p114 = pneg %p113
    // Predicated region
    $region25: #{axial_attention_3d.3} parent=5 // pred_check
      _
    $region26: #{axial_attention_3d.3} parent=5 // pred_check_branch
      %116 = sbr.rel (%p113) target = $region28
    $region27: #{axial_attention_3d.3} parent=5 // pred_region
      %s117 = ssub.s32 %s8, 1
      %p118 = scmp.lt.s32.totalorder %s13, 1
      %s119 = scalar_select %p118, %s13, 1
      %s120 = smul.addr %s119, 4
      %s121 = smul.addr %s120, 4
      %s122 = scalar_lea.vmem %s0, %s121
      %p123 = pneg %p34
      %p124 = pneg %p31
      %p125 = pneg %p55
      %p126 = pneg %p52
      %p127 = pneg %p81
      %p128 = pneg %p78
      %p129 = scmp.lt.s32.totalorder %s13, 1
      %s130 = scalar_select %p129, %s13, 1
      %s131 = smul.addr %s130, 20
      %s132 = smul.addr %s131, 8
      %s133 = scalar_lea.vmem %s2, %s132
      %p134 = scmp.lt.s32.totalorder %s13, 1
      %s135 = scalar_select %p134, %s13, 1
      %s136 = smul.addr %s135, 4
      %s137 = smul.addr %s136, 4
      %s138 = scalar_lea.vmem %s0, %s137
      %p139 = scmp.lt.s32.totalorder %s13, 1
      %s140 = scalar_select %p139, %s13, 1
      %s141 = smul.addr %s140, 20
      %s142 = smul.addr %s141, 8
      %s143 = scalar_lea.vmem %s2, %s142
      %v144 = vld [vmem:[%s1] sm:$0xff]
      %v145 = vld [vmem:[%s1 + $0x8] sm:$0xff]
      %v146 = vld [vmem:[%s1 + $0x10] sm:$0xff]
      %v147 = vld [vmem:[%s1 + $0x18] sm:$0xff]
      %v148 = vld [vmem:[%s1 + $0x20] sm:$0xf]
      %v149 = vld [vmem:[%s138] sm:$0xff]
      %v150 = vld [vmem:[%s138 + $0x8] sm:$0xff]
      %v153 = vcombine.high %v149, %v149
      %v154 = vcombine.high %v150, %v150
      %vm155 = vcmask 31744
      %v157 = vsel %vm155, %v144, 0
      %v160 = vsel %vm155, %v145, 0
      %v163 = vsel %vm155, %v146, 0
      %v166 = vsel %vm155, %v147, 0
      %v169 = vsel %vm155, %v148, 0
      %vm171 = vcmask 1043456
      %v172 = vsel %vm171, %v149, 0
      %v174 = vsel %vm171, %v153, 0
      %v176 = vsel %vm171, %v150, 0
      %v178 = vsel %vm171, %v154, 0
      %180 = vmatprep.subr.mxu0 0.0
      %181 = vmatpush1.msra.mxu0 0.0
      %182 = vmatprep.subr.mxu0 0.0
      %183 = vmatpush1.msra.mxu0 0.0
      %184 = vmatprep.subr.mxu0 0.0
      %185 = vmatpush1.msra.mxu0 0.0
      %186 = vmatprep.subr.mxu0 0.0
      %187 = vmatpush1.msra.mxu0 0.0
      %188 = vmatprep.subr.mxu0 0.0
      %189 = vmatpush1.msra.mxu0 0.0
      %190 = vmatprep.subr.mxu0 0.0
      %191 = vmatpush1.msra.mxu0 0.0
      %192 = vmatprep.subr.mxu0 0.0
      %193 = vmatpush1.msra.mxu0 0.0
      %194 = vmatprep.subr.mxu0 0.0
      %195 = vmatpush1.msra.mxu0 0.0
      %196 = vmatprep.subr.mxu0 0.0
      %197 = vmatpush1.msra.mxu0 0.0
      %198 = vmatprep.subr.mxu0 0.0
      %199 = vmatpush1.msra.mxu0 0.0
      %200 = vmatprep.subr.mxu0 0.0
      %201 = vmatpush1.msra.mxu0 0.0
      %202 = vmatprep.subr.mxu0 0.0
      %203 = vmatpush1.msra.mxu0 0.0
      %204 = vmatprep.subr.mxu0 0.0
      %205 = vmatpush1.msra.mxu0 0.0
      %206 = vmatprep.subr.mxu0 0.0
      %207 = vmatpush1.msra.mxu0 0.0
      %208 = vmatprep.subr.mxu0 0.0
      %209 = vmatpush1.msra.mxu0 0.0
      %210 = vmatprep.subr.mxu0 %v174
      %211 = vmatpush1.msra.mxu0 %v172
      %212 = vmatprep.subr.mxu0 0.0
      %213 = vmatpush2.msra.mxu0 0.0
      %214 = vmatprep.subr.mxu0 0.0
      %215 = vmatpush2.msra.mxu0 0.0
      %216 = vmatprep.subr.mxu0 0.0
      %217 = vmatpush2.msra.mxu0 0.0
      %218 = vmatprep.subr.mxu0 0.0
      %219 = vmatpush2.msra.mxu0 0.0
      %220 = vmatprep.subr.mxu0 0.0
      %221 = vmatpush2.msra.mxu0 0.0
      %222 = vmatprep.subr.mxu0 0.0
      %223 = vmatpush2.msra.mxu0 0.0
      %224 = vmatprep.subr.mxu0 0.0
      %225 = vmatpush2.msra.mxu0 0.0
      %226 = vmatprep.subr.mxu0 0.0
      %227 = vmatpush2.msra.mxu0 0.0
      %228 = vmatprep.subr.mxu0 0.0
      %229 = vmatpush2.msra.mxu0 0.0
      %230 = vmatprep.subr.mxu0 0.0
      %231 = vmatpush2.msra.mxu0 0.0
      %232 = vmatprep.subr.mxu0 0.0
      %233 = vmatpush2.msra.mxu0 0.0
      %234 = vmatprep.subr.mxu0 0.0
      %235 = vmatpush2.msra.mxu0 0.0
      %236 = vmatprep.subr.mxu0 0.0
      %237 = vmatpush2.msra.mxu0 0.0
      %238 = vmatprep.subr.mxu0 0.0
      %239 = vmatpush2.msra.mxu0 0.0
      %240 = vmatprep.subr.mxu0 0.0
      %241 = vmatpush2.msra.mxu0 0.0
      %242 = vmatprep.subr.mxu0 0.0
      %243 = vmatpush2.msra.mxu0 0.0
      %244 = vmatprep.mubr.f32.mxu0 0.0
      %245 = vmatmul.mubr.f32.gmra.mxu0 %v157
      %v246 = vpop.f32.mrf.mxu0
      %v247 = vadd.f32 0.0, %v246
      %v248 = vpop.f32.mrf.mxu0
      %v249 = vadd.f32 0.0, %v248
      %250 = vmatprep.mubr.f32.mxu0 0.0
      %251 = vmatmul.mubr.f32.gmra.mxu0 %v160
      %v252 = vpop.f32.mrf.mxu0
      %v253 = vadd.f32 0.0, %v252
      %v254 = vpop.f32.mrf.mxu0
      %v255 = vadd.f32 0.0, %v254
      %256 = vmatprep.mubr.f32.mxu0 0.0
      %257 = vmatmul.mubr.f32.gmra.mxu0 %v163
      %v258 = vpop.f32.mrf.mxu0
      %v259 = vadd.f32 0.0, %v258
      %v260 = vpop.f32.mrf.mxu0
      %v261 = vadd.f32 0.0, %v260
      %262 = vmatprep.mubr.f32.mxu0 0.0
      %263 = vmatmul.mubr.f32.gmra.mxu0 %v166
      %v264 = vpop.f32.mrf.mxu0
      %v265 = vadd.f32 0.0, %v264
      %v266 = vpop.f32.mrf.mxu0
      %v267 = vadd.f32 0.0, %v266
      %268 = vmatprep.mubr.f32.mxu0 0.0
      %269 = vmatmul.mubr.f32.gmra.mxu0 %v169
      %v270 = vpop.f32.mrf.mxu0
      %v271 = vadd.f32 0.0, %v270
      %v272 = vpop.f32.mrf.mxu0
      %v273 = vadd.f32 0.0, %v272
      %274 = vdwg.mxu0
      %275 = vmatprep.subr.mxu0 0.0
      %276 = vmatpush1.msra.mxu0 0.0
      %277 = vmatprep.subr.mxu0 0.0
      %278 = vmatpush1.msra.mxu0 0.0
      %279 = vmatprep.subr.mxu0 0.0
      %280 = vmatpush1.msra.mxu0 0.0
      %281 = vmatprep.subr.mxu0 0.0
      %282 = vmatpush1.msra.mxu0 0.0
      %283 = vmatprep.subr.mxu0 0.0
      %284 = vmatpush1.msra.mxu0 0.0
      %285 = vmatprep.subr.mxu0 0.0
      %286 = vmatpush1.msra.mxu0 0.0
      %287 = vmatprep.subr.mxu0 0.0
      %288 = vmatpush1.msra.mxu0 0.0
      %289 = vmatprep.subr.mxu0 0.0
      %290 = vmatpush1.msra.mxu0 0.0
      %291 = vmatprep.subr.mxu0 0.0
      %292 = vmatpush1.msra.mxu0 0.0
      %293 = vmatprep.subr.mxu0 0.0
      %294 = vmatpush1.msra.mxu0 0.0
      %295 = vmatprep.subr.mxu0 0.0
      %296 = vmatpush1.msra.mxu0 0.0
      %297 = vmatprep.subr.mxu0 0.0
      %298 = vmatpush1.msra.mxu0 0.0
      %299 = vmatprep.subr.mxu0 0.0
      %300 = vmatpush1.msra.mxu0 0.0
      %301 = vmatprep.subr.mxu0 0.0
      %302 = vmatpush1.msra.mxu0 0.0
      %303 = vmatprep.subr.mxu0 0.0
      %304 = vmatpush1.msra.mxu0 0.0
      %305 = vmatprep.subr.mxu0 %v178
      %306 = vmatpush1.msra.mxu0 %v176
      %307 = vmatprep.subr.mxu0 0.0
      %308 = vmatpush2.msra.mxu0 0.0
      %309 = vmatprep.subr.mxu0 0.0
      %310 = vmatpush2.msra.mxu0 0.0
      %311 = vmatprep.subr.mxu0 0.0
      %312 = vmatpush2.msra.mxu0 0.0
      %313 = vmatprep.subr.mxu0 0.0
      %314 = vmatpush2.msra.mxu0 0.0
      %315 = vmatprep.subr.mxu0 0.0
      %316 = vmatpush2.msra.mxu0 0.0
      %317 = vmatprep.subr.mxu0 0.0
      %318 = vmatpush2.msra.mxu0 0.0
      %319 = vmatprep.subr.mxu0 0.0
      %320 = vmatpush2.msra.mxu0 0.0
      %321 = vmatprep.subr.mxu0 0.0
      %322 = vmatpush2.msra.mxu0 0.0
      %323 = vmatprep.subr.mxu0 0.0
      %324 = vmatpush2.msra.mxu0 0.0
      %325 = vmatprep.subr.mxu0 0.0
      %326 = vmatpush2.msra.mxu0 0.0
      %327 = vmatprep.subr.mxu0 0.0
      %328 = vmatpush2.msra.mxu0 0.0
      %329 = vmatprep.subr.mxu0 0.0
      %330 = vmatpush2.msra.mxu0 0.0
      %331 = vmatprep.subr.mxu0 0.0
      %332 = vmatpush2.msra.mxu0 0.0
      %333 = vmatprep.subr.mxu0 0.0
      %334 = vmatpush2.msra.mxu0 0.0
      %335 = vmatprep.subr.mxu0 0.0
      %336 = vmatpush2.msra.mxu0 0.0
      %337 = vmatprep.subr.mxu0 0.0
      %338 = vmatpush2.msra.mxu0 0.0
      %339 = vmatprep.mubr.f32.mxu0 0.0
      %340 = vmatmul.mubr.f32.gmra.mxu0 %v157
      %v341 = vpop.f32.mrf.mxu0
      %v342 = vadd.f32 0.0, %v341
      %v343 = vpop.f32.mrf.mxu0
      %v344 = vadd.f32 0.0, %v343
      %345 = vmatprep.mubr.f32.mxu0 0.0
      %346 = vmatmul.mubr.f32.gmra.mxu0 %v160
      %v347 = vpop.f32.mrf.mxu0
      %v348 = vadd.f32 0.0, %v347
      %v349 = vpop.f32.mrf.mxu0
      %v350 = vadd.f32 0.0, %v349
      %351 = vmatprep.mubr.f32.mxu0 0.0
      %352 = vmatmul.mubr.f32.gmra.mxu0 %v163
      %v353 = vpop.f32.mrf.mxu0
      %v354 = vadd.f32 0.0, %v353
      %v355 = vpop.f32.mrf.mxu0
      %v356 = vadd.f32 0.0, %v355
      %357 = vmatprep.mubr.f32.mxu0 0.0
      %358 = vmatmul.mubr.f32.gmra.mxu0 %v166
      %v359 = vpop.f32.mrf.mxu0
      %v360 = vadd.f32 0.0, %v359
      %v361 = vpop.f32.mrf.mxu0
      %v362 = vadd.f32 0.0, %v361
      %363 = vmatprep.mubr.f32.mxu0 0.0
      %364 = vmatmul.mubr.f32.gmra.mxu0 %v169
      %v365 = vpop.f32.mrf.mxu0
      %v366 = vadd.f32 0.0, %v365
      %v367 = vpop.f32.mrf.mxu0
      %v368 = vadd.f32 0.0, %v367
      %369 = vdwg.mxu0
      %370 = vst [vmem:[%s143] sm:$0xff] %v247
      %371 = vst [vmem:[%s143 + $0x8] sm:$0xff] %v249
      %372 = vst [vmem:[%s143 + $0x10] sm:$0xff] %v342
      %373 = vst [vmem:[%s143 + $0x18] sm:$0xff] %v344
      %374 = vst [vmem:[%s143 + $0x20] sm:$0xff] %v253
      %375 = vst [vmem:[%s143 + $0x28] sm:$0xff] %v255
      %376 = vst [vmem:[%s143 + $0x30] sm:$0xff] %v348
      %377 = vst [vmem:[%s143 + $0x38] sm:$0xff] %v350
      %378 = vst [vmem:[%s143 + $0x40] sm:$0xff] %v259
      %379 = vst [vmem:[%s143 + $0x48] sm:$0xff] %v261
      %380 = vst [vmem:[%s143 + $0x50] sm:$0xff] %v354
      %381 = vst [vmem:[%s143 + $0x58] sm:$0xff] %v356
      %382 = vst [vmem:[%s143 + $0x60] sm:$0xff] %v265
      %383 = vst [vmem:[%s143 + $0x68] sm:$0xff] %v267
      %384 = vst [vmem:[%s143 + $0x70] sm:$0xff] %v360
      %385 = vst [vmem:[%s143 + $0x78] sm:$0xff] %v362
      %386 = vst [vmem:[%s143 + $0x80] sm:$0xf] %v271
      %387 = vst [vmem:[%s143 + $0x88] sm:$0xf] %v273
      %388 = vst [vmem:[%s143 + $0x90] sm:$0xf] %v366
      %389 = vst [vmem:[%s143 + $0x98] sm:$0xf] %v368
      %p390 = scmp.lt.s32.totalorder %s13, 1
      %s391 = scalar_select %p390, %s13, 1
      %s392 = smul.addr %s391, 20
      %s393 = smul.addr %s392, 8
      %s394 = scalar_lea.vmem %s2, %s393
      // Predicated region
      $region29: #{axial_attention_3d.3} parent=27 // pred_check
        %p395 = pneg %p78
      $region30: #{axial_attention_3d.3} parent=27 // pred_check_branch
        %397 = sbr.rel (%p395) target = $region32
      $region31: #{axial_attention_3d.3} parent=27 // pred_region
        _
      $region32: #{axial_attention_3d.3} parent=27 // pred_fallthru
        _
    $region28: #{axial_attention_3d.3} parent=5 // pred_fallthru
      _
    %p398 = scmp.le.s32.totalorder 2, %s8
    // Predicated region
    $region33: #{axial_attention_3d.3} parent=5 // pred_check
      %p399 = pneg %p398
    $region34: #{axial_attention_3d.3} parent=5 // pred_check_branch
      %401 = sbr.rel (%p399) target = $region36
    $region35: #{axial_attention_3d.3} parent=5 // pred_region
      %s402 = ssub.s32 %s8, 2
      // Predicated region
      $region37: #{axial_attention_3d.3} parent=35 // pred_check
        %p403 = pneg %p84
      $region38: #{axial_attention_3d.3} parent=35 // pred_check_branch
        %405 = sbr.rel (%p403) target = $region40
      $region39: #{axial_attention_3d.3} parent=35 // pred_region
        %p406 = scmp.lt.s32.totalorder %s14, 1
        %s407 = scalar_select %p406, %s14, 1
        %s408 = smul.addr %s407, 20
        %s409 = smul.addr %s408, 8
        %s410 = scalar_lea.vmem %s2, %s409
      $region40: #{axial_attention_3d.3} parent=35 // pred_fallthru
        _
    $region36: #{axial_attention_3d.3} parent=5 // pred_fallthru
      _
  $region6: #{axial_attention_3d.3} parent=0 // loop_footer
    %s12 = sadd.s32 1, %s8
  $region7: #{axial_attention_3d.3} parent=0 // loop_footer_branch
    %7 = sbr.rel target = $region3
  $region8: #{axial_attention_3d.3} parent=0 // loop_exit
    _

// kernel: axial_attention_3d.5
$region0: #{axial_attention_3d.5}
  #allocation0 [shape = 'u32[]', space=smem, size = 0x4, offset = 0x4, fixed_abs, tag = 'smem constant byte address 0x4 - core index']
  #allocation1 [shape = 'u32[144,128]{1,0:T(1,128)}', space=vmem, size = 0x12000, scoped, tag = 'internal scratch']
  %s0 = inlined_call_operand.vmem [shape: f32[2,4,512], index: 0, kind: input, shape index: {}]
  %s1 = inlined_call_operand.vmem [shape: f32[2,4,512], index: 1, kind: input, shape index: {}]
  %s2 = inlined_call_operand.vmem [shape: f32[2,4,512], index: 2, kind: input, shape index: {}]
  %s3 = inlined_call_operand.vmem [shape: f32[2,4,512], index: 3, kind: input, shape index: {}]
  %s4 = inlined_call_operand.vmem [shape: f32[3,4,4], index: 4, kind: input, shape index: {}]
  %s5 = inlined_call_operand.vmem [shape: f32[4,1], index: 5, kind: input, shape index: {}]
  %s6 = inlined_call_operand.vmem [shape: f32[2,4,512], index: 6, kind: output, shape index: {}]
  %s7 = sld [smem:[#allocation0]]
  $region57: #{axial_attention_3d.5} parent=0
    _
  %s9 = ssub.s32 1, %s7
  %s10 = scalar_select 0, %s9, %s7
  loop: start=0, step=1, limit=4
  $region2: #{axial_attention_3d.5} parent=0 // loop_pre_header
    _
  $region3: #{axial_attention_3d.5} parent=0 // loop_header
    %s12 = sphi 0, %s16
    %p13 = scmp.ge.s32.totalorder %s12, 4
    %s22 = sphi 0, %s24
    %s25 = sphi 0, %s22
    %s26 = sphi 0, %s25
    %s42 = sphi 0, %s26
    %s48 = sphi 0, %s50
    %s51 = sphi 0, %s48
    %s52 = sphi 0, %s51
    %s68 = sphi 0, %s52
    %s74 = sphi 0, %s76
    %s77 = sphi 0, %s74
    %s78 = sphi 0, %s77
    %s94 = sphi 0, %s78
    %s100 = sphi 0, %s102
    %s103 = sphi 0, %s100
    %s104 = sphi 0, %s103
    %s120 = sphi 0, %s104
    %s124 = sphi 0, %s124
    %s126 = sphi 0, %s124
    %s127 = sphi 0, %s126
    %s141 = sphi 0, %s127
    %s145 = sphi 0, %s145
    %s147 = sphi 0, %s145
    %s148 = sphi 0, %s147
    %s162 = sphi 0, %s148
    %s168 = sphi 0, %s170
    %s171 = sphi 0, %s168
    %s172 = sphi 0, %s171
    %s188 = sphi 0, %s172
  $region4: #{axial_attention_3d.5} parent=0 // loop_header_branch
    %15 = sbr.rel (%p13) target = $region8
  $region5: #{axial_attention_3d.5} parent=0 // loop_body
    %s17 = ssub.s32 %s12, 1
    %s18 = ssub.s32 %s12, 2
    %s19 = sadd.s32 %s12, 1
    %s20 = ssub.s32 %s12, %s19
    %p21 = scmp.eq.s32.totalorder %s20, 0
    %s23 = sadd.s32 %s22, 1
    %s24 = scalar_select %p21, %s22, %s23
    %p27 = pneg %p21
    %p28 = scmp.eq.s32.totalorder %s12, 1
    %p29 = por %p27, %p28
    %p30 = scmp.ne.s32.totalorder %s22, %s25
    %p31 = scmp.eq.s32.totalorder %s12, 0
    %p32 = por %p30, %p31
    %p33 = scmp.ne.s32.totalorder %s22, %s25
    %p34 = scmp.eq.s32.totalorder %s17, 1
    %p35 = por %p33, %p34
    %p36 = scmp.ne.s32.totalorder %s25, %s26
    %p37 = scmp.eq.s32.totalorder %s17, 0
    %p38 = por %p36, %p37
    %p39 = scmp.ne.s32.totalorder %s25, %s26
    %p40 = scmp.eq.s32.totalorder %s18, 1
    %p41 = por %p39, %p40
    %p43 = scmp.ne.s32.totalorder %s26, %s42
    %p44 = scmp.eq.s32.totalorder %s18, 0
    %p45 = por %p43, %p44
    %s46 = ssub.s32 %s12, %s19
    %p47 = scmp.eq.s32.totalorder %s46, 0
    %s49 = sadd.s32 %s48, 1
    %s50 = scalar_select %p47, %s48, %s49
    %p53 = pneg %p47
    %p54 = scmp.eq.s32.totalorder %s12, 1
    %p55 = por %p53, %p54
    %p56 = scmp.ne.s32.totalorder %s48, %s51
    %p57 = scmp.eq.s32.totalorder %s12, 0
    %p58 = por %p56, %p57
    %p59 = scmp.ne.s32.totalorder %s48, %s51
    %p60 = scmp.eq.s32.totalorder %s17, 1
    %p61 = por %p59, %p60
    %p62 = scmp.ne.s32.totalorder %s51, %s52
    %p63 = scmp.eq.s32.totalorder %s17, 0
    %p64 = por %p62, %p63
    %p65 = scmp.ne.s32.totalorder %s51, %s52
    %p66 = scmp.eq.s32.totalorder %s18, 1
    %p67 = por %p65, %p66
    %p69 = scmp.ne.s32.totalorder %s52, %s68
    %p70 = scmp.eq.s32.totalorder %s18, 0
    %p71 = por %p69, %p70
    %s72 = ssub.s32 %s12, %s19
    %p73 = scmp.eq.s32.totalorder %s72, 0
    %s75 = sadd.s32 %s74, 1
    %s76 = scalar_select %p73, %s74, %s75
    %p79 = pneg %p73
    %p80 = scmp.eq.s32.totalorder %s12, 1
    %p81 = por %p79, %p80
    %p82 = scmp.ne.s32.totalorder %s74, %s77
    %p83 = scmp.eq.s32.totalorder %s12, 0
    %p84 = por %p82, %p83
    %p85 = scmp.ne.s32.totalorder %s74, %s77
    %p86 = scmp.eq.s32.totalorder %s17, 1
    %p87 = por %p85, %p86
    %p88 = scmp.ne.s32.totalorder %s77, %s78
    %p89 = scmp.eq.s32.totalorder %s17, 0
    %p90 = por %p88, %p89
    %p91 = scmp.ne.s32.totalorder %s77, %s78
    %p92 = scmp.eq.s32.totalorder %s18, 1
    %p93 = por %p91, %p92
    %p95 = scmp.ne.s32.totalorder %s78, %s94
    %p96 = scmp.eq.s32.totalorder %s18, 0
    %p97 = por %p95, %p96
    %s98 = ssub.s32 %s12, %s19
    %p99 = scmp.eq.s32.totalorder %s98, 0
    %s101 = sadd.s32 %s100, 1
    %s102 = scalar_select %p99, %s100, %s101
    %p105 = pneg %p99
    %p106 = scmp.eq.s32.totalorder %s12, 1
    %p107 = por %p105, %p106
    %p108 = scmp.ne.s32.totalorder %s100, %s103
    %p109 = scmp.eq.s32.totalorder %s12, 0
    %p110 = por %p108, %p109
    %p111 = scmp.ne.s32.totalorder %s100, %s103
    %p112 = scmp.eq.s32.totalorder %s17, 1
    %p113 = por %p111, %p112
    %p114 = scmp.ne.s32.totalorder %s103, %s104
    %p115 = scmp.eq.s32.totalorder %s17, 0
    %p116 = por %p114, %p115
    %p117 = scmp.ne.s32.totalorder %s103, %s104
    %p118 = scmp.eq.s32.totalorder %s18, 1
    %p119 = por %p117, %p118
    %p121 = scmp.ne.s32.totalorder %s104, %s120
    %p122 = scmp.eq.s32.totalorder %s18, 0
    %p123 = por %p121, %p122
    %s125 = sadd.s32 %s124, 1
    %p128 = scmp.eq.s32.totalorder %s12, 1
    %p129 = scmp.ne.s32.totalorder %s124, %s126
    %p130 = scmp.eq.s32.totalorder %s12, 0
    %p131 = por %p129, %p130
    %p132 = scmp.ne.s32.totalorder %s124, %s126
    %p133 = scmp.eq.s32.totalorder %s17, 1
    %p134 = por %p132, %p133
    %p135 = scmp.ne.s32.totalorder %s126, %s127
    %p136 = scmp.eq.s32.totalorder %s17, 0
    %p137 = por %p135, %p136
    %p138 = scmp.ne.s32.totalorder %s126, %s127
    %p139 = scmp.eq.s32.totalorder %s18, 1
    %p140 = por %p138, %p139
    %p142 = scmp.ne.s32.totalorder %s127, %s141
    %p143 = scmp.eq.s32.totalorder %s18, 0
    %p144 = por %p142, %p143
    %s146 = sadd.s32 %s145, 1
    %p149 = scmp.eq.s32.totalorder %s12, 1
    %p150 = scmp.ne.s32.totalorder %s145, %s147
    %p151 = scmp.eq.s32.totalorder %s12, 0
    %p152 = por %p150, %p151
    %p153 = scmp.ne.s32.totalorder %s145, %s147
    %p154 = scmp.eq.s32.totalorder %s17, 1
    %p155 = por %p153, %p154
    %p156 = scmp.ne.s32.totalorder %s147, %s148
    %p157 = scmp.eq.s32.totalorder %s17, 0
    %p158 = por %p156, %p157
    %p159 = scmp.ne.s32.totalorder %s147, %s148
    %p160 = scmp.eq.s32.totalorder %s18, 1
    %p161 = por %p159, %p160
    %p163 = scmp.ne.s32.totalorder %s148, %s162
    %p164 = scmp.eq.s32.totalorder %s18, 0
    %p165 = por %p163, %p164
    %s166 = ssub.s32 %s12, %s19
    %p167 = scmp.eq.s32.totalorder %s166, 0
    %s169 = sadd.s32 %s168, 1
    %s170 = scalar_select %p167, %s168, %s169
    %p173 = pneg %p167
    %p174 = scmp.eq.s32.totalorder %s12, 1
    %p175 = por %p173, %p174
    %p176 = scmp.ne.s32.totalorder %s168, %s171
    %p177 = scmp.eq.s32.totalorder %s12, 0
    %p178 = por %p176, %p177
    %p179 = scmp.ne.s32.totalorder %s168, %s171
    %p180 = scmp.eq.s32.totalorder %s17, 1
    %p181 = por %p179, %p180
    %p182 = scmp.ne.s32.totalorder %s171, %s172
    %p183 = scmp.eq.s32.totalorder %s17, 0
    %p184 = por %p182, %p183
    %p185 = scmp.ne.s32.totalorder %s171, %s172
    %p186 = scmp.eq.s32.totalorder %s18, 1
    %p187 = por %p185, %p186
    %p189 = scmp.ne.s32.totalorder %s172, %s188
    %p190 = scmp.eq.s32.totalorder %s18, 0
    %p191 = por %p189, %p190
    %p192 = scmp.le.s32.totalorder 1, %s12
    %p193 = scmp.lt.s32.totalorder %s12, 3
    %p194 = pnand %p192, %p193
    %p195 = pneg %p194
    // Predicated region
    $region9: #{axial_attention_3d.5} parent=5 // pred_check
      _
    $region10: #{axial_attention_3d.5} parent=5 // pred_check_branch
      %197 = sbr.rel (%p194) target = $region12
    $region11: #{axial_attention_3d.5} parent=5 // pred_region
      %s198 = ssub.s32 %s12, 1
      // Predicated region
      $region13: #{axial_attention_3d.5} parent=11 // pred_check
        %p199 = pneg %p137
      $region14: #{axial_attention_3d.5} parent=11 // pred_check_branch
        %201 = sbr.rel (%p199) target = $region16
      $region15: #{axial_attention_3d.5} parent=11 // pred_region
        _
      $region16: #{axial_attention_3d.5} parent=11 // pred_fallthru
        _
      // Predicated region
      $region17: #{axial_attention_3d.5} parent=11 // pred_check
        %p202 = pneg %p158
      $region18: #{axial_attention_3d.5} parent=11 // pred_check_branch
        %204 = sbr.rel (%p202) target = $region20
      $region19: #{axial_attention_3d.5} parent=11 // pred_region
        _
      $region20: #{axial_attention_3d.5} parent=11 // pred_fallthru
        _
    $region12: #{axial_attention_3d.5} parent=5 // pred_fallthru
      _
    %p205 = scmp.lt.s32.totalorder %s12, 2
    // Predicated region
    $region21: #{axial_attention_3d.5} parent=5 // pred_check
      %p206 = pneg %p205
    $region22: #{axial_attention_3d.5} parent=5 // pred_check_branch
      %208 = sbr.rel (%p206) target = $region24
    $region23: #{axial_attention_3d.5} parent=5 // pred_region
      // Predicated region
      $region25: #{axial_attention_3d.5} parent=23 // pred_check
        %p209 = pneg %p32
      $region26: #{axial_attention_3d.5} parent=23 // pred_check_branch
        %211 = sbr.rel (%p209) target = $region28
      $region27: #{axial_attention_3d.5} parent=23 // pred_region
        %p212 = scmp.lt.s32.totalorder %s12, 1
        %s213 = scalar_select %p212, %s12, 1
        %s214 = smul.addr %s213, 4
        %s215 = smul.addr %s214, 4
        %s216 = scalar_lea.vmem %s0, %s215
      $region28: #{axial_attention_3d.5} parent=23 // pred_fallthru
        _
      // Predicated region
      $region29: #{axial_attention_3d.5} parent=23 // pred_check
        %p217 = pneg %p58
      $region30: #{axial_attention_3d.5} parent=23 // pred_check_branch
        %219 = sbr.rel (%p217) target = $region32
      $region31: #{axial_attention_3d.5} parent=23 // pred_region
        %p220 = scmp.lt.s32.totalorder %s12, 1
        %s221 = scalar_select %p220, %s12, 1
        %s222 = smul.addr %s221, 4
        %s223 = smul.addr %s222, 4
        %s224 = scalar_lea.vmem %s1, %s223
      $region32: #{axial_attention_3d.5} parent=23 // pred_fallthru
        _
      // Predicated region
      $region33: #{axial_attention_3d.5} parent=23 // pred_check
        %p225 = pneg %p84
      $region34: #{axial_attention_3d.5} parent=23 // pred_check_branch
        %227 = sbr.rel (%p225) target = $region36
      $region35: #{axial_attention_3d.5} parent=23 // pred_region
        %p228 = scmp.lt.s32.totalorder %s12, 1
        %s229 = scalar_select %p228, %s12, 1
        %s230 = smul.addr %s229, 4
        %s231 = smul.addr %s230, 4
        %s232 = scalar_lea.vmem %s2, %s231
      $region36: #{axial_attention_3d.5} parent=23 // pred_fallthru
        _
      // Predicated region
      $region37: #{axial_attention_3d.5} parent=23 // pred_check
        %p233 = pneg %p110
      $region38: #{axial_attention_3d.5} parent=23 // pred_check_branch
        %235 = sbr.rel (%p233) target = $region40
      $region39: #{axial_attention_3d.5} parent=23 // pred_region
        %p236 = scmp.lt.s32.totalorder %s12, 1
        %s237 = scalar_select %p236, %s12, 1
        %s238 = smul.addr %s237, 4
        %s239 = smul.addr %s238, 4
        %s240 = scalar_lea.vmem %s3, %s239
      $region40: #{axial_attention_3d.5} parent=23 // pred_fallthru
        _
    $region24: #{axial_attention_3d.5} parent=5 // pred_fallthru
      _
    %p241 = scmp.le.s32.totalorder 1, %s12
    %p242 = scmp.lt.s32.totalorder %s12, 3
    %p243 = pnand %p241, %p242
    %p244 = pneg %p243
    // Predicated region
    $region41: #{axial_attention_3d.5} parent=5 // pred_check
      _
    $region42: #{axial_attention_3d.5} parent=5 // pred_check_branch
      %246 = sbr.rel (%p243) target = $region44
    $region43: #{axial_attention_3d.5} parent=5 // pred_region
      %s247 = ssub.s32 %s12, 1
      %p248 = scmp.lt.s32.totalorder %s17, 1
      %s249 = scalar_select %p248, %s17, 1
      %s250 = smul.addr %s249, 4
      %s251 = smul.addr %s250, 4
      %s252 = scalar_lea.vmem %s0, %s251
      %p253 = pneg %p38
      %p254 = pneg %p35
      %p255 = scmp.lt.s32.totalorder %s17, 1
      %s256 = scalar_select %p255, %s17, 1
      %s257 = smul.addr %s256, 4
      %s258 = smul.addr %s257, 4
      %s259 = scalar_lea.vmem %s1, %s258
      %p260 = pneg %p64
      %p261 = pneg %p61
      %p262 = scmp.lt.s32.totalorder %s17, 1
      %s263 = scalar_select %p262, %s17, 1
      %s264 = smul.addr %s263, 4
      %s265 = smul.addr %s264, 4
      %s266 = scalar_lea.vmem %s2, %s265
      %p267 = pneg %p90
      %p268 = pneg %p87
      %p269 = scmp.lt.s32.totalorder %s17, 1
      %s270 = scalar_select %p269, %s17, 1
      %s271 = smul.addr %s270, 4
      %s272 = smul.addr %s271, 4
      %s273 = scalar_lea.vmem %s3, %s272
      %p274 = pneg %p116
      %p275 = pneg %p113
      %p276 = pneg %p137
      %p277 = pneg %p134
      %p278 = pneg %p158
      %p279 = pneg %p155
      %p280 = pneg %p184
      %p281 = pneg %p181
      %p282 = scmp.lt.s32.totalorder %s17, 1
      %s283 = scalar_select %p282, %s17, 1
      %s284 = smul.addr %s283, 4
      %s285 = smul.addr %s284, 4
      %s286 = scalar_lea.vmem %s6, %s285
      %p287 = scmp.lt.s32.totalorder %s17, 1
      %s288 = scalar_select %p287, %s17, 1
      %s289 = smul.addr %s288, 4
      %s290 = smul.addr %s289, 4
      %s291 = scalar_lea.vmem %s0, %s290
      %p292 = scmp.lt.s32.totalorder %s17, 1
      %s293 = scalar_select %p292, %s17, 1
      %s294 = smul.addr %s293, 4
      %s295 = smul.addr %s294, 4
      %s296 = scalar_lea.vmem %s1, %s295
      %p297 = scmp.lt.s32.totalorder %s17, 1
      %s298 = scalar_select %p297, %s17, 1
      %s299 = smul.addr %s298, 4
      %s300 = smul.addr %s299, 4
      %s301 = scalar_lea.vmem %s2, %s300
      %p302 = scmp.lt.s32.totalorder %s17, 1
      %s303 = scalar_select %p302, %s17, 1
      %s304 = smul.addr %s303, 4
      %s305 = smul.addr %s304, 4
      %s306 = scalar_lea.vmem %s3, %s305
      %p307 = scmp.lt.s32.totalorder %s17, 1
      %s308 = scalar_select %p307, %s17, 1
      %s309 = smul.addr %s308, 4
      %s310 = smul.addr %s309, 4
      %s311 = scalar_lea.vmem %s6, %s310
      %v312 = vld [vmem:[%s4] sm:$0xf]
      %v313 = vld [vmem:[%s291] sm:$0xff]
      %v314 = vld [vmem:[%s291 + $0x8] sm:$0xff]
      %s315 = scalar_lea.vmem %s4, 4
      %v316 = vld [vmem:[%s315] sm:$0xf]
      %v317 = vld [vmem:[%s296] sm:$0xff]
      %v318 = vld [vmem:[%s296 + $0x8] sm:$0xff]
      %v321 = vcombine.high %v317, %v317
      %v322 = vcombine.high %v318, %v318
      %vm323 = vcmask 31744
      %v325 = vsel %vm323, %v316, 0
      %vm327 = vcmask 1043456
      %v328 = vsel %vm327, %v317, 0
      %v330 = vsel %vm327, %v321, 0
      %v332 = vsel %vm327, %v318, 0
      %v334 = vsel %vm327, %v322, 0
      %336 = vmatprep.subr.mxu0 0.0
      %337 = vmatpush1.msra.mxu0 0.0
      %338 = vmatprep.subr.mxu0 0.0
      %339 = vmatpush1.msra.mxu0 0.0
      %340 = vmatprep.subr.mxu0 0.0
      %341 = vmatpush1.msra.mxu0 0.0
      %342 = vmatprep.subr.mxu0 0.0
      %343 = vmatpush1.msra.mxu0 0.0
      %344 = vmatprep.subr.mxu0 0.0
      %345 = vmatpush1.msra.mxu0 0.0
      %346 = vmatprep.subr.mxu0 0.0
      %347 = vmatpush1.msra.mxu0 0.0
      %348 = vmatprep.subr.mxu0 0.0
      %349 = vmatpush1.msra.mxu0 0.0
      %350 = vmatprep.subr.mxu0 0.0
      %351 = vmatpush1.msra.mxu0 0.0
      %352 = vmatprep.subr.mxu0 0.0
      %353 = vmatpush1.msra.mxu0 0.0
      %354 = vmatprep.subr.mxu0 0.0
      %355 = vmatpush1.msra.mxu0 0.0
      %356 = vmatprep.subr.mxu0 0.0
      %357 = vmatpush1.msra.mxu0 0.0
      %358 = vmatprep.subr.mxu0 0.0
      %359 = vmatpush1.msra.mxu0 0.0
      %360 = vmatprep.subr.mxu0 0.0
      %361 = vmatpush1.msra.mxu0 0.0
      %362 = vmatprep.subr.mxu0 0.0
      %363 = vmatpush1.msra.mxu0 0.0
      %364 = vmatprep.subr.mxu0 0.0
      %365 = vmatpush1.msra.mxu0 0.0
      %366 = vmatprep.subr.mxu0 %v330
      %367 = vmatpush1.msra.mxu0 %v328
      %368 = vmatprep.subr.mxu0 0.0
      %369 = vmatpush2.msra.mxu0 0.0
      %370 = vmatprep.subr.mxu0 0.0
      %371 = vmatpush2.msra.mxu0 0.0
      %372 = vmatprep.subr.mxu0 0.0
      %373 = vmatpush2.msra.mxu0 0.0
      %374 = vmatprep.subr.mxu0 0.0
      %375 = vmatpush2.msra.mxu0 0.0
      %376 = vmatprep.subr.mxu0 0.0
      %377 = vmatpush2.msra.mxu0 0.0
      %378 = vmatprep.subr.mxu0 0.0
      %379 = vmatpush2.msra.mxu0 0.0
      %380 = vmatprep.subr.mxu0 0.0
      %381 = vmatpush2.msra.mxu0 0.0
      %382 = vmatprep.subr.mxu0 0.0
      %383 = vmatpush2.msra.mxu0 0.0
      %384 = vmatprep.subr.mxu0 0.0
      %385 = vmatpush2.msra.mxu0 0.0
      %386 = vmatprep.subr.mxu0 0.0
      %387 = vmatpush2.msra.mxu0 0.0
      %388 = vmatprep.subr.mxu0 0.0
      %389 = vmatpush2.msra.mxu0 0.0
      %390 = vmatprep.subr.mxu0 0.0
      %391 = vmatpush2.msra.mxu0 0.0
      %392 = vmatprep.subr.mxu0 0.0
      %393 = vmatpush2.msra.mxu0 0.0
      %394 = vmatprep.subr.mxu0 0.0
      %395 = vmatpush2.msra.mxu0 0.0
      %396 = vmatprep.subr.mxu0 0.0
      %397 = vmatpush2.msra.mxu0 0.0
      %398 = vmatprep.subr.mxu0 0.0
      %399 = vmatpush2.msra.mxu0 0.0
      %400 = vmatprep.mubr.f32.mxu0 0.0
      %401 = vmatmul.mubr.f32.gmra.mxu0 %v325
      %v402 = vpop.f32.mrf.mxu0
      %v403 = vadd.f32 0.0, %v402
      %v404 = vpop.f32.mrf.mxu0
      %v405 = vadd.f32 0.0, %v404
      %406 = vdwg.mxu0
      %407 = vmatprep.subr.mxu0 0.0
      %408 = vmatpush1.msra.mxu0 0.0
      %409 = vmatprep.subr.mxu0 0.0
      %410 = vmatpush1.msra.mxu0 0.0
      %411 = vmatprep.subr.mxu0 0.0
      %412 = vmatpush1.msra.mxu0 0.0
      %413 = vmatprep.subr.mxu0 0.0
      %414 = vmatpush1.msra.mxu0 0.0
      %415 = vmatprep.subr.mxu0 0.0
      %416 = vmatpush1.msra.mxu0 0.0
      %417 = vmatprep.subr.mxu0 0.0
      %418 = vmatpush1.msra.mxu0 0.0
      %419 = vmatprep.subr.mxu0 0.0
      %420 = vmatpush1.msra.mxu0 0.0
      %421 = vmatprep.subr.mxu0 0.0
      %422 = vmatpush1.msra.mxu0 0.0
      %423 = vmatprep.subr.mxu0 0.0
      %424 = vmatpush1.msra.mxu0 0.0
      %425 = vmatprep.subr.mxu0 0.0
      %426 = vmatpush1.msra.mxu0 0.0
      %427 = vmatprep.subr.mxu0 0.0
      %428 = vmatpush1.msra.mxu0 0.0
      %429 = vmatprep.subr.mxu0 0.0
      %430 = vmatpush1.msra.mxu0 0.0
      %431 = vmatprep.subr.mxu0 0.0
      %432 = vmatpush1.msra.mxu0 0.0
      %433 = vmatprep.subr.mxu0 0.0
      %434 = vmatpush1.msra.mxu0 0.0
      %435 = vmatprep.subr.mxu0 0.0
      %436 = vmatpush1.msra.mxu0 0.0
      %437 = vmatprep.subr.mxu0 %v334
      %438 = vmatpush1.msra.mxu0 %v332
      %439 = vmatprep.subr.mxu0 0.0
      %440 = vmatpush2.msra.mxu0 0.0
      %441 = vmatprep.subr.mxu0 0.0
      %442 = vmatpush2.msra.mxu0 0.0
      %443 = vmatprep.subr.mxu0 0.0
      %444 = vmatpush2.msra.mxu0 0.0
      %445 = vmatprep.subr.mxu0 0.0
      %446 = vmatpush2.msra.mxu0 0.0
      %447 = vmatprep.subr.mxu0 0.0
      %448 = vmatpush2.msra.mxu0 0.0
      %449 = vmatprep.subr.mxu0 0.0
      %450 = vmatpush2.msra.mxu0 0.0
      %451 = vmatprep.subr.mxu0 0.0
      %452 = vmatpush2.msra.mxu0 0.0
      %453 = vmatprep.subr.mxu0 0.0
      %454 = vmatpush2.msra.mxu0 0.0
      %455 = vmatprep.subr.mxu0 0.0
      %456 = vmatpush2.msra.mxu0 0.0
      %457 = vmatprep.subr.mxu0 0.0
      %458 = vmatpush2.msra.mxu0 0.0
      %459 = vmatprep.subr.mxu0 0.0
      %460 = vmatpush2.msra.mxu0 0.0
      %461 = vmatprep.subr.mxu0 0.0
      %462 = vmatpush2.msra.mxu0 0.0
      %463 = vmatprep.subr.mxu0 0.0
      %464 = vmatpush2.msra.mxu0 0.0
      %465 = vmatprep.subr.mxu0 0.0
      %466 = vmatpush2.msra.mxu0 0.0
      %467 = vmatprep.subr.mxu0 0.0
      %468 = vmatpush2.msra.mxu0 0.0
      %469 = vmatprep.subr.mxu0 0.0
      %470 = vmatpush2.msra.mxu0 0.0
      %471 = vmatprep.mubr.f32.mxu0 0.0
      %472 = vmatmul.mubr.f32.gmra.mxu0 %v325
      %v473 = vpop.f32.mrf.mxu0
      %v474 = vadd.f32 0.0, %v473
      %v475 = vpop.f32.mrf.mxu0
      %v476 = vadd.f32 0.0, %v475
      %477 = vdwg.mxu0
      %v480 = vcombine.high %v313, %v313
      %v481 = vcombine.high %v314, %v314
      %v483 = vsel %vm323, %v312, 0
      %v485 = vsel %vm327, %v313, 0
      %v487 = vsel %vm327, %v480, 0
      %v489 = vsel %vm327, %v314, 0
      %v491 = vsel %vm327, %v481, 0
      %493 = vmatprep.subr.mxu0 0.0
      %494 = vmatpush1.msra.mxu0 0.0
      %495 = vmatprep.subr.mxu0 0.0
      %496 = vmatpush1.msra.mxu0 0.0
      %497 = vmatprep.subr.mxu0 0.0
      %498 = vmatpush1.msra.mxu0 0.0
      %499 = vmatprep.subr.mxu0 0.0
      %500 = vmatpush1.msra.mxu0 0.0
      %501 = vmatprep.subr.mxu0 0.0
      %502 = vmatpush1.msra.mxu0 0.0
      %503 = vmatprep.subr.mxu0 0.0
      %504 = vmatpush1.msra.mxu0 0.0
      %505 = vmatprep.subr.mxu0 0.0
      %506 = vmatpush1.msra.mxu0 0.0
      %507 = vmatprep.subr.mxu0 0.0
      %508 = vmatpush1.msra.mxu0 0.0
      %509 = vmatprep.subr.mxu0 0.0
      %510 = vmatpush1.msra.mxu0 0.0
      %511 = vmatprep.subr.mxu0 0.0
      %512 = vmatpush1.msra.mxu0 0.0
      %513 = vmatprep.subr.mxu0 0.0
      %514 = vmatpush1.msra.mxu0 0.0
      %515 = vmatprep.subr.mxu0 0.0
      %516 = vmatpush1.msra.mxu0 0.0
      %517 = vmatprep.subr.mxu0 0.0
      %518 = vmatpush1.msra.mxu0 0.0
      %519 = vmatprep.subr.mxu0 0.0
      %520 = vmatpush1.msra.mxu0 0.0
      %521 = vmatprep.subr.mxu0 0.0
      %522 = vmatpush1.msra.mxu0 0.0
      %523 = vmatprep.subr.mxu0 %v487
      %524 = vmatpush1.msra.mxu0 %v485
      %525 = vmatprep.subr.mxu0 0.0
      %526 = vmatpush2.msra.mxu0 0.0
      %527 = vmatprep.subr.mxu0 0.0
      %528 = vmatpush2.msra.mxu0 0.0
      %529 = vmatprep.subr.mxu0 0.0
      %530 = vmatpush2.msra.mxu0 0.0
      %531 = vmatprep.subr.mxu0 0.0
      %532 = vmatpush2.msra.mxu0 0.0
      %533 = vmatprep.subr.mxu0 0.0
      %534 = vmatpush2.msra.mxu0 0.0
      %535 = vmatprep.subr.mxu0 0.0
      %536 = vmatpush2.msra.mxu0 0.0
      %537 = vmatprep.subr.mxu0 0.0
      %538 = vmatpush2.msra.mxu0 0.0
      %539 = vmatprep.subr.mxu0 0.0
      %540 = vmatpush2.msra.mxu0 0.0
      %541 = vmatprep.subr.mxu0 0.0
      %542 = vmatpush2.msra.mxu0 0.0
      %543 = vmatprep.subr.mxu0 0.0
      %544 = vmatpush2.msra.mxu0 0.0
      %545 = vmatprep.subr.mxu0 0.0
      %546 = vmatpush2.msra.mxu0 0.0
      %547 = vmatprep.subr.mxu0 0.0
      %548 = vmatpush2.msra.mxu0 0.0
      %549 = vmatprep.subr.mxu0 0.0
      %550 = vmatpush2.msra.mxu0 0.0
      %551 = vmatprep.subr.mxu0 0.0
      %552 = vmatpush2.msra.mxu0 0.0
      %553 = vmatprep.subr.mxu0 0.0
      %554 = vmatpush2.msra.mxu0 0.0
      %555 = vmatprep.subr.mxu0 0.0
      %556 = vmatpush2.msra.mxu0 0.0
      %557 = vmatprep.mubr.f32.mxu0 0.0
      %558 = vmatmul.mubr.f32.gmra.mxu0 %v483
      %v559 = vpop.f32.mrf.mxu0
      %v560 = vadd.f32 %v403, %v559
      %v561 = vpop.f32.mrf.mxu0
      %v562 = vadd.f32 %v405, %v561
      %563 = vdwg.mxu0
      %564 = vmatprep.subr.mxu0 0.0
      %565 = vmatpush1.msra.mxu0 0.0
      %566 = vmatprep.subr.mxu0 0.0
      %567 = vmatpush1.msra.mxu0 0.0
      %568 = vmatprep.subr.mxu0 0.0
      %569 = vmatpush1.msra.mxu0 0.0
      %570 = vmatprep.subr.mxu0 0.0
      %571 = vmatpush1.msra.mxu0 0.0
      %572 = vmatprep.subr.mxu0 0.0
      %573 = vmatpush1.msra.mxu0 0.0
      %574 = vmatprep.subr.mxu0 0.0
      %575 = vmatpush1.msra.mxu0 0.0
      %576 = vmatprep.subr.mxu0 0.0
      %577 = vmatpush1.msra.mxu0 0.0
      %578 = vmatprep.subr.mxu0 0.0
      %579 = vmatpush1.msra.mxu0 0.0
      %580 = vmatprep.subr.mxu0 0.0
      %581 = vmatpush1.msra.mxu0 0.0
      %582 = vmatprep.subr.mxu0 0.0
      %583 = vmatpush1.msra.mxu0 0.0
      %584 = vmatprep.subr.mxu0 0.0
      %585 = vmatpush1.msra.mxu0 0.0
      %586 = vmatprep.subr.mxu0 0.0
      %587 = vmatpush1.msra.mxu0 0.0
      %588 = vmatprep.subr.mxu0 0.0
      %589 = vmatpush1.msra.mxu0 0.0
      %590 = vmatprep.subr.mxu0 0.0
      %591 = vmatpush1.msra.mxu0 0.0
      %592 = vmatprep.subr.mxu0 0.0
      %593 = vmatpush1.msra.mxu0 0.0
      %594 = vmatprep.subr.mxu0 %v491
      %595 = vmatpush1.msra.mxu0 %v489
      %596 = vmatprep.subr.mxu0 0.0
      %597 = vmatpush2.msra.mxu0 0.0
      %598 = vmatprep.subr.mxu0 0.0
      %599 = vmatpush2.msra.mxu0 0.0
      %600 = vmatprep.subr.mxu0 0.0
      %601 = vmatpush2.msra.mxu0 0.0
      %602 = vmatprep.subr.mxu0 0.0
      %603 = vmatpush2.msra.mxu0 0.0
      %604 = vmatprep.subr.mxu0 0.0
      %605 = vmatpush2.msra.mxu0 0.0
      %606 = vmatprep.subr.mxu0 0.0
      %607 = vmatpush2.msra.mxu0 0.0
      %608 = vmatprep.subr.mxu0 0.0
      %609 = vmatpush2.msra.mxu0 0.0
      %610 = vmatprep.subr.mxu0 0.0
      %611 = vmatpush2.msra.mxu0 0.0
      %612 = vmatprep.subr.mxu0 0.0
      %613 = vmatpush2.msra.mxu0 0.0
      %614 = vmatprep.subr.mxu0 0.0
      %615 = vmatpush2.msra.mxu0 0.0
      %616 = vmatprep.subr.mxu0 0.0
      %617 = vmatpush2.msra.mxu0 0.0
      %618 = vmatprep.subr.mxu0 0.0
      %619 = vmatpush2.msra.mxu0 0.0
      %620 = vmatprep.subr.mxu0 0.0
      %621 = vmatpush2.msra.mxu0 0.0
      %622 = vmatprep.subr.mxu0 0.0
      %623 = vmatpush2.msra.mxu0 0.0
      %624 = vmatprep.subr.mxu0 0.0
      %625 = vmatpush2.msra.mxu0 0.0
      %626 = vmatprep.subr.mxu0 0.0
      %627 = vmatpush2.msra.mxu0 0.0
      %628 = vmatprep.mubr.f32.mxu0 0.0
      %629 = vmatmul.mubr.f32.gmra.mxu0 %v483
      %v630 = vpop.f32.mrf.mxu0
      %v631 = vadd.f32 %v474, %v630
      %v632 = vpop.f32.mrf.mxu0
      %v633 = vadd.f32 %v476, %v632
      %634 = vdwg.mxu0
      %s635 = scalar_lea.vmem %s4, 8
      %v636 = vld [vmem:[%s635] sm:$0xf]
      %v637 = vld [vmem:[%s301] sm:$0xff]
      %v638 = vld [vmem:[%s301 + $0x8] sm:$0xff]
      %v641 = vcombine.high %v637, %v637
      %v642 = vcombine.high %v638, %v638
      %v644 = vsel %vm323, %v636, 0
      %v646 = vsel %vm327, %v637, 0
      %v648 = vsel %vm327, %v641, 0
      %v650 = vsel %vm327, %v638, 0
      %v652 = vsel %vm327, %v642, 0
      %654 = vmatprep.subr.mxu0 0.0
      %655 = vmatpush1.msra.mxu0 0.0
      %656 = vmatprep.subr.mxu0 0.0
      %657 = vmatpush1.msra.mxu0 0.0
      %658 = vmatprep.subr.mxu0 0.0
      %659 = vmatpush1.msra.mxu0 0.0
      %660 = vmatprep.subr.mxu0 0.0
      %661 = vmatpush1.msra.mxu0 0.0
      %662 = vmatprep.subr.mxu0 0.0
      %663 = vmatpush1.msra.mxu0 0.0
      %664 = vmatprep.subr.mxu0 0.0
      %665 = vmatpush1.msra.mxu0 0.0
      %666 = vmatprep.subr.mxu0 0.0
      %667 = vmatpush1.msra.mxu0 0.0
      %668 = vmatprep.subr.mxu0 0.0
      %669 = vmatpush1.msra.mxu0 0.0
      %670 = vmatprep.subr.mxu0 0.0
      %671 = vmatpush1.msra.mxu0 0.0
      %672 = vmatprep.subr.mxu0 0.0
      %673 = vmatpush1.msra.mxu0 0.0
      %674 = vmatprep.subr.mxu0 0.0
      %675 = vmatpush1.msra.mxu0 0.0
      %676 = vmatprep.subr.mxu0 0.0
      %677 = vmatpush1.msra.mxu0 0.0
      %678 = vmatprep.subr.mxu0 0.0
      %679 = vmatpush1.msra.mxu0 0.0
      %680 = vmatprep.subr.mxu0 0.0
      %681 = vmatpush1.msra.mxu0 0.0
      %682 = vmatprep.subr.mxu0 0.0
      %683 = vmatpush1.msra.mxu0 0.0
      %684 = vmatprep.subr.mxu0 %v648
      %685 = vmatpush1.msra.mxu0 %v646
      %686 = vmatprep.subr.mxu0 0.0
      %687 = vmatpush2.msra.mxu0 0.0
      %688 = vmatprep.subr.mxu0 0.0
      %689 = vmatpush2.msra.mxu0 0.0
      %690 = vmatprep.subr.mxu0 0.0
      %691 = vmatpush2.msra.mxu0 0.0
      %692 = vmatprep.subr.mxu0 0.0
      %693 = vmatpush2.msra.mxu0 0.0
      %694 = vmatprep.subr.mxu0 0.0
      %695 = vmatpush2.msra.mxu0 0.0
      %696 = vmatprep.subr.mxu0 0.0
      %697 = vmatpush2.msra.mxu0 0.0
      %698 = vmatprep.subr.mxu0 0.0
      %699 = vmatpush2.msra.mxu0 0.0
      %700 = vmatprep.subr.mxu0 0.0
      %701 = vmatpush2.msra.mxu0 0.0
      %702 = vmatprep.subr.mxu0 0.0
      %703 = vmatpush2.msra.mxu0 0.0
      %704 = vmatprep.subr.mxu0 0.0
      %705 = vmatpush2.msra.mxu0 0.0
      %706 = vmatprep.subr.mxu0 0.0
      %707 = vmatpush2.msra.mxu0 0.0
      %708 = vmatprep.subr.mxu0 0.0
      %709 = vmatpush2.msra.mxu0 0.0
      %710 = vmatprep.subr.mxu0 0.0
      %711 = vmatpush2.msra.mxu0 0.0
      %712 = vmatprep.subr.mxu0 0.0
      %713 = vmatpush2.msra.mxu0 0.0
      %714 = vmatprep.subr.mxu0 0.0
      %715 = vmatpush2.msra.mxu0 0.0
      %716 = vmatprep.subr.mxu0 0.0
      %717 = vmatpush2.msra.mxu0 0.0
      %718 = vmatprep.mubr.f32.mxu0 0.0
      %719 = vmatmul.mubr.f32.gmra.mxu0 %v644
      %v720 = vpop.f32.mrf.mxu0
      %v721 = vadd.f32 0.0, %v720
      %v722 = vpop.f32.mrf.mxu0
      %v723 = vadd.f32 0.0, %v722
      %724 = vdwg.mxu0
      %725 = vmatprep.subr.mxu0 0.0
      %726 = vmatpush1.msra.mxu0 0.0
      %727 = vmatprep.subr.mxu0 0.0
      %728 = vmatpush1.msra.mxu0 0.0
      %729 = vmatprep.subr.mxu0 0.0
      %730 = vmatpush1.msra.mxu0 0.0
      %731 = vmatprep.subr.mxu0 0.0
      %732 = vmatpush1.msra.mxu0 0.0
      %733 = vmatprep.subr.mxu0 0.0
      %734 = vmatpush1.msra.mxu0 0.0
      %735 = vmatprep.subr.mxu0 0.0
      %736 = vmatpush1.msra.mxu0 0.0
      %737 = vmatprep.subr.mxu0 0.0
      %738 = vmatpush1.msra.mxu0 0.0
      %739 = vmatprep.subr.mxu0 0.0
      %740 = vmatpush1.msra.mxu0 0.0
      %741 = vmatprep.subr.mxu0 0.0
      %742 = vmatpush1.msra.mxu0 0.0
      %743 = vmatprep.subr.mxu0 0.0
      %744 = vmatpush1.msra.mxu0 0.0
      %745 = vmatprep.subr.mxu0 0.0
      %746 = vmatpush1.msra.mxu0 0.0
      %747 = vmatprep.subr.mxu0 0.0
      %748 = vmatpush1.msra.mxu0 0.0
      %749 = vmatprep.subr.mxu0 0.0
      %750 = vmatpush1.msra.mxu0 0.0
      %751 = vmatprep.subr.mxu0 0.0
      %752 = vmatpush1.msra.mxu0 0.0
      %753 = vmatprep.subr.mxu0 0.0
      %754 = vmatpush1.msra.mxu0 0.0
      %755 = vmatprep.subr.mxu0 %v652
      %756 = vmatpush1.msra.mxu0 %v650
      %757 = vmatprep.subr.mxu0 0.0
      %758 = vmatpush2.msra.mxu0 0.0
      %759 = vmatprep.subr.mxu0 0.0
      %760 = vmatpush2.msra.mxu0 0.0
      %761 = vmatprep.subr.mxu0 0.0
      %762 = vmatpush2.msra.mxu0 0.0
      %763 = vmatprep.subr.mxu0 0.0
      %764 = vmatpush2.msra.mxu0 0.0
      %765 = vmatprep.subr.mxu0 0.0
      %766 = vmatpush2.msra.mxu0 0.0
      %767 = vmatprep.subr.mxu0 0.0
      %768 = vmatpush2.msra.mxu0 0.0
      %769 = vmatprep.subr.mxu0 0.0
      %770 = vmatpush2.msra.mxu0 0.0
      %771 = vmatprep.subr.mxu0 0.0
      %772 = vmatpush2.msra.mxu0 0.0
      %773 = vmatprep.subr.mxu0 0.0
      %774 = vmatpush2.msra.mxu0 0.0
      %775 = vmatprep.subr.mxu0 0.0
      %776 = vmatpush2.msra.mxu0 0.0
      %777 = vmatprep.subr.mxu0 0.0
      %778 = vmatpush2.msra.mxu0 0.0
      %779 = vmatprep.subr.mxu0 0.0
      %780 = vmatpush2.msra.mxu0 0.0
      %781 = vmatprep.subr.mxu0 0.0
      %782 = vmatpush2.msra.mxu0 0.0
      %783 = vmatprep.subr.mxu0 0.0
      %784 = vmatpush2.msra.mxu0 0.0
      %785 = vmatprep.subr.mxu0 0.0
      %786 = vmatpush2.msra.mxu0 0.0
      %787 = vmatprep.subr.mxu0 0.0
      %788 = vmatpush2.msra.mxu0 0.0
      %789 = vmatprep.mubr.f32.mxu0 0.0
      %790 = vmatmul.mubr.f32.gmra.mxu0 %v644
      %v791 = vpop.f32.mrf.mxu0
      %v792 = vadd.f32 0.0, %v791
      %v793 = vpop.f32.mrf.mxu0
      %v794 = vadd.f32 0.0, %v793
      %795 = vdwg.mxu0
      %v796 = vadd.f32 %v560, %v721
      %v797 = vadd.f32 %v562, %v723
      %v798 = vadd.f32 %v631, %v792
      %v799 = vadd.f32 %v633, %v794
      %v800 = vld [vmem:[%s5] sm:$0xf]
      %802 = vset.pattern.permute.xlu0 0
      %803 = vperm.xlu0 %802, %v800
      %v804 = vpop.permute.xlu0 %803
      %v806 = vadd.f32 %v796, %v804
      %v807 = vadd.f32 %v797, %v804
      %v808 = vadd.f32 %v798, %v804
      %v809 = vadd.f32 %v799, %v804
      %v810 = vld [vmem:[%s306] sm:$0xff]
      %v811 = vld [vmem:[%s306 + $0x8] sm:$0xff]
      %v814 = vcombine.high %v810, %v810
      %v815 = vcombine.high %v811, %v811
      %v818 = vadd.f32 %v806, %v810
      %v819 = vadd.f32 %v807, %v814
      %v820 = vadd.f32 %v808, %v811
      %v821 = vadd.f32 %v809, %v815
      %v822 = vmax.f32 %v818, 0.0
      %v823 = vmax.f32 %v819, 0.0
      %v824 = vmax.f32 %v820, 0.0
      %v825 = vmax.f32 %v821, 0.0
      %v830 = vcombine.low %v822, %v823
      %v831 = vcombine.low %v824, %v825
      %834 = vst [vmem:[%s311] sm:$0xff] %v830
      %835 = vst [vmem:[%s311 + $0x8] sm:$0xff] %v831
      %p836 = scmp.lt.s32.totalorder %s17, 1
      %s837 = scalar_select %p836, %s17, 1
      %s838 = smul.addr %s837, 4
      %s839 = smul.addr %s838, 4
      %s840 = scalar_lea.vmem %s6, %s839
      // Predicated region
      $region45: #{axial_attention_3d.5} parent=43 // pred_check
        %p841 = pneg %p181
      $region46: #{axial_attention_3d.5} parent=43 // pred_check_branch
        %843 = sbr.rel (%p841) target = $region48
      $region47: #{axial_attention_3d.5} parent=43 // pred_region
        _
      $region48: #{axial_attention_3d.5} parent=43 // pred_fallthru
        _
    $region44: #{axial_attention_3d.5} parent=5 // pred_fallthru
      _
    %p844 = scmp.le.s32.totalorder 2, %s12
    // Predicated region
    $region49: #{axial_attention_3d.5} parent=5 // pred_check
      %p845 = pneg %p844
    $region50: #{axial_attention_3d.5} parent=5 // pred_check_branch
      %847 = sbr.rel (%p845) target = $region52
    $region51: #{axial_attention_3d.5} parent=5 // pred_region
      %s848 = ssub.s32 %s12, 2
      // Predicated region
      $region53: #{axial_attention_3d.5} parent=51 // pred_check
        %p849 = pneg %p187
      $region54: #{axial_attention_3d.5} parent=51 // pred_check_branch
        %851 = sbr.rel (%p849) target = $region56
      $region55: #{axial_attention_3d.5} parent=51 // pred_region
        %p852 = scmp.lt.s32.totalorder %s18, 1
        %s853 = scalar_select %p852, %s18, 1
        %s854 = smul.addr %s853, 4
        %s855 = smul.addr %s854, 4
        %s856 = scalar_lea.vmem %s6, %s855
      $region56: #{axial_attention_3d.5} parent=51 // pred_fallthru
        _
    $region52: #{axial_attention_3d.5} parent=5 // pred_fallthru
      _
  $region6: #{axial_attention_3d.5} parent=0 // loop_footer
    %s16 = sadd.s32 1, %s12
  $region7: #{axial_attention_3d.5} parent=0 // loop_footer_branch
    %11 = sbr.rel target = $region3
  $region8: #{axial_attention_3d.5} parent=0 // loop_exit
    _

// kernel: axial_attention_3d.4
$region0: #{axial_attention_3d.4}
  #allocation0 [shape = 'u32[]', space=smem, size = 0x4, offset = 0x4, fixed_abs, tag = 'smem constant byte address 0x4 - core index']
  #allocation1 [shape = 'u32[144,128]{1,0:T(1,128)}', space=vmem, size = 0x12000, scoped, tag = 'internal scratch']
  %s0 = inlined_call_operand.vmem [shape: f32[8,64,8], index: 0, kind: input, shape index: {}]
  %s1 = inlined_call_operand.vmem [shape: f32[8,64,8], index: 1, kind: input, shape index: {}]
  %s2 = inlined_call_operand.vmem [shape: f32[8,64,8], index: 2, kind: input, shape index: {}]
  %s3 = inlined_call_operand.vmem [shape: f32[8,64,8], index: 3, kind: input, shape index: {}]
  %s4 = inlined_call_operand.vmem [shape: f32[8,64,8], index: 4, kind: input, shape index: {}]
  %s5 = inlined_call_operand.vmem [shape: f32[8,64,8], index: 5, kind: input, shape index: {}]
  %s6 = inlined_call_operand.vmem [shape: f32[8,64,8], index: 6, kind: input, shape index: {}]
  %s7 = inlined_call_operand.vmem [shape: f32[8,64,8], index: 7, kind: input, shape index: {}]
  %s8 = inlined_call_operand.vmem [shape: f32[8,64,8], index: 8, kind: input, shape index: {}]
  %s9 = inlined_call_operand.vmem [shape: f32[8,64,8], index: 9, kind: output, shape index: {0}]
  %s10 = inlined_call_operand.vmem [shape: f32[8,64,8], index: 10, kind: output, shape index: {1}]
  %s11 = inlined_call_operand.vmem [shape: f32[8,64,8], index: 11, kind: output, shape index: {2}]
  %12 = xla_tuple %s9, %s10, %s11
  %s13 = sld [smem:[#allocation0]]
  $region85: #{axial_attention_3d.4} parent=0
    _
  %s15 = ssub.s32 1, %s13
  %s16 = scalar_select 0, %s15, %s13
  loop: start=0, step=1, limit=4
  $region2: #{axial_attention_3d.4} parent=0 // loop_pre_header
    _
  $region3: #{axial_attention_3d.4} parent=0 // loop_header
    %s18 = sphi 0, %s22
    %p19 = scmp.ge.s32.totalorder %s18, 4
    %s28 = sphi 0, %s30
    %s31 = sphi 0, %s28
    %s32 = sphi 0, %s31
    %s48 = sphi 0, %s32
    %s54 = sphi 0, %s56
    %s57 = sphi 0, %s54
    %s58 = sphi 0, %s57
    %s74 = sphi 0, %s58
    %s80 = sphi 0, %s82
    %s83 = sphi 0, %s80
    %s84 = sphi 0, %s83
    %s100 = sphi 0, %s84
    %s106 = sphi 0, %s108
    %s109 = sphi 0, %s106
    %s110 = sphi 0, %s109
    %s126 = sphi 0, %s110
    %s132 = sphi 0, %s134
    %s135 = sphi 0, %s132
    %s136 = sphi 0, %s135
    %s152 = sphi 0, %s136
    %s158 = sphi 0, %s160
    %s161 = sphi 0, %s158
    %s162 = sphi 0, %s161
    %s178 = sphi 0, %s162
    %s184 = sphi 0, %s186
    %s187 = sphi 0, %s184
    %s188 = sphi 0, %s187
    %s204 = sphi 0, %s188
    %s210 = sphi 0, %s212
    %s213 = sphi 0, %s210
    %s214 = sphi 0, %s213
    %s230 = sphi 0, %s214
    %s236 = sphi 0, %s238
    %s239 = sphi 0, %s236
    %s240 = sphi 0, %s239
    %s256 = sphi 0, %s240
    %s262 = sphi 0, %s264
    %s265 = sphi 0, %s262
    %s266 = sphi 0, %s265
    %s282 = sphi 0, %s266
    %s288 = sphi 0, %s290
    %s291 = sphi 0, %s288
    %s292 = sphi 0, %s291
    %s308 = sphi 0, %s292
    %s314 = sphi 0, %s316
    %s317 = sphi 0, %s314
    %s318 = sphi 0, %s317
    %s334 = sphi 0, %s318
  $region4: #{axial_attention_3d.4} parent=0 // loop_header_branch
    %21 = sbr.rel (%p19) target = $region8
  $region5: #{axial_attention_3d.4} parent=0 // loop_body
    %s23 = ssub.s32 %s18, 1
    %s24 = ssub.s32 %s18, 2
    %s25 = sadd.s32 %s18, 1
    %s26 = ssub.s32 %s18, %s25
    %p27 = scmp.eq.s32.totalorder %s26, 0
    %s29 = sadd.s32 %s28, 1
    %s30 = scalar_select %p27, %s28, %s29
    %p33 = pneg %p27
    %p34 = scmp.eq.s32.totalorder %s18, 1
    %p35 = por %p33, %p34
    %p36 = scmp.ne.s32.totalorder %s28, %s31
    %p37 = scmp.eq.s32.totalorder %s18, 0
    %p38 = por %p36, %p37
    %p39 = scmp.ne.s32.totalorder %s28, %s31
    %p40 = scmp.eq.s32.totalorder %s23, 1
    %p41 = por %p39, %p40
    %p42 = scmp.ne.s32.totalorder %s31, %s32
    %p43 = scmp.eq.s32.totalorder %s23, 0
    %p44 = por %p42, %p43
    %p45 = scmp.ne.s32.totalorder %s31, %s32
    %p46 = scmp.eq.s32.totalorder %s24, 1
    %p47 = por %p45, %p46
    %p49 = scmp.ne.s32.totalorder %s32, %s48
    %p50 = scmp.eq.s32.totalorder %s24, 0
    %p51 = por %p49, %p50
    %s52 = ssub.s32 %s18, %s25
    %p53 = scmp.eq.s32.totalorder %s52, 0
    %s55 = sadd.s32 %s54, 1
    %s56 = scalar_select %p53, %s54, %s55
    %p59 = pneg %p53
    %p60 = scmp.eq.s32.totalorder %s18, 1
    %p61 = por %p59, %p60
    %p62 = scmp.ne.s32.totalorder %s54, %s57
    %p63 = scmp.eq.s32.totalorder %s18, 0
    %p64 = por %p62, %p63
    %p65 = scmp.ne.s32.totalorder %s54, %s57
    %p66 = scmp.eq.s32.totalorder %s23, 1
    %p67 = por %p65, %p66
    %p68 = scmp.ne.s32.totalorder %s57, %s58
    %p69 = scmp.eq.s32.totalorder %s23, 0
    %p70 = por %p68, %p69
    %p71 = scmp.ne.s32.totalorder %s57, %s58
    %p72 = scmp.eq.s32.totalorder %s24, 1
    %p73 = por %p71, %p72
    %p75 = scmp.ne.s32.totalorder %s58, %s74
    %p76 = scmp.eq.s32.totalorder %s24, 0
    %p77 = por %p75, %p76
    %s78 = ssub.s32 %s18, %s25
    %p79 = scmp.eq.s32.totalorder %s78, 0
    %s81 = sadd.s32 %s80, 1
    %s82 = scalar_select %p79, %s80, %s81
    %p85 = pneg %p79
    %p86 = scmp.eq.s32.totalorder %s18, 1
    %p87 = por %p85, %p86
    %p88 = scmp.ne.s32.totalorder %s80, %s83
    %p89 = scmp.eq.s32.totalorder %s18, 0
    %p90 = por %p88, %p89
    %p91 = scmp.ne.s32.totalorder %s80, %s83
    %p92 = scmp.eq.s32.totalorder %s23, 1
    %p93 = por %p91, %p92
    %p94 = scmp.ne.s32.totalorder %s83, %s84
    %p95 = scmp.eq.s32.totalorder %s23, 0
    %p96 = por %p94, %p95
    %p97 = scmp.ne.s32.totalorder %s83, %s84
    %p98 = scmp.eq.s32.totalorder %s24, 1
    %p99 = por %p97, %p98
    %p101 = scmp.ne.s32.totalorder %s84, %s100
    %p102 = scmp.eq.s32.totalorder %s24, 0
    %p103 = por %p101, %p102
    %s104 = ssub.s32 %s18, %s25
    %p105 = scmp.eq.s32.totalorder %s104, 0
    %s107 = sadd.s32 %s106, 1
    %s108 = scalar_select %p105, %s106, %s107
    %p111 = pneg %p105
    %p112 = scmp.eq.s32.totalorder %s18, 1
    %p113 = por %p111, %p112
    %p114 = scmp.ne.s32.totalorder %s106, %s109
    %p115 = scmp.eq.s32.totalorder %s18, 0
    %p116 = por %p114, %p115
    %p117 = scmp.ne.s32.totalorder %s106, %s109
    %p118 = scmp.eq.s32.totalorder %s23, 1
    %p119 = por %p117, %p118
    %p120 = scmp.ne.s32.totalorder %s109, %s110
    %p121 = scmp.eq.s32.totalorder %s23, 0
    %p122 = por %p120, %p121
    %p123 = scmp.ne.s32.totalorder %s109, %s110
    %p124 = scmp.eq.s32.totalorder %s24, 1
    %p125 = por %p123, %p124
    %p127 = scmp.ne.s32.totalorder %s110, %s126
    %p128 = scmp.eq.s32.totalorder %s24, 0
    %p129 = por %p127, %p128
    %s130 = ssub.s32 %s18, %s25
    %p131 = scmp.eq.s32.totalorder %s130, 0
    %s133 = sadd.s32 %s132, 1
    %s134 = scalar_select %p131, %s132, %s133
    %p137 = pneg %p131
    %p138 = scmp.eq.s32.totalorder %s18, 1
    %p139 = por %p137, %p138
    %p140 = scmp.ne.s32.totalorder %s132, %s135
    %p141 = scmp.eq.s32.totalorder %s18, 0
    %p142 = por %p140, %p141
    %p143 = scmp.ne.s32.totalorder %s132, %s135
    %p144 = scmp.eq.s32.totalorder %s23, 1
    %p145 = por %p143, %p144
    %p146 = scmp.ne.s32.totalorder %s135, %s136
    %p147 = scmp.eq.s32.totalorder %s23, 0
    %p148 = por %p146, %p147
    %p149 = scmp.ne.s32.totalorder %s135, %s136
    %p150 = scmp.eq.s32.totalorder %s24, 1
    %p151 = por %p149, %p150
    %p153 = scmp.ne.s32.totalorder %s136, %s152
    %p154 = scmp.eq.s32.totalorder %s24, 0
    %p155 = por %p153, %p154
    %s156 = ssub.s32 %s18, %s25
    %p157 = scmp.eq.s32.totalorder %s156, 0
    %s159 = sadd.s32 %s158, 1
    %s160 = scalar_select %p157, %s158, %s159
    %p163 = pneg %p157
    %p164 = scmp.eq.s32.totalorder %s18, 1
    %p165 = por %p163, %p164
    %p166 = scmp.ne.s32.totalorder %s158, %s161
    %p167 = scmp.eq.s32.totalorder %s18, 0
    %p168 = por %p166, %p167
    %p169 = scmp.ne.s32.totalorder %s158, %s161
    %p170 = scmp.eq.s32.totalorder %s23, 1
    %p171 = por %p169, %p170
    %p172 = scmp.ne.s32.totalorder %s161, %s162
    %p173 = scmp.eq.s32.totalorder %s23, 0
    %p174 = por %p172, %p173
    %p175 = scmp.ne.s32.totalorder %s161, %s162
    %p176 = scmp.eq.s32.totalorder %s24, 1
    %p177 = por %p175, %p176
    %p179 = scmp.ne.s32.totalorder %s162, %s178
    %p180 = scmp.eq.s32.totalorder %s24, 0
    %p181 = por %p179, %p180
    %s182 = ssub.s32 %s18, %s25
    %p183 = scmp.eq.s32.totalorder %s182, 0
    %s185 = sadd.s32 %s184, 1
    %s186 = scalar_select %p183, %s184, %s185
    %p189 = pneg %p183
    %p190 = scmp.eq.s32.totalorder %s18, 1
    %p191 = por %p189, %p190
    %p192 = scmp.ne.s32.totalorder %s184, %s187
    %p193 = scmp.eq.s32.totalorder %s18, 0
    %p194 = por %p192, %p193
    %p195 = scmp.ne.s32.totalorder %s184, %s187
    %p196 = scmp.eq.s32.totalorder %s23, 1
    %p197 = por %p195, %p196
    %p198 = scmp.ne.s32.totalorder %s187, %s188
    %p199 = scmp.eq.s32.totalorder %s23, 0
    %p200 = por %p198, %p199
    %p201 = scmp.ne.s32.totalorder %s187, %s188
    %p202 = scmp.eq.s32.totalorder %s24, 1
    %p203 = por %p201, %p202
    %p205 = scmp.ne.s32.totalorder %s188, %s204
    %p206 = scmp.eq.s32.totalorder %s24, 0
    %p207 = por %p205, %p206
    %s208 = ssub.s32 %s18, %s25
    %p209 = scmp.eq.s32.totalorder %s208, 0
    %s211 = sadd.s32 %s210, 1
    %s212 = scalar_select %p209, %s210, %s211
    %p215 = pneg %p209
    %p216 = scmp.eq.s32.totalorder %s18, 1
    %p217 = por %p215, %p216
    %p218 = scmp.ne.s32.totalorder %s210, %s213
    %p219 = scmp.eq.s32.totalorder %s18, 0
    %p220 = por %p218, %p219
    %p221 = scmp.ne.s32.totalorder %s210, %s213
    %p222 = scmp.eq.s32.totalorder %s23, 1
    %p223 = por %p221, %p222
    %p224 = scmp.ne.s32.totalorder %s213, %s214
    %p225 = scmp.eq.s32.totalorder %s23, 0
    %p226 = por %p224, %p225
    %p227 = scmp.ne.s32.totalorder %s213, %s214
    %p228 = scmp.eq.s32.totalorder %s24, 1
    %p229 = por %p227, %p228
    %p231 = scmp.ne.s32.totalorder %s214, %s230
    %p232 = scmp.eq.s32.totalorder %s24, 0
    %p233 = por %p231, %p232
    %s234 = ssub.s32 %s18, %s25
    %p235 = scmp.eq.s32.totalorder %s234, 0
    %s237 = sadd.s32 %s236, 1
    %s238 = scalar_select %p235, %s236, %s237
    %p241 = pneg %p235
    %p242 = scmp.eq.s32.totalorder %s18, 1
    %p243 = por %p241, %p242
    %p244 = scmp.ne.s32.totalorder %s236, %s239
    %p245 = scmp.eq.s32.totalorder %s18, 0
    %p246 = por %p244, %p245
    %p247 = scmp.ne.s32.totalorder %s236, %s239
    %p248 = scmp.eq.s32.totalorder %s23, 1
    %p249 = por %p247, %p248
    %p250 = scmp.ne.s32.totalorder %s239, %s240
    %p251 = scmp.eq.s32.totalorder %s23, 0
    %p252 = por %p250, %p251
    %p253 = scmp.ne.s32.totalorder %s239, %s240
    %p254 = scmp.eq.s32.totalorder %s24, 1
    %p255 = por %p253, %p254
    %p257 = scmp.ne.s32.totalorder %s240, %s256
    %p258 = scmp.eq.s32.totalorder %s24, 0
    %p259 = por %p257, %p258
    %s260 = ssub.s32 %s18, %s25
    %p261 = scmp.eq.s32.totalorder %s260, 0
    %s263 = sadd.s32 %s262, 1
    %s264 = scalar_select %p261, %s262, %s263
    %p267 = pneg %p261
    %p268 = scmp.eq.s32.totalorder %s18, 1
    %p269 = por %p267, %p268
    %p270 = scmp.ne.s32.totalorder %s262, %s265
    %p271 = scmp.eq.s32.totalorder %s18, 0
    %p272 = por %p270, %p271
    %p273 = scmp.ne.s32.totalorder %s262, %s265
    %p274 = scmp.eq.s32.totalorder %s23, 1
    %p275 = por %p273, %p274
    %p276 = scmp.ne.s32.totalorder %s265, %s266
    %p277 = scmp.eq.s32.totalorder %s23, 0
    %p278 = por %p276, %p277
    %p279 = scmp.ne.s32.totalorder %s265, %s266
    %p280 = scmp.eq.s32.totalorder %s24, 1
    %p281 = por %p279, %p280
    %p283 = scmp.ne.s32.totalorder %s266, %s282
    %p284 = scmp.eq.s32.totalorder %s24, 0
    %p285 = por %p283, %p284
    %s286 = ssub.s32 %s18, %s25
    %p287 = scmp.eq.s32.totalorder %s286, 0
    %s289 = sadd.s32 %s288, 1
    %s290 = scalar_select %p287, %s288, %s289
    %p293 = pneg %p287
    %p294 = scmp.eq.s32.totalorder %s18, 1
    %p295 = por %p293, %p294
    %p296 = scmp.ne.s32.totalorder %s288, %s291
    %p297 = scmp.eq.s32.totalorder %s18, 0
    %p298 = por %p296, %p297
    %p299 = scmp.ne.s32.totalorder %s288, %s291
    %p300 = scmp.eq.s32.totalorder %s23, 1
    %p301 = por %p299, %p300
    %p302 = scmp.ne.s32.totalorder %s291, %s292
    %p303 = scmp.eq.s32.totalorder %s23, 0
    %p304 = por %p302, %p303
    %p305 = scmp.ne.s32.totalorder %s291, %s292
    %p306 = scmp.eq.s32.totalorder %s24, 1
    %p307 = por %p305, %p306
    %p309 = scmp.ne.s32.totalorder %s292, %s308
    %p310 = scmp.eq.s32.totalorder %s24, 0
    %p311 = por %p309, %p310
    %s312 = ssub.s32 %s18, %s25
    %p313 = scmp.eq.s32.totalorder %s312, 0
    %s315 = sadd.s32 %s314, 1
    %s316 = scalar_select %p313, %s314, %s315
    %p319 = pneg %p313
    %p320 = scmp.eq.s32.totalorder %s18, 1
    %p321 = por %p319, %p320
    %p322 = scmp.ne.s32.totalorder %s314, %s317
    %p323 = scmp.eq.s32.totalorder %s18, 0
    %p324 = por %p322, %p323
    %p325 = scmp.ne.s32.totalorder %s314, %s317
    %p326 = scmp.eq.s32.totalorder %s23, 1
    %p327 = por %p325, %p326
    %p328 = scmp.ne.s32.totalorder %s317, %s318
    %p329 = scmp.eq.s32.totalorder %s23, 0
    %p330 = por %p328, %p329
    %p331 = scmp.ne.s32.totalorder %s317, %s318
    %p332 = scmp.eq.s32.totalorder %s24, 1
    %p333 = por %p331, %p332
    %p335 = scmp.ne.s32.totalorder %s318, %s334
    %p336 = scmp.eq.s32.totalorder %s24, 0
    %p337 = por %p335, %p336
    %p338 = scmp.le.s32.totalorder 1, %s18
    %p339 = scmp.lt.s32.totalorder %s18, 3
    %p340 = pnand %p338, %p339
    %p341 = pneg %p340
    // Predicated region
    $region9: #{axial_attention_3d.4} parent=5 // pred_check
      _
    $region10: #{axial_attention_3d.4} parent=5 // pred_check_branch
      %343 = sbr.rel (%p340) target = $region12
    $region11: #{axial_attention_3d.4} parent=5 // pred_region
      %s344 = ssub.s32 %s18, 1
    $region12: #{axial_attention_3d.4} parent=5 // pred_fallthru
      _
    %p345 = scmp.lt.s32.totalorder %s18, 2
    // Predicated region
    $region13: #{axial_attention_3d.4} parent=5 // pred_check
      %p346 = pneg %p345
    $region14: #{axial_attention_3d.4} parent=5 // pred_check_branch
      %348 = sbr.rel (%p346) target = $region16
    $region15: #{axial_attention_3d.4} parent=5 // pred_region
      // Predicated region
      $region17: #{axial_attention_3d.4} parent=15 // pred_check
        %p349 = pneg %p38
      $region18: #{axial_attention_3d.4} parent=15 // pred_check_branch
        %351 = sbr.rel (%p349) target = $region20
      $region19: #{axial_attention_3d.4} parent=15 // pred_region
        %s352 = smul.u32 4, %s18
        %p353 = scmp.lt.s32.totalorder %s352, 7
        %s354 = scalar_select %p353, %s352, 7
        %s355 = smul.addr %s354, 8
        %s356 = smul.addr %s355, 8
        %s357 = scalar_lea.vmem %s0, %s356
        %s358 = smul.u32 4, %s18
      $region20: #{axial_attention_3d.4} parent=15 // pred_fallthru
        _
      // Predicated region
      $region21: #{axial_attention_3d.4} parent=15 // pred_check
        %p359 = pneg %p64
      $region22: #{axial_attention_3d.4} parent=15 // pred_check_branch
        %361 = sbr.rel (%p359) target = $region24
      $region23: #{axial_attention_3d.4} parent=15 // pred_region
        %s362 = smul.u32 4, %s18
        %p363 = scmp.lt.s32.totalorder %s362, 7
        %s364 = scalar_select %p363, %s362, 7
        %s365 = smul.addr %s364, 8
        %s366 = smul.addr %s365, 8
        %s367 = scalar_lea.vmem %s1, %s366
        %s368 = smul.u32 4, %s18
      $region24: #{axial_attention_3d.4} parent=15 // pred_fallthru
        _
      // Predicated region
      $region25: #{axial_attention_3d.4} parent=15 // pred_check
        %p369 = pneg %p90
      $region26: #{axial_attention_3d.4} parent=15 // pred_check_branch
        %371 = sbr.rel (%p369) target = $region28
      $region27: #{axial_attention_3d.4} parent=15 // pred_region
        %s372 = smul.u32 4, %s18
        %p373 = scmp.lt.s32.totalorder %s372, 7
        %s374 = scalar_select %p373, %s372, 7
        %s375 = smul.addr %s374, 8
        %s376 = smul.addr %s375, 8
        %s377 = scalar_lea.vmem %s2, %s376
        %s378 = smul.u32 4, %s18
      $region28: #{axial_attention_3d.4} parent=15 // pred_fallthru
        _
      // Predicated region
      $region29: #{axial_attention_3d.4} parent=15 // pred_check
        %p379 = pneg %p116
      $region30: #{axial_attention_3d.4} parent=15 // pred_check_branch
        %381 = sbr.rel (%p379) target = $region32
      $region31: #{axial_attention_3d.4} parent=15 // pred_region
        %s382 = smul.u32 4, %s18
        %p383 = scmp.lt.s32.totalorder %s382, 7
        %s384 = scalar_select %p383, %s382, 7
        %s385 = smul.addr %s384, 8
        %s386 = smul.addr %s385, 8
        %s387 = scalar_lea.vmem %s3, %s386
        %s388 = smul.u32 4, %s18
      $region32: #{axial_attention_3d.4} parent=15 // pred_fallthru
        _
      // Predicated region
      $region33: #{axial_attention_3d.4} parent=15 // pred_check
        %p389 = pneg %p142
      $region34: #{axial_attention_3d.4} parent=15 // pred_check_branch
        %391 = sbr.rel (%p389) target = $region36
      $region35: #{axial_attention_3d.4} parent=15 // pred_region
        %s392 = smul.u32 4, %s18
        %p393 = scmp.lt.s32.totalorder %s392, 7
        %s394 = scalar_select %p393, %s392, 7
        %s395 = smul.addr %s394, 8
        %s396 = smul.addr %s395, 8
        %s397 = scalar_lea.vmem %s4, %s396
        %s398 = smul.u32 4, %s18
      $region36: #{axial_attention_3d.4} parent=15 // pred_fallthru
        _
      // Predicated region
      $region37: #{axial_attention_3d.4} parent=15 // pred_check
        %p399 = pneg %p168
      $region38: #{axial_attention_3d.4} parent=15 // pred_check_branch
        %401 = sbr.rel (%p399) target = $region40
      $region39: #{axial_attention_3d.4} parent=15 // pred_region
        %s402 = smul.u32 4, %s18
        %p403 = scmp.lt.s32.totalorder %s402, 7
        %s404 = scalar_select %p403, %s402, 7
        %s405 = smul.addr %s404, 8
        %s406 = smul.addr %s405, 8
        %s407 = scalar_lea.vmem %s5, %s406
        %s408 = smul.u32 4, %s18
      $region40: #{axial_attention_3d.4} parent=15 // pred_fallthru
        _
      // Predicated region
      $region41: #{axial_attention_3d.4} parent=15 // pred_check
        %p409 = pneg %p194
      $region42: #{axial_attention_3d.4} parent=15 // pred_check_branch
        %411 = sbr.rel (%p409) target = $region44
      $region43: #{axial_attention_3d.4} parent=15 // pred_region
        %s412 = smul.u32 4, %s18
        %p413 = scmp.lt.s32.totalorder %s412, 7
        %s414 = scalar_select %p413, %s412, 7
        %s415 = smul.addr %s414, 8
        %s416 = smul.addr %s415, 8
        %s417 = scalar_lea.vmem %s6, %s416
        %s418 = smul.u32 4, %s18
      $region44: #{axial_attention_3d.4} parent=15 // pred_fallthru
        _
      // Predicated region
      $region45: #{axial_attention_3d.4} parent=15 // pred_check
        %p419 = pneg %p220
      $region46: #{axial_attention_3d.4} parent=15 // pred_check_branch
        %421 = sbr.rel (%p419) target = $region48
      $region47: #{axial_attention_3d.4} parent=15 // pred_region
        %s422 = smul.u32 4, %s18
        %p423 = scmp.lt.s32.totalorder %s422, 7
        %s424 = scalar_select %p423, %s422, 7
        %s425 = smul.addr %s424, 8
        %s426 = smul.addr %s425, 8
        %s427 = scalar_lea.vmem %s7, %s426
        %s428 = smul.u32 4, %s18
      $region48: #{axial_attention_3d.4} parent=15 // pred_fallthru
        _
      // Predicated region
      $region49: #{axial_attention_3d.4} parent=15 // pred_check
        %p429 = pneg %p246
      $region50: #{axial_attention_3d.4} parent=15 // pred_check_branch
        %431 = sbr.rel (%p429) target = $region52
      $region51: #{axial_attention_3d.4} parent=15 // pred_region
        %s432 = smul.u32 4, %s18
        %p433 = scmp.lt.s32.totalorder %s432, 7
        %s434 = scalar_select %p433, %s432, 7
        %s435 = smul.addr %s434, 8
        %s436 = smul.addr %s435, 8
        %s437 = scalar_lea.vmem %s8, %s436
        %s438 = smul.u32 4, %s18
      $region52: #{axial_attention_3d.4} parent=15 // pred_fallthru
        _
    $region16: #{axial_attention_3d.4} parent=5 // pred_fallthru
      _
    %p439 = scmp.le.s32.totalorder 1, %s18
    %p440 = scmp.lt.s32.totalorder %s18, 3
    %p441 = pnand %p439, %p440
    %p442 = pneg %p441
    // Predicated region
    $region53: #{axial_attention_3d.4} parent=5 // pred_check
      _
    $region54: #{axial_attention_3d.4} parent=5 // pred_check_branch
      %444 = sbr.rel (%p441) target = $region56
    $region55: #{axial_attention_3d.4} parent=5 // pred_region
      %s445 = ssub.s32 %s18, 1
      %s446 = smul.u32 4, %s23
      %p447 = scmp.lt.s32.totalorder %s446, 7
      %s448 = scalar_select %p447, %s446, 7
      %s449 = smul.addr %s448, 8
      %s450 = smul.addr %s449, 8
      %s451 = scalar_lea.vmem %s0, %s450
      %p452 = pneg %p44
      %p453 = pneg %p41
      %s454 = smul.u32 4, %s23
      %p455 = scmp.lt.s32.totalorder %s454, 7
      %s456 = scalar_select %p455, %s454, 7
      %s457 = smul.addr %s456, 8
      %s458 = smul.addr %s457, 8
      %s459 = scalar_lea.vmem %s1, %s458
      %p460 = pneg %p70
      %p461 = pneg %p67
      %s462 = smul.u32 4, %s23
      %p463 = scmp.lt.s32.totalorder %s462, 7
      %s464 = scalar_select %p463, %s462, 7
      %s465 = smul.addr %s464, 8
      %s466 = smul.addr %s465, 8
      %s467 = scalar_lea.vmem %s2, %s466
      %p468 = pneg %p96
      %p469 = pneg %p93
      %s470 = smul.u32 4, %s23
      %p471 = scmp.lt.s32.totalorder %s470, 7
      %s472 = scalar_select %p471, %s470, 7
      %s473 = smul.addr %s472, 8
      %s474 = smul.addr %s473, 8
      %s475 = scalar_lea.vmem %s3, %s474
      %p476 = pneg %p122
      %p477 = pneg %p119
      %s478 = smul.u32 4, %s23
      %p479 = scmp.lt.s32.totalorder %s478, 7
      %s480 = scalar_select %p479, %s478, 7
      %s481 = smul.addr %s480, 8
      %s482 = smul.addr %s481, 8
      %s483 = scalar_lea.vmem %s4, %s482
      %p484 = pneg %p148
      %p485 = pneg %p145
      %s486 = smul.u32 4, %s23
      %p487 = scmp.lt.s32.totalorder %s486, 7
      %s488 = scalar_select %p487, %s486, 7
      %s489 = smul.addr %s488, 8
      %s490 = smul.addr %s489, 8
      %s491 = scalar_lea.vmem %s5, %s490
      %p492 = pneg %p174
      %p493 = pneg %p171
      %s494 = smul.u32 4, %s23
      %p495 = scmp.lt.s32.totalorder %s494, 7
      %s496 = scalar_select %p495, %s494, 7
      %s497 = smul.addr %s496, 8
      %s498 = smul.addr %s497, 8
      %s499 = scalar_lea.vmem %s6, %s498
      %p500 = pneg %p200
      %p501 = pneg %p197
      %s502 = smul.u32 4, %s23
      %p503 = scmp.lt.s32.totalorder %s502, 7
      %s504 = scalar_select %p503, %s502, 7
      %s505 = smul.addr %s504, 8
      %s506 = smul.addr %s505, 8
      %s507 = scalar_lea.vmem %s7, %s506
      %p508 = pneg %p226
      %p509 = pneg %p223
      %s510 = smul.u32 4, %s23
      %p511 = scmp.lt.s32.totalorder %s510, 7
      %s512 = scalar_select %p511, %s510, 7
      %s513 = smul.addr %s512, 8
      %s514 = smul.addr %s513, 8
      %s515 = scalar_lea.vmem %s8, %s514
      %p516 = pneg %p252
      %p517 = pneg %p249
      %p518 = pneg %p278
      %p519 = pneg %p275
      %s520 = smul.u32 4, %s23
      %p521 = scmp.lt.s32.totalorder %s520, 7
      %s522 = scalar_select %p521, %s520, 7
      %s523 = smul.addr %s522, 8
      %s524 = smul.addr %s523, 8
      %s525 = scalar_lea.vmem %s9, %s524
      %p526 = pneg %p304
      %p527 = pneg %p301
      %s528 = smul.u32 4, %s23
      %p529 = scmp.lt.s32.totalorder %s528, 7
      %s530 = scalar_select %p529, %s528, 7
      %s531 = smul.addr %s530, 8
      %s532 = smul.addr %s531, 8
      %s533 = scalar_lea.vmem %s10, %s532
      %p534 = pneg %p330
      %p535 = pneg %p327
      %s536 = smul.u32 4, %s23
      %p537 = scmp.lt.s32.totalorder %s536, 7
      %s538 = scalar_select %p537, %s536, 7
      %s539 = smul.addr %s538, 8
      %s540 = smul.addr %s539, 8
      %s541 = scalar_lea.vmem %s11, %s540
      %s542 = smul.u32 4, %s23
      %p543 = scmp.lt.s32.totalorder %s542, 7
      %s544 = scalar_select %p543, %s542, 7
      %s545 = smul.addr %s544, 8
      %s546 = smul.addr %s545, 8
      %s547 = scalar_lea.vmem %s0, %s546
      %s548 = smul.u32 4, %s23
      %s549 = smul.u32 4, %s23
      %p550 = scmp.lt.s32.totalorder %s549, 7
      %s551 = scalar_select %p550, %s549, 7
      %s552 = smul.addr %s551, 8
      %s553 = smul.addr %s552, 8
      %s554 = scalar_lea.vmem %s1, %s553
      %s555 = smul.u32 4, %s23
      %s556 = smul.u32 4, %s23
      %p557 = scmp.lt.s32.totalorder %s556, 7
      %s558 = scalar_select %p557, %s556, 7
      %s559 = smul.addr %s558, 8
      %s560 = smul.addr %s559, 8
      %s561 = scalar_lea.vmem %s2, %s560
      %s562 = smul.u32 4, %s23
      %s563 = smul.u32 4, %s23
      %p564 = scmp.lt.s32.totalorder %s563, 7
      %s565 = scalar_select %p564, %s563, 7
      %s566 = smul.addr %s565, 8
      %s567 = smul.addr %s566, 8
      %s568 = scalar_lea.vmem %s3, %s567
      %s569 = smul.u32 4, %s23
      %s570 = smul.u32 4, %s23
      %p571 = scmp.lt.s32.totalorder %s570, 7
      %s572 = scalar_select %p571, %s570, 7
      %s573 = smul.addr %s572, 8
      %s574 = smul.addr %s573, 8
      %s575 = scalar_lea.vmem %s4, %s574
      %s576 = smul.u32 4, %s23
      %s577 = smul.u32 4, %s23
      %p578 = scmp.lt.s32.totalorder %s577, 7
      %s579 = scalar_select %p578, %s577, 7
      %s580 = smul.addr %s579, 8
      %s581 = smul.addr %s580, 8
      %s582 = scalar_lea.vmem %s5, %s581
      %s583 = smul.u32 4, %s23
      %s584 = smul.u32 4, %s23
      %p585 = scmp.lt.s32.totalorder %s584, 7
      %s586 = scalar_select %p585, %s584, 7
      %s587 = smul.addr %s586, 8
      %s588 = smul.addr %s587, 8
      %s589 = scalar_lea.vmem %s6, %s588
      %s590 = smul.u32 4, %s23
      %s591 = smul.u32 4, %s23
      %p592 = scmp.lt.s32.totalorder %s591, 7
      %s593 = scalar_select %p592, %s591, 7
      %s594 = smul.addr %s593, 8
      %s595 = smul.addr %s594, 8
      %s596 = scalar_lea.vmem %s7, %s595
      %s597 = smul.u32 4, %s23
      %s598 = smul.u32 4, %s23
      %p599 = scmp.lt.s32.totalorder %s598, 7
      %s600 = scalar_select %p599, %s598, 7
      %s601 = smul.addr %s600, 8
      %s602 = smul.addr %s601, 8
      %s603 = scalar_lea.vmem %s8, %s602
      %s604 = smul.u32 4, %s23
      %s605 = smul.u32 4, %s23
      %p606 = scmp.lt.s32.totalorder %s605, 7
      %s607 = scalar_select %p606, %s605, 7
      %s608 = smul.addr %s607, 8
      %s609 = smul.addr %s608, 8
      %s610 = scalar_lea.vmem %s9, %s609
      %s611 = smul.u32 4, %s23
      %s612 = smul.u32 4, %s23
      %p613 = scmp.lt.s32.totalorder %s612, 7
      %s614 = scalar_select %p613, %s612, 7
      %s615 = smul.addr %s614, 8
      %s616 = smul.addr %s615, 8
      %s617 = scalar_lea.vmem %s10, %s616
      %s618 = smul.u32 4, %s23
      %s619 = smul.u32 4, %s23
      %p620 = scmp.lt.s32.totalorder %s619, 7
      %s621 = scalar_select %p620, %s619, 7
      %s622 = smul.addr %s621, 8
      %s623 = smul.addr %s622, 8
      %s624 = scalar_lea.vmem %s11, %s623
      %s625 = smul.u32 4, %s23
      %v626 = vld [vmem:[%s547] sm:$0xff]
      %v627 = vld [vmem:[%s547 + $0x8] sm:$0xff]
      %v628 = vld [vmem:[%s547 + $0x10] sm:$0xff]
      %v629 = vld [vmem:[%s547 + $0x18] sm:$0xff]
      %v630 = vld [vmem:[%s547 + $0x20] sm:$0xff]
      %v631 = vld [vmem:[%s547 + $0x28] sm:$0xff]
      %v632 = vld [vmem:[%s547 + $0x30] sm:$0xff]
      %v633 = vld [vmem:[%s547 + $0x38] sm:$0xff]
      %v634 = vld [vmem:[%s547 + $0x40] sm:$0xff]
      %v635 = vld [vmem:[%s547 + $0x48] sm:$0xff]
      %v636 = vld [vmem:[%s547 + $0x50] sm:$0xff]
      %v637 = vld [vmem:[%s547 + $0x58] sm:$0xff]
      %v638 = vld [vmem:[%s547 + $0x60] sm:$0xff]
      %v639 = vld [vmem:[%s547 + $0x68] sm:$0xff]
      %v640 = vld [vmem:[%s547 + $0x70] sm:$0xff]
      %v641 = vld [vmem:[%s547 + $0x78] sm:$0xff]
      %v642 = vld [vmem:[%s547 + $0x80] sm:$0xff]
      %v643 = vld [vmem:[%s547 + $0x88] sm:$0xff]
      %v644 = vld [vmem:[%s547 + $0x90] sm:$0xff]
      %v645 = vld [vmem:[%s547 + $0x98] sm:$0xff]
      %v646 = vld [vmem:[%s547 + $0xa0] sm:$0xff]
      %v647 = vld [vmem:[%s547 + $0xa8] sm:$0xff]
      %v648 = vld [vmem:[%s547 + $0xb0] sm:$0xff]
      %v649 = vld [vmem:[%s547 + $0xb8] sm:$0xff]
      %v650 = vld [vmem:[%s547 + $0xc0] sm:$0xff]
      %v651 = vld [vmem:[%s547 + $0xc8] sm:$0xff]
      %v652 = vld [vmem:[%s547 + $0xd0] sm:$0xff]
      %v653 = vld [vmem:[%s547 + $0xd8] sm:$0xff]
      %v654 = vld [vmem:[%s547 + $0xe0] sm:$0xff]
      %v655 = vld [vmem:[%s547 + $0xe8] sm:$0xff]
      %v656 = vld [vmem:[%s547 + $0xf0] sm:$0xff]
      %v657 = vld [vmem:[%s547 + $0xf8] sm:$0xff]
      %v658 = vld [vmem:[%s554] sm:$0xff]
      %v659 = vld [vmem:[%s554 + $0x8] sm:$0xff]
      %v660 = vld [vmem:[%s554 + $0x10] sm:$0xff]
      %v661 = vld [vmem:[%s554 + $0x18] sm:$0xff]
      %v662 = vld [vmem:[%s554 + $0x20] sm:$0xff]
      %v663 = vld [vmem:[%s554 + $0x28] sm:$0xff]
      %v664 = vld [vmem:[%s554 + $0x30] sm:$0xff]
      %v665 = vld [vmem:[%s554 + $0x38] sm:$0xff]
      %v666 = vld [vmem:[%s554 + $0x40] sm:$0xff]
      %v667 = vld [vmem:[%s554 + $0x48] sm:$0xff]
      %v668 = vld [vmem:[%s554 + $0x50] sm:$0xff]
      %v669 = vld [vmem:[%s554 + $0x58] sm:$0xff]
      %v670 = vld [vmem:[%s554 + $0x60] sm:$0xff]
      %v671 = vld [vmem:[%s554 + $0x68] sm:$0xff]
      %v672 = vld [vmem:[%s554 + $0x70] sm:$0xff]
      %v673 = vld [vmem:[%s554 + $0x78] sm:$0xff]
      %v674 = vld [vmem:[%s554 + $0x80] sm:$0xff]
      %v675 = vld [vmem:[%s554 + $0x88] sm:$0xff]
      %v676 = vld [vmem:[%s554 + $0x90] sm:$0xff]
      %v677 = vld [vmem:[%s554 + $0x98] sm:$0xff]
      %v678 = vld [vmem:[%s554 + $0xa0] sm:$0xff]
      %v679 = vld [vmem:[%s554 + $0xa8] sm:$0xff]
      %v680 = vld [vmem:[%s554 + $0xb0] sm:$0xff]
      %v681 = vld [vmem:[%s554 + $0xb8] sm:$0xff]
      %v682 = vld [vmem:[%s554 + $0xc0] sm:$0xff]
      %v683 = vld [vmem:[%s554 + $0xc8] sm:$0xff]
      %v684 = vld [vmem:[%s554 + $0xd0] sm:$0xff]
      %v685 = vld [vmem:[%s554 + $0xd8] sm:$0xff]
      %v686 = vld [vmem:[%s554 + $0xe0] sm:$0xff]
      %v687 = vld [vmem:[%s554 + $0xe8] sm:$0xff]
      %v688 = vld [vmem:[%s554 + $0xf0] sm:$0xff]
      %v689 = vld [vmem:[%s554 + $0xf8] sm:$0xff]
      %v690 = vld [vmem:[%s561] sm:$0xff]
      %v691 = vld [vmem:[%s561 + $0x8] sm:$0xff]
      %v692 = vld [vmem:[%s561 + $0x10] sm:$0xff]
      %v693 = vld [vmem:[%s561 + $0x18] sm:$0xff]
      %v694 = vld [vmem:[%s561 + $0x20] sm:$0xff]
      %v695 = vld [vmem:[%s561 + $0x28] sm:$0xff]
      %v696 = vld [vmem:[%s561 + $0x30] sm:$0xff]
      %v697 = vld [vmem:[%s561 + $0x38] sm:$0xff]
      %v698 = vld [vmem:[%s561 + $0x40] sm:$0xff]
      %v699 = vld [vmem:[%s561 + $0x48] sm:$0xff]
      %v700 = vld [vmem:[%s561 + $0x50] sm:$0xff]
      %v701 = vld [vmem:[%s561 + $0x58] sm:$0xff]
      %v702 = vld [vmem:[%s561 + $0x60] sm:$0xff]
      %v703 = vld [vmem:[%s561 + $0x68] sm:$0xff]
      %v704 = vld [vmem:[%s561 + $0x70] sm:$0xff]
      %v705 = vld [vmem:[%s561 + $0x78] sm:$0xff]
      %v706 = vld [vmem:[%s561 + $0x80] sm:$0xff]
      %v707 = vld [vmem:[%s561 + $0x88] sm:$0xff]
      %v708 = vld [vmem:[%s561 + $0x90] sm:$0xff]
      %v709 = vld [vmem:[%s561 + $0x98] sm:$0xff]
      %v710 = vld [vmem:[%s561 + $0xa0] sm:$0xff]
      %v711 = vld [vmem:[%s561 + $0xa8] sm:$0xff]
      %v712 = vld [vmem:[%s561 + $0xb0] sm:$0xff]
      %v713 = vld [vmem:[%s561 + $0xb8] sm:$0xff]
      %v714 = vld [vmem:[%s561 + $0xc0] sm:$0xff]
      %v715 = vld [vmem:[%s561 + $0xc8] sm:$0xff]
      %v716 = vld [vmem:[%s561 + $0xd0] sm:$0xff]
      %v717 = vld [vmem:[%s561 + $0xd8] sm:$0xff]
      %v718 = vld [vmem:[%s561 + $0xe0] sm:$0xff]
      %v719 = vld [vmem:[%s561 + $0xe8] sm:$0xff]
      %v720 = vld [vmem:[%s561 + $0xf0] sm:$0xff]
      %v721 = vld [vmem:[%s561 + $0xf8] sm:$0xff]
      %vm722 = vcmask 64512
      %v724 = vsel %vm722, %v626, 0
      %v727 = vsel %vm722, %v627, 0
      %v730 = vsel %vm722, %v628, 0
      %v733 = vsel %vm722, %v629, 0
      %v736 = vsel %vm722, %v630, 0
      %v739 = vsel %vm722, %v631, 0
      %v742 = vsel %vm722, %v632, 0
      %v745 = vsel %vm722, %v633, 0
      %v748 = vsel %vm722, %v658, 0
      %v751 = vsel %vm722, %v659, 0
      %v754 = vsel %vm722, %v660, 0
      %v757 = vsel %vm722, %v661, 0
      %v760 = vsel %vm722, %v662, 0
      %v763 = vsel %vm722, %v663, 0
      %v766 = vsel %vm722, %v664, 0
      %v769 = vsel %vm722, %v665, 0
      %771 = vmatprep.subr.mxu0 0.0
      %772 = vmatpush1.xpose.msra.mxu0 0.0
      %773 = vmatprep.subr.mxu0 0.0
      %774 = vmatpush1.xpose.msra.mxu0 0.0
      %775 = vmatprep.subr.mxu0 0.0
      %776 = vmatpush1.xpose.msra.mxu0 0.0
      %777 = vmatprep.subr.mxu0 0.0
      %778 = vmatpush1.xpose.msra.mxu0 0.0
      %779 = vmatprep.subr.mxu0 0.0
      %780 = vmatpush1.xpose.msra.mxu0 0.0
      %781 = vmatprep.subr.mxu0 0.0
      %782 = vmatpush1.xpose.msra.mxu0 0.0
      %783 = vmatprep.subr.mxu0 0.0
      %784 = vmatpush1.xpose.msra.mxu0 0.0
      %785 = vmatprep.subr.mxu0 0.0
      %786 = vmatpush1.xpose.msra.mxu0 0.0
      %787 = vmatprep.subr.mxu0 0.0
      %788 = vmatpush1.xpose.msra.mxu0 %v769
      %789 = vmatprep.subr.mxu0 0.0
      %790 = vmatpush1.xpose.msra.mxu0 %v766
      %791 = vmatprep.subr.mxu0 0.0
      %792 = vmatpush1.xpose.msra.mxu0 %v763
      %793 = vmatprep.subr.mxu0 0.0
      %794 = vmatpush1.xpose.msra.mxu0 %v760
      %795 = vmatprep.subr.mxu0 0.0
      %796 = vmatpush1.xpose.msra.mxu0 %v757
      %797 = vmatprep.subr.mxu0 0.0
      %798 = vmatpush1.xpose.msra.mxu0 %v754
      %799 = vmatprep.subr.mxu0 0.0
      %800 = vmatpush1.xpose.msra.mxu0 %v751
      %801 = vmatprep.subr.mxu0 0.0
      %802 = vmatpush1.xpose.msra.mxu0 %v748
      %803 = vmatprep.subr.mxu0 0.0
      %804 = vmatpush2.xpose.msra.mxu0 0.0
      %805 = vmatprep.subr.mxu0 0.0
      %806 = vmatpush2.xpose.msra.mxu0 0.0
      %807 = vmatprep.subr.mxu0 0.0
      %808 = vmatpush2.xpose.msra.mxu0 0.0
      %809 = vmatprep.subr.mxu0 0.0
      %810 = vmatpush2.xpose.msra.mxu0 0.0
      %811 = vmatprep.subr.mxu0 0.0
      %812 = vmatpush2.xpose.msra.mxu0 0.0
      %813 = vmatprep.subr.mxu0 0.0
      %814 = vmatpush2.xpose.msra.mxu0 0.0
      %815 = vmatprep.subr.mxu0 0.0
      %816 = vmatpush2.xpose.msra.mxu0 0.0
      %817 = vmatprep.subr.mxu0 0.0
      %818 = vmatpush2.xpose.msra.mxu0 0.0
      %819 = vmatprep.subr.mxu0 0.0
      %820 = vmatpush2.xpose.msra.mxu0 0.0
      %821 = vmatprep.subr.mxu0 0.0
      %822 = vmatpush2.xpose.msra.mxu0 0.0
      %823 = vmatprep.subr.mxu0 0.0
      %824 = vmatpush2.xpose.msra.mxu0 0.0
      %825 = vmatprep.subr.mxu0 0.0
      %826 = vmatpush2.xpose.msra.mxu0 0.0
      %827 = vmatprep.subr.mxu0 0.0
      %828 = vmatpush2.xpose.msra.mxu0 0.0
      %829 = vmatprep.subr.mxu0 0.0
      %830 = vmatpush2.xpose.msra.mxu0 0.0
      %831 = vmatprep.subr.mxu0 0.0
      %832 = vmatpush2.xpose.msra.mxu0 0.0
      %833 = vmatprep.subr.mxu0 0.0
      %834 = vmatpush2.xpose.msra.mxu0 0.0
      %835 = vmatprep.mubr.f32.mxu0 0.0
      %836 = vmatmul.mubr.f32.gmra.mxu0 %v724
      %v837 = vpop.f32.mrf.mxu0
      %v838 = vadd.f32 0.0, %v837
      %v839 = vpop.f32.mrf.mxu0
      %840 = vmatprep.mubr.f32.mxu0 0.0
      %841 = vmatmul.mubr.f32.gmra.mxu0 %v727
      %v842 = vpop.f32.mrf.mxu0
      %v843 = vadd.f32 0.0, %v842
      %v844 = vpop.f32.mrf.mxu0
      %845 = vmatprep.mubr.f32.mxu0 0.0
      %846 = vmatmul.mubr.f32.gmra.mxu0 %v730
      %v847 = vpop.f32.mrf.mxu0
      %v848 = vadd.f32 0.0, %v847
      %v849 = vpop.f32.mrf.mxu0
      %850 = vmatprep.mubr.f32.mxu0 0.0
      %851 = vmatmul.mubr.f32.gmra.mxu0 %v733
      %v852 = vpop.f32.mrf.mxu0
      %v853 = vadd.f32 0.0, %v852
      %v854 = vpop.f32.mrf.mxu0
      %855 = vmatprep.mubr.f32.mxu0 0.0
      %856 = vmatmul.mubr.f32.gmra.mxu0 %v736
      %v857 = vpop.f32.mrf.mxu0
      %v858 = vadd.f32 0.0, %v857
      %v859 = vpop.f32.mrf.mxu0
      %860 = vmatprep.mubr.f32.mxu0 0.0
      %861 = vmatmul.mubr.f32.gmra.mxu0 %v739
      %v862 = vpop.f32.mrf.mxu0
      %v863 = vadd.f32 0.0, %v862
      %v864 = vpop.f32.mrf.mxu0
      %865 = vmatprep.mubr.f32.mxu0 0.0
      %866 = vmatmul.mubr.f32.gmra.mxu0 %v742
      %v867 = vpop.f32.mrf.mxu0
      %v868 = vadd.f32 0.0, %v867
      %v869 = vpop.f32.mrf.mxu0
      %870 = vmatprep.mubr.f32.mxu0 0.0
      %871 = vmatmul.mubr.f32.gmra.mxu0 %v745
      %v872 = vpop.f32.mrf.mxu0
      %v873 = vadd.f32 0.0, %v872
      %v874 = vpop.f32.mrf.mxu0
      %875 = vdwg.mxu0
      %v877 = vsel %vm722, %v634, 0
      %v880 = vsel %vm722, %v635, 0
      %v883 = vsel %vm722, %v636, 0
      %v886 = vsel %vm722, %v637, 0
      %v889 = vsel %vm722, %v638, 0
      %v892 = vsel %vm722, %v639, 0
      %v895 = vsel %vm722, %v640, 0
      %v898 = vsel %vm722, %v641, 0
      %v901 = vsel %vm722, %v666, 0
      %v904 = vsel %vm722, %v667, 0
      %v907 = vsel %vm722, %v668, 0
      %v910 = vsel %vm722, %v669, 0
      %v913 = vsel %vm722, %v670, 0
      %v916 = vsel %vm722, %v671, 0
      %v919 = vsel %vm722, %v672, 0
      %v922 = vsel %vm722, %v673, 0
      %924 = vmatprep.subr.mxu0 0.0
      %925 = vmatpush1.xpose.msra.mxu0 0.0
      %926 = vmatprep.subr.mxu0 0.0
      %927 = vmatpush1.xpose.msra.mxu0 0.0
      %928 = vmatprep.subr.mxu0 0.0
      %929 = vmatpush1.xpose.msra.mxu0 0.0
      %930 = vmatprep.subr.mxu0 0.0
      %931 = vmatpush1.xpose.msra.mxu0 0.0
      %932 = vmatprep.subr.mxu0 0.0
      %933 = vmatpush1.xpose.msra.mxu0 0.0
      %934 = vmatprep.subr.mxu0 0.0
      %935 = vmatpush1.xpose.msra.mxu0 0.0
      %936 = vmatprep.subr.mxu0 0.0
      %937 = vmatpush1.xpose.msra.mxu0 0.0
      %938 = vmatprep.subr.mxu0 0.0
      %939 = vmatpush1.xpose.msra.mxu0 0.0
      %940 = vmatprep.subr.mxu0 0.0
      %941 = vmatpush1.xpose.msra.mxu0 %v922
      %942 = vmatprep.subr.mxu0 0.0
      %943 = vmatpush1.xpose.msra.mxu0 %v919
      %944 = vmatprep.subr.mxu0 0.0
      %945 = vmatpush1.xpose.msra.mxu0 %v916
      %946 = vmatprep.subr.mxu0 0.0
      %947 = vmatpush1.xpose.msra.mxu0 %v913
      %948 = vmatprep.subr.mxu0 0.0
      %949 = vmatpush1.xpose.msra.mxu0 %v910
      %950 = vmatprep.subr.mxu0 0.0
      %951 = vmatpush1.xpose.msra.mxu0 %v907
      %952 = vmatprep.subr.mxu0 0.0
      %953 = vmatpush1.xpose.msra.mxu0 %v904
      %954 = vmatprep.subr.mxu0 0.0
      %955 = vmatpush1.xpose.msra.mxu0 %v901
      %956 = vmatprep.subr.mxu0 0.0
      %957 = vmatpush2.xpose.msra.mxu0 0.0
      %958 = vmatprep.subr.mxu0 0.0
      %959 = vmatpush2.xpose.msra.mxu0 0.0
      %960 = vmatprep.subr.mxu0 0.0
      %961 = vmatpush2.xpose.msra.mxu0 0.0
      %962 = vmatprep.subr.mxu0 0.0
      %963 = vmatpush2.xpose.msra.mxu0 0.0
      %964 = vmatprep.subr.mxu0 0.0
      %965 = vmatpush2.xpose.msra.mxu0 0.0
      %966 = vmatprep.subr.mxu0 0.0
      %967 = vmatpush2.xpose.msra.mxu0 0.0
      %968 = vmatprep.subr.mxu0 0.0
      %969 = vmatpush2.xpose.msra.mxu0 0.0
      %970 = vmatprep.subr.mxu0 0.0
      %971 = vmatpush2.xpose.msra.mxu0 0.0
      %972 = vmatprep.subr.mxu0 0.0
      %973 = vmatpush2.xpose.msra.mxu0 0.0
      %974 = vmatprep.subr.mxu0 0.0
      %975 = vmatpush2.xpose.msra.mxu0 0.0
      %976 = vmatprep.subr.mxu0 0.0
      %977 = vmatpush2.xpose.msra.mxu0 0.0
      %978 = vmatprep.subr.mxu0 0.0
      %979 = vmatpush2.xpose.msra.mxu0 0.0
      %980 = vmatprep.subr.mxu0 0.0
      %981 = vmatpush2.xpose.msra.mxu0 0.0
      %982 = vmatprep.subr.mxu0 0.0
      %983 = vmatpush2.xpose.msra.mxu0 0.0
      %984 = vmatprep.subr.mxu0 0.0
      %985 = vmatpush2.xpose.msra.mxu0 0.0
      %986 = vmatprep.subr.mxu0 0.0
      %987 = vmatpush2.xpose.msra.mxu0 0.0
      %988 = vmatprep.mubr.f32.mxu0 0.0
      %989 = vmatmul.mubr.f32.gmra.mxu0 %v877
      %v990 = vpop.f32.mrf.mxu0
      %v991 = vadd.f32 0.0, %v990
      %v992 = vpop.f32.mrf.mxu0
      %993 = vmatprep.mubr.f32.mxu0 0.0
      %994 = vmatmul.mubr.f32.gmra.mxu0 %v880
      %v995 = vpop.f32.mrf.mxu0
      %v996 = vadd.f32 0.0, %v995
      %v997 = vpop.f32.mrf.mxu0
      %998 = vmatprep.mubr.f32.mxu0 0.0
      %999 = vmatmul.mubr.f32.gmra.mxu0 %v883
      %v1000 = vpop.f32.mrf.mxu0
      %v1001 = vadd.f32 0.0, %v1000
      %v1002 = vpop.f32.mrf.mxu0
      %1003 = vmatprep.mubr.f32.mxu0 0.0
      %1004 = vmatmul.mubr.f32.gmra.mxu0 %v886
      %v1005 = vpop.f32.mrf.mxu0
      %v1006 = vadd.f32 0.0, %v1005
      %v1007 = vpop.f32.mrf.mxu0
      %1008 = vmatprep.mubr.f32.mxu0 0.0
      %1009 = vmatmul.mubr.f32.gmra.mxu0 %v889
      %v1010 = vpop.f32.mrf.mxu0
      %v1011 = vadd.f32 0.0, %v1010
      %v1012 = vpop.f32.mrf.mxu0
      %1013 = vmatprep.mubr.f32.mxu0 0.0
      %1014 = vmatmul.mubr.f32.gmra.mxu0 %v892
      %v1015 = vpop.f32.mrf.mxu0
      %v1016 = vadd.f32 0.0, %v1015
      %v1017 = vpop.f32.mrf.mxu0
      %1018 = vmatprep.mubr.f32.mxu0 0.0
      %1019 = vmatmul.mubr.f32.gmra.mxu0 %v895
      %v1020 = vpop.f32.mrf.mxu0
      %v1021 = vadd.f32 0.0, %v1020
      %v1022 = vpop.f32.mrf.mxu0
      %1023 = vmatprep.mubr.f32.mxu0 0.0
      %1024 = vmatmul.mubr.f32.gmra.mxu0 %v898
      %v1025 = vpop.f32.mrf.mxu0
      %v1026 = vadd.f32 0.0, %v1025
      %v1027 = vpop.f32.mrf.mxu0
      %1028 = vdwg.mxu0
      %v1030 = vsel %vm722, %v642, 0
      %v1033 = vsel %vm722, %v643, 0
      %v1036 = vsel %vm722, %v644, 0
      %v1039 = vsel %vm722, %v645, 0
      %v1042 = vsel %vm722, %v646, 0
      %v1045 = vsel %vm722, %v647, 0
      %v1048 = vsel %vm722, %v648, 0
      %v1051 = vsel %vm722, %v649, 0
      %v1054 = vsel %vm722, %v674, 0
      %v1057 = vsel %vm722, %v675, 0
      %v1060 = vsel %vm722, %v676, 0
      %v1063 = vsel %vm722, %v677, 0
      %v1066 = vsel %vm722, %v678, 0
      %v1069 = vsel %vm722, %v679, 0
      %v1072 = vsel %vm722, %v680, 0
      %v1075 = vsel %vm722, %v681, 0
      %1077 = vmatprep.subr.mxu0 0.0
      %1078 = vmatpush1.xpose.msra.mxu0 0.0
      %1079 = vmatprep.subr.mxu0 0.0
      %1080 = vmatpush1.xpose.msra.mxu0 0.0
      %1081 = vmatprep.subr.mxu0 0.0
      %1082 = vmatpush1.xpose.msra.mxu0 0.0
      %1083 = vmatprep.subr.mxu0 0.0
      %1084 = vmatpush1.xpose.msra.mxu0 0.0
      %1085 = vmatprep.subr.mxu0 0.0
      %1086 = vmatpush1.xpose.msra.mxu0 0.0
      %1087 = vmatprep.subr.mxu0 0.0
      %1088 = vmatpush1.xpose.msra.mxu0 0.0
      %1089 = vmatprep.subr.mxu0 0.0
      %1090 = vmatpush1.xpose.msra.mxu0 0.0
      %1091 = vmatprep.subr.mxu0 0.0
      %1092 = vmatpush1.xpose.msra.mxu0 0.0
      %1093 = vmatprep.subr.mxu0 0.0
      %1094 = vmatpush1.xpose.msra.mxu0 %v1075
      %1095 = vmatprep.subr.mxu0 0.0
      %1096 = vmatpush1.xpose.msra.mxu0 %v1072
      %1097 = vmatprep.subr.mxu0 0.0
      %1098 = vmatpush1.xpose.msra.mxu0 %v1069
      %1099 = vmatprep.subr.mxu0 0.0
      %1100 = vmatpush1.xpose.msra.mxu0 %v1066
      %1101 = vmatprep.subr.mxu0 0.0
      %1102 = vmatpush1.xpose.msra.mxu0 %v1063
      %1103 = vmatprep.subr.mxu0 0.0
      %1104 = vmatpush1.xpose.msra.mxu0 %v1060
      %1105 = vmatprep.subr.mxu0 0.0
      %1106 = vmatpush1.xpose.msra.mxu0 %v1057
      %1107 = vmatprep.subr.mxu0 0.0
      %1108 = vmatpush1.xpose.msra.mxu0 %v1054
      %1109 = vmatprep.subr.mxu0 0.0
      %1110 = vmatpush2.xpose.msra.mxu0 0.0
      %1111 = vmatprep.subr.mxu0 0.0
      %1112 = vmatpush2.xpose.msra.mxu0 0.0
      %1113 = vmatprep.subr.mxu0 0.0
      %1114 = vmatpush2.xpose.msra.mxu0 0.0
      %1115 = vmatprep.subr.mxu0 0.0
      %1116 = vmatpush2.xpose.msra.mxu0 0.0
      %1117 = vmatprep.subr.mxu0 0.0
      %1118 = vmatpush2.xpose.msra.mxu0 0.0
      %1119 = vmatprep.subr.mxu0 0.0
      %1120 = vmatpush2.xpose.msra.mxu0 0.0
      %1121 = vmatprep.subr.mxu0 0.0
      %1122 = vmatpush2.xpose.msra.mxu0 0.0
      %1123 = vmatprep.subr.mxu0 0.0
      %1124 = vmatpush2.xpose.msra.mxu0 0.0
      %1125 = vmatprep.subr.mxu0 0.0
      %1126 = vmatpush2.xpose.msra.mxu0 0.0
      %1127 = vmatprep.subr.mxu0 0.0
      %1128 = vmatpush2.xpose.msra.mxu0 0.0
      %1129 = vmatprep.subr.mxu0 0.0
      %1130 = vmatpush2.xpose.msra.mxu0 0.0
      %1131 = vmatprep.subr.mxu0 0.0
      %1132 = vmatpush2.xpose.msra.mxu0 0.0
      %1133 = vmatprep.subr.mxu0 0.0
      %1134 = vmatpush2.xpose.msra.mxu0 0.0
      %1135 = vmatprep.subr.mxu0 0.0
      %1136 = vmatpush2.xpose.msra.mxu0 0.0
      %1137 = vmatprep.subr.mxu0 0.0
      %1138 = vmatpush2.xpose.msra.mxu0 0.0
      %1139 = vmatprep.subr.mxu0 0.0
      %1140 = vmatpush2.xpose.msra.mxu0 0.0
      %1141 = vmatprep.mubr.f32.mxu0 0.0
      %1142 = vmatmul.mubr.f32.gmra.mxu0 %v1030
      %v1143 = vpop.f32.mrf.mxu0
      %v1144 = vadd.f32 0.0, %v1143
      %v1145 = vpop.f32.mrf.mxu0
      %1146 = vmatprep.mubr.f32.mxu0 0.0
      %1147 = vmatmul.mubr.f32.gmra.mxu0 %v1033
      %v1148 = vpop.f32.mrf.mxu0
      %v1149 = vadd.f32 0.0, %v1148
      %v1150 = vpop.f32.mrf.mxu0
      %1151 = vmatprep.mubr.f32.mxu0 0.0
      %1152 = vmatmul.mubr.f32.gmra.mxu0 %v1036
      %v1153 = vpop.f32.mrf.mxu0
      %v1154 = vadd.f32 0.0, %v1153
      %v1155 = vpop.f32.mrf.mxu0
      %1156 = vmatprep.mubr.f32.mxu0 0.0
      %1157 = vmatmul.mubr.f32.gmra.mxu0 %v1039
      %v1158 = vpop.f32.mrf.mxu0
      %v1159 = vadd.f32 0.0, %v1158
      %v1160 = vpop.f32.mrf.mxu0
      %1161 = vmatprep.mubr.f32.mxu0 0.0
      %1162 = vmatmul.mubr.f32.gmra.mxu0 %v1042
      %v1163 = vpop.f32.mrf.mxu0
      %v1164 = vadd.f32 0.0, %v1163
      %v1165 = vpop.f32.mrf.mxu0
      %1166 = vmatprep.mubr.f32.mxu0 0.0
      %1167 = vmatmul.mubr.f32.gmra.mxu0 %v1045
      %v1168 = vpop.f32.mrf.mxu0
      %v1169 = vadd.f32 0.0, %v1168
      %v1170 = vpop.f32.mrf.mxu0
      %1171 = vmatprep.mubr.f32.mxu0 0.0
      %1172 = vmatmul.mubr.f32.gmra.mxu0 %v1048
      %v1173 = vpop.f32.mrf.mxu0
      %v1174 = vadd.f32 0.0, %v1173
      %v1175 = vpop.f32.mrf.mxu0
      %1176 = vmatprep.mubr.f32.mxu0 0.0
      %1177 = vmatmul.mubr.f32.gmra.mxu0 %v1051
      %v1178 = vpop.f32.mrf.mxu0
      %v1179 = vadd.f32 0.0, %v1178
      %v1180 = vpop.f32.mrf.mxu0
      %1181 = vdwg.mxu0
      %v1183 = vsel %vm722, %v650, 0
      %v1186 = vsel %vm722, %v651, 0
      %v1189 = vsel %vm722, %v652, 0
      %v1192 = vsel %vm722, %v653, 0
      %v1195 = vsel %vm722, %v654, 0
      %v1198 = vsel %vm722, %v655, 0
      %v1201 = vsel %vm722, %v656, 0
      %v1204 = vsel %vm722, %v657, 0
      %v1207 = vsel %vm722, %v682, 0
      %v1210 = vsel %vm722, %v683, 0
      %v1213 = vsel %vm722, %v684, 0
      %v1216 = vsel %vm722, %v685, 0
      %v1219 = vsel %vm722, %v686, 0
      %v1222 = vsel %vm722, %v687, 0
      %v1225 = vsel %vm722, %v688, 0
      %v1228 = vsel %vm722, %v689, 0
      %1230 = vmatprep.subr.mxu0 0.0
      %1231 = vmatpush1.xpose.msra.mxu0 0.0
      %1232 = vmatprep.subr.mxu0 0.0
      %1233 = vmatpush1.xpose.msra.mxu0 0.0
      %1234 = vmatprep.subr.mxu0 0.0
      %1235 = vmatpush1.xpose.msra.mxu0 0.0
      %1236 = vmatprep.subr.mxu0 0.0
      %1237 = vmatpush1.xpose.msra.mxu0 0.0
      %1238 = vmatprep.subr.mxu0 0.0
      %1239 = vmatpush1.xpose.msra.mxu0 0.0
      %1240 = vmatprep.subr.mxu0 0.0
      %1241 = vmatpush1.xpose.msra.mxu0 0.0
      %1242 = vmatprep.subr.mxu0 0.0
      %1243 = vmatpush1.xpose.msra.mxu0 0.0
      %1244 = vmatprep.subr.mxu0 0.0
      %1245 = vmatpush1.xpose.msra.mxu0 0.0
      %1246 = vmatprep.subr.mxu0 0.0
      %1247 = vmatpush1.xpose.msra.mxu0 %v1228
      %1248 = vmatprep.subr.mxu0 0.0
      %1249 = vmatpush1.xpose.msra.mxu0 %v1225
      %1250 = vmatprep.subr.mxu0 0.0
      %1251 = vmatpush1.xpose.msra.mxu0 %v1222
      %1252 = vmatprep.subr.mxu0 0.0
      %1253 = vmatpush1.xpose.msra.mxu0 %v1219
      %1254 = vmatprep.subr.mxu0 0.0
      %1255 = vmatpush1.xpose.msra.mxu0 %v1216
      %1256 = vmatprep.subr.mxu0 0.0
      %1257 = vmatpush1.xpose.msra.mxu0 %v1213
      %1258 = vmatprep.subr.mxu0 0.0
      %1259 = vmatpush1.xpose.msra.mxu0 %v1210
      %1260 = vmatprep.subr.mxu0 0.0
      %1261 = vmatpush1.xpose.msra.mxu0 %v1207
      %1262 = vmatprep.subr.mxu0 0.0
      %1263 = vmatpush2.xpose.msra.mxu0 0.0
      %1264 = vmatprep.subr.mxu0 0.0
      %1265 = vmatpush2.xpose.msra.mxu0 0.0
      %1266 = vmatprep.subr.mxu0 0.0
      %1267 = vmatpush2.xpose.msra.mxu0 0.0
      %1268 = vmatprep.subr.mxu0 0.0
      %1269 = vmatpush2.xpose.msra.mxu0 0.0
      %1270 = vmatprep.subr.mxu0 0.0
      %1271 = vmatpush2.xpose.msra.mxu0 0.0
      %1272 = vmatprep.subr.mxu0 0.0
      %1273 = vmatpush2.xpose.msra.mxu0 0.0
      %1274 = vmatprep.subr.mxu0 0.0
      %1275 = vmatpush2.xpose.msra.mxu0 0.0
      %1276 = vmatprep.subr.mxu0 0.0
      %1277 = vmatpush2.xpose.msra.mxu0 0.0
      %1278 = vmatprep.subr.mxu0 0.0
      %1279 = vmatpush2.xpose.msra.mxu0 0.0
      %1280 = vmatprep.subr.mxu0 0.0
      %1281 = vmatpush2.xpose.msra.mxu0 0.0
      %1282 = vmatprep.subr.mxu0 0.0
      %1283 = vmatpush2.xpose.msra.mxu0 0.0
      %1284 = vmatprep.subr.mxu0 0.0
      %1285 = vmatpush2.xpose.msra.mxu0 0.0
      %1286 = vmatprep.subr.mxu0 0.0
      %1287 = vmatpush2.xpose.msra.mxu0 0.0
      %1288 = vmatprep.subr.mxu0 0.0
      %1289 = vmatpush2.xpose.msra.mxu0 0.0
      %1290 = vmatprep.subr.mxu0 0.0
      %1291 = vmatpush2.xpose.msra.mxu0 0.0
      %1292 = vmatprep.subr.mxu0 0.0
      %1293 = vmatpush2.xpose.msra.mxu0 0.0
      %1294 = vmatprep.mubr.f32.mxu0 0.0
      %1295 = vmatmul.mubr.f32.gmra.mxu0 %v1183
      %v1296 = vpop.f32.mrf.mxu0
      %v1297 = vadd.f32 0.0, %v1296
      %v1298 = vpop.f32.mrf.mxu0
      %1299 = vmatprep.mubr.f32.mxu0 0.0
      %1300 = vmatmul.mubr.f32.gmra.mxu0 %v1186
      %v1301 = vpop.f32.mrf.mxu0
      %v1302 = vadd.f32 0.0, %v1301
      %v1303 = vpop.f32.mrf.mxu0
      %1304 = vmatprep.mubr.f32.mxu0 0.0
      %1305 = vmatmul.mubr.f32.gmra.mxu0 %v1189
      %v1306 = vpop.f32.mrf.mxu0
      %v1307 = vadd.f32 0.0, %v1306
      %v1308 = vpop.f32.mrf.mxu0
      %1309 = vmatprep.mubr.f32.mxu0 0.0
      %1310 = vmatmul.mubr.f32.gmra.mxu0 %v1192
      %v1311 = vpop.f32.mrf.mxu0
      %v1312 = vadd.f32 0.0, %v1311
      %v1313 = vpop.f32.mrf.mxu0
      %1314 = vmatprep.mubr.f32.mxu0 0.0
      %1315 = vmatmul.mubr.f32.gmra.mxu0 %v1195
      %v1316 = vpop.f32.mrf.mxu0
      %v1317 = vadd.f32 0.0, %v1316
      %v1318 = vpop.f32.mrf.mxu0
      %1319 = vmatprep.mubr.f32.mxu0 0.0
      %1320 = vmatmul.mubr.f32.gmra.mxu0 %v1198
      %v1321 = vpop.f32.mrf.mxu0
      %v1322 = vadd.f32 0.0, %v1321
      %v1323 = vpop.f32.mrf.mxu0
      %1324 = vmatprep.mubr.f32.mxu0 0.0
      %1325 = vmatmul.mubr.f32.gmra.mxu0 %v1201
      %v1326 = vpop.f32.mrf.mxu0
      %v1327 = vadd.f32 0.0, %v1326
      %v1328 = vpop.f32.mrf.mxu0
      %1329 = vmatprep.mubr.f32.mxu0 0.0
      %1330 = vmatmul.mubr.f32.gmra.mxu0 %v1204
      %v1331 = vpop.f32.mrf.mxu0
      %v1332 = vadd.f32 0.0, %v1331
      %v1333 = vpop.f32.mrf.mxu0
      %1334 = vdwg.mxu0
      %vm1335 = vcmask 523264
      %v1336 = vsel %vm1335, %v838, -inf
      %1337 = vmax.xlane.f32.xlu0 %v1336
      %v1338 = vpop.xlane.xlu0 %1337
      %v1339 = vsel %vm1335, %v843, -inf
      %1340 = vmax.xlane.f32.xlu0 %v1339
      %v1341 = vpop.xlane.xlu0 %1340
      %v1342 = vsel %vm1335, %v848, -inf
      %1343 = vmax.xlane.f32.xlu0 %v1342
      %v1344 = vpop.xlane.xlu0 %1343
      %v1345 = vsel %vm1335, %v853, -inf
      %1346 = vmax.xlane.f32.xlu0 %v1345
      %v1347 = vpop.xlane.xlu0 %1346
      %v1348 = vsel %vm1335, %v858, -inf
      %1349 = vmax.xlane.f32.xlu0 %v1348
      %v1350 = vpop.xlane.xlu0 %1349
      %v1351 = vsel %vm1335, %v863, -inf
      %1352 = vmax.xlane.f32.xlu0 %v1351
      %v1353 = vpop.xlane.xlu0 %1352
      %v1354 = vsel %vm1335, %v868, -inf
      %1355 = vmax.xlane.f32.xlu0 %v1354
      %v1356 = vpop.xlane.xlu0 %1355
      %v1357 = vsel %vm1335, %v873, -inf
      %1358 = vmax.xlane.f32.xlu0 %v1357
      %v1359 = vpop.xlane.xlu0 %1358
      %v1360 = vsel %vm1335, %v991, -inf
      %1361 = vmax.xlane.f32.xlu0 %v1360
      %v1362 = vpop.xlane.xlu0 %1361
      %v1363 = vsel %vm1335, %v996, -inf
      %1364 = vmax.xlane.f32.xlu0 %v1363
      %v1365 = vpop.xlane.xlu0 %1364
      %v1366 = vsel %vm1335, %v1001, -inf
      %1367 = vmax.xlane.f32.xlu0 %v1366
      %v1368 = vpop.xlane.xlu0 %1367
      %v1369 = vsel %vm1335, %v1006, -inf
      %1370 = vmax.xlane.f32.xlu0 %v1369
      %v1371 = vpop.xlane.xlu0 %1370
      %v1372 = vsel %vm1335, %v1011, -inf
      %1373 = vmax.xlane.f32.xlu0 %v1372
      %v1374 = vpop.xlane.xlu0 %1373
      %v1375 = vsel %vm1335, %v1016, -inf
      %1376 = vmax.xlane.f32.xlu0 %v1375
      %v1377 = vpop.xlane.xlu0 %1376
      %v1378 = vsel %vm1335, %v1021, -inf
      %1379 = vmax.xlane.f32.xlu0 %v1378
      %v1380 = vpop.xlane.xlu0 %1379
      %v1381 = vsel %vm1335, %v1026, -inf
      %1382 = vmax.xlane.f32.xlu0 %v1381
      %v1383 = vpop.xlane.xlu0 %1382
      %v1384 = vsel %vm1335, %v1144, -inf
      %1385 = vmax.xlane.f32.xlu0 %v1384
      %v1386 = vpop.xlane.xlu0 %1385
      %v1387 = vsel %vm1335, %v1149, -inf
      %1388 = vmax.xlane.f32.xlu0 %v1387
      %v1389 = vpop.xlane.xlu0 %1388
      %v1390 = vsel %vm1335, %v1154, -inf
      %1391 = vmax.xlane.f32.xlu0 %v1390
      %v1392 = vpop.xlane.xlu0 %1391
      %v1393 = vsel %vm1335, %v1159, -inf
      %1394 = vmax.xlane.f32.xlu0 %v1393
      %v1395 = vpop.xlane.xlu0 %1394
      %v1396 = vsel %vm1335, %v1164, -inf
      %1397 = vmax.xlane.f32.xlu0 %v1396
      %v1398 = vpop.xlane.xlu0 %1397
      %v1399 = vsel %vm1335, %v1169, -inf
      %1400 = vmax.xlane.f32.xlu0 %v1399
      %v1401 = vpop.xlane.xlu0 %1400
      %v1402 = vsel %vm1335, %v1174, -inf
      %1403 = vmax.xlane.f32.xlu0 %v1402
      %v1404 = vpop.xlane.xlu0 %1403
      %v1405 = vsel %vm1335, %v1179, -inf
      %1406 = vmax.xlane.f32.xlu0 %v1405
      %v1407 = vpop.xlane.xlu0 %1406
      %v1408 = vsel %vm1335, %v1297, -inf
      %1409 = vmax.xlane.f32.xlu0 %v1408
      %v1410 = vpop.xlane.xlu0 %1409
      %v1411 = vsel %vm1335, %v1302, -inf
      %1412 = vmax.xlane.f32.xlu0 %v1411
      %v1413 = vpop.xlane.xlu0 %1412
      %v1414 = vsel %vm1335, %v1307, -inf
      %1415 = vmax.xlane.f32.xlu0 %v1414
      %v1416 = vpop.xlane.xlu0 %1415
      %v1417 = vsel %vm1335, %v1312, -inf
      %1418 = vmax.xlane.f32.xlu0 %v1417
      %v1419 = vpop.xlane.xlu0 %1418
      %v1420 = vsel %vm1335, %v1317, -inf
      %1421 = vmax.xlane.f32.xlu0 %v1420
      %v1422 = vpop.xlane.xlu0 %1421
      %v1423 = vsel %vm1335, %v1322, -inf
      %1424 = vmax.xlane.f32.xlu0 %v1423
      %v1425 = vpop.xlane.xlu0 %1424
      %v1426 = vsel %vm1335, %v1327, -inf
      %1427 = vmax.xlane.f32.xlu0 %v1426
      %v1428 = vpop.xlane.xlu0 %1427
      %v1429 = vsel %vm1335, %v1332, -inf
      %1430 = vmax.xlane.f32.xlu0 %v1429
      %v1431 = vpop.xlane.xlu0 %1430
      %v1432 = vsub.f32 %v838, %v1338
      %v1433 = vsub.f32 %v843, %v1341
      %v1434 = vsub.f32 %v848, %v1344
      %v1435 = vsub.f32 %v853, %v1347
      %v1436 = vsub.f32 %v858, %v1350
      %v1437 = vsub.f32 %v863, %v1353
      %v1438 = vsub.f32 %v868, %v1356
      %v1439 = vsub.f32 %v873, %v1359
      %v1440 = vsub.f32 %v991, %v1362
      %v1441 = vsub.f32 %v996, %v1365
      %v1442 = vsub.f32 %v1001, %v1368
      %v1443 = vsub.f32 %v1006, %v1371
      %v1444 = vsub.f32 %v1011, %v1374
      %v1445 = vsub.f32 %v1016, %v1377
      %v1446 = vsub.f32 %v1021, %v1380
      %v1447 = vsub.f32 %v1026, %v1383
      %v1448 = vsub.f32 %v1144, %v1386
      %v1449 = vsub.f32 %v1149, %v1389
      %v1450 = vsub.f32 %v1154, %v1392
      %v1451 = vsub.f32 %v1159, %v1395
      %v1452 = vsub.f32 %v1164, %v1398
      %v1453 = vsub.f32 %v1169, %v1401
      %v1454 = vsub.f32 %v1174, %v1404
      %v1455 = vsub.f32 %v1179, %v1407
      %v1456 = vsub.f32 %v1297, %v1410
      %v1457 = vsub.f32 %v1302, %v1413
      %v1458 = vsub.f32 %v1307, %v1416
      %v1459 = vsub.f32 %v1312, %v1419
      %v1460 = vsub.f32 %v1317, %v1422
      %v1461 = vsub.f32 %v1322, %v1425
      %v1462 = vsub.f32 %v1327, %v1428
      %v1463 = vsub.f32 %v1332, %v1431
      %v1464 = vmul.f32 %v1432, 1.442695
      %v1465 = vpow.pop %v1464
      %v1466 = vmul.f32 %v1433, 1.442695
      %v1467 = vpow.pop %v1466
      %v1468 = vmul.f32 %v1434, 1.442695
      %v1469 = vpow.pop %v1468
      %v1470 = vmul.f32 %v1435, 1.442695
      %v1471 = vpow.pop %v1470
      %v1472 = vmul.f32 %v1436, 1.442695
      %v1473 = vpow.pop %v1472
      %v1474 = vmul.f32 %v1437, 1.442695
      %v1475 = vpow.pop %v1474
      %v1476 = vmul.f32 %v1438, 1.442695
      %v1477 = vpow.pop %v1476
      %v1478 = vmul.f32 %v1439, 1.442695
      %v1479 = vpow.pop %v1478
      %v1480 = vmul.f32 %v1440, 1.442695
      %v1481 = vpow.pop %v1480
      %v1482 = vmul.f32 %v1441, 1.442695
      %v1483 = vpow.pop %v1482
      %v1484 = vmul.f32 %v1442, 1.442695
      %v1485 = vpow.pop %v1484
      %v1486 = vmul.f32 %v1443, 1.442695
      %v1487 = vpow.pop %v1486
      %v1488 = vmul.f32 %v1444, 1.442695
      %v1489 = vpow.pop %v1488
      %v1490 = vmul.f32 %v1445, 1.442695
      %v1491 = vpow.pop %v1490
      %v1492 = vmul.f32 %v1446, 1.442695
      %v1493 = vpow.pop %v1492
      %v1494 = vmul.f32 %v1447, 1.442695
      %v1495 = vpow.pop %v1494
      %v1496 = vmul.f32 %v1448, 1.442695
      %v1497 = vpow.pop %v1496
      %v1498 = vmul.f32 %v1449, 1.442695
      %v1499 = vpow.pop %v1498
      %v1500 = vmul.f32 %v1450, 1.442695
      %v1501 = vpow.pop %v1500
      %v1502 = vmul.f32 %v1451, 1.442695
      %v1503 = vpow.pop %v1502
      %v1504 = vmul.f32 %v1452, 1.442695
      %v1505 = vpow.pop %v1504
      %v1506 = vmul.f32 %v1453, 1.442695
      %v1507 = vpow.pop %v1506
      %v1508 = vmul.f32 %v1454, 1.442695
      %v1509 = vpow.pop %v1508
      %v1510 = vmul.f32 %v1455, 1.442695
      %v1511 = vpow.pop %v1510
      %v1512 = vmul.f32 %v1456, 1.442695
      %v1513 = vpow.pop %v1512
      %v1514 = vmul.f32 %v1457, 1.442695
      %v1515 = vpow.pop %v1514
      %v1516 = vmul.f32 %v1458, 1.442695
      %v1517 = vpow.pop %v1516
      %v1518 = vmul.f32 %v1459, 1.442695
      %v1519 = vpow.pop %v1518
      %v1520 = vmul.f32 %v1460, 1.442695
      %v1521 = vpow.pop %v1520
      %v1522 = vmul.f32 %v1461, 1.442695
      %v1523 = vpow.pop %v1522
      %v1524 = vmul.f32 %v1462, 1.442695
      %v1525 = vpow.pop %v1524
      %v1526 = vmul.f32 %v1463, 1.442695
      %v1527 = vpow.pop %v1526
      %v1528 = vsel %vm1335, %v1465, 0.0
      %1529 = vadd.xlane.f32.xlu0 %v1528
      %v1530 = vpop.xlane.xlu0 %1529
      %v1531 = vsel %vm1335, %v1467, 0.0
      %1532 = vadd.xlane.f32.xlu0 %v1531
      %v1533 = vpop.xlane.xlu0 %1532
      %v1534 = vsel %vm1335, %v1469, 0.0
      %1535 = vadd.xlane.f32.xlu0 %v1534
      %v1536 = vpop.xlane.xlu0 %1535
      %v1537 = vsel %vm1335, %v1471, 0.0
      %1538 = vadd.xlane.f32.xlu0 %v1537
      %v1539 = vpop.xlane.xlu0 %1538
      %v1540 = vsel %vm1335, %v1473, 0.0
      %1541 = vadd.xlane.f32.xlu0 %v1540
      %v1542 = vpop.xlane.xlu0 %1541
      %v1543 = vsel %vm1335, %v1475, 0.0
      %1544 = vadd.xlane.f32.xlu0 %v1543
      %v1545 = vpop.xlane.xlu0 %1544
      %v1546 = vsel %vm1335, %v1477, 0.0
      %1547 = vadd.xlane.f32.xlu0 %v1546
      %v1548 = vpop.xlane.xlu0 %1547
      %v1549 = vsel %vm1335, %v1479, 0.0
      %1550 = vadd.xlane.f32.xlu0 %v1549
      %v1551 = vpop.xlane.xlu0 %1550
      %v1552 = vsel %vm1335, %v1481, 0.0
      %1553 = vadd.xlane.f32.xlu0 %v1552
      %v1554 = vpop.xlane.xlu0 %1553
      %v1555 = vsel %vm1335, %v1483, 0.0
      %1556 = vadd.xlane.f32.xlu0 %v1555
      %v1557 = vpop.xlane.xlu0 %1556
      %v1558 = vsel %vm1335, %v1485, 0.0
      %1559 = vadd.xlane.f32.xlu0 %v1558
      %v1560 = vpop.xlane.xlu0 %1559
      %v1561 = vsel %vm1335, %v1487, 0.0
      %1562 = vadd.xlane.f32.xlu0 %v1561
      %v1563 = vpop.xlane.xlu0 %1562
      %v1564 = vsel %vm1335, %v1489, 0.0
      %1565 = vadd.xlane.f32.xlu0 %v1564
      %v1566 = vpop.xlane.xlu0 %1565
      %v1567 = vsel %vm1335, %v1491, 0.0
      %1568 = vadd.xlane.f32.xlu0 %v1567
      %v1569 = vpop.xlane.xlu0 %1568
      %v1570 = vsel %vm1335, %v1493, 0.0
      %1571 = vadd.xlane.f32.xlu0 %v1570
      %v1572 = vpop.xlane.xlu0 %1571
      %v1573 = vsel %vm1335, %v1495, 0.0
      %1574 = vadd.xlane.f32.xlu0 %v1573
      %v1575 = vpop.xlane.xlu0 %1574
      %v1576 = vsel %vm1335, %v1497, 0.0
      %1577 = vadd.xlane.f32.xlu0 %v1576
      %v1578 = vpop.xlane.xlu0 %1577
      %v1579 = vsel %vm1335, %v1499, 0.0
      %1580 = vadd.xlane.f32.xlu0 %v1579
      %v1581 = vpop.xlane.xlu0 %1580
      %v1582 = vsel %vm1335, %v1501, 0.0
      %1583 = vadd.xlane.f32.xlu0 %v1582
      %v1584 = vpop.xlane.xlu0 %1583
      %v1585 = vsel %vm1335, %v1503, 0.0
      %1586 = vadd.xlane.f32.xlu0 %v1585
      %v1587 = vpop.xlane.xlu0 %1586
      %v1588 = vsel %vm1335, %v1505, 0.0
      %1589 = vadd.xlane.f32.xlu0 %v1588
      %v1590 = vpop.xlane.xlu0 %1589
      %v1591 = vsel %vm1335, %v1507, 0.0
      %1592 = vadd.xlane.f32.xlu0 %v1591
      %v1593 = vpop.xlane.xlu0 %1592
      %v1594 = vsel %vm1335, %v1509, 0.0
      %1595 = vadd.xlane.f32.xlu0 %v1594
      %v1596 = vpop.xlane.xlu0 %1595
      %v1597 = vsel %vm1335, %v1511, 0.0
      %1598 = vadd.xlane.f32.xlu0 %v1597
      %v1599 = vpop.xlane.xlu0 %1598
      %v1600 = vsel %vm1335, %v1513, 0.0
      %1601 = vadd.xlane.f32.xlu0 %v1600
      %v1602 = vpop.xlane.xlu0 %1601
      %v1603 = vsel %vm1335, %v1515, 0.0
      %1604 = vadd.xlane.f32.xlu0 %v1603
      %v1605 = vpop.xlane.xlu0 %1604
      %v1606 = vsel %vm1335, %v1517, 0.0
      %1607 = vadd.xlane.f32.xlu0 %v1606
      %v1608 = vpop.xlane.xlu0 %1607
      %v1609 = vsel %vm1335, %v1519, 0.0
      %1610 = vadd.xlane.f32.xlu0 %v1609
      %v1611 = vpop.xlane.xlu0 %1610
      %v1612 = vsel %vm1335, %v1521, 0.0
      %1613 = vadd.xlane.f32.xlu0 %v1612
      %v1614 = vpop.xlane.xlu0 %1613
      %v1615 = vsel %vm1335, %v1523, 0.0
      %1616 = vadd.xlane.f32.xlu0 %v1615
      %v1617 = vpop.xlane.xlu0 %1616
      %v1618 = vsel %vm1335, %v1525, 0.0
      %1619 = vadd.xlane.f32.xlu0 %v1618
      %v1620 = vpop.xlane.xlu0 %1619
      %v1621 = vsel %vm1335, %v1527, 0.0
      %1622 = vadd.xlane.f32.xlu0 %v1621
      %v1623 = vpop.xlane.xlu0 %1622
      %v1624 = vrcp.pop %v1530
      %v1625 = vrcp.pop %v1533
      %v1626 = vrcp.pop %v1536
      %v1627 = vrcp.pop %v1539
      %v1628 = vrcp.pop %v1542
      %v1629 = vrcp.pop %v1545
      %v1630 = vrcp.pop %v1548
      %v1631 = vrcp.pop %v1551
      %v1632 = vrcp.pop %v1554
      %v1633 = vrcp.pop %v1557
      %v1634 = vrcp.pop %v1560
      %v1635 = vrcp.pop %v1563
      %v1636 = vrcp.pop %v1566
      %v1637 = vrcp.pop %v1569
      %v1638 = vrcp.pop %v1572
      %v1639 = vrcp.pop %v1575
      %v1640 = vrcp.pop %v1578
      %v1641 = vrcp.pop %v1581
      %v1642 = vrcp.pop %v1584
      %v1643 = vrcp.pop %v1587
      %v1644 = vrcp.pop %v1590
      %v1645 = vrcp.pop %v1593
      %v1646 = vrcp.pop %v1596
      %v1647 = vrcp.pop %v1599
      %v1648 = vrcp.pop %v1602
      %v1649 = vrcp.pop %v1605
      %v1650 = vrcp.pop %v1608
      %v1651 = vrcp.pop %v1611
      %v1652 = vrcp.pop %v1614
      %v1653 = vrcp.pop %v1617
      %v1654 = vrcp.pop %v1620
      %v1655 = vrcp.pop %v1623
      %v1656 = vmul.f32 %v1465, %v1624
      %v1657 = vmul.f32 %v1467, %v1625
      %v1658 = vmul.f32 %v1469, %v1626
      %v1659 = vmul.f32 %v1471, %v1627
      %v1660 = vmul.f32 %v1473, %v1628
      %v1661 = vmul.f32 %v1475, %v1629
      %v1662 = vmul.f32 %v1477, %v1630
      %v1663 = vmul.f32 %v1479, %v1631
      %v1664 = vmul.f32 %v1481, %v1632
      %v1665 = vmul.f32 %v1483, %v1633
      %v1666 = vmul.f32 %v1485, %v1634
      %v1667 = vmul.f32 %v1487, %v1635
      %v1668 = vmul.f32 %v1489, %v1636
      %v1669 = vmul.f32 %v1491, %v1637
      %v1670 = vmul.f32 %v1493, %v1638
      %v1671 = vmul.f32 %v1495, %v1639
      %v1672 = vmul.f32 %v1497, %v1640
      %v1673 = vmul.f32 %v1499, %v1641
      %v1674 = vmul.f32 %v1501, %v1642
      %v1675 = vmul.f32 %v1503, %v1643
      %v1676 = vmul.f32 %v1505, %v1644
      %v1677 = vmul.f32 %v1507, %v1645
      %v1678 = vmul.f32 %v1509, %v1646
      %v1679 = vmul.f32 %v1511, %v1647
      %v1680 = vmul.f32 %v1513, %v1648
      %v1681 = vmul.f32 %v1515, %v1649
      %v1682 = vmul.f32 %v1517, %v1650
      %v1683 = vmul.f32 %v1519, %v1651
      %v1684 = vmul.f32 %v1521, %v1652
      %v1685 = vmul.f32 %v1523, %v1653
      %v1686 = vmul.f32 %v1525, %v1654
      %v1687 = vmul.f32 %v1527, %v1655
      %v1688 = vadd.f32 %v1656, 1e-06
      %v1689 = vadd.f32 %v1657, 1e-06
      %v1690 = vadd.f32 %v1658, 1e-06
      %v1691 = vadd.f32 %v1659, 1e-06
      %v1692 = vadd.f32 %v1660, 1e-06
      %v1693 = vadd.f32 %v1661, 1e-06
      %v1694 = vadd.f32 %v1662, 1e-06
      %v1695 = vadd.f32 %v1663, 1e-06
      %v1696 = vadd.f32 %v1664, 1e-06
      %v1697 = vadd.f32 %v1665, 1e-06
      %v1698 = vadd.f32 %v1666, 1e-06
      %v1699 = vadd.f32 %v1667, 1e-06
      %v1700 = vadd.f32 %v1668, 1e-06
      %v1701 = vadd.f32 %v1669, 1e-06
      %v1702 = vadd.f32 %v1670, 1e-06
      %v1703 = vadd.f32 %v1671, 1e-06
      %v1704 = vadd.f32 %v1672, 1e-06
      %v1705 = vadd.f32 %v1673, 1e-06
      %v1706 = vadd.f32 %v1674, 1e-06
      %v1707 = vadd.f32 %v1675, 1e-06
      %v1708 = vadd.f32 %v1676, 1e-06
      %v1709 = vadd.f32 %v1677, 1e-06
      %v1710 = vadd.f32 %v1678, 1e-06
      %v1711 = vadd.f32 %v1679, 1e-06
      %v1712 = vadd.f32 %v1680, 1e-06
      %v1713 = vadd.f32 %v1681, 1e-06
      %v1714 = vadd.f32 %v1682, 1e-06
      %v1715 = vadd.f32 %v1683, 1e-06
      %v1716 = vadd.f32 %v1684, 1e-06
      %v1717 = vadd.f32 %v1685, 1e-06
      %v1718 = vadd.f32 %v1686, 1e-06
      %v1719 = vadd.f32 %v1687, 1e-06
      %v1721 = vsel %vm1335, %v1688, 0
      %v1724 = vsel %vm1335, %v1689, 0
      %v1727 = vsel %vm1335, %v1690, 0
      %v1730 = vsel %vm1335, %v1691, 0
      %v1733 = vsel %vm1335, %v1692, 0
      %v1736 = vsel %vm1335, %v1693, 0
      %v1739 = vsel %vm1335, %v1694, 0
      %v1742 = vsel %vm1335, %v1695, 0
      %1744 = vmatprep.subr.mxu0 0.0
      %1745 = vmatpush1.msra.mxu0 0.0
      %1746 = vmatprep.subr.mxu0 0.0
      %1747 = vmatpush1.msra.mxu0 0.0
      %1748 = vmatprep.subr.mxu0 0.0
      %1749 = vmatpush1.msra.mxu0 0.0
      %1750 = vmatprep.subr.mxu0 0.0
      %1751 = vmatpush1.msra.mxu0 0.0
      %1752 = vmatprep.subr.mxu0 0.0
      %1753 = vmatpush1.msra.mxu0 0.0
      %1754 = vmatprep.subr.mxu0 0.0
      %1755 = vmatpush1.msra.mxu0 0.0
      %1756 = vmatprep.subr.mxu0 0.0
      %1757 = vmatpush1.msra.mxu0 0.0
      %1758 = vmatprep.subr.mxu0 0.0
      %1759 = vmatpush1.msra.mxu0 0.0
      %1760 = vmatprep.subr.mxu0 0.0
      %1761 = vmatpush1.msra.mxu0 %v697
      %1762 = vmatprep.subr.mxu0 0.0
      %1763 = vmatpush1.msra.mxu0 %v696
      %1764 = vmatprep.subr.mxu0 0.0
      %1765 = vmatpush1.msra.mxu0 %v695
      %1766 = vmatprep.subr.mxu0 0.0
      %1767 = vmatpush1.msra.mxu0 %v694
      %1768 = vmatprep.subr.mxu0 0.0
      %1769 = vmatpush1.msra.mxu0 %v693
      %1770 = vmatprep.subr.mxu0 0.0
      %1771 = vmatpush1.msra.mxu0 %v692
      %1772 = vmatprep.subr.mxu0 0.0
      %1773 = vmatpush1.msra.mxu0 %v691
      %1774 = vmatprep.subr.mxu0 0.0
      %1775 = vmatpush1.msra.mxu0 %v690
      %1776 = vmatprep.subr.mxu0 0.0
      %1777 = vmatpush2.msra.mxu0 0.0
      %1778 = vmatprep.subr.mxu0 0.0
      %1779 = vmatpush2.msra.mxu0 0.0
      %1780 = vmatprep.subr.mxu0 0.0
      %1781 = vmatpush2.msra.mxu0 0.0
      %1782 = vmatprep.subr.mxu0 0.0
      %1783 = vmatpush2.msra.mxu0 0.0
      %1784 = vmatprep.subr.mxu0 0.0
      %1785 = vmatpush2.msra.mxu0 0.0
      %1786 = vmatprep.subr.mxu0 0.0
      %1787 = vmatpush2.msra.mxu0 0.0
      %1788 = vmatprep.subr.mxu0 0.0
      %1789 = vmatpush2.msra.mxu0 0.0
      %1790 = vmatprep.subr.mxu0 0.0
      %1791 = vmatpush2.msra.mxu0 0.0
      %1792 = vmatprep.subr.mxu0 0.0
      %1793 = vmatpush2.msra.mxu0 0.0
      %1794 = vmatprep.subr.mxu0 0.0
      %1795 = vmatpush2.msra.mxu0 0.0
      %1796 = vmatprep.subr.mxu0 0.0
      %1797 = vmatpush2.msra.mxu0 0.0
      %1798 = vmatprep.subr.mxu0 0.0
      %1799 = vmatpush2.msra.mxu0 0.0
      %1800 = vmatprep.subr.mxu0 0.0
      %1801 = vmatpush2.msra.mxu0 0.0
      %1802 = vmatprep.subr.mxu0 0.0
      %1803 = vmatpush2.msra.mxu0 0.0
      %1804 = vmatprep.subr.mxu0 0.0
      %1805 = vmatpush2.msra.mxu0 0.0
      %1806 = vmatprep.subr.mxu0 0.0
      %1807 = vmatpush2.msra.mxu0 0.0
      %1808 = vmatprep.mubr.f32.mxu0 0.0
      %1809 = vmatmul.mubr.f32.gmra.mxu0 %v1721
      %v1810 = vpop.f32.mrf.mxu0
      %v1811 = vadd.f32 0.0, %v1810
      %v1812 = vpop.f32.mrf.mxu0
      %1813 = vmatprep.mubr.f32.mxu0 0.0
      %1814 = vmatmul.mubr.f32.gmra.mxu0 %v1724
      %v1815 = vpop.f32.mrf.mxu0
      %v1816 = vadd.f32 0.0, %v1815
      %v1817 = vpop.f32.mrf.mxu0
      %1818 = vmatprep.mubr.f32.mxu0 0.0
      %1819 = vmatmul.mubr.f32.gmra.mxu0 %v1727
      %v1820 = vpop.f32.mrf.mxu0
      %v1821 = vadd.f32 0.0, %v1820
      %v1822 = vpop.f32.mrf.mxu0
      %1823 = vmatprep.mubr.f32.mxu0 0.0
      %1824 = vmatmul.mubr.f32.gmra.mxu0 %v1730
      %v1825 = vpop.f32.mrf.mxu0
      %v1826 = vadd.f32 0.0, %v1825
      %v1827 = vpop.f32.mrf.mxu0
      %1828 = vmatprep.mubr.f32.mxu0 0.0
      %1829 = vmatmul.mubr.f32.gmra.mxu0 %v1733
      %v1830 = vpop.f32.mrf.mxu0
      %v1831 = vadd.f32 0.0, %v1830
      %v1832 = vpop.f32.mrf.mxu0
      %1833 = vmatprep.mubr.f32.mxu0 0.0
      %1834 = vmatmul.mubr.f32.gmra.mxu0 %v1736
      %v1835 = vpop.f32.mrf.mxu0
      %v1836 = vadd.f32 0.0, %v1835
      %v1837 = vpop.f32.mrf.mxu0
      %1838 = vmatprep.mubr.f32.mxu0 0.0
      %1839 = vmatmul.mubr.f32.gmra.mxu0 %v1739
      %v1840 = vpop.f32.mrf.mxu0
      %v1841 = vadd.f32 0.0, %v1840
      %v1842 = vpop.f32.mrf.mxu0
      %1843 = vmatprep.mubr.f32.mxu0 0.0
      %1844 = vmatmul.mubr.f32.gmra.mxu0 %v1742
      %v1845 = vpop.f32.mrf.mxu0
      %v1846 = vadd.f32 0.0, %v1845
      %v1847 = vpop.f32.mrf.mxu0
      %1848 = vdwg.mxu0
      %v1850 = vsel %vm1335, %v1696, 0
      %v1853 = vsel %vm1335, %v1697, 0
      %v1856 = vsel %vm1335, %v1698, 0
      %v1859 = vsel %vm1335, %v1699, 0
      %v1862 = vsel %vm1335, %v1700, 0
      %v1865 = vsel %vm1335, %v1701, 0
      %v1868 = vsel %vm1335, %v1702, 0
      %v1871 = vsel %vm1335, %v1703, 0
      %1873 = vmatprep.subr.mxu0 0.0
      %1874 = vmatpush1.msra.mxu0 0.0
      %1875 = vmatprep.subr.mxu0 0.0
      %1876 = vmatpush1.msra.mxu0 0.0
      %1877 = vmatprep.subr.mxu0 0.0
      %1878 = vmatpush1.msra.mxu0 0.0
      %1879 = vmatprep.subr.mxu0 0.0
      %1880 = vmatpush1.msra.mxu0 0.0
      %1881 = vmatprep.subr.mxu0 0.0
      %1882 = vmatpush1.msra.mxu0 0.0
      %1883 = vmatprep.subr.mxu0 0.0
      %1884 = vmatpush1.msra.mxu0 0.0
      %1885 = vmatprep.subr.mxu0 0.0
      %1886 = vmatpush1.msra.mxu0 0.0
      %1887 = vmatprep.subr.mxu0 0.0
      %1888 = vmatpush1.msra.mxu0 0.0
      %1889 = vmatprep.subr.mxu0 0.0
      %1890 = vmatpush1.msra.mxu0 %v705
      %1891 = vmatprep.subr.mxu0 0.0
      %1892 = vmatpush1.msra.mxu0 %v704
      %1893 = vmatprep.subr.mxu0 0.0
      %1894 = vmatpush1.msra.mxu0 %v703
      %1895 = vmatprep.subr.mxu0 0.0
      %1896 = vmatpush1.msra.mxu0 %v702
      %1897 = vmatprep.subr.mxu0 0.0
      %1898 = vmatpush1.msra.mxu0 %v701
      %1899 = vmatprep.subr.mxu0 0.0
      %1900 = vmatpush1.msra.mxu0 %v700
      %1901 = vmatprep.subr.mxu0 0.0
      %1902 = vmatpush1.msra.mxu0 %v699
      %1903 = vmatprep.subr.mxu0 0.0
      %1904 = vmatpush1.msra.mxu0 %v698
      %1905 = vmatprep.subr.mxu0 0.0
      %1906 = vmatpush2.msra.mxu0 0.0
      %1907 = vmatprep.subr.mxu0 0.0
      %1908 = vmatpush2.msra.mxu0 0.0
      %1909 = vmatprep.subr.mxu0 0.0
      %1910 = vmatpush2.msra.mxu0 0.0
      %1911 = vmatprep.subr.mxu0 0.0
      %1912 = vmatpush2.msra.mxu0 0.0
      %1913 = vmatprep.subr.mxu0 0.0
      %1914 = vmatpush2.msra.mxu0 0.0
      %1915 = vmatprep.subr.mxu0 0.0
      %1916 = vmatpush2.msra.mxu0 0.0
      %1917 = vmatprep.subr.mxu0 0.0
      %1918 = vmatpush2.msra.mxu0 0.0
      %1919 = vmatprep.subr.mxu0 0.0
      %1920 = vmatpush2.msra.mxu0 0.0
      %1921 = vmatprep.subr.mxu0 0.0
      %1922 = vmatpush2.msra.mxu0 0.0
      %1923 = vmatprep.subr.mxu0 0.0
      %1924 = vmatpush2.msra.mxu0 0.0
      %1925 = vmatprep.subr.mxu0 0.0
      %1926 = vmatpush2.msra.mxu0 0.0
      %1927 = vmatprep.subr.mxu0 0.0
      %1928 = vmatpush2.msra.mxu0 0.0
      %1929 = vmatprep.subr.mxu0 0.0
      %1930 = vmatpush2.msra.mxu0 0.0
      %1931 = vmatprep.subr.mxu0 0.0
      %1932 = vmatpush2.msra.mxu0 0.0
      %1933 = vmatprep.subr.mxu0 0.0
      %1934 = vmatpush2.msra.mxu0 0.0
      %1935 = vmatprep.subr.mxu0 0.0
      %1936 = vmatpush2.msra.mxu0 0.0
      %1937 = vmatprep.mubr.f32.mxu0 0.0
      %1938 = vmatmul.mubr.f32.gmra.mxu0 %v1850
      %v1939 = vpop.f32.mrf.mxu0
      %v1940 = vadd.f32 0.0, %v1939
      %v1941 = vpop.f32.mrf.mxu0
      %1942 = vmatprep.mubr.f32.mxu0 0.0
      %1943 = vmatmul.mubr.f32.gmra.mxu0 %v1853
      %v1944 = vpop.f32.mrf.mxu0
      %v1945 = vadd.f32 0.0, %v1944
      %v1946 = vpop.f32.mrf.mxu0
      %1947 = vmatprep.mubr.f32.mxu0 0.0
      %1948 = vmatmul.mubr.f32.gmra.mxu0 %v1856
      %v1949 = vpop.f32.mrf.mxu0
      %v1950 = vadd.f32 0.0, %v1949
      %v1951 = vpop.f32.mrf.mxu0
      %1952 = vmatprep.mubr.f32.mxu0 0.0
      %1953 = vmatmul.mubr.f32.gmra.mxu0 %v1859
      %v1954 = vpop.f32.mrf.mxu0
      %v1955 = vadd.f32 0.0, %v1954
      %v1956 = vpop.f32.mrf.mxu0
      %1957 = vmatprep.mubr.f32.mxu0 0.0
      %1958 = vmatmul.mubr.f32.gmra.mxu0 %v1862
      %v1959 = vpop.f32.mrf.mxu0
      %v1960 = vadd.f32 0.0, %v1959
      %v1961 = vpop.f32.mrf.mxu0
      %1962 = vmatprep.mubr.f32.mxu0 0.0
      %1963 = vmatmul.mubr.f32.gmra.mxu0 %v1865
      %v1964 = vpop.f32.mrf.mxu0
      %v1965 = vadd.f32 0.0, %v1964
      %v1966 = vpop.f32.mrf.mxu0
      %1967 = vmatprep.mubr.f32.mxu0 0.0
      %1968 = vmatmul.mubr.f32.gmra.mxu0 %v1868
      %v1969 = vpop.f32.mrf.mxu0
      %v1970 = vadd.f32 0.0, %v1969
      %v1971 = vpop.f32.mrf.mxu0
      %1972 = vmatprep.mubr.f32.mxu0 0.0
      %1973 = vmatmul.mubr.f32.gmra.mxu0 %v1871
      %v1974 = vpop.f32.mrf.mxu0
      %v1975 = vadd.f32 0.0, %v1974
      %v1976 = vpop.f32.mrf.mxu0
      %1977 = vdwg.mxu0
      %v1979 = vsel %vm1335, %v1704, 0
      %v1982 = vsel %vm1335, %v1705, 0
      %v1985 = vsel %vm1335, %v1706, 0
      %v1988 = vsel %vm1335, %v1707, 0
      %v1991 = vsel %vm1335, %v1708, 0
      %v1994 = vsel %vm1335, %v1709, 0
      %v1997 = vsel %vm1335, %v1710, 0
      %v2000 = vsel %vm1335, %v1711, 0
      %2002 = vmatprep.subr.mxu0 0.0
      %2003 = vmatpush1.msra.mxu0 0.0
      %2004 = vmatprep.subr.mxu0 0.0
      %2005 = vmatpush1.msra.mxu0 0.0
      %2006 = vmatprep.subr.mxu0 0.0
      %2007 = vmatpush1.msra.mxu0 0.0
      %2008 = vmatprep.subr.mxu0 0.0
      %2009 = vmatpush1.msra.mxu0 0.0
      %2010 = vmatprep.subr.mxu0 0.0
      %2011 = vmatpush1.msra.mxu0 0.0
      %2012 = vmatprep.subr.mxu0 0.0
      %2013 = vmatpush1.msra.mxu0 0.0
      %2014 = vmatprep.subr.mxu0 0.0
      %2015 = vmatpush1.msra.mxu0 0.0
      %2016 = vmatprep.subr.mxu0 0.0
      %2017 = vmatpush1.msra.mxu0 0.0
      %2018 = vmatprep.subr.mxu0 0.0
      %2019 = vmatpush1.msra.mxu0 %v713
      %2020 = vmatprep.subr.mxu0 0.0
      %2021 = vmatpush1.msra.mxu0 %v712
      %2022 = vmatprep.subr.mxu0 0.0
      %2023 = vmatpush1.msra.mxu0 %v711
      %2024 = vmatprep.subr.mxu0 0.0
      %2025 = vmatpush1.msra.mxu0 %v710
      %2026 = vmatprep.subr.mxu0 0.0
      %2027 = vmatpush1.msra.mxu0 %v709
      %2028 = vmatprep.subr.mxu0 0.0
      %2029 = vmatpush1.msra.mxu0 %v708
      %2030 = vmatprep.subr.mxu0 0.0
      %2031 = vmatpush1.msra.mxu0 %v707
      %2032 = vmatprep.subr.mxu0 0.0
      %2033 = vmatpush1.msra.mxu0 %v706
      %2034 = vmatprep.subr.mxu0 0.0
      %2035 = vmatpush2.msra.mxu0 0.0
      %2036 = vmatprep.subr.mxu0 0.0
      %2037 = vmatpush2.msra.mxu0 0.0
      %2038 = vmatprep.subr.mxu0 0.0
      %2039 = vmatpush2.msra.mxu0 0.0
      %2040 = vmatprep.subr.mxu0 0.0
      %2041 = vmatpush2.msra.mxu0 0.0
      %2042 = vmatprep.subr.mxu0 0.0
      %2043 = vmatpush2.msra.mxu0 0.0
      %2044 = vmatprep.subr.mxu0 0.0
      %2045 = vmatpush2.msra.mxu0 0.0
      %2046 = vmatprep.subr.mxu0 0.0
      %2047 = vmatpush2.msra.mxu0 0.0
      %2048 = vmatprep.subr.mxu0 0.0
      %2049 = vmatpush2.msra.mxu0 0.0
      %2050 = vmatprep.subr.mxu0 0.0
      %2051 = vmatpush2.msra.mxu0 0.0
      %2052 = vmatprep.subr.mxu0 0.0
      %2053 = vmatpush2.msra.mxu0 0.0
      %2054 = vmatprep.subr.mxu0 0.0
      %2055 = vmatpush2.msra.mxu0 0.0
      %2056 = vmatprep.subr.mxu0 0.0
      %2057 = vmatpush2.msra.mxu0 0.0
      %2058 = vmatprep.subr.mxu0 0.0
      %2059 = vmatpush2.msra.mxu0 0.0
      %2060 = vmatprep.subr.mxu0 0.0
      %2061 = vmatpush2.msra.mxu0 0.0
      %2062 = vmatprep.subr.mxu0 0.0
      %2063 = vmatpush2.msra.mxu0 0.0
      %2064 = vmatprep.subr.mxu0 0.0
      %2065 = vmatpush2.msra.mxu0 0.0
      %2066 = vmatprep.mubr.f32.mxu0 0.0
      %2067 = vmatmul.mubr.f32.gmra.mxu0 %v1979
      %v2068 = vpop.f32.mrf.mxu0
      %v2069 = vadd.f32 0.0, %v2068
      %v2070 = vpop.f32.mrf.mxu0
      %2071 = vmatprep.mubr.f32.mxu0 0.0
      %2072 = vmatmul.mubr.f32.gmra.mxu0 %v1982
      %v2073 = vpop.f32.mrf.mxu0
      %v2074 = vadd.f32 0.0, %v2073
      %v2075 = vpop.f32.mrf.mxu0
      %2076 = vmatprep.mubr.f32.mxu0 0.0
      %2077 = vmatmul.mubr.f32.gmra.mxu0 %v1985
      %v2078 = vpop.f32.mrf.mxu0
      %v2079 = vadd.f32 0.0, %v2078
      %v2080 = vpop.f32.mrf.mxu0
      %2081 = vmatprep.mubr.f32.mxu0 0.0
      %2082 = vmatmul.mubr.f32.gmra.mxu0 %v1988
      %v2083 = vpop.f32.mrf.mxu0
      %v2084 = vadd.f32 0.0, %v2083
      %v2085 = vpop.f32.mrf.mxu0
      %2086 = vmatprep.mubr.f32.mxu0 0.0
      %2087 = vmatmul.mubr.f32.gmra.mxu0 %v1991
      %v2088 = vpop.f32.mrf.mxu0
      %v2089 = vadd.f32 0.0, %v2088
      %v2090 = vpop.f32.mrf.mxu0
      %2091 = vmatprep.mubr.f32.mxu0 0.0
      %2092 = vmatmul.mubr.f32.gmra.mxu0 %v1994
      %v2093 = vpop.f32.mrf.mxu0
      %v2094 = vadd.f32 0.0, %v2093
      %v2095 = vpop.f32.mrf.mxu0
      %2096 = vmatprep.mubr.f32.mxu0 0.0
      %2097 = vmatmul.mubr.f32.gmra.mxu0 %v1997
      %v2098 = vpop.f32.mrf.mxu0
      %v2099 = vadd.f32 0.0, %v2098
      %v2100 = vpop.f32.mrf.mxu0
      %2101 = vmatprep.mubr.f32.mxu0 0.0
      %2102 = vmatmul.mubr.f32.gmra.mxu0 %v2000
      %v2103 = vpop.f32.mrf.mxu0
      %v2104 = vadd.f32 0.0, %v2103
      %v2105 = vpop.f32.mrf.mxu0
      %2106 = vdwg.mxu0
      %v2108 = vsel %vm1335, %v1712, 0
      %v2111 = vsel %vm1335, %v1713, 0
      %v2114 = vsel %vm1335, %v1714, 0
      %v2117 = vsel %vm1335, %v1715, 0
      %v2120 = vsel %vm1335, %v1716, 0
      %v2123 = vsel %vm1335, %v1717, 0
      %v2126 = vsel %vm1335, %v1718, 0
      %v2129 = vsel %vm1335, %v1719, 0
      %2131 = vmatprep.subr.mxu0 0.0
      %2132 = vmatpush1.msra.mxu0 0.0
      %2133 = vmatprep.subr.mxu0 0.0
      %2134 = vmatpush1.msra.mxu0 0.0
      %2135 = vmatprep.subr.mxu0 0.0
      %2136 = vmatpush1.msra.mxu0 0.0
      %2137 = vmatprep.subr.mxu0 0.0
      %2138 = vmatpush1.msra.mxu0 0.0
      %2139 = vmatprep.subr.mxu0 0.0
      %2140 = vmatpush1.msra.mxu0 0.0
      %2141 = vmatprep.subr.mxu0 0.0
      %2142 = vmatpush1.msra.mxu0 0.0
      %2143 = vmatprep.subr.mxu0 0.0
      %2144 = vmatpush1.msra.mxu0 0.0
      %2145 = vmatprep.subr.mxu0 0.0
      %2146 = vmatpush1.msra.mxu0 0.0
      %2147 = vmatprep.subr.mxu0 0.0
      %2148 = vmatpush1.msra.mxu0 %v721
      %2149 = vmatprep.subr.mxu0 0.0
      %2150 = vmatpush1.msra.mxu0 %v720
      %2151 = vmatprep.subr.mxu0 0.0
      %2152 = vmatpush1.msra.mxu0 %v719
      %2153 = vmatprep.subr.mxu0 0.0
      %2154 = vmatpush1.msra.mxu0 %v718
      %2155 = vmatprep.subr.mxu0 0.0
      %2156 = vmatpush1.msra.mxu0 %v717
      %2157 = vmatprep.subr.mxu0 0.0
      %2158 = vmatpush1.msra.mxu0 %v716
      %2159 = vmatprep.subr.mxu0 0.0
      %2160 = vmatpush1.msra.mxu0 %v715
      %2161 = vmatprep.subr.mxu0 0.0
      %2162 = vmatpush1.msra.mxu0 %v714
      %2163 = vmatprep.subr.mxu0 0.0
      %2164 = vmatpush2.msra.mxu0 0.0
      %2165 = vmatprep.subr.mxu0 0.0
      %2166 = vmatpush2.msra.mxu0 0.0
      %2167 = vmatprep.subr.mxu0 0.0
      %2168 = vmatpush2.msra.mxu0 0.0
      %2169 = vmatprep.subr.mxu0 0.0
      %2170 = vmatpush2.msra.mxu0 0.0
      %2171 = vmatprep.subr.mxu0 0.0
      %2172 = vmatpush2.msra.mxu0 0.0
      %2173 = vmatprep.subr.mxu0 0.0
      %2174 = vmatpush2.msra.mxu0 0.0
      %2175 = vmatprep.subr.mxu0 0.0
      %2176 = vmatpush2.msra.mxu0 0.0
      %2177 = vmatprep.subr.mxu0 0.0
      %2178 = vmatpush2.msra.mxu0 0.0
      %2179 = vmatprep.subr.mxu0 0.0
      %2180 = vmatpush2.msra.mxu0 0.0
      %2181 = vmatprep.subr.mxu0 0.0
      %2182 = vmatpush2.msra.mxu0 0.0
      %2183 = vmatprep.subr.mxu0 0.0
      %2184 = vmatpush2.msra.mxu0 0.0
      %2185 = vmatprep.subr.mxu0 0.0
      %2186 = vmatpush2.msra.mxu0 0.0
      %2187 = vmatprep.subr.mxu0 0.0
      %2188 = vmatpush2.msra.mxu0 0.0
      %2189 = vmatprep.subr.mxu0 0.0
      %2190 = vmatpush2.msra.mxu0 0.0
      %2191 = vmatprep.subr.mxu0 0.0
      %2192 = vmatpush2.msra.mxu0 0.0
      %2193 = vmatprep.subr.mxu0 0.0
      %2194 = vmatpush2.msra.mxu0 0.0
      %2195 = vmatprep.mubr.f32.mxu0 0.0
      %2196 = vmatmul.mubr.f32.gmra.mxu0 %v2108
      %v2197 = vpop.f32.mrf.mxu0
      %v2198 = vadd.f32 0.0, %v2197
      %v2199 = vpop.f32.mrf.mxu0
      %2200 = vmatprep.mubr.f32.mxu0 0.0
      %2201 = vmatmul.mubr.f32.gmra.mxu0 %v2111
      %v2202 = vpop.f32.mrf.mxu0
      %v2203 = vadd.f32 0.0, %v2202
      %v2204 = vpop.f32.mrf.mxu0
      %2205 = vmatprep.mubr.f32.mxu0 0.0
      %2206 = vmatmul.mubr.f32.gmra.mxu0 %v2114
      %v2207 = vpop.f32.mrf.mxu0
      %v2208 = vadd.f32 0.0, %v2207
      %v2209 = vpop.f32.mrf.mxu0
      %2210 = vmatprep.mubr.f32.mxu0 0.0
      %2211 = vmatmul.mubr.f32.gmra.mxu0 %v2117
      %v2212 = vpop.f32.mrf.mxu0
      %v2213 = vadd.f32 0.0, %v2212
      %v2214 = vpop.f32.mrf.mxu0
      %2215 = vmatprep.mubr.f32.mxu0 0.0
      %2216 = vmatmul.mubr.f32.gmra.mxu0 %v2120
      %v2217 = vpop.f32.mrf.mxu0
      %v2218 = vadd.f32 0.0, %v2217
      %v2219 = vpop.f32.mrf.mxu0
      %2220 = vmatprep.mubr.f32.mxu0 0.0
      %2221 = vmatmul.mubr.f32.gmra.mxu0 %v2123
      %v2222 = vpop.f32.mrf.mxu0
      %v2223 = vadd.f32 0.0, %v2222
      %v2224 = vpop.f32.mrf.mxu0
      %2225 = vmatprep.mubr.f32.mxu0 0.0
      %2226 = vmatmul.mubr.f32.gmra.mxu0 %v2126
      %v2227 = vpop.f32.mrf.mxu0
      %v2228 = vadd.f32 0.0, %v2227
      %v2229 = vpop.f32.mrf.mxu0
      %2230 = vmatprep.mubr.f32.mxu0 0.0
      %2231 = vmatmul.mubr.f32.gmra.mxu0 %v2129
      %v2232 = vpop.f32.mrf.mxu0
      %v2233 = vadd.f32 0.0, %v2232
      %v2234 = vpop.f32.mrf.mxu0
      %2235 = vdwg.mxu0
      %2236 = vst.msk [vmem:[%s610] sm:$0xff] %vm722, %v1811
      %2237 = vst.msk [vmem:[%s610 + $0x8] sm:$0xff] %vm722, %v1816
      %2238 = vst.msk [vmem:[%s610 + $0x10] sm:$0xff] %vm722, %v1821
      %2239 = vst.msk [vmem:[%s610 + $0x18] sm:$0xff] %vm722, %v1826
      %2240 = vst.msk [vmem:[%s610 + $0x20] sm:$0xff] %vm722, %v1831
      %2241 = vst.msk [vmem:[%s610 + $0x28] sm:$0xff] %vm722, %v1836
      %2242 = vst.msk [vmem:[%s610 + $0x30] sm:$0xff] %vm722, %v1841
      %2243 = vst.msk [vmem:[%s610 + $0x38] sm:$0xff] %vm722, %v1846
      %2244 = vst.msk [vmem:[%s610 + $0x40] sm:$0xff] %vm722, %v1940
      %2245 = vst.msk [vmem:[%s610 + $0x48] sm:$0xff] %vm722, %v1945
      %2246 = vst.msk [vmem:[%s610 + $0x50] sm:$0xff] %vm722, %v1950
      %2247 = vst.msk [vmem:[%s610 + $0x58] sm:$0xff] %vm722, %v1955
      %2248 = vst.msk [vmem:[%s610 + $0x60] sm:$0xff] %vm722, %v1960
      %2249 = vst.msk [vmem:[%s610 + $0x68] sm:$0xff] %vm722, %v1965
      %2250 = vst.msk [vmem:[%s610 + $0x70] sm:$0xff] %vm722, %v1970
      %2251 = vst.msk [vmem:[%s610 + $0x78] sm:$0xff] %vm722, %v1975
      %2252 = vst.msk [vmem:[%s610 + $0x80] sm:$0xff] %vm722, %v2069
      %2253 = vst.msk [vmem:[%s610 + $0x88] sm:$0xff] %vm722, %v2074
      %2254 = vst.msk [vmem:[%s610 + $0x90] sm:$0xff] %vm722, %v2079
      %2255 = vst.msk [vmem:[%s610 + $0x98] sm:$0xff] %vm722, %v2084
      %2256 = vst.msk [vmem:[%s610 + $0xa0] sm:$0xff] %vm722, %v2089
      %2257 = vst.msk [vmem:[%s610 + $0xa8] sm:$0xff] %vm722, %v2094
      %2258 = vst.msk [vmem:[%s610 + $0xb0] sm:$0xff] %vm722, %v2099
      %2259 = vst.msk [vmem:[%s610 + $0xb8] sm:$0xff] %vm722, %v2104
      %2260 = vst.msk [vmem:[%s610 + $0xc0] sm:$0xff] %vm722, %v2198
      %2261 = vst.msk [vmem:[%s610 + $0xc8] sm:$0xff] %vm722, %v2203
      %2262 = vst.msk [vmem:[%s610 + $0xd0] sm:$0xff] %vm722, %v2208
      %2263 = vst.msk [vmem:[%s610 + $0xd8] sm:$0xff] %vm722, %v2213
      %2264 = vst.msk [vmem:[%s610 + $0xe0] sm:$0xff] %vm722, %v2218
      %2265 = vst.msk [vmem:[%s610 + $0xe8] sm:$0xff] %vm722, %v2223
      %2266 = vst.msk [vmem:[%s610 + $0xf0] sm:$0xff] %vm722, %v2228
      %2267 = vst.msk [vmem:[%s610 + $0xf8] sm:$0xff] %vm722, %v2233
      %v2268 = vld [vmem:[%s568] sm:$0xff]
      %v2269 = vld [vmem:[%s568 + $0x8] sm:$0xff]
      %v2270 = vld [vmem:[%s568 + $0x10] sm:$0xff]
      %v2271 = vld [vmem:[%s568 + $0x18] sm:$0xff]
      %v2272 = vld [vmem:[%s568 + $0x20] sm:$0xff]
      %v2273 = vld [vmem:[%s568 + $0x28] sm:$0xff]
      %v2274 = vld [vmem:[%s568 + $0x30] sm:$0xff]
      %v2275 = vld [vmem:[%s568 + $0x38] sm:$0xff]
      %v2276 = vld [vmem:[%s568 + $0x40] sm:$0xff]
      %v2277 = vld [vmem:[%s568 + $0x48] sm:$0xff]
      %v2278 = vld [vmem:[%s568 + $0x50] sm:$0xff]
      %v2279 = vld [vmem:[%s568 + $0x58] sm:$0xff]
      %v2280 = vld [vmem:[%s568 + $0x60] sm:$0xff]
      %v2281 = vld [vmem:[%s568 + $0x68] sm:$0xff]
      %v2282 = vld [vmem:[%s568 + $0x70] sm:$0xff]
      %v2283 = vld [vmem:[%s568 + $0x78] sm:$0xff]
      %v2284 = vld [vmem:[%s568 + $0x80] sm:$0xff]
      %v2285 = vld [vmem:[%s568 + $0x88] sm:$0xff]
      %v2286 = vld [vmem:[%s568 + $0x90] sm:$0xff]
      %v2287 = vld [vmem:[%s568 + $0x98] sm:$0xff]
      %v2288 = vld [vmem:[%s568 + $0xa0] sm:$0xff]
      %v2289 = vld [vmem:[%s568 + $0xa8] sm:$0xff]
      %v2290 = vld [vmem:[%s568 + $0xb0] sm:$0xff]
      %v2291 = vld [vmem:[%s568 + $0xb8] sm:$0xff]
      %v2292 = vld [vmem:[%s568 + $0xc0] sm:$0xff]
      %v2293 = vld [vmem:[%s568 + $0xc8] sm:$0xff]
      %v2294 = vld [vmem:[%s568 + $0xd0] sm:$0xff]
      %v2295 = vld [vmem:[%s568 + $0xd8] sm:$0xff]
      %v2296 = vld [vmem:[%s568 + $0xe0] sm:$0xff]
      %v2297 = vld [vmem:[%s568 + $0xe8] sm:$0xff]
      %v2298 = vld [vmem:[%s568 + $0xf0] sm:$0xff]
      %v2299 = vld [vmem:[%s568 + $0xf8] sm:$0xff]
      %v2300 = vld [vmem:[%s575] sm:$0xff]
      %v2301 = vld [vmem:[%s575 + $0x8] sm:$0xff]
      %v2302 = vld [vmem:[%s575 + $0x10] sm:$0xff]
      %v2303 = vld [vmem:[%s575 + $0x18] sm:$0xff]
      %v2304 = vld [vmem:[%s575 + $0x20] sm:$0xff]
      %v2305 = vld [vmem:[%s575 + $0x28] sm:$0xff]
      %v2306 = vld [vmem:[%s575 + $0x30] sm:$0xff]
      %v2307 = vld [vmem:[%s575 + $0x38] sm:$0xff]
      %v2308 = vld [vmem:[%s575 + $0x40] sm:$0xff]
      %v2309 = vld [vmem:[%s575 + $0x48] sm:$0xff]
      %v2310 = vld [vmem:[%s575 + $0x50] sm:$0xff]
      %v2311 = vld [vmem:[%s575 + $0x58] sm:$0xff]
      %v2312 = vld [vmem:[%s575 + $0x60] sm:$0xff]
      %v2313 = vld [vmem:[%s575 + $0x68] sm:$0xff]
      %v2314 = vld [vmem:[%s575 + $0x70] sm:$0xff]
      %v2315 = vld [vmem:[%s575 + $0x78] sm:$0xff]
      %v2316 = vld [vmem:[%s575 + $0x80] sm:$0xff]
      %v2317 = vld [vmem:[%s575 + $0x88] sm:$0xff]
      %v2318 = vld [vmem:[%s575 + $0x90] sm:$0xff]
      %v2319 = vld [vmem:[%s575 + $0x98] sm:$0xff]
      %v2320 = vld [vmem:[%s575 + $0xa0] sm:$0xff]
      %v2321 = vld [vmem:[%s575 + $0xa8] sm:$0xff]
      %v2322 = vld [vmem:[%s575 + $0xb0] sm:$0xff]
      %v2323 = vld [vmem:[%s575 + $0xb8] sm:$0xff]
      %v2324 = vld [vmem:[%s575 + $0xc0] sm:$0xff]
      %v2325 = vld [vmem:[%s575 + $0xc8] sm:$0xff]
      %v2326 = vld [vmem:[%s575 + $0xd0] sm:$0xff]
      %v2327 = vld [vmem:[%s575 + $0xd8] sm:$0xff]
      %v2328 = vld [vmem:[%s575 + $0xe0] sm:$0xff]
      %v2329 = vld [vmem:[%s575 + $0xe8] sm:$0xff]
      %v2330 = vld [vmem:[%s575 + $0xf0] sm:$0xff]
      %v2331 = vld [vmem:[%s575 + $0xf8] sm:$0xff]
      %v2332 = vld [vmem:[%s582] sm:$0xff]
      %v2333 = vld [vmem:[%s582 + $0x8] sm:$0xff]
      %v2334 = vld [vmem:[%s582 + $0x10] sm:$0xff]
      %v2335 = vld [vmem:[%s582 + $0x18] sm:$0xff]
      %v2336 = vld [vmem:[%s582 + $0x20] sm:$0xff]
      %v2337 = vld [vmem:[%s582 + $0x28] sm:$0xff]
      %v2338 = vld [vmem:[%s582 + $0x30] sm:$0xff]
      %v2339 = vld [vmem:[%s582 + $0x38] sm:$0xff]
      %v2340 = vld [vmem:[%s582 + $0x40] sm:$0xff]
      %v2341 = vld [vmem:[%s582 + $0x48] sm:$0xff]
      %v2342 = vld [vmem:[%s582 + $0x50] sm:$0xff]
      %v2343 = vld [vmem:[%s582 + $0x58] sm:$0xff]
      %v2344 = vld [vmem:[%s582 + $0x60] sm:$0xff]
      %v2345 = vld [vmem:[%s582 + $0x68] sm:$0xff]
      %v2346 = vld [vmem:[%s582 + $0x70] sm:$0xff]
      %v2347 = vld [vmem:[%s582 + $0x78] sm:$0xff]
      %v2348 = vld [vmem:[%s582 + $0x80] sm:$0xff]
      %v2349 = vld [vmem:[%s582 + $0x88] sm:$0xff]
      %v2350 = vld [vmem:[%s582 + $0x90] sm:$0xff]
      %v2351 = vld [vmem:[%s582 + $0x98] sm:$0xff]
      %v2352 = vld [vmem:[%s582 + $0xa0] sm:$0xff]
      %v2353 = vld [vmem:[%s582 + $0xa8] sm:$0xff]
      %v2354 = vld [vmem:[%s582 + $0xb0] sm:$0xff]
      %v2355 = vld [vmem:[%s582 + $0xb8] sm:$0xff]
      %v2356 = vld [vmem:[%s582 + $0xc0] sm:$0xff]
      %v2357 = vld [vmem:[%s582 + $0xc8] sm:$0xff]
      %v2358 = vld [vmem:[%s582 + $0xd0] sm:$0xff]
      %v2359 = vld [vmem:[%s582 + $0xd8] sm:$0xff]
      %v2360 = vld [vmem:[%s582 + $0xe0] sm:$0xff]
      %v2361 = vld [vmem:[%s582 + $0xe8] sm:$0xff]
      %v2362 = vld [vmem:[%s582 + $0xf0] sm:$0xff]
      %v2363 = vld [vmem:[%s582 + $0xf8] sm:$0xff]
      %v2365 = vsel %vm722, %v2268, 0
      %v2368 = vsel %vm722, %v2269, 0
      %v2371 = vsel %vm722, %v2270, 0
      %v2374 = vsel %vm722, %v2271, 0
      %v2377 = vsel %vm722, %v2272, 0
      %v2380 = vsel %vm722, %v2273, 0
      %v2383 = vsel %vm722, %v2274, 0
      %v2386 = vsel %vm722, %v2275, 0
      %v2389 = vsel %vm722, %v2300, 0
      %v2392 = vsel %vm722, %v2301, 0
      %v2395 = vsel %vm722, %v2302, 0
      %v2398 = vsel %vm722, %v2303, 0
      %v2401 = vsel %vm722, %v2304, 0
      %v2404 = vsel %vm722, %v2305, 0
      %v2407 = vsel %vm722, %v2306, 0
      %v2410 = vsel %vm722, %v2307, 0
      %2412 = vmatprep.subr.mxu0 0.0
      %2413 = vmatpush1.xpose.msra.mxu0 0.0
      %2414 = vmatprep.subr.mxu0 0.0
      %2415 = vmatpush1.xpose.msra.mxu0 0.0
      %2416 = vmatprep.subr.mxu0 0.0
      %2417 = vmatpush1.xpose.msra.mxu0 0.0
      %2418 = vmatprep.subr.mxu0 0.0
      %2419 = vmatpush1.xpose.msra.mxu0 0.0
      %2420 = vmatprep.subr.mxu0 0.0
      %2421 = vmatpush1.xpose.msra.mxu0 0.0
      %2422 = vmatprep.subr.mxu0 0.0
      %2423 = vmatpush1.xpose.msra.mxu0 0.0
      %2424 = vmatprep.subr.mxu0 0.0
      %2425 = vmatpush1.xpose.msra.mxu0 0.0
      %2426 = vmatprep.subr.mxu0 0.0
      %2427 = vmatpush1.xpose.msra.mxu0 0.0
      %2428 = vmatprep.subr.mxu0 0.0
      %2429 = vmatpush1.xpose.msra.mxu0 %v2410
      %2430 = vmatprep.subr.mxu0 0.0
      %2431 = vmatpush1.xpose.msra.mxu0 %v2407
      %2432 = vmatprep.subr.mxu0 0.0
      %2433 = vmatpush1.xpose.msra.mxu0 %v2404
      %2434 = vmatprep.subr.mxu0 0.0
      %2435 = vmatpush1.xpose.msra.mxu0 %v2401
      %2436 = vmatprep.subr.mxu0 0.0
      %2437 = vmatpush1.xpose.msra.mxu0 %v2398
      %2438 = vmatprep.subr.mxu0 0.0
      %2439 = vmatpush1.xpose.msra.mxu0 %v2395
      %2440 = vmatprep.subr.mxu0 0.0
      %2441 = vmatpush1.xpose.msra.mxu0 %v2392
      %2442 = vmatprep.subr.mxu0 0.0
      %2443 = vmatpush1.xpose.msra.mxu0 %v2389
      %2444 = vmatprep.subr.mxu0 0.0
      %2445 = vmatpush2.xpose.msra.mxu0 0.0
      %2446 = vmatprep.subr.mxu0 0.0
      %2447 = vmatpush2.xpose.msra.mxu0 0.0
      %2448 = vmatprep.subr.mxu0 0.0
      %2449 = vmatpush2.xpose.msra.mxu0 0.0
      %2450 = vmatprep.subr.mxu0 0.0
      %2451 = vmatpush2.xpose.msra.mxu0 0.0
      %2452 = vmatprep.subr.mxu0 0.0
      %2453 = vmatpush2.xpose.msra.mxu0 0.0
      %2454 = vmatprep.subr.mxu0 0.0
      %2455 = vmatpush2.xpose.msra.mxu0 0.0
      %2456 = vmatprep.subr.mxu0 0.0
      %2457 = vmatpush2.xpose.msra.mxu0 0.0
      %2458 = vmatprep.subr.mxu0 0.0
      %2459 = vmatpush2.xpose.msra.mxu0 0.0
      %2460 = vmatprep.subr.mxu0 0.0
      %2461 = vmatpush2.xpose.msra.mxu0 0.0
      %2462 = vmatprep.subr.mxu0 0.0
      %2463 = vmatpush2.xpose.msra.mxu0 0.0
      %2464 = vmatprep.subr.mxu0 0.0
      %2465 = vmatpush2.xpose.msra.mxu0 0.0
      %2466 = vmatprep.subr.mxu0 0.0
      %2467 = vmatpush2.xpose.msra.mxu0 0.0
      %2468 = vmatprep.subr.mxu0 0.0
      %2469 = vmatpush2.xpose.msra.mxu0 0.0
      %2470 = vmatprep.subr.mxu0 0.0
      %2471 = vmatpush2.xpose.msra.mxu0 0.0
      %2472 = vmatprep.subr.mxu0 0.0
      %2473 = vmatpush2.xpose.msra.mxu0 0.0
      %2474 = vmatprep.subr.mxu0 0.0
      %2475 = vmatpush2.xpose.msra.mxu0 0.0
      %2476 = vmatprep.mubr.f32.mxu0 0.0
      %2477 = vmatmul.mubr.f32.gmra.mxu0 %v2365
      %v2478 = vpop.f32.mrf.mxu0
      %v2479 = vadd.f32 0.0, %v2478
      %v2480 = vpop.f32.mrf.mxu0
      %2481 = vmatprep.mubr.f32.mxu0 0.0
      %2482 = vmatmul.mubr.f32.gmra.mxu0 %v2368
      %v2483 = vpop.f32.mrf.mxu0
      %v2484 = vadd.f32 0.0, %v2483
      %v2485 = vpop.f32.mrf.mxu0
      %2486 = vmatprep.mubr.f32.mxu0 0.0
      %2487 = vmatmul.mubr.f32.gmra.mxu0 %v2371
      %v2488 = vpop.f32.mrf.mxu0
      %v2489 = vadd.f32 0.0, %v2488
      %v2490 = vpop.f32.mrf.mxu0
      %2491 = vmatprep.mubr.f32.mxu0 0.0
      %2492 = vmatmul.mubr.f32.gmra.mxu0 %v2374
      %v2493 = vpop.f32.mrf.mxu0
      %v2494 = vadd.f32 0.0, %v2493
      %v2495 = vpop.f32.mrf.mxu0
      %2496 = vmatprep.mubr.f32.mxu0 0.0
      %2497 = vmatmul.mubr.f32.gmra.mxu0 %v2377
      %v2498 = vpop.f32.mrf.mxu0
      %v2499 = vadd.f32 0.0, %v2498
      %v2500 = vpop.f32.mrf.mxu0
      %2501 = vmatprep.mubr.f32.mxu0 0.0
      %2502 = vmatmul.mubr.f32.gmra.mxu0 %v2380
      %v2503 = vpop.f32.mrf.mxu0
      %v2504 = vadd.f32 0.0, %v2503
      %v2505 = vpop.f32.mrf.mxu0
      %2506 = vmatprep.mubr.f32.mxu0 0.0
      %2507 = vmatmul.mubr.f32.gmra.mxu0 %v2383
      %v2508 = vpop.f32.mrf.mxu0
      %v2509 = vadd.f32 0.0, %v2508
      %v2510 = vpop.f32.mrf.mxu0
      %2511 = vmatprep.mubr.f32.mxu0 0.0
      %2512 = vmatmul.mubr.f32.gmra.mxu0 %v2386
      %v2513 = vpop.f32.mrf.mxu0
      %v2514 = vadd.f32 0.0, %v2513
      %v2515 = vpop.f32.mrf.mxu0
      %2516 = vdwg.mxu0
      %v2518 = vsel %vm722, %v2276, 0
      %v2521 = vsel %vm722, %v2277, 0
      %v2524 = vsel %vm722, %v2278, 0
      %v2527 = vsel %vm722, %v2279, 0
      %v2530 = vsel %vm722, %v2280, 0
      %v2533 = vsel %vm722, %v2281, 0
      %v2536 = vsel %vm722, %v2282, 0
      %v2539 = vsel %vm722, %v2283, 0
      %v2542 = vsel %vm722, %v2308, 0
      %v2545 = vsel %vm722, %v2309, 0
      %v2548 = vsel %vm722, %v2310, 0
      %v2551 = vsel %vm722, %v2311, 0
      %v2554 = vsel %vm722, %v2312, 0
      %v2557 = vsel %vm722, %v2313, 0
      %v2560 = vsel %vm722, %v2314, 0
      %v2563 = vsel %vm722, %v2315, 0
      %2565 = vmatprep.subr.mxu0 0.0
      %2566 = vmatpush1.xpose.msra.mxu0 0.0
      %2567 = vmatprep.subr.mxu0 0.0
      %2568 = vmatpush1.xpose.msra.mxu0 0.0
      %2569 = vmatprep.subr.mxu0 0.0
      %2570 = vmatpush1.xpose.msra.mxu0 0.0
      %2571 = vmatprep.subr.mxu0 0.0
      %2572 = vmatpush1.xpose.msra.mxu0 0.0
      %2573 = vmatprep.subr.mxu0 0.0
      %2574 = vmatpush1.xpose.msra.mxu0 0.0
      %2575 = vmatprep.subr.mxu0 0.0
      %2576 = vmatpush1.xpose.msra.mxu0 0.0
      %2577 = vmatprep.subr.mxu0 0.0
      %2578 = vmatpush1.xpose.msra.mxu0 0.0
      %2579 = vmatprep.subr.mxu0 0.0
      %2580 = vmatpush1.xpose.msra.mxu0 0.0
      %2581 = vmatprep.subr.mxu0 0.0
      %2582 = vmatpush1.xpose.msra.mxu0 %v2563
      %2583 = vmatprep.subr.mxu0 0.0
      %2584 = vmatpush1.xpose.msra.mxu0 %v2560
      %2585 = vmatprep.subr.mxu0 0.0
      %2586 = vmatpush1.xpose.msra.mxu0 %v2557
      %2587 = vmatprep.subr.mxu0 0.0
      %2588 = vmatpush1.xpose.msra.mxu0 %v2554
      %2589 = vmatprep.subr.mxu0 0.0
      %2590 = vmatpush1.xpose.msra.mxu0 %v2551
      %2591 = vmatprep.subr.mxu0 0.0
      %2592 = vmatpush1.xpose.msra.mxu0 %v2548
      %2593 = vmatprep.subr.mxu0 0.0
      %2594 = vmatpush1.xpose.msra.mxu0 %v2545
      %2595 = vmatprep.subr.mxu0 0.0
      %2596 = vmatpush1.xpose.msra.mxu0 %v2542
      %2597 = vmatprep.subr.mxu0 0.0
      %2598 = vmatpush2.xpose.msra.mxu0 0.0
      %2599 = vmatprep.subr.mxu0 0.0
      %2600 = vmatpush2.xpose.msra.mxu0 0.0
      %2601 = vmatprep.subr.mxu0 0.0
      %2602 = vmatpush2.xpose.msra.mxu0 0.0
      %2603 = vmatprep.subr.mxu0 0.0
      %2604 = vmatpush2.xpose.msra.mxu0 0.0
      %2605 = vmatprep.subr.mxu0 0.0
      %2606 = vmatpush2.xpose.msra.mxu0 0.0
      %2607 = vmatprep.subr.mxu0 0.0
      %2608 = vmatpush2.xpose.msra.mxu0 0.0
      %2609 = vmatprep.subr.mxu0 0.0
      %2610 = vmatpush2.xpose.msra.mxu0 0.0
      %2611 = vmatprep.subr.mxu0 0.0
      %2612 = vmatpush2.xpose.msra.mxu0 0.0
      %2613 = vmatprep.subr.mxu0 0.0
      %2614 = vmatpush2.xpose.msra.mxu0 0.0
      %2615 = vmatprep.subr.mxu0 0.0
      %2616 = vmatpush2.xpose.msra.mxu0 0.0
      %2617 = vmatprep.subr.mxu0 0.0
      %2618 = vmatpush2.xpose.msra.mxu0 0.0
      %2619 = vmatprep.subr.mxu0 0.0
      %2620 = vmatpush2.xpose.msra.mxu0 0.0
      %2621 = vmatprep.subr.mxu0 0.0
      %2622 = vmatpush2.xpose.msra.mxu0 0.0
      %2623 = vmatprep.subr.mxu0 0.0
      %2624 = vmatpush2.xpose.msra.mxu0 0.0
      %2625 = vmatprep.subr.mxu0 0.0
      %2626 = vmatpush2.xpose.msra.mxu0 0.0
      %2627 = vmatprep.subr.mxu0 0.0
      %2628 = vmatpush2.xpose.msra.mxu0 0.0
      %2629 = vmatprep.mubr.f32.mxu0 0.0
      %2630 = vmatmul.mubr.f32.gmra.mxu0 %v2518
      %v2631 = vpop.f32.mrf.mxu0
      %v2632 = vadd.f32 0.0, %v2631
      %v2633 = vpop.f32.mrf.mxu0
      %2634 = vmatprep.mubr.f32.mxu0 0.0
      %2635 = vmatmul.mubr.f32.gmra.mxu0 %v2521
      %v2636 = vpop.f32.mrf.mxu0
      %v2637 = vadd.f32 0.0, %v2636
      %v2638 = vpop.f32.mrf.mxu0
      %2639 = vmatprep.mubr.f32.mxu0 0.0
      %2640 = vmatmul.mubr.f32.gmra.mxu0 %v2524
      %v2641 = vpop.f32.mrf.mxu0
      %v2642 = vadd.f32 0.0, %v2641
      %v2643 = vpop.f32.mrf.mxu0
      %2644 = vmatprep.mubr.f32.mxu0 0.0
      %2645 = vmatmul.mubr.f32.gmra.mxu0 %v2527
      %v2646 = vpop.f32.mrf.mxu0
      %v2647 = vadd.f32 0.0, %v2646
      %v2648 = vpop.f32.mrf.mxu0
      %2649 = vmatprep.mubr.f32.mxu0 0.0
      %2650 = vmatmul.mubr.f32.gmra.mxu0 %v2530
      %v2651 = vpop.f32.mrf.mxu0
      %v2652 = vadd.f32 0.0, %v2651
      %v2653 = vpop.f32.mrf.mxu0
      %2654 = vmatprep.mubr.f32.mxu0 0.0
      %2655 = vmatmul.mubr.f32.gmra.mxu0 %v2533
      %v2656 = vpop.f32.mrf.mxu0
      %v2657 = vadd.f32 0.0, %v2656
      %v2658 = vpop.f32.mrf.mxu0
      %2659 = vmatprep.mubr.f32.mxu0 0.0
      %2660 = vmatmul.mubr.f32.gmra.mxu0 %v2536
      %v2661 = vpop.f32.mrf.mxu0
      %v2662 = vadd.f32 0.0, %v2661
      %v2663 = vpop.f32.mrf.mxu0
      %2664 = vmatprep.mubr.f32.mxu0 0.0
      %2665 = vmatmul.mubr.f32.gmra.mxu0 %v2539
      %v2666 = vpop.f32.mrf.mxu0
      %v2667 = vadd.f32 0.0, %v2666
      %v2668 = vpop.f32.mrf.mxu0
      %2669 = vdwg.mxu0
      %v2671 = vsel %vm722, %v2284, 0
      %v2674 = vsel %vm722, %v2285, 0
      %v2677 = vsel %vm722, %v2286, 0
      %v2680 = vsel %vm722, %v2287, 0
      %v2683 = vsel %vm722, %v2288, 0
      %v2686 = vsel %vm722, %v2289, 0
      %v2689 = vsel %vm722, %v2290, 0
      %v2692 = vsel %vm722, %v2291, 0
      %v2695 = vsel %vm722, %v2316, 0
      %v2698 = vsel %vm722, %v2317, 0
      %v2701 = vsel %vm722, %v2318, 0
      %v2704 = vsel %vm722, %v2319, 0
      %v2707 = vsel %vm722, %v2320, 0
      %v2710 = vsel %vm722, %v2321, 0
      %v2713 = vsel %vm722, %v2322, 0
      %v2716 = vsel %vm722, %v2323, 0
      %2718 = vmatprep.subr.mxu0 0.0
      %2719 = vmatpush1.xpose.msra.mxu0 0.0
      %2720 = vmatprep.subr.mxu0 0.0
      %2721 = vmatpush1.xpose.msra.mxu0 0.0
      %2722 = vmatprep.subr.mxu0 0.0
      %2723 = vmatpush1.xpose.msra.mxu0 0.0
      %2724 = vmatprep.subr.mxu0 0.0
      %2725 = vmatpush1.xpose.msra.mxu0 0.0
      %2726 = vmatprep.subr.mxu0 0.0
      %2727 = vmatpush1.xpose.msra.mxu0 0.0
      %2728 = vmatprep.subr.mxu0 0.0
      %2729 = vmatpush1.xpose.msra.mxu0 0.0
      %2730 = vmatprep.subr.mxu0 0.0
      %2731 = vmatpush1.xpose.msra.mxu0 0.0
      %2732 = vmatprep.subr.mxu0 0.0
      %2733 = vmatpush1.xpose.msra.mxu0 0.0
      %2734 = vmatprep.subr.mxu0 0.0
      %2735 = vmatpush1.xpose.msra.mxu0 %v2716
      %2736 = vmatprep.subr.mxu0 0.0
      %2737 = vmatpush1.xpose.msra.mxu0 %v2713
      %2738 = vmatprep.subr.mxu0 0.0
      %2739 = vmatpush1.xpose.msra.mxu0 %v2710
      %2740 = vmatprep.subr.mxu0 0.0
      %2741 = vmatpush1.xpose.msra.mxu0 %v2707
      %2742 = vmatprep.subr.mxu0 0.0
      %2743 = vmatpush1.xpose.msra.mxu0 %v2704
      %2744 = vmatprep.subr.mxu0 0.0
      %2745 = vmatpush1.xpose.msra.mxu0 %v2701
      %2746 = vmatprep.subr.mxu0 0.0
      %2747 = vmatpush1.xpose.msra.mxu0 %v2698
      %2748 = vmatprep.subr.mxu0 0.0
      %2749 = vmatpush1.xpose.msra.mxu0 %v2695
      %2750 = vmatprep.subr.mxu0 0.0
      %2751 = vmatpush2.xpose.msra.mxu0 0.0
      %2752 = vmatprep.subr.mxu0 0.0
      %2753 = vmatpush2.xpose.msra.mxu0 0.0
      %2754 = vmatprep.subr.mxu0 0.0
      %2755 = vmatpush2.xpose.msra.mxu0 0.0
      %2756 = vmatprep.subr.mxu0 0.0
      %2757 = vmatpush2.xpose.msra.mxu0 0.0
      %2758 = vmatprep.subr.mxu0 0.0
      %2759 = vmatpush2.xpose.msra.mxu0 0.0
      %2760 = vmatprep.subr.mxu0 0.0
      %2761 = vmatpush2.xpose.msra.mxu0 0.0
      %2762 = vmatprep.subr.mxu0 0.0
      %2763 = vmatpush2.xpose.msra.mxu0 0.0
      %2764 = vmatprep.subr.mxu0 0.0
      %2765 = vmatpush2.xpose.msra.mxu0 0.0
      %2766 = vmatprep.subr.mxu0 0.0
      %2767 = vmatpush2.xpose.msra.mxu0 0.0
      %2768 = vmatprep.subr.mxu0 0.0
      %2769 = vmatpush2.xpose.msra.mxu0 0.0
      %2770 = vmatprep.subr.mxu0 0.0
      %2771 = vmatpush2.xpose.msra.mxu0 0.0
      %2772 = vmatprep.subr.mxu0 0.0
      %2773 = vmatpush2.xpose.msra.mxu0 0.0
      %2774 = vmatprep.subr.mxu0 0.0
      %2775 = vmatpush2.xpose.msra.mxu0 0.0
      %2776 = vmatprep.subr.mxu0 0.0
      %2777 = vmatpush2.xpose.msra.mxu0 0.0
      %2778 = vmatprep.subr.mxu0 0.0
      %2779 = vmatpush2.xpose.msra.mxu0 0.0
      %2780 = vmatprep.subr.mxu0 0.0
      %2781 = vmatpush2.xpose.msra.mxu0 0.0
      %2782 = vmatprep.mubr.f32.mxu0 0.0
      %2783 = vmatmul.mubr.f32.gmra.mxu0 %v2671
      %v2784 = vpop.f32.mrf.mxu0
      %v2785 = vadd.f32 0.0, %v2784
      %v2786 = vpop.f32.mrf.mxu0
      %2787 = vmatprep.mubr.f32.mxu0 0.0
      %2788 = vmatmul.mubr.f32.gmra.mxu0 %v2674
      %v2789 = vpop.f32.mrf.mxu0
      %v2790 = vadd.f32 0.0, %v2789
      %v2791 = vpop.f32.mrf.mxu0
      %2792 = vmatprep.mubr.f32.mxu0 0.0
      %2793 = vmatmul.mubr.f32.gmra.mxu0 %v2677
      %v2794 = vpop.f32.mrf.mxu0
      %v2795 = vadd.f32 0.0, %v2794
      %v2796 = vpop.f32.mrf.mxu0
      %2797 = vmatprep.mubr.f32.mxu0 0.0
      %2798 = vmatmul.mubr.f32.gmra.mxu0 %v2680
      %v2799 = vpop.f32.mrf.mxu0
      %v2800 = vadd.f32 0.0, %v2799
      %v2801 = vpop.f32.mrf.mxu0
      %2802 = vmatprep.mubr.f32.mxu0 0.0
      %2803 = vmatmul.mubr.f32.gmra.mxu0 %v2683
      %v2804 = vpop.f32.mrf.mxu0
      %v2805 = vadd.f32 0.0, %v2804
      %v2806 = vpop.f32.mrf.mxu0
      %2807 = vmatprep.mubr.f32.mxu0 0.0
      %2808 = vmatmul.mubr.f32.gmra.mxu0 %v2686
      %v2809 = vpop.f32.mrf.mxu0
      %v2810 = vadd.f32 0.0, %v2809
      %v2811 = vpop.f32.mrf.mxu0
      %2812 = vmatprep.mubr.f32.mxu0 0.0
      %2813 = vmatmul.mubr.f32.gmra.mxu0 %v2689
      %v2814 = vpop.f32.mrf.mxu0
      %v2815 = vadd.f32 0.0, %v2814
      %v2816 = vpop.f32.mrf.mxu0
      %2817 = vmatprep.mubr.f32.mxu0 0.0
      %2818 = vmatmul.mubr.f32.gmra.mxu0 %v2692
      %v2819 = vpop.f32.mrf.mxu0
      %v2820 = vadd.f32 0.0, %v2819
      %v2821 = vpop.f32.mrf.mxu0
      %2822 = vdwg.mxu0
      %v2824 = vsel %vm722, %v2292, 0
      %v2827 = vsel %vm722, %v2293, 0
      %v2830 = vsel %vm722, %v2294, 0
      %v2833 = vsel %vm722, %v2295, 0
      %v2836 = vsel %vm722, %v2296, 0
      %v2839 = vsel %vm722, %v2297, 0
      %v2842 = vsel %vm722, %v2298, 0
      %v2845 = vsel %vm722, %v2299, 0
      %v2848 = vsel %vm722, %v2324, 0
      %v2851 = vsel %vm722, %v2325, 0
      %v2854 = vsel %vm722, %v2326, 0
      %v2857 = vsel %vm722, %v2327, 0
      %v2860 = vsel %vm722, %v2328, 0
      %v2863 = vsel %vm722, %v2329, 0
      %v2866 = vsel %vm722, %v2330, 0
      %v2869 = vsel %vm722, %v2331, 0
      %2871 = vmatprep.subr.mxu0 0.0
      %2872 = vmatpush1.xpose.msra.mxu0 0.0
      %2873 = vmatprep.subr.mxu0 0.0
      %2874 = vmatpush1.xpose.msra.mxu0 0.0
      %2875 = vmatprep.subr.mxu0 0.0
      %2876 = vmatpush1.xpose.msra.mxu0 0.0
      %2877 = vmatprep.subr.mxu0 0.0
      %2878 = vmatpush1.xpose.msra.mxu0 0.0
      %2879 = vmatprep.subr.mxu0 0.0
      %2880 = vmatpush1.xpose.msra.mxu0 0.0
      %2881 = vmatprep.subr.mxu0 0.0
      %2882 = vmatpush1.xpose.msra.mxu0 0.0
      %2883 = vmatprep.subr.mxu0 0.0
      %2884 = vmatpush1.xpose.msra.mxu0 0.0
      %2885 = vmatprep.subr.mxu0 0.0
      %2886 = vmatpush1.xpose.msra.mxu0 0.0
      %2887 = vmatprep.subr.mxu0 0.0
      %2888 = vmatpush1.xpose.msra.mxu0 %v2869
      %2889 = vmatprep.subr.mxu0 0.0
      %2890 = vmatpush1.xpose.msra.mxu0 %v2866
      %2891 = vmatprep.subr.mxu0 0.0
      %2892 = vmatpush1.xpose.msra.mxu0 %v2863
      %2893 = vmatprep.subr.mxu0 0.0
      %2894 = vmatpush1.xpose.msra.mxu0 %v2860
      %2895 = vmatprep.subr.mxu0 0.0
      %2896 = vmatpush1.xpose.msra.mxu0 %v2857
      %2897 = vmatprep.subr.mxu0 0.0
      %2898 = vmatpush1.xpose.msra.mxu0 %v2854
      %2899 = vmatprep.subr.mxu0 0.0
      %2900 = vmatpush1.xpose.msra.mxu0 %v2851
      %2901 = vmatprep.subr.mxu0 0.0
      %2902 = vmatpush1.xpose.msra.mxu0 %v2848
      %2903 = vmatprep.subr.mxu0 0.0
      %2904 = vmatpush2.xpose.msra.mxu0 0.0
      %2905 = vmatprep.subr.mxu0 0.0
      %2906 = vmatpush2.xpose.msra.mxu0 0.0
      %2907 = vmatprep.subr.mxu0 0.0
      %2908 = vmatpush2.xpose.msra.mxu0 0.0
      %2909 = vmatprep.subr.mxu0 0.0
      %2910 = vmatpush2.xpose.msra.mxu0 0.0
      %2911 = vmatprep.subr.mxu0 0.0
      %2912 = vmatpush2.xpose.msra.mxu0 0.0
      %2913 = vmatprep.subr.mxu0 0.0
      %2914 = vmatpush2.xpose.msra.mxu0 0.0
      %2915 = vmatprep.subr.mxu0 0.0
      %2916 = vmatpush2.xpose.msra.mxu0 0.0
      %2917 = vmatprep.subr.mxu0 0.0
      %2918 = vmatpush2.xpose.msra.mxu0 0.0
      %2919 = vmatprep.subr.mxu0 0.0
      %2920 = vmatpush2.xpose.msra.mxu0 0.0
      %2921 = vmatprep.subr.mxu0 0.0
      %2922 = vmatpush2.xpose.msra.mxu0 0.0
      %2923 = vmatprep.subr.mxu0 0.0
      %2924 = vmatpush2.xpose.msra.mxu0 0.0
      %2925 = vmatprep.subr.mxu0 0.0
      %2926 = vmatpush2.xpose.msra.mxu0 0.0
      %2927 = vmatprep.subr.mxu0 0.0
      %2928 = vmatpush2.xpose.msra.mxu0 0.0
      %2929 = vmatprep.subr.mxu0 0.0
      %2930 = vmatpush2.xpose.msra.mxu0 0.0
      %2931 = vmatprep.subr.mxu0 0.0
      %2932 = vmatpush2.xpose.msra.mxu0 0.0
      %2933 = vmatprep.subr.mxu0 0.0
      %2934 = vmatpush2.xpose.msra.mxu0 0.0
      %2935 = vmatprep.mubr.f32.mxu0 0.0
      %2936 = vmatmul.mubr.f32.gmra.mxu0 %v2824
      %v2937 = vpop.f32.mrf.mxu0
      %v2938 = vadd.f32 0.0, %v2937
      %v2939 = vpop.f32.mrf.mxu0
      %2940 = vmatprep.mubr.f32.mxu0 0.0
      %2941 = vmatmul.mubr.f32.gmra.mxu0 %v2827
      %v2942 = vpop.f32.mrf.mxu0
      %v2943 = vadd.f32 0.0, %v2942
      %v2944 = vpop.f32.mrf.mxu0
      %2945 = vmatprep.mubr.f32.mxu0 0.0
      %2946 = vmatmul.mubr.f32.gmra.mxu0 %v2830
      %v2947 = vpop.f32.mrf.mxu0
      %v2948 = vadd.f32 0.0, %v2947
      %v2949 = vpop.f32.mrf.mxu0
      %2950 = vmatprep.mubr.f32.mxu0 0.0
      %2951 = vmatmul.mubr.f32.gmra.mxu0 %v2833
      %v2952 = vpop.f32.mrf.mxu0
      %v2953 = vadd.f32 0.0, %v2952
      %v2954 = vpop.f32.mrf.mxu0
      %2955 = vmatprep.mubr.f32.mxu0 0.0
      %2956 = vmatmul.mubr.f32.gmra.mxu0 %v2836
      %v2957 = vpop.f32.mrf.mxu0
      %v2958 = vadd.f32 0.0, %v2957
      %v2959 = vpop.f32.mrf.mxu0
      %2960 = vmatprep.mubr.f32.mxu0 0.0
      %2961 = vmatmul.mubr.f32.gmra.mxu0 %v2839
      %v2962 = vpop.f32.mrf.mxu0
      %v2963 = vadd.f32 0.0, %v2962
      %v2964 = vpop.f32.mrf.mxu0
      %2965 = vmatprep.mubr.f32.mxu0 0.0
      %2966 = vmatmul.mubr.f32.gmra.mxu0 %v2842
      %v2967 = vpop.f32.mrf.mxu0
      %v2968 = vadd.f32 0.0, %v2967
      %v2969 = vpop.f32.mrf.mxu0
      %2970 = vmatprep.mubr.f32.mxu0 0.0
      %2971 = vmatmul.mubr.f32.gmra.mxu0 %v2845
      %v2972 = vpop.f32.mrf.mxu0
      %v2973 = vadd.f32 0.0, %v2972
      %v2974 = vpop.f32.mrf.mxu0
      %2975 = vdwg.mxu0
      %v2976 = vsel %vm1335, %v2479, -inf
      %2977 = vmax.xlane.f32.xlu0 %v2976
      %v2978 = vpop.xlane.xlu0 %2977
      %v2979 = vsel %vm1335, %v2484, -inf
      %2980 = vmax.xlane.f32.xlu0 %v2979
      %v2981 = vpop.xlane.xlu0 %2980
      %v2982 = vsel %vm1335, %v2489, -inf
      %2983 = vmax.xlane.f32.xlu0 %v2982
      %v2984 = vpop.xlane.xlu0 %2983
      %v2985 = vsel %vm1335, %v2494, -inf
      %2986 = vmax.xlane.f32.xlu0 %v2985
      %v2987 = vpop.xlane.xlu0 %2986
      %v2988 = vsel %vm1335, %v2499, -inf
      %2989 = vmax.xlane.f32.xlu0 %v2988
      %v2990 = vpop.xlane.xlu0 %2989
      %v2991 = vsel %vm1335, %v2504, -inf
      %2992 = vmax.xlane.f32.xlu0 %v2991
      %v2993 = vpop.xlane.xlu0 %2992
      %v2994 = vsel %vm1335, %v2509, -inf
      %2995 = vmax.xlane.f32.xlu0 %v2994
      %v2996 = vpop.xlane.xlu0 %2995
      %v2997 = vsel %vm1335, %v2514, -inf
      %2998 = vmax.xlane.f32.xlu0 %v2997
      %v2999 = vpop.xlane.xlu0 %2998
      %v3000 = vsel %vm1335, %v2632, -inf
      %3001 = vmax.xlane.f32.xlu0 %v3000
      %v3002 = vpop.xlane.xlu0 %3001
      %v3003 = vsel %vm1335, %v2637, -inf
      %3004 = vmax.xlane.f32.xlu0 %v3003
      %v3005 = vpop.xlane.xlu0 %3004
      %v3006 = vsel %vm1335, %v2642, -inf
      %3007 = vmax.xlane.f32.xlu0 %v3006
      %v3008 = vpop.xlane.xlu0 %3007
      %v3009 = vsel %vm1335, %v2647, -inf
      %3010 = vmax.xlane.f32.xlu0 %v3009
      %v3011 = vpop.xlane.xlu0 %3010
      %v3012 = vsel %vm1335, %v2652, -inf
      %3013 = vmax.xlane.f32.xlu0 %v3012
      %v3014 = vpop.xlane.xlu0 %3013
      %v3015 = vsel %vm1335, %v2657, -inf
      %3016 = vmax.xlane.f32.xlu0 %v3015
      %v3017 = vpop.xlane.xlu0 %3016
      %v3018 = vsel %vm1335, %v2662, -inf
      %3019 = vmax.xlane.f32.xlu0 %v3018
      %v3020 = vpop.xlane.xlu0 %3019
      %v3021 = vsel %vm1335, %v2667, -inf
      %3022 = vmax.xlane.f32.xlu0 %v3021
      %v3023 = vpop.xlane.xlu0 %3022
      %v3024 = vsel %vm1335, %v2785, -inf
      %3025 = vmax.xlane.f32.xlu0 %v3024
      %v3026 = vpop.xlane.xlu0 %3025
      %v3027 = vsel %vm1335, %v2790, -inf
      %3028 = vmax.xlane.f32.xlu0 %v3027
      %v3029 = vpop.xlane.xlu0 %3028
      %v3030 = vsel %vm1335, %v2795, -inf
      %3031 = vmax.xlane.f32.xlu0 %v3030
      %v3032 = vpop.xlane.xlu0 %3031
      %v3033 = vsel %vm1335, %v2800, -inf
      %3034 = vmax.xlane.f32.xlu0 %v3033
      %v3035 = vpop.xlane.xlu0 %3034
      %v3036 = vsel %vm1335, %v2805, -inf
      %3037 = vmax.xlane.f32.xlu0 %v3036
      %v3038 = vpop.xlane.xlu0 %3037
      %v3039 = vsel %vm1335, %v2810, -inf
      %3040 = vmax.xlane.f32.xlu0 %v3039
      %v3041 = vpop.xlane.xlu0 %3040
      %v3042 = vsel %vm1335, %v2815, -inf
      %3043 = vmax.xlane.f32.xlu0 %v3042
      %v3044 = vpop.xlane.xlu0 %3043
      %v3045 = vsel %vm1335, %v2820, -inf
      %3046 = vmax.xlane.f32.xlu0 %v3045
      %v3047 = vpop.xlane.xlu0 %3046
      %v3048 = vsel %vm1335, %v2938, -inf
      %3049 = vmax.xlane.f32.xlu0 %v3048
      %v3050 = vpop.xlane.xlu0 %3049
      %v3051 = vsel %vm1335, %v2943, -inf
      %3052 = vmax.xlane.f32.xlu0 %v3051
      %v3053 = vpop.xlane.xlu0 %3052
      %v3054 = vsel %vm1335, %v2948, -inf
      %3055 = vmax.xlane.f32.xlu0 %v3054
      %v3056 = vpop.xlane.xlu0 %3055
      %v3057 = vsel %vm1335, %v2953, -inf
      %3058 = vmax.xlane.f32.xlu0 %v3057
      %v3059 = vpop.xlane.xlu0 %3058
      %v3060 = vsel %vm1335, %v2958, -inf
      %3061 = vmax.xlane.f32.xlu0 %v3060
      %v3062 = vpop.xlane.xlu0 %3061
      %v3063 = vsel %vm1335, %v2963, -inf
      %3064 = vmax.xlane.f32.xlu0 %v3063
      %v3065 = vpop.xlane.xlu0 %3064
      %v3066 = vsel %vm1335, %v2968, -inf
      %3067 = vmax.xlane.f32.xlu0 %v3066
      %v3068 = vpop.xlane.xlu0 %3067
      %v3069 = vsel %vm1335, %v2973, -inf
      %3070 = vmax.xlane.f32.xlu0 %v3069
      %v3071 = vpop.xlane.xlu0 %3070
      %v3072 = vsub.f32 %v2479, %v2978
      %v3073 = vsub.f32 %v2484, %v2981
      %v3074 = vsub.f32 %v2489, %v2984
      %v3075 = vsub.f32 %v2494, %v2987
      %v3076 = vsub.f32 %v2499, %v2990
      %v3077 = vsub.f32 %v2504, %v2993
      %v3078 = vsub.f32 %v2509, %v2996
      %v3079 = vsub.f32 %v2514, %v2999
      %v3080 = vsub.f32 %v2632, %v3002
      %v3081 = vsub.f32 %v2637, %v3005
      %v3082 = vsub.f32 %v2642, %v3008
      %v3083 = vsub.f32 %v2647, %v3011
      %v3084 = vsub.f32 %v2652, %v3014
      %v3085 = vsub.f32 %v2657, %v3017
      %v3086 = vsub.f32 %v2662, %v3020
      %v3087 = vsub.f32 %v2667, %v3023
      %v3088 = vsub.f32 %v2785, %v3026
      %v3089 = vsub.f32 %v2790, %v3029
      %v3090 = vsub.f32 %v2795, %v3032
      %v3091 = vsub.f32 %v2800, %v3035
      %v3092 = vsub.f32 %v2805, %v3038
      %v3093 = vsub.f32 %v2810, %v3041
      %v3094 = vsub.f32 %v2815, %v3044
      %v3095 = vsub.f32 %v2820, %v3047
      %v3096 = vsub.f32 %v2938, %v3050
      %v3097 = vsub.f32 %v2943, %v3053
      %v3098 = vsub.f32 %v2948, %v3056
      %v3099 = vsub.f32 %v2953, %v3059
      %v3100 = vsub.f32 %v2958, %v3062
      %v3101 = vsub.f32 %v2963, %v3065
      %v3102 = vsub.f32 %v2968, %v3068
      %v3103 = vsub.f32 %v2973, %v3071
      %v3104 = vmul.f32 %v3072, 1.442695
      %v3105 = vpow.pop %v3104
      %v3106 = vmul.f32 %v3073, 1.442695
      %v3107 = vpow.pop %v3106
      %v3108 = vmul.f32 %v3074, 1.442695
      %v3109 = vpow.pop %v3108
      %v3110 = vmul.f32 %v3075, 1.442695
      %v3111 = vpow.pop %v3110
      %v3112 = vmul.f32 %v3076, 1.442695
      %v3113 = vpow.pop %v3112
      %v3114 = vmul.f32 %v3077, 1.442695
      %v3115 = vpow.pop %v3114
      %v3116 = vmul.f32 %v3078, 1.442695
      %v3117 = vpow.pop %v3116
      %v3118 = vmul.f32 %v3079, 1.442695
      %v3119 = vpow.pop %v3118
      %v3120 = vmul.f32 %v3080, 1.442695
      %v3121 = vpow.pop %v3120
      %v3122 = vmul.f32 %v3081, 1.442695
      %v3123 = vpow.pop %v3122
      %v3124 = vmul.f32 %v3082, 1.442695
      %v3125 = vpow.pop %v3124
      %v3126 = vmul.f32 %v3083, 1.442695
      %v3127 = vpow.pop %v3126
      %v3128 = vmul.f32 %v3084, 1.442695
      %v3129 = vpow.pop %v3128
      %v3130 = vmul.f32 %v3085, 1.442695
      %v3131 = vpow.pop %v3130
      %v3132 = vmul.f32 %v3086, 1.442695
      %v3133 = vpow.pop %v3132
      %v3134 = vmul.f32 %v3087, 1.442695
      %v3135 = vpow.pop %v3134
      %v3136 = vmul.f32 %v3088, 1.442695
      %v3137 = vpow.pop %v3136
      %v3138 = vmul.f32 %v3089, 1.442695
      %v3139 = vpow.pop %v3138
      %v3140 = vmul.f32 %v3090, 1.442695
      %v3141 = vpow.pop %v3140
      %v3142 = vmul.f32 %v3091, 1.442695
      %v3143 = vpow.pop %v3142
      %v3144 = vmul.f32 %v3092, 1.442695
      %v3145 = vpow.pop %v3144
      %v3146 = vmul.f32 %v3093, 1.442695
      %v3147 = vpow.pop %v3146
      %v3148 = vmul.f32 %v3094, 1.442695
      %v3149 = vpow.pop %v3148
      %v3150 = vmul.f32 %v3095, 1.442695
      %v3151 = vpow.pop %v3150
      %v3152 = vmul.f32 %v3096, 1.442695
      %v3153 = vpow.pop %v3152
      %v3154 = vmul.f32 %v3097, 1.442695
      %v3155 = vpow.pop %v3154
      %v3156 = vmul.f32 %v3098, 1.442695
      %v3157 = vpow.pop %v3156
      %v3158 = vmul.f32 %v3099, 1.442695
      %v3159 = vpow.pop %v3158
      %v3160 = vmul.f32 %v3100, 1.442695
      %v3161 = vpow.pop %v3160
      %v3162 = vmul.f32 %v3101, 1.442695
      %v3163 = vpow.pop %v3162
      %v3164 = vmul.f32 %v3102, 1.442695
      %v3165 = vpow.pop %v3164
      %v3166 = vmul.f32 %v3103, 1.442695
      %v3167 = vpow.pop %v3166
      %v3168 = vsel %vm1335, %v3105, 0.0
      %3169 = vadd.xlane.f32.xlu0 %v3168
      %v3170 = vpop.xlane.xlu0 %3169
      %v3171 = vsel %vm1335, %v3107, 0.0
      %3172 = vadd.xlane.f32.xlu0 %v3171
      %v3173 = vpop.xlane.xlu0 %3172
      %v3174 = vsel %vm1335, %v3109, 0.0
      %3175 = vadd.xlane.f32.xlu0 %v3174
      %v3176 = vpop.xlane.xlu0 %3175
      %v3177 = vsel %vm1335, %v3111, 0.0
      %3178 = vadd.xlane.f32.xlu0 %v3177
      %v3179 = vpop.xlane.xlu0 %3178
      %v3180 = vsel %vm1335, %v3113, 0.0
      %3181 = vadd.xlane.f32.xlu0 %v3180
      %v3182 = vpop.xlane.xlu0 %3181
      %v3183 = vsel %vm1335, %v3115, 0.0
      %3184 = vadd.xlane.f32.xlu0 %v3183
      %v3185 = vpop.xlane.xlu0 %3184
      %v3186 = vsel %vm1335, %v3117, 0.0
      %3187 = vadd.xlane.f32.xlu0 %v3186
      %v3188 = vpop.xlane.xlu0 %3187
      %v3189 = vsel %vm1335, %v3119, 0.0
      %3190 = vadd.xlane.f32.xlu0 %v3189
      %v3191 = vpop.xlane.xlu0 %3190
      %v3192 = vsel %vm1335, %v3121, 0.0
      %3193 = vadd.xlane.f32.xlu0 %v3192
      %v3194 = vpop.xlane.xlu0 %3193
      %v3195 = vsel %vm1335, %v3123, 0.0
      %3196 = vadd.xlane.f32.xlu0 %v3195
      %v3197 = vpop.xlane.xlu0 %3196
      %v3198 = vsel %vm1335, %v3125, 0.0
      %3199 = vadd.xlane.f32.xlu0 %v3198
      %v3200 = vpop.xlane.xlu0 %3199
      %v3201 = vsel %vm1335, %v3127, 0.0
      %3202 = vadd.xlane.f32.xlu0 %v3201
      %v3203 = vpop.xlane.xlu0 %3202
      %v3204 = vsel %vm1335, %v3129, 0.0
      %3205 = vadd.xlane.f32.xlu0 %v3204
      %v3206 = vpop.xlane.xlu0 %3205
      %v3207 = vsel %vm1335, %v3131, 0.0
      %3208 = vadd.xlane.f32.xlu0 %v3207
      %v3209 = vpop.xlane.xlu0 %3208
      %v3210 = vsel %vm1335, %v3133, 0.0
      %3211 = vadd.xlane.f32.xlu0 %v3210
      %v3212 = vpop.xlane.xlu0 %3211
      %v3213 = vsel %vm1335, %v3135, 0.0
      %3214 = vadd.xlane.f32.xlu0 %v3213
      %v3215 = vpop.xlane.xlu0 %3214
      %v3216 = vsel %vm1335, %v3137, 0.0
      %3217 = vadd.xlane.f32.xlu0 %v3216
      %v3218 = vpop.xlane.xlu0 %3217
      %v3219 = vsel %vm1335, %v3139, 0.0
      %3220 = vadd.xlane.f32.xlu0 %v3219
      %v3221 = vpop.xlane.xlu0 %3220
      %v3222 = vsel %vm1335, %v3141, 0.0
      %3223 = vadd.xlane.f32.xlu0 %v3222
      %v3224 = vpop.xlane.xlu0 %3223
      %v3225 = vsel %vm1335, %v3143, 0.0
      %3226 = vadd.xlane.f32.xlu0 %v3225
      %v3227 = vpop.xlane.xlu0 %3226
      %v3228 = vsel %vm1335, %v3145, 0.0
      %3229 = vadd.xlane.f32.xlu0 %v3228
      %v3230 = vpop.xlane.xlu0 %3229
      %v3231 = vsel %vm1335, %v3147, 0.0
      %3232 = vadd.xlane.f32.xlu0 %v3231
      %v3233 = vpop.xlane.xlu0 %3232
      %v3234 = vsel %vm1335, %v3149, 0.0
      %3235 = vadd.xlane.f32.xlu0 %v3234
      %v3236 = vpop.xlane.xlu0 %3235
      %v3237 = vsel %vm1335, %v3151, 0.0
      %3238 = vadd.xlane.f32.xlu0 %v3237
      %v3239 = vpop.xlane.xlu0 %3238
      %v3240 = vsel %vm1335, %v3153, 0.0
      %3241 = vadd.xlane.f32.xlu0 %v3240
      %v3242 = vpop.xlane.xlu0 %3241
      %v3243 = vsel %vm1335, %v3155, 0.0
      %3244 = vadd.xlane.f32.xlu0 %v3243
      %v3245 = vpop.xlane.xlu0 %3244
      %v3246 = vsel %vm1335, %v3157, 0.0
      %3247 = vadd.xlane.f32.xlu0 %v3246
      %v3248 = vpop.xlane.xlu0 %3247
      %v3249 = vsel %vm1335, %v3159, 0.0
      %3250 = vadd.xlane.f32.xlu0 %v3249
      %v3251 = vpop.xlane.xlu0 %3250
      %v3252 = vsel %vm1335, %v3161, 0.0
      %3253 = vadd.xlane.f32.xlu0 %v3252
      %v3254 = vpop.xlane.xlu0 %3253
      %v3255 = vsel %vm1335, %v3163, 0.0
      %3256 = vadd.xlane.f32.xlu0 %v3255
      %v3257 = vpop.xlane.xlu0 %3256
      %v3258 = vsel %vm1335, %v3165, 0.0
      %3259 = vadd.xlane.f32.xlu0 %v3258
      %v3260 = vpop.xlane.xlu0 %3259
      %v3261 = vsel %vm1335, %v3167, 0.0
      %3262 = vadd.xlane.f32.xlu0 %v3261
      %v3263 = vpop.xlane.xlu0 %3262
      %v3264 = vrcp.pop %v3170
      %v3265 = vrcp.pop %v3173
      %v3266 = vrcp.pop %v3176
      %v3267 = vrcp.pop %v3179
      %v3268 = vrcp.pop %v3182
      %v3269 = vrcp.pop %v3185
      %v3270 = vrcp.pop %v3188
      %v3271 = vrcp.pop %v3191
      %v3272 = vrcp.pop %v3194
      %v3273 = vrcp.pop %v3197
      %v3274 = vrcp.pop %v3200
      %v3275 = vrcp.pop %v3203
      %v3276 = vrcp.pop %v3206
      %v3277 = vrcp.pop %v3209
      %v3278 = vrcp.pop %v3212
      %v3279 = vrcp.pop %v3215
      %v3280 = vrcp.pop %v3218
      %v3281 = vrcp.pop %v3221
      %v3282 = vrcp.pop %v3224
      %v3283 = vrcp.pop %v3227
      %v3284 = vrcp.pop %v3230
      %v3285 = vrcp.pop %v3233
      %v3286 = vrcp.pop %v3236
      %v3287 = vrcp.pop %v3239
      %v3288 = vrcp.pop %v3242
      %v3289 = vrcp.pop %v3245
      %v3290 = vrcp.pop %v3248
      %v3291 = vrcp.pop %v3251
      %v3292 = vrcp.pop %v3254
      %v3293 = vrcp.pop %v3257
      %v3294 = vrcp.pop %v3260
      %v3295 = vrcp.pop %v3263
      %v3296 = vmul.f32 %v3105, %v3264
      %v3297 = vmul.f32 %v3107, %v3265
      %v3298 = vmul.f32 %v3109, %v3266
      %v3299 = vmul.f32 %v3111, %v3267
      %v3300 = vmul.f32 %v3113, %v3268
      %v3301 = vmul.f32 %v3115, %v3269
      %v3302 = vmul.f32 %v3117, %v3270
      %v3303 = vmul.f32 %v3119, %v3271
      %v3304 = vmul.f32 %v3121, %v3272
      %v3305 = vmul.f32 %v3123, %v3273
      %v3306 = vmul.f32 %v3125, %v3274
      %v3307 = vmul.f32 %v3127, %v3275
      %v3308 = vmul.f32 %v3129, %v3276
      %v3309 = vmul.f32 %v3131, %v3277
      %v3310 = vmul.f32 %v3133, %v3278
      %v3311 = vmul.f32 %v3135, %v3279
      %v3312 = vmul.f32 %v3137, %v3280
      %v3313 = vmul.f32 %v3139, %v3281
      %v3314 = vmul.f32 %v3141, %v3282
      %v3315 = vmul.f32 %v3143, %v3283
      %v3316 = vmul.f32 %v3145, %v3284
      %v3317 = vmul.f32 %v3147, %v3285
      %v3318 = vmul.f32 %v3149, %v3286
      %v3319 = vmul.f32 %v3151, %v3287
      %v3320 = vmul.f32 %v3153, %v3288
      %v3321 = vmul.f32 %v3155, %v3289
      %v3322 = vmul.f32 %v3157, %v3290
      %v3323 = vmul.f32 %v3159, %v3291
      %v3324 = vmul.f32 %v3161, %v3292
      %v3325 = vmul.f32 %v3163, %v3293
      %v3326 = vmul.f32 %v3165, %v3294
      %v3327 = vmul.f32 %v3167, %v3295
      %v3328 = vadd.f32 %v3296, 1e-06
      %v3329 = vadd.f32 %v3297, 1e-06
      %v3330 = vadd.f32 %v3298, 1e-06
      %v3331 = vadd.f32 %v3299, 1e-06
      %v3332 = vadd.f32 %v3300, 1e-06
      %v3333 = vadd.f32 %v3301, 1e-06
      %v3334 = vadd.f32 %v3302, 1e-06
      %v3335 = vadd.f32 %v3303, 1e-06
      %v3336 = vadd.f32 %v3304, 1e-06
      %v3337 = vadd.f32 %v3305, 1e-06
      %v3338 = vadd.f32 %v3306, 1e-06
      %v3339 = vadd.f32 %v3307, 1e-06
      %v3340 = vadd.f32 %v3308, 1e-06
      %v3341 = vadd.f32 %v3309, 1e-06
      %v3342 = vadd.f32 %v3310, 1e-06
      %v3343 = vadd.f32 %v3311, 1e-06
      %v3344 = vadd.f32 %v3312, 1e-06
      %v3345 = vadd.f32 %v3313, 1e-06
      %v3346 = vadd.f32 %v3314, 1e-06
      %v3347 = vadd.f32 %v3315, 1e-06
      %v3348 = vadd.f32 %v3316, 1e-06
      %v3349 = vadd.f32 %v3317, 1e-06
      %v3350 = vadd.f32 %v3318, 1e-06
      %v3351 = vadd.f32 %v3319, 1e-06
      %v3352 = vadd.f32 %v3320, 1e-06
      %v3353 = vadd.f32 %v3321, 1e-06
      %v3354 = vadd.f32 %v3322, 1e-06
      %v3355 = vadd.f32 %v3323, 1e-06
      %v3356 = vadd.f32 %v3324, 1e-06
      %v3357 = vadd.f32 %v3325, 1e-06
      %v3358 = vadd.f32 %v3326, 1e-06
      %v3359 = vadd.f32 %v3327, 1e-06
      %v3361 = vsel %vm1335, %v3328, 0
      %v3364 = vsel %vm1335, %v3329, 0
      %v3367 = vsel %vm1335, %v3330, 0
      %v3370 = vsel %vm1335, %v3331, 0
      %v3373 = vsel %vm1335, %v3332, 0
      %v3376 = vsel %vm1335, %v3333, 0
      %v3379 = vsel %vm1335, %v3334, 0
      %v3382 = vsel %vm1335, %v3335, 0
      %3384 = vmatprep.subr.mxu0 0.0
      %3385 = vmatpush1.msra.mxu0 0.0
      %3386 = vmatprep.subr.mxu0 0.0
      %3387 = vmatpush1.msra.mxu0 0.0
      %3388 = vmatprep.subr.mxu0 0.0
      %3389 = vmatpush1.msra.mxu0 0.0
      %3390 = vmatprep.subr.mxu0 0.0
      %3391 = vmatpush1.msra.mxu0 0.0
      %3392 = vmatprep.subr.mxu0 0.0
      %3393 = vmatpush1.msra.mxu0 0.0
      %3394 = vmatprep.subr.mxu0 0.0
      %3395 = vmatpush1.msra.mxu0 0.0
      %3396 = vmatprep.subr.mxu0 0.0
      %3397 = vmatpush1.msra.mxu0 0.0
      %3398 = vmatprep.subr.mxu0 0.0
      %3399 = vmatpush1.msra.mxu0 0.0
      %3400 = vmatprep.subr.mxu0 0.0
      %3401 = vmatpush1.msra.mxu0 %v2339
      %3402 = vmatprep.subr.mxu0 0.0
      %3403 = vmatpush1.msra.mxu0 %v2338
      %3404 = vmatprep.subr.mxu0 0.0
      %3405 = vmatpush1.msra.mxu0 %v2337
      %3406 = vmatprep.subr.mxu0 0.0
      %3407 = vmatpush1.msra.mxu0 %v2336
      %3408 = vmatprep.subr.mxu0 0.0
      %3409 = vmatpush1.msra.mxu0 %v2335
      %3410 = vmatprep.subr.mxu0 0.0
      %3411 = vmatpush1.msra.mxu0 %v2334
      %3412 = vmatprep.subr.mxu0 0.0
      %3413 = vmatpush1.msra.mxu0 %v2333
      %3414 = vmatprep.subr.mxu0 0.0
      %3415 = vmatpush1.msra.mxu0 %v2332
      %3416 = vmatprep.subr.mxu0 0.0
      %3417 = vmatpush2.msra.mxu0 0.0
      %3418 = vmatprep.subr.mxu0 0.0
      %3419 = vmatpush2.msra.mxu0 0.0
      %3420 = vmatprep.subr.mxu0 0.0
      %3421 = vmatpush2.msra.mxu0 0.0
      %3422 = vmatprep.subr.mxu0 0.0
      %3423 = vmatpush2.msra.mxu0 0.0
      %3424 = vmatprep.subr.mxu0 0.0
      %3425 = vmatpush2.msra.mxu0 0.0
      %3426 = vmatprep.subr.mxu0 0.0
      %3427 = vmatpush2.msra.mxu0 0.0
      %3428 = vmatprep.subr.mxu0 0.0
      %3429 = vmatpush2.msra.mxu0 0.0
      %3430 = vmatprep.subr.mxu0 0.0
      %3431 = vmatpush2.msra.mxu0 0.0
      %3432 = vmatprep.subr.mxu0 0.0
      %3433 = vmatpush2.msra.mxu0 0.0
      %3434 = vmatprep.subr.mxu0 0.0
      %3435 = vmatpush2.msra.mxu0 0.0
      %3436 = vmatprep.subr.mxu0 0.0
      %3437 = vmatpush2.msra.mxu0 0.0
      %3438 = vmatprep.subr.mxu0 0.0
      %3439 = vmatpush2.msra.mxu0 0.0
      %3440 = vmatprep.subr.mxu0 0.0
      %3441 = vmatpush2.msra.mxu0 0.0
      %3442 = vmatprep.subr.mxu0 0.0
      %3443 = vmatpush2.msra.mxu0 0.0
      %3444 = vmatprep.subr.mxu0 0.0
      %3445 = vmatpush2.msra.mxu0 0.0
      %3446 = vmatprep.subr.mxu0 0.0
      %3447 = vmatpush2.msra.mxu0 0.0
      %3448 = vmatprep.mubr.f32.mxu0 0.0
      %3449 = vmatmul.mubr.f32.gmra.mxu0 %v3361
      %v3450 = vpop.f32.mrf.mxu0
      %v3451 = vadd.f32 0.0, %v3450
      %v3452 = vpop.f32.mrf.mxu0
      %3453 = vmatprep.mubr.f32.mxu0 0.0
      %3454 = vmatmul.mubr.f32.gmra.mxu0 %v3364
      %v3455 = vpop.f32.mrf.mxu0
      %v3456 = vadd.f32 0.0, %v3455
      %v3457 = vpop.f32.mrf.mxu0
      %3458 = vmatprep.mubr.f32.mxu0 0.0
      %3459 = vmatmul.mubr.f32.gmra.mxu0 %v3367
      %v3460 = vpop.f32.mrf.mxu0
      %v3461 = vadd.f32 0.0, %v3460
      %v3462 = vpop.f32.mrf.mxu0
      %3463 = vmatprep.mubr.f32.mxu0 0.0
      %3464 = vmatmul.mubr.f32.gmra.mxu0 %v3370
      %v3465 = vpop.f32.mrf.mxu0
      %v3466 = vadd.f32 0.0, %v3465
      %v3467 = vpop.f32.mrf.mxu0
      %3468 = vmatprep.mubr.f32.mxu0 0.0
      %3469 = vmatmul.mubr.f32.gmra.mxu0 %v3373
      %v3470 = vpop.f32.mrf.mxu0
      %v3471 = vadd.f32 0.0, %v3470
      %v3472 = vpop.f32.mrf.mxu0
      %3473 = vmatprep.mubr.f32.mxu0 0.0
      %3474 = vmatmul.mubr.f32.gmra.mxu0 %v3376
      %v3475 = vpop.f32.mrf.mxu0
      %v3476 = vadd.f32 0.0, %v3475
      %v3477 = vpop.f32.mrf.mxu0
      %3478 = vmatprep.mubr.f32.mxu0 0.0
      %3479 = vmatmul.mubr.f32.gmra.mxu0 %v3379
      %v3480 = vpop.f32.mrf.mxu0
      %v3481 = vadd.f32 0.0, %v3480
      %v3482 = vpop.f32.mrf.mxu0
      %3483 = vmatprep.mubr.f32.mxu0 0.0
      %3484 = vmatmul.mubr.f32.gmra.mxu0 %v3382
      %v3485 = vpop.f32.mrf.mxu0
      %v3486 = vadd.f32 0.0, %v3485
      %v3487 = vpop.f32.mrf.mxu0
      %3488 = vdwg.mxu0
      %v3490 = vsel %vm1335, %v3336, 0
      %v3493 = vsel %vm1335, %v3337, 0
      %v3496 = vsel %vm1335, %v3338, 0
      %v3499 = vsel %vm1335, %v3339, 0
      %v3502 = vsel %vm1335, %v3340, 0
      %v3505 = vsel %vm1335, %v3341, 0
      %v3508 = vsel %vm1335, %v3342, 0
      %v3511 = vsel %vm1335, %v3343, 0
      %3513 = vmatprep.subr.mxu0 0.0
      %3514 = vmatpush1.msra.mxu0 0.0
      %3515 = vmatprep.subr.mxu0 0.0
      %3516 = vmatpush1.msra.mxu0 0.0
      %3517 = vmatprep.subr.mxu0 0.0
      %3518 = vmatpush1.msra.mxu0 0.0
      %3519 = vmatprep.subr.mxu0 0.0
      %3520 = vmatpush1.msra.mxu0 0.0
      %3521 = vmatprep.subr.mxu0 0.0
      %3522 = vmatpush1.msra.mxu0 0.0
      %3523 = vmatprep.subr.mxu0 0.0
      %3524 = vmatpush1.msra.mxu0 0.0
      %3525 = vmatprep.subr.mxu0 0.0
      %3526 = vmatpush1.msra.mxu0 0.0
      %3527 = vmatprep.subr.mxu0 0.0
      %3528 = vmatpush1.msra.mxu0 0.0
      %3529 = vmatprep.subr.mxu0 0.0
      %3530 = vmatpush1.msra.mxu0 %v2347
      %3531 = vmatprep.subr.mxu0 0.0
      %3532 = vmatpush1.msra.mxu0 %v2346
      %3533 = vmatprep.subr.mxu0 0.0
      %3534 = vmatpush1.msra.mxu0 %v2345
      %3535 = vmatprep.subr.mxu0 0.0
      %3536 = vmatpush1.msra.mxu0 %v2344
      %3537 = vmatprep.subr.mxu0 0.0
      %3538 = vmatpush1.msra.mxu0 %v2343
      %3539 = vmatprep.subr.mxu0 0.0
      %3540 = vmatpush1.msra.mxu0 %v2342
      %3541 = vmatprep.subr.mxu0 0.0
      %3542 = vmatpush1.msra.mxu0 %v2341
      %3543 = vmatprep.subr.mxu0 0.0
      %3544 = vmatpush1.msra.mxu0 %v2340
      %3545 = vmatprep.subr.mxu0 0.0
      %3546 = vmatpush2.msra.mxu0 0.0
      %3547 = vmatprep.subr.mxu0 0.0
      %3548 = vmatpush2.msra.mxu0 0.0
      %3549 = vmatprep.subr.mxu0 0.0
      %3550 = vmatpush2.msra.mxu0 0.0
      %3551 = vmatprep.subr.mxu0 0.0
      %3552 = vmatpush2.msra.mxu0 0.0
      %3553 = vmatprep.subr.mxu0 0.0
      %3554 = vmatpush2.msra.mxu0 0.0
      %3555 = vmatprep.subr.mxu0 0.0
      %3556 = vmatpush2.msra.mxu0 0.0
      %3557 = vmatprep.subr.mxu0 0.0
      %3558 = vmatpush2.msra.mxu0 0.0
      %3559 = vmatprep.subr.mxu0 0.0
      %3560 = vmatpush2.msra.mxu0 0.0
      %3561 = vmatprep.subr.mxu0 0.0
      %3562 = vmatpush2.msra.mxu0 0.0
      %3563 = vmatprep.subr.mxu0 0.0
      %3564 = vmatpush2.msra.mxu0 0.0
      %3565 = vmatprep.subr.mxu0 0.0
      %3566 = vmatpush2.msra.mxu0 0.0
      %3567 = vmatprep.subr.mxu0 0.0
      %3568 = vmatpush2.msra.mxu0 0.0
      %3569 = vmatprep.subr.mxu0 0.0
      %3570 = vmatpush2.msra.mxu0 0.0
      %3571 = vmatprep.subr.mxu0 0.0
      %3572 = vmatpush2.msra.mxu0 0.0
      %3573 = vmatprep.subr.mxu0 0.0
      %3574 = vmatpush2.msra.mxu0 0.0
      %3575 = vmatprep.subr.mxu0 0.0
      %3576 = vmatpush2.msra.mxu0 0.0
      %3577 = vmatprep.mubr.f32.mxu0 0.0
      %3578 = vmatmul.mubr.f32.gmra.mxu0 %v3490
      %v3579 = vpop.f32.mrf.mxu0
      %v3580 = vadd.f32 0.0, %v3579
      %v3581 = vpop.f32.mrf.mxu0
      %3582 = vmatprep.mubr.f32.mxu0 0.0
      %3583 = vmatmul.mubr.f32.gmra.mxu0 %v3493
      %v3584 = vpop.f32.mrf.mxu0
      %v3585 = vadd.f32 0.0, %v3584
      %v3586 = vpop.f32.mrf.mxu0
      %3587 = vmatprep.mubr.f32.mxu0 0.0
      %3588 = vmatmul.mubr.f32.gmra.mxu0 %v3496
      %v3589 = vpop.f32.mrf.mxu0
      %v3590 = vadd.f32 0.0, %v3589
      %v3591 = vpop.f32.mrf.mxu0
      %3592 = vmatprep.mubr.f32.mxu0 0.0
      %3593 = vmatmul.mubr.f32.gmra.mxu0 %v3499
      %v3594 = vpop.f32.mrf.mxu0
      %v3595 = vadd.f32 0.0, %v3594
      %v3596 = vpop.f32.mrf.mxu0
      %3597 = vmatprep.mubr.f32.mxu0 0.0
      %3598 = vmatmul.mubr.f32.gmra.mxu0 %v3502
      %v3599 = vpop.f32.mrf.mxu0
      %v3600 = vadd.f32 0.0, %v3599
      %v3601 = vpop.f32.mrf.mxu0
      %3602 = vmatprep.mubr.f32.mxu0 0.0
      %3603 = vmatmul.mubr.f32.gmra.mxu0 %v3505
      %v3604 = vpop.f32.mrf.mxu0
      %v3605 = vadd.f32 0.0, %v3604
      %v3606 = vpop.f32.mrf.mxu0
      %3607 = vmatprep.mubr.f32.mxu0 0.0
      %3608 = vmatmul.mubr.f32.gmra.mxu0 %v3508
      %v3609 = vpop.f32.mrf.mxu0
      %v3610 = vadd.f32 0.0, %v3609
      %v3611 = vpop.f32.mrf.mxu0
      %3612 = vmatprep.mubr.f32.mxu0 0.0
      %3613 = vmatmul.mubr.f32.gmra.mxu0 %v3511
      %v3614 = vpop.f32.mrf.mxu0
      %v3615 = vadd.f32 0.0, %v3614
      %v3616 = vpop.f32.mrf.mxu0
      %3617 = vdwg.mxu0
      %v3619 = vsel %vm1335, %v3344, 0
      %v3622 = vsel %vm1335, %v3345, 0
      %v3625 = vsel %vm1335, %v3346, 0
      %v3628 = vsel %vm1335, %v3347, 0
      %v3631 = vsel %vm1335, %v3348, 0
      %v3634 = vsel %vm1335, %v3349, 0
      %v3637 = vsel %vm1335, %v3350, 0
      %v3640 = vsel %vm1335, %v3351, 0
      %3642 = vmatprep.subr.mxu0 0.0
      %3643 = vmatpush1.msra.mxu0 0.0
      %3644 = vmatprep.subr.mxu0 0.0
      %3645 = vmatpush1.msra.mxu0 0.0
      %3646 = vmatprep.subr.mxu0 0.0
      %3647 = vmatpush1.msra.mxu0 0.0
      %3648 = vmatprep.subr.mxu0 0.0
      %3649 = vmatpush1.msra.mxu0 0.0
      %3650 = vmatprep.subr.mxu0 0.0
      %3651 = vmatpush1.msra.mxu0 0.0
      %3652 = vmatprep.subr.mxu0 0.0
      %3653 = vmatpush1.msra.mxu0 0.0
      %3654 = vmatprep.subr.mxu0 0.0
      %3655 = vmatpush1.msra.mxu0 0.0
      %3656 = vmatprep.subr.mxu0 0.0
      %3657 = vmatpush1.msra.mxu0 0.0
      %3658 = vmatprep.subr.mxu0 0.0
      %3659 = vmatpush1.msra.mxu0 %v2355
      %3660 = vmatprep.subr.mxu0 0.0
      %3661 = vmatpush1.msra.mxu0 %v2354
      %3662 = vmatprep.subr.mxu0 0.0
      %3663 = vmatpush1.msra.mxu0 %v2353
      %3664 = vmatprep.subr.mxu0 0.0
      %3665 = vmatpush1.msra.mxu0 %v2352
      %3666 = vmatprep.subr.mxu0 0.0
      %3667 = vmatpush1.msra.mxu0 %v2351
      %3668 = vmatprep.subr.mxu0 0.0
      %3669 = vmatpush1.msra.mxu0 %v2350
      %3670 = vmatprep.subr.mxu0 0.0
      %3671 = vmatpush1.msra.mxu0 %v2349
      %3672 = vmatprep.subr.mxu0 0.0
      %3673 = vmatpush1.msra.mxu0 %v2348
      %3674 = vmatprep.subr.mxu0 0.0
      %3675 = vmatpush2.msra.mxu0 0.0
      %3676 = vmatprep.subr.mxu0 0.0
      %3677 = vmatpush2.msra.mxu0 0.0
      %3678 = vmatprep.subr.mxu0 0.0
      %3679 = vmatpush2.msra.mxu0 0.0
      %3680 = vmatprep.subr.mxu0 0.0
      %3681 = vmatpush2.msra.mxu0 0.0
      %3682 = vmatprep.subr.mxu0 0.0
      %3683 = vmatpush2.msra.mxu0 0.0
      %3684 = vmatprep.subr.mxu0 0.0
      %3685 = vmatpush2.msra.mxu0 0.0
      %3686 = vmatprep.subr.mxu0 0.0
      %3687 = vmatpush2.msra.mxu0 0.0
      %3688 = vmatprep.subr.mxu0 0.0
      %3689 = vmatpush2.msra.mxu0 0.0
      %3690 = vmatprep.subr.mxu0 0.0
      %3691 = vmatpush2.msra.mxu0 0.0
      %3692 = vmatprep.subr.mxu0 0.0
      %3693 = vmatpush2.msra.mxu0 0.0
      %3694 = vmatprep.subr.mxu0 0.0
      %3695 = vmatpush2.msra.mxu0 0.0
      %3696 = vmatprep.subr.mxu0 0.0
      %3697 = vmatpush2.msra.mxu0 0.0
      %3698 = vmatprep.subr.mxu0 0.0
      %3699 = vmatpush2.msra.mxu0 0.0
      %3700 = vmatprep.subr.mxu0 0.0
      %3701 = vmatpush2.msra.mxu0 0.0
      %3702 = vmatprep.subr.mxu0 0.0
      %3703 = vmatpush2.msra.mxu0 0.0
      %3704 = vmatprep.subr.mxu0 0.0
      %3705 = vmatpush2.msra.mxu0 0.0
      %3706 = vmatprep.mubr.f32.mxu0 0.0
      %3707 = vmatmul.mubr.f32.gmra.mxu0 %v3619
      %v3708 = vpop.f32.mrf.mxu0
      %v3709 = vadd.f32 0.0, %v3708
      %v3710 = vpop.f32.mrf.mxu0
      %3711 = vmatprep.mubr.f32.mxu0 0.0
      %3712 = vmatmul.mubr.f32.gmra.mxu0 %v3622
      %v3713 = vpop.f32.mrf.mxu0
      %v3714 = vadd.f32 0.0, %v3713
      %v3715 = vpop.f32.mrf.mxu0
      %3716 = vmatprep.mubr.f32.mxu0 0.0
      %3717 = vmatmul.mubr.f32.gmra.mxu0 %v3625
      %v3718 = vpop.f32.mrf.mxu0
      %v3719 = vadd.f32 0.0, %v3718
      %v3720 = vpop.f32.mrf.mxu0
      %3721 = vmatprep.mubr.f32.mxu0 0.0
      %3722 = vmatmul.mubr.f32.gmra.mxu0 %v3628
      %v3723 = vpop.f32.mrf.mxu0
      %v3724 = vadd.f32 0.0, %v3723
      %v3725 = vpop.f32.mrf.mxu0
      %3726 = vmatprep.mubr.f32.mxu0 0.0
      %3727 = vmatmul.mubr.f32.gmra.mxu0 %v3631
      %v3728 = vpop.f32.mrf.mxu0
      %v3729 = vadd.f32 0.0, %v3728
      %v3730 = vpop.f32.mrf.mxu0
      %3731 = vmatprep.mubr.f32.mxu0 0.0
      %3732 = vmatmul.mubr.f32.gmra.mxu0 %v3634
      %v3733 = vpop.f32.mrf.mxu0
      %v3734 = vadd.f32 0.0, %v3733
      %v3735 = vpop.f32.mrf.mxu0
      %3736 = vmatprep.mubr.f32.mxu0 0.0
      %3737 = vmatmul.mubr.f32.gmra.mxu0 %v3637
      %v3738 = vpop.f32.mrf.mxu0
      %v3739 = vadd.f32 0.0, %v3738
      %v3740 = vpop.f32.mrf.mxu0
      %3741 = vmatprep.mubr.f32.mxu0 0.0
      %3742 = vmatmul.mubr.f32.gmra.mxu0 %v3640
      %v3743 = vpop.f32.mrf.mxu0
      %v3744 = vadd.f32 0.0, %v3743
      %v3745 = vpop.f32.mrf.mxu0
      %3746 = vdwg.mxu0
      %v3748 = vsel %vm1335, %v3352, 0
      %v3751 = vsel %vm1335, %v3353, 0
      %v3754 = vsel %vm1335, %v3354, 0
      %v3757 = vsel %vm1335, %v3355, 0
      %v3760 = vsel %vm1335, %v3356, 0
      %v3763 = vsel %vm1335, %v3357, 0
      %v3766 = vsel %vm1335, %v3358, 0
      %v3769 = vsel %vm1335, %v3359, 0
      %3771 = vmatprep.subr.mxu0 0.0
      %3772 = vmatpush1.msra.mxu0 0.0
      %3773 = vmatprep.subr.mxu0 0.0
      %3774 = vmatpush1.msra.mxu0 0.0
      %3775 = vmatprep.subr.mxu0 0.0
      %3776 = vmatpush1.msra.mxu0 0.0
      %3777 = vmatprep.subr.mxu0 0.0
      %3778 = vmatpush1.msra.mxu0 0.0
      %3779 = vmatprep.subr.mxu0 0.0
      %3780 = vmatpush1.msra.mxu0 0.0
      %3781 = vmatprep.subr.mxu0 0.0
      %3782 = vmatpush1.msra.mxu0 0.0
      %3783 = vmatprep.subr.mxu0 0.0
      %3784 = vmatpush1.msra.mxu0 0.0
      %3785 = vmatprep.subr.mxu0 0.0
      %3786 = vmatpush1.msra.mxu0 0.0
      %3787 = vmatprep.subr.mxu0 0.0
      %3788 = vmatpush1.msra.mxu0 %v2363
      %3789 = vmatprep.subr.mxu0 0.0
      %3790 = vmatpush1.msra.mxu0 %v2362
      %3791 = vmatprep.subr.mxu0 0.0
      %3792 = vmatpush1.msra.mxu0 %v2361
      %3793 = vmatprep.subr.mxu0 0.0
      %3794 = vmatpush1.msra.mxu0 %v2360
      %3795 = vmatprep.subr.mxu0 0.0
      %3796 = vmatpush1.msra.mxu0 %v2359
      %3797 = vmatprep.subr.mxu0 0.0
      %3798 = vmatpush1.msra.mxu0 %v2358
      %3799 = vmatprep.subr.mxu0 0.0
      %3800 = vmatpush1.msra.mxu0 %v2357
      %3801 = vmatprep.subr.mxu0 0.0
      %3802 = vmatpush1.msra.mxu0 %v2356
      %3803 = vmatprep.subr.mxu0 0.0
      %3804 = vmatpush2.msra.mxu0 0.0
      %3805 = vmatprep.subr.mxu0 0.0
      %3806 = vmatpush2.msra.mxu0 0.0
      %3807 = vmatprep.subr.mxu0 0.0
      %3808 = vmatpush2.msra.mxu0 0.0
      %3809 = vmatprep.subr.mxu0 0.0
      %3810 = vmatpush2.msra.mxu0 0.0
      %3811 = vmatprep.subr.mxu0 0.0
      %3812 = vmatpush2.msra.mxu0 0.0
      %3813 = vmatprep.subr.mxu0 0.0
      %3814 = vmatpush2.msra.mxu0 0.0
      %3815 = vmatprep.subr.mxu0 0.0
      %3816 = vmatpush2.msra.mxu0 0.0
      %3817 = vmatprep.subr.mxu0 0.0
      %3818 = vmatpush2.msra.mxu0 0.0
      %3819 = vmatprep.subr.mxu0 0.0
      %3820 = vmatpush2.msra.mxu0 0.0
      %3821 = vmatprep.subr.mxu0 0.0
      %3822 = vmatpush2.msra.mxu0 0.0
      %3823 = vmatprep.subr.mxu0 0.0
      %3824 = vmatpush2.msra.mxu0 0.0
      %3825 = vmatprep.subr.mxu0 0.0
      %3826 = vmatpush2.msra.mxu0 0.0
      %3827 = vmatprep.subr.mxu0 0.0
      %3828 = vmatpush2.msra.mxu0 0.0
      %3829 = vmatprep.subr.mxu0 0.0
      %3830 = vmatpush2.msra.mxu0 0.0
      %3831 = vmatprep.subr.mxu0 0.0
      %3832 = vmatpush2.msra.mxu0 0.0
      %3833 = vmatprep.subr.mxu0 0.0
      %3834 = vmatpush2.msra.mxu0 0.0
      %3835 = vmatprep.mubr.f32.mxu0 0.0
      %3836 = vmatmul.mubr.f32.gmra.mxu0 %v3748
      %v3837 = vpop.f32.mrf.mxu0
      %v3838 = vadd.f32 0.0, %v3837
      %v3839 = vpop.f32.mrf.mxu0
      %3840 = vmatprep.mubr.f32.mxu0 0.0
      %3841 = vmatmul.mubr.f32.gmra.mxu0 %v3751
      %v3842 = vpop.f32.mrf.mxu0
      %v3843 = vadd.f32 0.0, %v3842
      %v3844 = vpop.f32.mrf.mxu0
      %3845 = vmatprep.mubr.f32.mxu0 0.0
      %3846 = vmatmul.mubr.f32.gmra.mxu0 %v3754
      %v3847 = vpop.f32.mrf.mxu0
      %v3848 = vadd.f32 0.0, %v3847
      %v3849 = vpop.f32.mrf.mxu0
      %3850 = vmatprep.mubr.f32.mxu0 0.0
      %3851 = vmatmul.mubr.f32.gmra.mxu0 %v3757
      %v3852 = vpop.f32.mrf.mxu0
      %v3853 = vadd.f32 0.0, %v3852
      %v3854 = vpop.f32.mrf.mxu0
      %3855 = vmatprep.mubr.f32.mxu0 0.0
      %3856 = vmatmul.mubr.f32.gmra.mxu0 %v3760
      %v3857 = vpop.f32.mrf.mxu0
      %v3858 = vadd.f32 0.0, %v3857
      %v3859 = vpop.f32.mrf.mxu0
      %3860 = vmatprep.mubr.f32.mxu0 0.0
      %3861 = vmatmul.mubr.f32.gmra.mxu0 %v3763
      %v3862 = vpop.f32.mrf.mxu0
      %v3863 = vadd.f32 0.0, %v3862
      %v3864 = vpop.f32.mrf.mxu0
      %3865 = vmatprep.mubr.f32.mxu0 0.0
      %3866 = vmatmul.mubr.f32.gmra.mxu0 %v3766
      %v3867 = vpop.f32.mrf.mxu0
      %v3868 = vadd.f32 0.0, %v3867
      %v3869 = vpop.f32.mrf.mxu0
      %3870 = vmatprep.mubr.f32.mxu0 0.0
      %3871 = vmatmul.mubr.f32.gmra.mxu0 %v3769
      %v3872 = vpop.f32.mrf.mxu0
      %v3873 = vadd.f32 0.0, %v3872
      %v3874 = vpop.f32.mrf.mxu0
      %3875 = vdwg.mxu0
      %3876 = vst.msk [vmem:[%s617] sm:$0xff] %vm722, %v3451
      %3877 = vst.msk [vmem:[%s617 + $0x8] sm:$0xff] %vm722, %v3456
      %3878 = vst.msk [vmem:[%s617 + $0x10] sm:$0xff] %vm722, %v3461
      %3879 = vst.msk [vmem:[%s617 + $0x18] sm:$0xff] %vm722, %v3466
      %3880 = vst.msk [vmem:[%s617 + $0x20] sm:$0xff] %vm722, %v3471
      %3881 = vst.msk [vmem:[%s617 + $0x28] sm:$0xff] %vm722, %v3476
      %3882 = vst.msk [vmem:[%s617 + $0x30] sm:$0xff] %vm722, %v3481
      %3883 = vst.msk [vmem:[%s617 + $0x38] sm:$0xff] %vm722, %v3486
      %3884 = vst.msk [vmem:[%s617 + $0x40] sm:$0xff] %vm722, %v3580
      %3885 = vst.msk [vmem:[%s617 + $0x48] sm:$0xff] %vm722, %v3585
      %3886 = vst.msk [vmem:[%s617 + $0x50] sm:$0xff] %vm722, %v3590
      %3887 = vst.msk [vmem:[%s617 + $0x58] sm:$0xff] %vm722, %v3595
      %3888 = vst.msk [vmem:[%s617 + $0x60] sm:$0xff] %vm722, %v3600
      %3889 = vst.msk [vmem:[%s617 + $0x68] sm:$0xff] %vm722, %v3605
      %3890 = vst.msk [vmem:[%s617 + $0x70] sm:$0xff] %vm722, %v3610
      %3891 = vst.msk [vmem:[%s617 + $0x78] sm:$0xff] %vm722, %v3615
      %3892 = vst.msk [vmem:[%s617 + $0x80] sm:$0xff] %vm722, %v3709
      %3893 = vst.msk [vmem:[%s617 + $0x88] sm:$0xff] %vm722, %v3714
      %3894 = vst.msk [vmem:[%s617 + $0x90] sm:$0xff] %vm722, %v3719
      %3895 = vst.msk [vmem:[%s617 + $0x98] sm:$0xff] %vm722, %v3724
      %3896 = vst.msk [vmem:[%s617 + $0xa0] sm:$0xff] %vm722, %v3729
      %3897 = vst.msk [vmem:[%s617 + $0xa8] sm:$0xff] %vm722, %v3734
      %3898 = vst.msk [vmem:[%s617 + $0xb0] sm:$0xff] %vm722, %v3739
      %3899 = vst.msk [vmem:[%s617 + $0xb8] sm:$0xff] %vm722, %v3744
      %3900 = vst.msk [vmem:[%s617 + $0xc0] sm:$0xff] %vm722, %v3838
      %3901 = vst.msk [vmem:[%s617 + $0xc8] sm:$0xff] %vm722, %v3843
      %3902 = vst.msk [vmem:[%s617 + $0xd0] sm:$0xff] %vm722, %v3848
      %3903 = vst.msk [vmem:[%s617 + $0xd8] sm:$0xff] %vm722, %v3853
      %3904 = vst.msk [vmem:[%s617 + $0xe0] sm:$0xff] %vm722, %v3858
      %3905 = vst.msk [vmem:[%s617 + $0xe8] sm:$0xff] %vm722, %v3863
      %3906 = vst.msk [vmem:[%s617 + $0xf0] sm:$0xff] %vm722, %v3868
      %3907 = vst.msk [vmem:[%s617 + $0xf8] sm:$0xff] %vm722, %v3873
      %v3908 = vld [vmem:[%s589] sm:$0xff]
      %v3909 = vld [vmem:[%s589 + $0x8] sm:$0xff]
      %v3910 = vld [vmem:[%s589 + $0x10] sm:$0xff]
      %v3911 = vld [vmem:[%s589 + $0x18] sm:$0xff]
      %v3912 = vld [vmem:[%s589 + $0x20] sm:$0xff]
      %v3913 = vld [vmem:[%s589 + $0x28] sm:$0xff]
      %v3914 = vld [vmem:[%s589 + $0x30] sm:$0xff]
      %v3915 = vld [vmem:[%s589 + $0x38] sm:$0xff]
      %v3916 = vld [vmem:[%s589 + $0x40] sm:$0xff]
      %v3917 = vld [vmem:[%s589 + $0x48] sm:$0xff]
      %v3918 = vld [vmem:[%s589 + $0x50] sm:$0xff]
      %v3919 = vld [vmem:[%s589 + $0x58] sm:$0xff]
      %v3920 = vld [vmem:[%s589 + $0x60] sm:$0xff]
      %v3921 = vld [vmem:[%s589 + $0x68] sm:$0xff]
      %v3922 = vld [vmem:[%s589 + $0x70] sm:$0xff]
      %v3923 = vld [vmem:[%s589 + $0x78] sm:$0xff]
      %v3924 = vld [vmem:[%s589 + $0x80] sm:$0xff]
      %v3925 = vld [vmem:[%s589 + $0x88] sm:$0xff]
      %v3926 = vld [vmem:[%s589 + $0x90] sm:$0xff]
      %v3927 = vld [vmem:[%s589 + $0x98] sm:$0xff]
      %v3928 = vld [vmem:[%s589 + $0xa0] sm:$0xff]
      %v3929 = vld [vmem:[%s589 + $0xa8] sm:$0xff]
      %v3930 = vld [vmem:[%s589 + $0xb0] sm:$0xff]
      %v3931 = vld [vmem:[%s589 + $0xb8] sm:$0xff]
      %v3932 = vld [vmem:[%s589 + $0xc0] sm:$0xff]
      %v3933 = vld [vmem:[%s589 + $0xc8] sm:$0xff]
      %v3934 = vld [vmem:[%s589 + $0xd0] sm:$0xff]
      %v3935 = vld [vmem:[%s589 + $0xd8] sm:$0xff]
      %v3936 = vld [vmem:[%s589 + $0xe0] sm:$0xff]
      %v3937 = vld [vmem:[%s589 + $0xe8] sm:$0xff]
      %v3938 = vld [vmem:[%s589 + $0xf0] sm:$0xff]
      %v3939 = vld [vmem:[%s589 + $0xf8] sm:$0xff]
      %v3940 = vld [vmem:[%s596] sm:$0xff]
      %v3941 = vld [vmem:[%s596 + $0x8] sm:$0xff]
      %v3942 = vld [vmem:[%s596 + $0x10] sm:$0xff]
      %v3943 = vld [vmem:[%s596 + $0x18] sm:$0xff]
      %v3944 = vld [vmem:[%s596 + $0x20] sm:$0xff]
      %v3945 = vld [vmem:[%s596 + $0x28] sm:$0xff]
      %v3946 = vld [vmem:[%s596 + $0x30] sm:$0xff]
      %v3947 = vld [vmem:[%s596 + $0x38] sm:$0xff]
      %v3948 = vld [vmem:[%s596 + $0x40] sm:$0xff]
      %v3949 = vld [vmem:[%s596 + $0x48] sm:$0xff]
      %v3950 = vld [vmem:[%s596 + $0x50] sm:$0xff]
      %v3951 = vld [vmem:[%s596 + $0x58] sm:$0xff]
      %v3952 = vld [vmem:[%s596 + $0x60] sm:$0xff]
      %v3953 = vld [vmem:[%s596 + $0x68] sm:$0xff]
      %v3954 = vld [vmem:[%s596 + $0x70] sm:$0xff]
      %v3955 = vld [vmem:[%s596 + $0x78] sm:$0xff]
      %v3956 = vld [vmem:[%s596 + $0x80] sm:$0xff]
      %v3957 = vld [vmem:[%s596 + $0x88] sm:$0xff]
      %v3958 = vld [vmem:[%s596 + $0x90] sm:$0xff]
      %v3959 = vld [vmem:[%s596 + $0x98] sm:$0xff]
      %v3960 = vld [vmem:[%s596 + $0xa0] sm:$0xff]
      %v3961 = vld [vmem:[%s596 + $0xa8] sm:$0xff]
      %v3962 = vld [vmem:[%s596 + $0xb0] sm:$0xff]
      %v3963 = vld [vmem:[%s596 + $0xb8] sm:$0xff]
      %v3964 = vld [vmem:[%s596 + $0xc0] sm:$0xff]
      %v3965 = vld [vmem:[%s596 + $0xc8] sm:$0xff]
      %v3966 = vld [vmem:[%s596 + $0xd0] sm:$0xff]
      %v3967 = vld [vmem:[%s596 + $0xd8] sm:$0xff]
      %v3968 = vld [vmem:[%s596 + $0xe0] sm:$0xff]
      %v3969 = vld [vmem:[%s596 + $0xe8] sm:$0xff]
      %v3970 = vld [vmem:[%s596 + $0xf0] sm:$0xff]
      %v3971 = vld [vmem:[%s596 + $0xf8] sm:$0xff]
      %v3972 = vld [vmem:[%s603] sm:$0xff]
      %v3973 = vld [vmem:[%s603 + $0x8] sm:$0xff]
      %v3974 = vld [vmem:[%s603 + $0x10] sm:$0xff]
      %v3975 = vld [vmem:[%s603 + $0x18] sm:$0xff]
      %v3976 = vld [vmem:[%s603 + $0x20] sm:$0xff]
      %v3977 = vld [vmem:[%s603 + $0x28] sm:$0xff]
      %v3978 = vld [vmem:[%s603 + $0x30] sm:$0xff]
      %v3979 = vld [vmem:[%s603 + $0x38] sm:$0xff]
      %v3980 = vld [vmem:[%s603 + $0x40] sm:$0xff]
      %v3981 = vld [vmem:[%s603 + $0x48] sm:$0xff]
      %v3982 = vld [vmem:[%s603 + $0x50] sm:$0xff]
      %v3983 = vld [vmem:[%s603 + $0x58] sm:$0xff]
      %v3984 = vld [vmem:[%s603 + $0x60] sm:$0xff]
      %v3985 = vld [vmem:[%s603 + $0x68] sm:$0xff]
      %v3986 = vld [vmem:[%s603 + $0x70] sm:$0xff]
      %v3987 = vld [vmem:[%s603 + $0x78] sm:$0xff]
      %v3988 = vld [vmem:[%s603 + $0x80] sm:$0xff]
      %v3989 = vld [vmem:[%s603 + $0x88] sm:$0xff]
      %v3990 = vld [vmem:[%s603 + $0x90] sm:$0xff]
      %v3991 = vld [vmem:[%s603 + $0x98] sm:$0xff]
      %v3992 = vld [vmem:[%s603 + $0xa0] sm:$0xff]
      %v3993 = vld [vmem:[%s603 + $0xa8] sm:$0xff]
      %v3994 = vld [vmem:[%s603 + $0xb0] sm:$0xff]
      %v3995 = vld [vmem:[%s603 + $0xb8] sm:$0xff]
      %v3996 = vld [vmem:[%s603 + $0xc0] sm:$0xff]
      %v3997 = vld [vmem:[%s603 + $0xc8] sm:$0xff]
      %v3998 = vld [vmem:[%s603 + $0xd0] sm:$0xff]
      %v3999 = vld [vmem:[%s603 + $0xd8] sm:$0xff]
      %v4000 = vld [vmem:[%s603 + $0xe0] sm:$0xff]
      %v4001 = vld [vmem:[%s603 + $0xe8] sm:$0xff]
      %v4002 = vld [vmem:[%s603 + $0xf0] sm:$0xff]
      %v4003 = vld [vmem:[%s603 + $0xf8] sm:$0xff]
      %v4005 = vsel %vm722, %v3908, 0
      %v4008 = vsel %vm722, %v3909, 0
      %v4011 = vsel %vm722, %v3910, 0
      %v4014 = vsel %vm722, %v3911, 0
      %v4017 = vsel %vm722, %v3912, 0
      %v4020 = vsel %vm722, %v3913, 0
      %v4023 = vsel %vm722, %v3914, 0
      %v4026 = vsel %vm722, %v3915, 0
      %v4029 = vsel %vm722, %v3940, 0
      %v4032 = vsel %vm722, %v3941, 0
      %v4035 = vsel %vm722, %v3942, 0
      %v4038 = vsel %vm722, %v3943, 0
      %v4041 = vsel %vm722, %v3944, 0
      %v4044 = vsel %vm722, %v3945, 0
      %v4047 = vsel %vm722, %v3946, 0
      %v4050 = vsel %vm722, %v3947, 0
      %4052 = vmatprep.subr.mxu0 0.0
      %4053 = vmatpush1.xpose.msra.mxu0 0.0
      %4054 = vmatprep.subr.mxu0 0.0
      %4055 = vmatpush1.xpose.msra.mxu0 0.0
      %4056 = vmatprep.subr.mxu0 0.0
      %4057 = vmatpush1.xpose.msra.mxu0 0.0
      %4058 = vmatprep.subr.mxu0 0.0
      %4059 = vmatpush1.xpose.msra.mxu0 0.0
      %4060 = vmatprep.subr.mxu0 0.0
      %4061 = vmatpush1.xpose.msra.mxu0 0.0
      %4062 = vmatprep.subr.mxu0 0.0
      %4063 = vmatpush1.xpose.msra.mxu0 0.0
      %4064 = vmatprep.subr.mxu0 0.0
      %4065 = vmatpush1.xpose.msra.mxu0 0.0
      %4066 = vmatprep.subr.mxu0 0.0
      %4067 = vmatpush1.xpose.msra.mxu0 0.0
      %4068 = vmatprep.subr.mxu0 0.0
      %4069 = vmatpush1.xpose.msra.mxu0 %v4050
      %4070 = vmatprep.subr.mxu0 0.0
      %4071 = vmatpush1.xpose.msra.mxu0 %v4047
      %4072 = vmatprep.subr.mxu0 0.0
      %4073 = vmatpush1.xpose.msra.mxu0 %v4044
      %4074 = vmatprep.subr.mxu0 0.0
      %4075 = vmatpush1.xpose.msra.mxu0 %v4041
      %4076 = vmatprep.subr.mxu0 0.0
      %4077 = vmatpush1.xpose.msra.mxu0 %v4038
      %4078 = vmatprep.subr.mxu0 0.0
      %4079 = vmatpush1.xpose.msra.mxu0 %v4035
      %4080 = vmatprep.subr.mxu0 0.0
      %4081 = vmatpush1.xpose.msra.mxu0 %v4032
      %4082 = vmatprep.subr.mxu0 0.0
      %4083 = vmatpush1.xpose.msra.mxu0 %v4029
      %4084 = vmatprep.subr.mxu0 0.0
      %4085 = vmatpush2.xpose.msra.mxu0 0.0
      %4086 = vmatprep.subr.mxu0 0.0
      %4087 = vmatpush2.xpose.msra.mxu0 0.0
      %4088 = vmatprep.subr.mxu0 0.0
      %4089 = vmatpush2.xpose.msra.mxu0 0.0
      %4090 = vmatprep.subr.mxu0 0.0
      %4091 = vmatpush2.xpose.msra.mxu0 0.0
      %4092 = vmatprep.subr.mxu0 0.0
      %4093 = vmatpush2.xpose.msra.mxu0 0.0
      %4094 = vmatprep.subr.mxu0 0.0
      %4095 = vmatpush2.xpose.msra.mxu0 0.0
      %4096 = vmatprep.subr.mxu0 0.0
      %4097 = vmatpush2.xpose.msra.mxu0 0.0
      %4098 = vmatprep.subr.mxu0 0.0
      %4099 = vmatpush2.xpose.msra.mxu0 0.0
      %4100 = vmatprep.subr.mxu0 0.0
      %4101 = vmatpush2.xpose.msra.mxu0 0.0
      %4102 = vmatprep.subr.mxu0 0.0
      %4103 = vmatpush2.xpose.msra.mxu0 0.0
      %4104 = vmatprep.subr.mxu0 0.0
      %4105 = vmatpush2.xpose.msra.mxu0 0.0
      %4106 = vmatprep.subr.mxu0 0.0
      %4107 = vmatpush2.xpose.msra.mxu0 0.0
      %4108 = vmatprep.subr.mxu0 0.0
      %4109 = vmatpush2.xpose.msra.mxu0 0.0
      %4110 = vmatprep.subr.mxu0 0.0
      %4111 = vmatpush2.xpose.msra.mxu0 0.0
      %4112 = vmatprep.subr.mxu0 0.0
      %4113 = vmatpush2.xpose.msra.mxu0 0.0
      %4114 = vmatprep.subr.mxu0 0.0
      %4115 = vmatpush2.xpose.msra.mxu0 0.0
      %4116 = vmatprep.mubr.f32.mxu0 0.0
      %4117 = vmatmul.mubr.f32.gmra.mxu0 %v4005
      %v4118 = vpop.f32.mrf.mxu0
      %v4119 = vadd.f32 0.0, %v4118
      %v4120 = vpop.f32.mrf.mxu0
      %4121 = vmatprep.mubr.f32.mxu0 0.0
      %4122 = vmatmul.mubr.f32.gmra.mxu0 %v4008
      %v4123 = vpop.f32.mrf.mxu0
      %v4124 = vadd.f32 0.0, %v4123
      %v4125 = vpop.f32.mrf.mxu0
      %4126 = vmatprep.mubr.f32.mxu0 0.0
      %4127 = vmatmul.mubr.f32.gmra.mxu0 %v4011
      %v4128 = vpop.f32.mrf.mxu0
      %v4129 = vadd.f32 0.0, %v4128
      %v4130 = vpop.f32.mrf.mxu0
      %4131 = vmatprep.mubr.f32.mxu0 0.0
      %4132 = vmatmul.mubr.f32.gmra.mxu0 %v4014
      %v4133 = vpop.f32.mrf.mxu0
      %v4134 = vadd.f32 0.0, %v4133
      %v4135 = vpop.f32.mrf.mxu0
      %4136 = vmatprep.mubr.f32.mxu0 0.0
      %4137 = vmatmul.mubr.f32.gmra.mxu0 %v4017
      %v4138 = vpop.f32.mrf.mxu0
      %v4139 = vadd.f32 0.0, %v4138
      %v4140 = vpop.f32.mrf.mxu0
      %4141 = vmatprep.mubr.f32.mxu0 0.0
      %4142 = vmatmul.mubr.f32.gmra.mxu0 %v4020
      %v4143 = vpop.f32.mrf.mxu0
      %v4144 = vadd.f32 0.0, %v4143
      %v4145 = vpop.f32.mrf.mxu0
      %4146 = vmatprep.mubr.f32.mxu0 0.0
      %4147 = vmatmul.mubr.f32.gmra.mxu0 %v4023
      %v4148 = vpop.f32.mrf.mxu0
      %v4149 = vadd.f32 0.0, %v4148
      %v4150 = vpop.f32.mrf.mxu0
      %4151 = vmatprep.mubr.f32.mxu0 0.0
      %4152 = vmatmul.mubr.f32.gmra.mxu0 %v4026
      %v4153 = vpop.f32.mrf.mxu0
      %v4154 = vadd.f32 0.0, %v4153
      %v4155 = vpop.f32.mrf.mxu0
      %4156 = vdwg.mxu0
      %v4158 = vsel %vm722, %v3916, 0
      %v4161 = vsel %vm722, %v3917, 0
      %v4164 = vsel %vm722, %v3918, 0
      %v4167 = vsel %vm722, %v3919, 0
      %v4170 = vsel %vm722, %v3920, 0
      %v4173 = vsel %vm722, %v3921, 0
      %v4176 = vsel %vm722, %v3922, 0
      %v4179 = vsel %vm722, %v3923, 0
      %v4182 = vsel %vm722, %v3948, 0
      %v4185 = vsel %vm722, %v3949, 0
      %v4188 = vsel %vm722, %v3950, 0
      %v4191 = vsel %vm722, %v3951, 0
      %v4194 = vsel %vm722, %v3952, 0
      %v4197 = vsel %vm722, %v3953, 0
      %v4200 = vsel %vm722, %v3954, 0
      %v4203 = vsel %vm722, %v3955, 0
      %4205 = vmatprep.subr.mxu0 0.0
      %4206 = vmatpush1.xpose.msra.mxu0 0.0
      %4207 = vmatprep.subr.mxu0 0.0
      %4208 = vmatpush1.xpose.msra.mxu0 0.0
      %4209 = vmatprep.subr.mxu0 0.0
      %4210 = vmatpush1.xpose.msra.mxu0 0.0
      %4211 = vmatprep.subr.mxu0 0.0
      %4212 = vmatpush1.xpose.msra.mxu0 0.0
      %4213 = vmatprep.subr.mxu0 0.0
      %4214 = vmatpush1.xpose.msra.mxu0 0.0
      %4215 = vmatprep.subr.mxu0 0.0
      %4216 = vmatpush1.xpose.msra.mxu0 0.0
      %4217 = vmatprep.subr.mxu0 0.0
      %4218 = vmatpush1.xpose.msra.mxu0 0.0
      %4219 = vmatprep.subr.mxu0 0.0
      %4220 = vmatpush1.xpose.msra.mxu0 0.0
      %4221 = vmatprep.subr.mxu0 0.0
      %4222 = vmatpush1.xpose.msra.mxu0 %v4203
      %4223 = vmatprep.subr.mxu0 0.0
      %4224 = vmatpush1.xpose.msra.mxu0 %v4200
      %4225 = vmatprep.subr.mxu0 0.0
      %4226 = vmatpush1.xpose.msra.mxu0 %v4197
      %4227 = vmatprep.subr.mxu0 0.0
      %4228 = vmatpush1.xpose.msra.mxu0 %v4194
      %4229 = vmatprep.subr.mxu0 0.0
      %4230 = vmatpush1.xpose.msra.mxu0 %v4191
      %4231 = vmatprep.subr.mxu0 0.0
      %4232 = vmatpush1.xpose.msra.mxu0 %v4188
      %4233 = vmatprep.subr.mxu0 0.0
      %4234 = vmatpush1.xpose.msra.mxu0 %v4185
      %4235 = vmatprep.subr.mxu0 0.0
      %4236 = vmatpush1.xpose.msra.mxu0 %v4182
      %4237 = vmatprep.subr.mxu0 0.0
      %4238 = vmatpush2.xpose.msra.mxu0 0.0
      %4239 = vmatprep.subr.mxu0 0.0
      %4240 = vmatpush2.xpose.msra.mxu0 0.0
      %4241 = vmatprep.subr.mxu0 0.0
      %4242 = vmatpush2.xpose.msra.mxu0 0.0
      %4243 = vmatprep.subr.mxu0 0.0
      %4244 = vmatpush2.xpose.msra.mxu0 0.0
      %4245 = vmatprep.subr.mxu0 0.0
      %4246 = vmatpush2.xpose.msra.mxu0 0.0
      %4247 = vmatprep.subr.mxu0 0.0
      %4248 = vmatpush2.xpose.msra.mxu0 0.0
      %4249 = vmatprep.subr.mxu0 0.0
      %4250 = vmatpush2.xpose.msra.mxu0 0.0
      %4251 = vmatprep.subr.mxu0 0.0
      %4252 = vmatpush2.xpose.msra.mxu0 0.0
      %4253 = vmatprep.subr.mxu0 0.0
      %4254 = vmatpush2.xpose.msra.mxu0 0.0
      %4255 = vmatprep.subr.mxu0 0.0
      %4256 = vmatpush2.xpose.msra.mxu0 0.0
      %4257 = vmatprep.subr.mxu0 0.0
      %4258 = vmatpush2.xpose.msra.mxu0 0.0
      %4259 = vmatprep.subr.mxu0 0.0
      %4260 = vmatpush2.xpose.msra.mxu0 0.0
      %4261 = vmatprep.subr.mxu0 0.0
      %4262 = vmatpush2.xpose.msra.mxu0 0.0
      %4263 = vmatprep.subr.mxu0 0.0
      %4264 = vmatpush2.xpose.msra.mxu0 0.0
      %4265 = vmatprep.subr.mxu0 0.0
      %4266 = vmatpush2.xpose.msra.mxu0 0.0
      %4267 = vmatprep.subr.mxu0 0.0
      %4268 = vmatpush2.xpose.msra.mxu0 0.0
      %4269 = vmatprep.mubr.f32.mxu0 0.0
      %4270 = vmatmul.mubr.f32.gmra.mxu0 %v4158
      %v4271 = vpop.f32.mrf.mxu0
      %v4272 = vadd.f32 0.0, %v4271
      %v4273 = vpop.f32.mrf.mxu0
      %4274 = vmatprep.mubr.f32.mxu0 0.0
      %4275 = vmatmul.mubr.f32.gmra.mxu0 %v4161
      %v4276 = vpop.f32.mrf.mxu0
      %v4277 = vadd.f32 0.0, %v4276
      %v4278 = vpop.f32.mrf.mxu0
      %4279 = vmatprep.mubr.f32.mxu0 0.0
      %4280 = vmatmul.mubr.f32.gmra.mxu0 %v4164
      %v4281 = vpop.f32.mrf.mxu0
      %v4282 = vadd.f32 0.0, %v4281
      %v4283 = vpop.f32.mrf.mxu0
      %4284 = vmatprep.mubr.f32.mxu0 0.0
      %4285 = vmatmul.mubr.f32.gmra.mxu0 %v4167
      %v4286 = vpop.f32.mrf.mxu0
      %v4287 = vadd.f32 0.0, %v4286
      %v4288 = vpop.f32.mrf.mxu0
      %4289 = vmatprep.mubr.f32.mxu0 0.0
      %4290 = vmatmul.mubr.f32.gmra.mxu0 %v4170
      %v4291 = vpop.f32.mrf.mxu0
      %v4292 = vadd.f32 0.0, %v4291
      %v4293 = vpop.f32.mrf.mxu0
      %4294 = vmatprep.mubr.f32.mxu0 0.0
      %4295 = vmatmul.mubr.f32.gmra.mxu0 %v4173
      %v4296 = vpop.f32.mrf.mxu0
      %v4297 = vadd.f32 0.0, %v4296
      %v4298 = vpop.f32.mrf.mxu0
      %4299 = vmatprep.mubr.f32.mxu0 0.0
      %4300 = vmatmul.mubr.f32.gmra.mxu0 %v4176
      %v4301 = vpop.f32.mrf.mxu0
      %v4302 = vadd.f32 0.0, %v4301
      %v4303 = vpop.f32.mrf.mxu0
      %4304 = vmatprep.mubr.f32.mxu0 0.0
      %4305 = vmatmul.mubr.f32.gmra.mxu0 %v4179
      %v4306 = vpop.f32.mrf.mxu0
      %v4307 = vadd.f32 0.0, %v4306
      %v4308 = vpop.f32.mrf.mxu0
      %4309 = vdwg.mxu0
      %v4311 = vsel %vm722, %v3924, 0
      %v4314 = vsel %vm722, %v3925, 0
      %v4317 = vsel %vm722, %v3926, 0
      %v4320 = vsel %vm722, %v3927, 0
      %v4323 = vsel %vm722, %v3928, 0
      %v4326 = vsel %vm722, %v3929, 0
      %v4329 = vsel %vm722, %v3930, 0
      %v4332 = vsel %vm722, %v3931, 0
      %v4335 = vsel %vm722, %v3956, 0
      %v4338 = vsel %vm722, %v3957, 0
      %v4341 = vsel %vm722, %v3958, 0
      %v4344 = vsel %vm722, %v3959, 0
      %v4347 = vsel %vm722, %v3960, 0
      %v4350 = vsel %vm722, %v3961, 0
      %v4353 = vsel %vm722, %v3962, 0
      %v4356 = vsel %vm722, %v3963, 0
      %4358 = vmatprep.subr.mxu0 0.0
      %4359 = vmatpush1.xpose.msra.mxu0 0.0
      %4360 = vmatprep.subr.mxu0 0.0
      %4361 = vmatpush1.xpose.msra.mxu0 0.0
      %4362 = vmatprep.subr.mxu0 0.0
      %4363 = vmatpush1.xpose.msra.mxu0 0.0
      %4364 = vmatprep.subr.mxu0 0.0
      %4365 = vmatpush1.xpose.msra.mxu0 0.0
      %4366 = vmatprep.subr.mxu0 0.0
      %4367 = vmatpush1.xpose.msra.mxu0 0.0
      %4368 = vmatprep.subr.mxu0 0.0
      %4369 = vmatpush1.xpose.msra.mxu0 0.0
      %4370 = vmatprep.subr.mxu0 0.0
      %4371 = vmatpush1.xpose.msra.mxu0 0.0
      %4372 = vmatprep.subr.mxu0 0.0
      %4373 = vmatpush1.xpose.msra.mxu0 0.0
      %4374 = vmatprep.subr.mxu0 0.0
      %4375 = vmatpush1.xpose.msra.mxu0 %v4356
      %4376 = vmatprep.subr.mxu0 0.0
      %4377 = vmatpush1.xpose.msra.mxu0 %v4353
      %4378 = vmatprep.subr.mxu0 0.0
      %4379 = vmatpush1.xpose.msra.mxu0 %v4350
      %4380 = vmatprep.subr.mxu0 0.0
      %4381 = vmatpush1.xpose.msra.mxu0 %v4347
      %4382 = vmatprep.subr.mxu0 0.0
      %4383 = vmatpush1.xpose.msra.mxu0 %v4344
      %4384 = vmatprep.subr.mxu0 0.0
      %4385 = vmatpush1.xpose.msra.mxu0 %v4341
      %4386 = vmatprep.subr.mxu0 0.0
      %4387 = vmatpush1.xpose.msra.mxu0 %v4338
      %4388 = vmatprep.subr.mxu0 0.0
      %4389 = vmatpush1.xpose.msra.mxu0 %v4335
      %4390 = vmatprep.subr.mxu0 0.0
      %4391 = vmatpush2.xpose.msra.mxu0 0.0
      %4392 = vmatprep.subr.mxu0 0.0
      %4393 = vmatpush2.xpose.msra.mxu0 0.0
      %4394 = vmatprep.subr.mxu0 0.0
      %4395 = vmatpush2.xpose.msra.mxu0 0.0
      %4396 = vmatprep.subr.mxu0 0.0
      %4397 = vmatpush2.xpose.msra.mxu0 0.0
      %4398 = vmatprep.subr.mxu0 0.0
      %4399 = vmatpush2.xpose.msra.mxu0 0.0
      %4400 = vmatprep.subr.mxu0 0.0
      %4401 = vmatpush2.xpose.msra.mxu0 0.0
      %4402 = vmatprep.subr.mxu0 0.0
      %4403 = vmatpush2.xpose.msra.mxu0 0.0
      %4404 = vmatprep.subr.mxu0 0.0
      %4405 = vmatpush2.xpose.msra.mxu0 0.0
      %4406 = vmatprep.subr.mxu0 0.0
      %4407 = vmatpush2.xpose.msra.mxu0 0.0
      %4408 = vmatprep.subr.mxu0 0.0
      %4409 = vmatpush2.xpose.msra.mxu0 0.0
      %4410 = vmatprep.subr.mxu0 0.0
      %4411 = vmatpush2.xpose.msra.mxu0 0.0
      %4412 = vmatprep.subr.mxu0 0.0
      %4413 = vmatpush2.xpose.msra.mxu0 0.0
      %4414 = vmatprep.subr.mxu0 0.0
      %4415 = vmatpush2.xpose.msra.mxu0 0.0
      %4416 = vmatprep.subr.mxu0 0.0
      %4417 = vmatpush2.xpose.msra.mxu0 0.0
      %4418 = vmatprep.subr.mxu0 0.0
      %4419 = vmatpush2.xpose.msra.mxu0 0.0
      %4420 = vmatprep.subr.mxu0 0.0
      %4421 = vmatpush2.xpose.msra.mxu0 0.0
      %4422 = vmatprep.mubr.f32.mxu0 0.0
      %4423 = vmatmul.mubr.f32.gmra.mxu0 %v4311
      %v4424 = vpop.f32.mrf.mxu0
      %v4425 = vadd.f32 0.0, %v4424
      %v4426 = vpop.f32.mrf.mxu0
      %4427 = vmatprep.mubr.f32.mxu0 0.0
      %4428 = vmatmul.mubr.f32.gmra.mxu0 %v4314
      %v4429 = vpop.f32.mrf.mxu0
      %v4430 = vadd.f32 0.0, %v4429
      %v4431 = vpop.f32.mrf.mxu0
      %4432 = vmatprep.mubr.f32.mxu0 0.0
      %4433 = vmatmul.mubr.f32.gmra.mxu0 %v4317
      %v4434 = vpop.f32.mrf.mxu0
      %v4435 = vadd.f32 0.0, %v4434
      %v4436 = vpop.f32.mrf.mxu0
      %4437 = vmatprep.mubr.f32.mxu0 0.0
      %4438 = vmatmul.mubr.f32.gmra.mxu0 %v4320
      %v4439 = vpop.f32.mrf.mxu0
      %v4440 = vadd.f32 0.0, %v4439
      %v4441 = vpop.f32.mrf.mxu0
      %4442 = vmatprep.mubr.f32.mxu0 0.0
      %4443 = vmatmul.mubr.f32.gmra.mxu0 %v4323
      %v4444 = vpop.f32.mrf.mxu0
      %v4445 = vadd.f32 0.0, %v4444
      %v4446 = vpop.f32.mrf.mxu0
      %4447 = vmatprep.mubr.f32.mxu0 0.0
      %4448 = vmatmul.mubr.f32.gmra.mxu0 %v4326
      %v4449 = vpop.f32.mrf.mxu0
      %v4450 = vadd.f32 0.0, %v4449
      %v4451 = vpop.f32.mrf.mxu0
      %4452 = vmatprep.mubr.f32.mxu0 0.0
      %4453 = vmatmul.mubr.f32.gmra.mxu0 %v4329
      %v4454 = vpop.f32.mrf.mxu0
      %v4455 = vadd.f32 0.0, %v4454
      %v4456 = vpop.f32.mrf.mxu0
      %4457 = vmatprep.mubr.f32.mxu0 0.0
      %4458 = vmatmul.mubr.f32.gmra.mxu0 %v4332
      %v4459 = vpop.f32.mrf.mxu0
      %v4460 = vadd.f32 0.0, %v4459
      %v4461 = vpop.f32.mrf.mxu0
      %4462 = vdwg.mxu0
      %v4464 = vsel %vm722, %v3932, 0
      %v4467 = vsel %vm722, %v3933, 0
      %v4470 = vsel %vm722, %v3934, 0
      %v4473 = vsel %vm722, %v3935, 0
      %v4476 = vsel %vm722, %v3936, 0
      %v4479 = vsel %vm722, %v3937, 0
      %v4482 = vsel %vm722, %v3938, 0
      %v4485 = vsel %vm722, %v3939, 0
      %v4488 = vsel %vm722, %v3964, 0
      %v4491 = vsel %vm722, %v3965, 0
      %v4494 = vsel %vm722, %v3966, 0
      %v4497 = vsel %vm722, %v3967, 0
      %v4500 = vsel %vm722, %v3968, 0
      %v4503 = vsel %vm722, %v3969, 0
      %v4506 = vsel %vm722, %v3970, 0
      %v4509 = vsel %vm722, %v3971, 0
      %4511 = vmatprep.subr.mxu0 0.0
      %4512 = vmatpush1.xpose.msra.mxu0 0.0
      %4513 = vmatprep.subr.mxu0 0.0
      %4514 = vmatpush1.xpose.msra.mxu0 0.0
      %4515 = vmatprep.subr.mxu0 0.0
      %4516 = vmatpush1.xpose.msra.mxu0 0.0
      %4517 = vmatprep.subr.mxu0 0.0
      %4518 = vmatpush1.xpose.msra.mxu0 0.0
      %4519 = vmatprep.subr.mxu0 0.0
      %4520 = vmatpush1.xpose.msra.mxu0 0.0
      %4521 = vmatprep.subr.mxu0 0.0
      %4522 = vmatpush1.xpose.msra.mxu0 0.0
      %4523 = vmatprep.subr.mxu0 0.0
      %4524 = vmatpush1.xpose.msra.mxu0 0.0
      %4525 = vmatprep.subr.mxu0 0.0
      %4526 = vmatpush1.xpose.msra.mxu0 0.0
      %4527 = vmatprep.subr.mxu0 0.0
      %4528 = vmatpush1.xpose.msra.mxu0 %v4509
      %4529 = vmatprep.subr.mxu0 0.0
      %4530 = vmatpush1.xpose.msra.mxu0 %v4506
      %4531 = vmatprep.subr.mxu0 0.0
      %4532 = vmatpush1.xpose.msra.mxu0 %v4503
      %4533 = vmatprep.subr.mxu0 0.0
      %4534 = vmatpush1.xpose.msra.mxu0 %v4500
      %4535 = vmatprep.subr.mxu0 0.0
      %4536 = vmatpush1.xpose.msra.mxu0 %v4497
      %4537 = vmatprep.subr.mxu0 0.0
      %4538 = vmatpush1.xpose.msra.mxu0 %v4494
      %4539 = vmatprep.subr.mxu0 0.0
      %4540 = vmatpush1.xpose.msra.mxu0 %v4491
      %4541 = vmatprep.subr.mxu0 0.0
      %4542 = vmatpush1.xpose.msra.mxu0 %v4488
      %4543 = vmatprep.subr.mxu0 0.0
      %4544 = vmatpush2.xpose.msra.mxu0 0.0
      %4545 = vmatprep.subr.mxu0 0.0
      %4546 = vmatpush2.xpose.msra.mxu0 0.0
      %4547 = vmatprep.subr.mxu0 0.0
      %4548 = vmatpush2.xpose.msra.mxu0 0.0
      %4549 = vmatprep.subr.mxu0 0.0
      %4550 = vmatpush2.xpose.msra.mxu0 0.0
      %4551 = vmatprep.subr.mxu0 0.0
      %4552 = vmatpush2.xpose.msra.mxu0 0.0
      %4553 = vmatprep.subr.mxu0 0.0
      %4554 = vmatpush2.xpose.msra.mxu0 0.0
      %4555 = vmatprep.subr.mxu0 0.0
      %4556 = vmatpush2.xpose.msra.mxu0 0.0
      %4557 = vmatprep.subr.mxu0 0.0
      %4558 = vmatpush2.xpose.msra.mxu0 0.0
      %4559 = vmatprep.subr.mxu0 0.0
      %4560 = vmatpush2.xpose.msra.mxu0 0.0
      %4561 = vmatprep.subr.mxu0 0.0
      %4562 = vmatpush2.xpose.msra.mxu0 0.0
      %4563 = vmatprep.subr.mxu0 0.0
      %4564 = vmatpush2.xpose.msra.mxu0 0.0
      %4565 = vmatprep.subr.mxu0 0.0
      %4566 = vmatpush2.xpose.msra.mxu0 0.0
      %4567 = vmatprep.subr.mxu0 0.0
      %4568 = vmatpush2.xpose.msra.mxu0 0.0
      %4569 = vmatprep.subr.mxu0 0.0
      %4570 = vmatpush2.xpose.msra.mxu0 0.0
      %4571 = vmatprep.subr.mxu0 0.0
      %4572 = vmatpush2.xpose.msra.mxu0 0.0
      %4573 = vmatprep.subr.mxu0 0.0
      %4574 = vmatpush2.xpose.msra.mxu0 0.0
      %4575 = vmatprep.mubr.f32.mxu0 0.0
      %4576 = vmatmul.mubr.f32.gmra.mxu0 %v4464
      %v4577 = vpop.f32.mrf.mxu0
      %v4578 = vadd.f32 0.0, %v4577
      %v4579 = vpop.f32.mrf.mxu0
      %4580 = vmatprep.mubr.f32.mxu0 0.0
      %4581 = vmatmul.mubr.f32.gmra.mxu0 %v4467
      %v4582 = vpop.f32.mrf.mxu0
      %v4583 = vadd.f32 0.0, %v4582
      %v4584 = vpop.f32.mrf.mxu0
      %4585 = vmatprep.mubr.f32.mxu0 0.0
      %4586 = vmatmul.mubr.f32.gmra.mxu0 %v4470
      %v4587 = vpop.f32.mrf.mxu0
      %v4588 = vadd.f32 0.0, %v4587
      %v4589 = vpop.f32.mrf.mxu0
      %4590 = vmatprep.mubr.f32.mxu0 0.0
      %4591 = vmatmul.mubr.f32.gmra.mxu0 %v4473
      %v4592 = vpop.f32.mrf.mxu0
      %v4593 = vadd.f32 0.0, %v4592
      %v4594 = vpop.f32.mrf.mxu0
      %4595 = vmatprep.mubr.f32.mxu0 0.0
      %4596 = vmatmul.mubr.f32.gmra.mxu0 %v4476
      %v4597 = vpop.f32.mrf.mxu0
      %v4598 = vadd.f32 0.0, %v4597
      %v4599 = vpop.f32.mrf.mxu0
      %4600 = vmatprep.mubr.f32.mxu0 0.0
      %4601 = vmatmul.mubr.f32.gmra.mxu0 %v4479
      %v4602 = vpop.f32.mrf.mxu0
      %v4603 = vadd.f32 0.0, %v4602
      %v4604 = vpop.f32.mrf.mxu0
      %4605 = vmatprep.mubr.f32.mxu0 0.0
      %4606 = vmatmul.mubr.f32.gmra.mxu0 %v4482
      %v4607 = vpop.f32.mrf.mxu0
      %v4608 = vadd.f32 0.0, %v4607
      %v4609 = vpop.f32.mrf.mxu0
      %4610 = vmatprep.mubr.f32.mxu0 0.0
      %4611 = vmatmul.mubr.f32.gmra.mxu0 %v4485
      %v4612 = vpop.f32.mrf.mxu0
      %v4613 = vadd.f32 0.0, %v4612
      %v4614 = vpop.f32.mrf.mxu0
      %4615 = vdwg.mxu0
      %v4616 = vsel %vm1335, %v4119, -inf
      %4617 = vmax.xlane.f32.xlu0 %v4616
      %v4618 = vpop.xlane.xlu0 %4617
      %v4619 = vsel %vm1335, %v4124, -inf
      %4620 = vmax.xlane.f32.xlu0 %v4619
      %v4621 = vpop.xlane.xlu0 %4620
      %v4622 = vsel %vm1335, %v4129, -inf
      %4623 = vmax.xlane.f32.xlu0 %v4622
      %v4624 = vpop.xlane.xlu0 %4623
      %v4625 = vsel %vm1335, %v4134, -inf
      %4626 = vmax.xlane.f32.xlu0 %v4625
      %v4627 = vpop.xlane.xlu0 %4626
      %v4628 = vsel %vm1335, %v4139, -inf
      %4629 = vmax.xlane.f32.xlu0 %v4628
      %v4630 = vpop.xlane.xlu0 %4629
      %v4631 = vsel %vm1335, %v4144, -inf
      %4632 = vmax.xlane.f32.xlu0 %v4631
      %v4633 = vpop.xlane.xlu0 %4632
      %v4634 = vsel %vm1335, %v4149, -inf
      %4635 = vmax.xlane.f32.xlu0 %v4634
      %v4636 = vpop.xlane.xlu0 %4635
      %v4637 = vsel %vm1335, %v4154, -inf
      %4638 = vmax.xlane.f32.xlu0 %v4637
      %v4639 = vpop.xlane.xlu0 %4638
      %v4640 = vsel %vm1335, %v4272, -inf
      %4641 = vmax.xlane.f32.xlu0 %v4640
      %v4642 = vpop.xlane.xlu0 %4641
      %v4643 = vsel %vm1335, %v4277, -inf
      %4644 = vmax.xlane.f32.xlu0 %v4643
      %v4645 = vpop.xlane.xlu0 %4644
      %v4646 = vsel %vm1335, %v4282, -inf
      %4647 = vmax.xlane.f32.xlu0 %v4646
      %v4648 = vpop.xlane.xlu0 %4647
      %v4649 = vsel %vm1335, %v4287, -inf
      %4650 = vmax.xlane.f32.xlu0 %v4649
      %v4651 = vpop.xlane.xlu0 %4650
      %v4652 = vsel %vm1335, %v4292, -inf
      %4653 = vmax.xlane.f32.xlu0 %v4652
      %v4654 = vpop.xlane.xlu0 %4653
      %v4655 = vsel %vm1335, %v4297, -inf
      %4656 = vmax.xlane.f32.xlu0 %v4655
      %v4657 = vpop.xlane.xlu0 %4656
      %v4658 = vsel %vm1335, %v4302, -inf
      %4659 = vmax.xlane.f32.xlu0 %v4658
      %v4660 = vpop.xlane.xlu0 %4659
      %v4661 = vsel %vm1335, %v4307, -inf
      %4662 = vmax.xlane.f32.xlu0 %v4661
      %v4663 = vpop.xlane.xlu0 %4662
      %v4664 = vsel %vm1335, %v4425, -inf
      %4665 = vmax.xlane.f32.xlu0 %v4664
      %v4666 = vpop.xlane.xlu0 %4665
      %v4667 = vsel %vm1335, %v4430, -inf
      %4668 = vmax.xlane.f32.xlu0 %v4667
      %v4669 = vpop.xlane.xlu0 %4668
      %v4670 = vsel %vm1335, %v4435, -inf
      %4671 = vmax.xlane.f32.xlu0 %v4670
      %v4672 = vpop.xlane.xlu0 %4671
      %v4673 = vsel %vm1335, %v4440, -inf
      %4674 = vmax.xlane.f32.xlu0 %v4673
      %v4675 = vpop.xlane.xlu0 %4674
      %v4676 = vsel %vm1335, %v4445, -inf
      %4677 = vmax.xlane.f32.xlu0 %v4676
      %v4678 = vpop.xlane.xlu0 %4677
      %v4679 = vsel %vm1335, %v4450, -inf
      %4680 = vmax.xlane.f32.xlu0 %v4679
      %v4681 = vpop.xlane.xlu0 %4680
      %v4682 = vsel %vm1335, %v4455, -inf
      %4683 = vmax.xlane.f32.xlu0 %v4682
      %v4684 = vpop.xlane.xlu0 %4683
      %v4685 = vsel %vm1335, %v4460, -inf
      %4686 = vmax.xlane.f32.xlu0 %v4685
      %v4687 = vpop.xlane.xlu0 %4686
      %v4688 = vsel %vm1335, %v4578, -inf
      %4689 = vmax.xlane.f32.xlu0 %v4688
      %v4690 = vpop.xlane.xlu0 %4689
      %v4691 = vsel %vm1335, %v4583, -inf
      %4692 = vmax.xlane.f32.xlu0 %v4691
      %v4693 = vpop.xlane.xlu0 %4692
      %v4694 = vsel %vm1335, %v4588, -inf
      %4695 = vmax.xlane.f32.xlu0 %v4694
      %v4696 = vpop.xlane.xlu0 %4695
      %v4697 = vsel %vm1335, %v4593, -inf
      %4698 = vmax.xlane.f32.xlu0 %v4697
      %v4699 = vpop.xlane.xlu0 %4698
      %v4700 = vsel %vm1335, %v4598, -inf
      %4701 = vmax.xlane.f32.xlu0 %v4700
      %v4702 = vpop.xlane.xlu0 %4701
      %v4703 = vsel %vm1335, %v4603, -inf
      %4704 = vmax.xlane.f32.xlu0 %v4703
      %v4705 = vpop.xlane.xlu0 %4704
      %v4706 = vsel %vm1335, %v4608, -inf
      %4707 = vmax.xlane.f32.xlu0 %v4706
      %v4708 = vpop.xlane.xlu0 %4707
      %v4709 = vsel %vm1335, %v4613, -inf
      %4710 = vmax.xlane.f32.xlu0 %v4709
      %v4711 = vpop.xlane.xlu0 %4710
      %v4712 = vsub.f32 %v4119, %v4618
      %v4713 = vsub.f32 %v4124, %v4621
      %v4714 = vsub.f32 %v4129, %v4624
      %v4715 = vsub.f32 %v4134, %v4627
      %v4716 = vsub.f32 %v4139, %v4630
      %v4717 = vsub.f32 %v4144, %v4633
      %v4718 = vsub.f32 %v4149, %v4636
      %v4719 = vsub.f32 %v4154, %v4639
      %v4720 = vsub.f32 %v4272, %v4642
      %v4721 = vsub.f32 %v4277, %v4645
      %v4722 = vsub.f32 %v4282, %v4648
      %v4723 = vsub.f32 %v4287, %v4651
      %v4724 = vsub.f32 %v4292, %v4654
      %v4725 = vsub.f32 %v4297, %v4657
      %v4726 = vsub.f32 %v4302, %v4660
      %v4727 = vsub.f32 %v4307, %v4663
      %v4728 = vsub.f32 %v4425, %v4666
      %v4729 = vsub.f32 %v4430, %v4669
      %v4730 = vsub.f32 %v4435, %v4672
      %v4731 = vsub.f32 %v4440, %v4675
      %v4732 = vsub.f32 %v4445, %v4678
      %v4733 = vsub.f32 %v4450, %v4681
      %v4734 = vsub.f32 %v4455, %v4684
      %v4735 = vsub.f32 %v4460, %v4687
      %v4736 = vsub.f32 %v4578, %v4690
      %v4737 = vsub.f32 %v4583, %v4693
      %v4738 = vsub.f32 %v4588, %v4696
      %v4739 = vsub.f32 %v4593, %v4699
      %v4740 = vsub.f32 %v4598, %v4702
      %v4741 = vsub.f32 %v4603, %v4705
      %v4742 = vsub.f32 %v4608, %v4708
      %v4743 = vsub.f32 %v4613, %v4711
      %v4744 = vmul.f32 %v4712, 1.442695
      %v4745 = vpow.pop %v4744
      %v4746 = vmul.f32 %v4713, 1.442695
      %v4747 = vpow.pop %v4746
      %v4748 = vmul.f32 %v4714, 1.442695
      %v4749 = vpow.pop %v4748
      %v4750 = vmul.f32 %v4715, 1.442695
      %v4751 = vpow.pop %v4750
      %v4752 = vmul.f32 %v4716, 1.442695
      %v4753 = vpow.pop %v4752
      %v4754 = vmul.f32 %v4717, 1.442695
      %v4755 = vpow.pop %v4754
      %v4756 = vmul.f32 %v4718, 1.442695
      %v4757 = vpow.pop %v4756
      %v4758 = vmul.f32 %v4719, 1.442695
      %v4759 = vpow.pop %v4758
      %v4760 = vmul.f32 %v4720, 1.442695
      %v4761 = vpow.pop %v4760
      %v4762 = vmul.f32 %v4721, 1.442695
      %v4763 = vpow.pop %v4762
      %v4764 = vmul.f32 %v4722, 1.442695
      %v4765 = vpow.pop %v4764
      %v4766 = vmul.f32 %v4723, 1.442695
      %v4767 = vpow.pop %v4766
      %v4768 = vmul.f32 %v4724, 1.442695
      %v4769 = vpow.pop %v4768
      %v4770 = vmul.f32 %v4725, 1.442695
      %v4771 = vpow.pop %v4770
      %v4772 = vmul.f32 %v4726, 1.442695
      %v4773 = vpow.pop %v4772
      %v4774 = vmul.f32 %v4727, 1.442695
      %v4775 = vpow.pop %v4774
      %v4776 = vmul.f32 %v4728, 1.442695
      %v4777 = vpow.pop %v4776
      %v4778 = vmul.f32 %v4729, 1.442695
      %v4779 = vpow.pop %v4778
      %v4780 = vmul.f32 %v4730, 1.442695
      %v4781 = vpow.pop %v4780
      %v4782 = vmul.f32 %v4731, 1.442695
      %v4783 = vpow.pop %v4782
      %v4784 = vmul.f32 %v4732, 1.442695
      %v4785 = vpow.pop %v4784
      %v4786 = vmul.f32 %v4733, 1.442695
      %v4787 = vpow.pop %v4786
      %v4788 = vmul.f32 %v4734, 1.442695
      %v4789 = vpow.pop %v4788
      %v4790 = vmul.f32 %v4735, 1.442695
      %v4791 = vpow.pop %v4790
      %v4792 = vmul.f32 %v4736, 1.442695
      %v4793 = vpow.pop %v4792
      %v4794 = vmul.f32 %v4737, 1.442695
      %v4795 = vpow.pop %v4794
      %v4796 = vmul.f32 %v4738, 1.442695
      %v4797 = vpow.pop %v4796
      %v4798 = vmul.f32 %v4739, 1.442695
      %v4799 = vpow.pop %v4798
      %v4800 = vmul.f32 %v4740, 1.442695
      %v4801 = vpow.pop %v4800
      %v4802 = vmul.f32 %v4741, 1.442695
      %v4803 = vpow.pop %v4802
      %v4804 = vmul.f32 %v4742, 1.442695
      %v4805 = vpow.pop %v4804
      %v4806 = vmul.f32 %v4743, 1.442695
      %v4807 = vpow.pop %v4806
      %v4808 = vsel %vm1335, %v4745, 0.0
      %4809 = vadd.xlane.f32.xlu0 %v4808
      %v4810 = vpop.xlane.xlu0 %4809
      %v4811 = vsel %vm1335, %v4747, 0.0
      %4812 = vadd.xlane.f32.xlu0 %v4811
      %v4813 = vpop.xlane.xlu0 %4812
      %v4814 = vsel %vm1335, %v4749, 0.0
      %4815 = vadd.xlane.f32.xlu0 %v4814
      %v4816 = vpop.xlane.xlu0 %4815
      %v4817 = vsel %vm1335, %v4751, 0.0
      %4818 = vadd.xlane.f32.xlu0 %v4817
      %v4819 = vpop.xlane.xlu0 %4818
      %v4820 = vsel %vm1335, %v4753, 0.0
      %4821 = vadd.xlane.f32.xlu0 %v4820
      %v4822 = vpop.xlane.xlu0 %4821
      %v4823 = vsel %vm1335, %v4755, 0.0
      %4824 = vadd.xlane.f32.xlu0 %v4823
      %v4825 = vpop.xlane.xlu0 %4824
      %v4826 = vsel %vm1335, %v4757, 0.0
      %4827 = vadd.xlane.f32.xlu0 %v4826
      %v4828 = vpop.xlane.xlu0 %4827
      %v4829 = vsel %vm1335, %v4759, 0.0
      %4830 = vadd.xlane.f32.xlu0 %v4829
      %v4831 = vpop.xlane.xlu0 %4830
      %v4832 = vsel %vm1335, %v4761, 0.0
      %4833 = vadd.xlane.f32.xlu0 %v4832
      %v4834 = vpop.xlane.xlu0 %4833
      %v4835 = vsel %vm1335, %v4763, 0.0
      %4836 = vadd.xlane.f32.xlu0 %v4835
      %v4837 = vpop.xlane.xlu0 %4836
      %v4838 = vsel %vm1335, %v4765, 0.0
      %4839 = vadd.xlane.f32.xlu0 %v4838
      %v4840 = vpop.xlane.xlu0 %4839
      %v4841 = vsel %vm1335, %v4767, 0.0
      %4842 = vadd.xlane.f32.xlu0 %v4841
      %v4843 = vpop.xlane.xlu0 %4842
      %v4844 = vsel %vm1335, %v4769, 0.0
      %4845 = vadd.xlane.f32.xlu0 %v4844
      %v4846 = vpop.xlane.xlu0 %4845
      %v4847 = vsel %vm1335, %v4771, 0.0
      %4848 = vadd.xlane.f32.xlu0 %v4847
      %v4849 = vpop.xlane.xlu0 %4848
      %v4850 = vsel %vm1335, %v4773, 0.0
      %4851 = vadd.xlane.f32.xlu0 %v4850
      %v4852 = vpop.xlane.xlu0 %4851
      %v4853 = vsel %vm1335, %v4775, 0.0
      %4854 = vadd.xlane.f32.xlu0 %v4853
      %v4855 = vpop.xlane.xlu0 %4854
      %v4856 = vsel %vm1335, %v4777, 0.0
      %4857 = vadd.xlane.f32.xlu0 %v4856
      %v4858 = vpop.xlane.xlu0 %4857
      %v4859 = vsel %vm1335, %v4779, 0.0
      %4860 = vadd.xlane.f32.xlu0 %v4859
      %v4861 = vpop.xlane.xlu0 %4860
      %v4862 = vsel %vm1335, %v4781, 0.0
      %4863 = vadd.xlane.f32.xlu0 %v4862
      %v4864 = vpop.xlane.xlu0 %4863
      %v4865 = vsel %vm1335, %v4783, 0.0
      %4866 = vadd.xlane.f32.xlu0 %v4865
      %v4867 = vpop.xlane.xlu0 %4866
      %v4868 = vsel %vm1335, %v4785, 0.0
      %4869 = vadd.xlane.f32.xlu0 %v4868
      %v4870 = vpop.xlane.xlu0 %4869
      %v4871 = vsel %vm1335, %v4787, 0.0
      %4872 = vadd.xlane.f32.xlu0 %v4871
      %v4873 = vpop.xlane.xlu0 %4872
      %v4874 = vsel %vm1335, %v4789, 0.0
      %4875 = vadd.xlane.f32.xlu0 %v4874
      %v4876 = vpop.xlane.xlu0 %4875
      %v4877 = vsel %vm1335, %v4791, 0.0
      %4878 = vadd.xlane.f32.xlu0 %v4877
      %v4879 = vpop.xlane.xlu0 %4878
      %v4880 = vsel %vm1335, %v4793, 0.0
      %4881 = vadd.xlane.f32.xlu0 %v4880
      %v4882 = vpop.xlane.xlu0 %4881
      %v4883 = vsel %vm1335, %v4795, 0.0
      %4884 = vadd.xlane.f32.xlu0 %v4883
      %v4885 = vpop.xlane.xlu0 %4884
      %v4886 = vsel %vm1335, %v4797, 0.0
      %4887 = vadd.xlane.f32.xlu0 %v4886
      %v4888 = vpop.xlane.xlu0 %4887
      %v4889 = vsel %vm1335, %v4799, 0.0
      %4890 = vadd.xlane.f32.xlu0 %v4889
      %v4891 = vpop.xlane.xlu0 %4890
      %v4892 = vsel %vm1335, %v4801, 0.0
      %4893 = vadd.xlane.f32.xlu0 %v4892
      %v4894 = vpop.xlane.xlu0 %4893
      %v4895 = vsel %vm1335, %v4803, 0.0
      %4896 = vadd.xlane.f32.xlu0 %v4895
      %v4897 = vpop.xlane.xlu0 %4896
      %v4898 = vsel %vm1335, %v4805, 0.0
      %4899 = vadd.xlane.f32.xlu0 %v4898
      %v4900 = vpop.xlane.xlu0 %4899
      %v4901 = vsel %vm1335, %v4807, 0.0
      %4902 = vadd.xlane.f32.xlu0 %v4901
      %v4903 = vpop.xlane.xlu0 %4902
      %v4904 = vrcp.pop %v4810
      %v4905 = vrcp.pop %v4813
      %v4906 = vrcp.pop %v4816
      %v4907 = vrcp.pop %v4819
      %v4908 = vrcp.pop %v4822
      %v4909 = vrcp.pop %v4825
      %v4910 = vrcp.pop %v4828
      %v4911 = vrcp.pop %v4831
      %v4912 = vrcp.pop %v4834
      %v4913 = vrcp.pop %v4837
      %v4914 = vrcp.pop %v4840
      %v4915 = vrcp.pop %v4843
      %v4916 = vrcp.pop %v4846
      %v4917 = vrcp.pop %v4849
      %v4918 = vrcp.pop %v4852
      %v4919 = vrcp.pop %v4855
      %v4920 = vrcp.pop %v4858
      %v4921 = vrcp.pop %v4861
      %v4922 = vrcp.pop %v4864
      %v4923 = vrcp.pop %v4867
      %v4924 = vrcp.pop %v4870
      %v4925 = vrcp.pop %v4873
      %v4926 = vrcp.pop %v4876
      %v4927 = vrcp.pop %v4879
      %v4928 = vrcp.pop %v4882
      %v4929 = vrcp.pop %v4885
      %v4930 = vrcp.pop %v4888
      %v4931 = vrcp.pop %v4891
      %v4932 = vrcp.pop %v4894
      %v4933 = vrcp.pop %v4897
      %v4934 = vrcp.pop %v4900
      %v4935 = vrcp.pop %v4903
      %v4936 = vmul.f32 %v4745, %v4904
      %v4937 = vmul.f32 %v4747, %v4905
      %v4938 = vmul.f32 %v4749, %v4906
      %v4939 = vmul.f32 %v4751, %v4907
      %v4940 = vmul.f32 %v4753, %v4908
      %v4941 = vmul.f32 %v4755, %v4909
      %v4942 = vmul.f32 %v4757, %v4910
      %v4943 = vmul.f32 %v4759, %v4911
      %v4944 = vmul.f32 %v4761, %v4912
      %v4945 = vmul.f32 %v4763, %v4913
      %v4946 = vmul.f32 %v4765, %v4914
      %v4947 = vmul.f32 %v4767, %v4915
      %v4948 = vmul.f32 %v4769, %v4916
      %v4949 = vmul.f32 %v4771, %v4917
      %v4950 = vmul.f32 %v4773, %v4918
      %v4951 = vmul.f32 %v4775, %v4919
      %v4952 = vmul.f32 %v4777, %v4920
      %v4953 = vmul.f32 %v4779, %v4921
      %v4954 = vmul.f32 %v4781, %v4922
      %v4955 = vmul.f32 %v4783, %v4923
      %v4956 = vmul.f32 %v4785, %v4924
      %v4957 = vmul.f32 %v4787, %v4925
      %v4958 = vmul.f32 %v4789, %v4926
      %v4959 = vmul.f32 %v4791, %v4927
      %v4960 = vmul.f32 %v4793, %v4928
      %v4961 = vmul.f32 %v4795, %v4929
      %v4962 = vmul.f32 %v4797, %v4930
      %v4963 = vmul.f32 %v4799, %v4931
      %v4964 = vmul.f32 %v4801, %v4932
      %v4965 = vmul.f32 %v4803, %v4933
      %v4966 = vmul.f32 %v4805, %v4934
      %v4967 = vmul.f32 %v4807, %v4935
      %v4968 = vadd.f32 %v4936, 1e-06
      %v4969 = vadd.f32 %v4937, 1e-06
      %v4970 = vadd.f32 %v4938, 1e-06
      %v4971 = vadd.f32 %v4939, 1e-06
      %v4972 = vadd.f32 %v4940, 1e-06
      %v4973 = vadd.f32 %v4941, 1e-06
      %v4974 = vadd.f32 %v4942, 1e-06
      %v4975 = vadd.f32 %v4943, 1e-06
      %v4976 = vadd.f32 %v4944, 1e-06
      %v4977 = vadd.f32 %v4945, 1e-06
      %v4978 = vadd.f32 %v4946, 1e-06
      %v4979 = vadd.f32 %v4947, 1e-06
      %v4980 = vadd.f32 %v4948, 1e-06
      %v4981 = vadd.f32 %v4949, 1e-06
      %v4982 = vadd.f32 %v4950, 1e-06
      %v4983 = vadd.f32 %v4951, 1e-06
      %v4984 = vadd.f32 %v4952, 1e-06
      %v4985 = vadd.f32 %v4953, 1e-06
      %v4986 = vadd.f32 %v4954, 1e-06
      %v4987 = vadd.f32 %v4955, 1e-06
      %v4988 = vadd.f32 %v4956, 1e-06
      %v4989 = vadd.f32 %v4957, 1e-06
      %v4990 = vadd.f32 %v4958, 1e-06
      %v4991 = vadd.f32 %v4959, 1e-06
      %v4992 = vadd.f32 %v4960, 1e-06
      %v4993 = vadd.f32 %v4961, 1e-06
      %v4994 = vadd.f32 %v4962, 1e-06
      %v4995 = vadd.f32 %v4963, 1e-06
      %v4996 = vadd.f32 %v4964, 1e-06
      %v4997 = vadd.f32 %v4965, 1e-06
      %v4998 = vadd.f32 %v4966, 1e-06
      %v4999 = vadd.f32 %v4967, 1e-06
      %v5001 = vsel %vm1335, %v4968, 0
      %v5004 = vsel %vm1335, %v4969, 0
      %v5007 = vsel %vm1335, %v4970, 0
      %v5010 = vsel %vm1335, %v4971, 0
      %v5013 = vsel %vm1335, %v4972, 0
      %v5016 = vsel %vm1335, %v4973, 0
      %v5019 = vsel %vm1335, %v4974, 0
      %v5022 = vsel %vm1335, %v4975, 0
      %5024 = vmatprep.subr.mxu0 0.0
      %5025 = vmatpush1.msra.mxu0 0.0
      %5026 = vmatprep.subr.mxu0 0.0
      %5027 = vmatpush1.msra.mxu0 0.0
      %5028 = vmatprep.subr.mxu0 0.0
      %5029 = vmatpush1.msra.mxu0 0.0
      %5030 = vmatprep.subr.mxu0 0.0
      %5031 = vmatpush1.msra.mxu0 0.0
      %5032 = vmatprep.subr.mxu0 0.0
      %5033 = vmatpush1.msra.mxu0 0.0
      %5034 = vmatprep.subr.mxu0 0.0
      %5035 = vmatpush1.msra.mxu0 0.0
      %5036 = vmatprep.subr.mxu0 0.0
      %5037 = vmatpush1.msra.mxu0 0.0
      %5038 = vmatprep.subr.mxu0 0.0
      %5039 = vmatpush1.msra.mxu0 0.0
      %5040 = vmatprep.subr.mxu0 0.0
      %5041 = vmatpush1.msra.mxu0 %v3979
      %5042 = vmatprep.subr.mxu0 0.0
      %5043 = vmatpush1.msra.mxu0 %v3978
      %5044 = vmatprep.subr.mxu0 0.0
      %5045 = vmatpush1.msra.mxu0 %v3977
      %5046 = vmatprep.subr.mxu0 0.0
      %5047 = vmatpush1.msra.mxu0 %v3976
      %5048 = vmatprep.subr.mxu0 0.0
      %5049 = vmatpush1.msra.mxu0 %v3975
      %5050 = vmatprep.subr.mxu0 0.0
      %5051 = vmatpush1.msra.mxu0 %v3974
      %5052 = vmatprep.subr.mxu0 0.0
      %5053 = vmatpush1.msra.mxu0 %v3973
      %5054 = vmatprep.subr.mxu0 0.0
      %5055 = vmatpush1.msra.mxu0 %v3972
      %5056 = vmatprep.subr.mxu0 0.0
      %5057 = vmatpush2.msra.mxu0 0.0
      %5058 = vmatprep.subr.mxu0 0.0
      %5059 = vmatpush2.msra.mxu0 0.0
      %5060 = vmatprep.subr.mxu0 0.0
      %5061 = vmatpush2.msra.mxu0 0.0
      %5062 = vmatprep.subr.mxu0 0.0
      %5063 = vmatpush2.msra.mxu0 0.0
      %5064 = vmatprep.subr.mxu0 0.0
      %5065 = vmatpush2.msra.mxu0 0.0
      %5066 = vmatprep.subr.mxu0 0.0
      %5067 = vmatpush2.msra.mxu0 0.0
      %5068 = vmatprep.subr.mxu0 0.0
      %5069 = vmatpush2.msra.mxu0 0.0
      %5070 = vmatprep.subr.mxu0 0.0
      %5071 = vmatpush2.msra.mxu0 0.0
      %5072 = vmatprep.subr.mxu0 0.0
      %5073 = vmatpush2.msra.mxu0 0.0
      %5074 = vmatprep.subr.mxu0 0.0
      %5075 = vmatpush2.msra.mxu0 0.0
      %5076 = vmatprep.subr.mxu0 0.0
      %5077 = vmatpush2.msra.mxu0 0.0
      %5078 = vmatprep.subr.mxu0 0.0
      %5079 = vmatpush2.msra.mxu0 0.0
      %5080 = vmatprep.subr.mxu0 0.0
      %5081 = vmatpush2.msra.mxu0 0.0
      %5082 = vmatprep.subr.mxu0 0.0
      %5083 = vmatpush2.msra.mxu0 0.0
      %5084 = vmatprep.subr.mxu0 0.0
      %5085 = vmatpush2.msra.mxu0 0.0
      %5086 = vmatprep.subr.mxu0 0.0
      %5087 = vmatpush2.msra.mxu0 0.0
      %5088 = vmatprep.mubr.f32.mxu0 0.0
      %5089 = vmatmul.mubr.f32.gmra.mxu0 %v5001
      %v5090 = vpop.f32.mrf.mxu0
      %v5091 = vadd.f32 0.0, %v5090
      %v5092 = vpop.f32.mrf.mxu0
      %5093 = vmatprep.mubr.f32.mxu0 0.0
      %5094 = vmatmul.mubr.f32.gmra.mxu0 %v5004
      %v5095 = vpop.f32.mrf.mxu0
      %v5096 = vadd.f32 0.0, %v5095
      %v5097 = vpop.f32.mrf.mxu0
      %5098 = vmatprep.mubr.f32.mxu0 0.0
      %5099 = vmatmul.mubr.f32.gmra.mxu0 %v5007
      %v5100 = vpop.f32.mrf.mxu0
      %v5101 = vadd.f32 0.0, %v5100
      %v5102 = vpop.f32.mrf.mxu0
      %5103 = vmatprep.mubr.f32.mxu0 0.0
      %5104 = vmatmul.mubr.f32.gmra.mxu0 %v5010
      %v5105 = vpop.f32.mrf.mxu0
      %v5106 = vadd.f32 0.0, %v5105
      %v5107 = vpop.f32.mrf.mxu0
      %5108 = vmatprep.mubr.f32.mxu0 0.0
      %5109 = vmatmul.mubr.f32.gmra.mxu0 %v5013
      %v5110 = vpop.f32.mrf.mxu0
      %v5111 = vadd.f32 0.0, %v5110
      %v5112 = vpop.f32.mrf.mxu0
      %5113 = vmatprep.mubr.f32.mxu0 0.0
      %5114 = vmatmul.mubr.f32.gmra.mxu0 %v5016
      %v5115 = vpop.f32.mrf.mxu0
      %v5116 = vadd.f32 0.0, %v5115
      %v5117 = vpop.f32.mrf.mxu0
      %5118 = vmatprep.mubr.f32.mxu0 0.0
      %5119 = vmatmul.mubr.f32.gmra.mxu0 %v5019
      %v5120 = vpop.f32.mrf.mxu0
      %v5121 = vadd.f32 0.0, %v5120
      %v5122 = vpop.f32.mrf.mxu0
      %5123 = vmatprep.mubr.f32.mxu0 0.0
      %5124 = vmatmul.mubr.f32.gmra.mxu0 %v5022
      %v5125 = vpop.f32.mrf.mxu0
      %v5126 = vadd.f32 0.0, %v5125
      %v5127 = vpop.f32.mrf.mxu0
      %5128 = vdwg.mxu0
      %v5130 = vsel %vm1335, %v4976, 0
      %v5133 = vsel %vm1335, %v4977, 0
      %v5136 = vsel %vm1335, %v4978, 0
      %v5139 = vsel %vm1335, %v4979, 0
      %v5142 = vsel %vm1335, %v4980, 0
      %v5145 = vsel %vm1335, %v4981, 0
      %v5148 = vsel %vm1335, %v4982, 0
      %v5151 = vsel %vm1335, %v4983, 0
      %5153 = vmatprep.subr.mxu0 0.0
      %5154 = vmatpush1.msra.mxu0 0.0
      %5155 = vmatprep.subr.mxu0 0.0
      %5156 = vmatpush1.msra.mxu0 0.0
      %5157 = vmatprep.subr.mxu0 0.0
      %5158 = vmatpush1.msra.mxu0 0.0
      %5159 = vmatprep.subr.mxu0 0.0
      %5160 = vmatpush1.msra.mxu0 0.0
      %5161 = vmatprep.subr.mxu0 0.0
      %5162 = vmatpush1.msra.mxu0 0.0
      %5163 = vmatprep.subr.mxu0 0.0
      %5164 = vmatpush1.msra.mxu0 0.0
      %5165 = vmatprep.subr.mxu0 0.0
      %5166 = vmatpush1.msra.mxu0 0.0
      %5167 = vmatprep.subr.mxu0 0.0
      %5168 = vmatpush1.msra.mxu0 0.0
      %5169 = vmatprep.subr.mxu0 0.0
      %5170 = vmatpush1.msra.mxu0 %v3987
      %5171 = vmatprep.subr.mxu0 0.0
      %5172 = vmatpush1.msra.mxu0 %v3986
      %5173 = vmatprep.subr.mxu0 0.0
      %5174 = vmatpush1.msra.mxu0 %v3985
      %5175 = vmatprep.subr.mxu0 0.0
      %5176 = vmatpush1.msra.mxu0 %v3984
      %5177 = vmatprep.subr.mxu0 0.0
      %5178 = vmatpush1.msra.mxu0 %v3983
      %5179 = vmatprep.subr.mxu0 0.0
      %5180 = vmatpush1.msra.mxu0 %v3982
      %5181 = vmatprep.subr.mxu0 0.0
      %5182 = vmatpush1.msra.mxu0 %v3981
      %5183 = vmatprep.subr.mxu0 0.0
      %5184 = vmatpush1.msra.mxu0 %v3980
      %5185 = vmatprep.subr.mxu0 0.0
      %5186 = vmatpush2.msra.mxu0 0.0
      %5187 = vmatprep.subr.mxu0 0.0
      %5188 = vmatpush2.msra.mxu0 0.0
      %5189 = vmatprep.subr.mxu0 0.0
      %5190 = vmatpush2.msra.mxu0 0.0
      %5191 = vmatprep.subr.mxu0 0.0
      %5192 = vmatpush2.msra.mxu0 0.0
      %5193 = vmatprep.subr.mxu0 0.0
      %5194 = vmatpush2.msra.mxu0 0.0
      %5195 = vmatprep.subr.mxu0 0.0
      %5196 = vmatpush2.msra.mxu0 0.0
      %5197 = vmatprep.subr.mxu0 0.0
      %5198 = vmatpush2.msra.mxu0 0.0
      %5199 = vmatprep.subr.mxu0 0.0
      %5200 = vmatpush2.msra.mxu0 0.0
      %5201 = vmatprep.subr.mxu0 0.0
      %5202 = vmatpush2.msra.mxu0 0.0
      %5203 = vmatprep.subr.mxu0 0.0
      %5204 = vmatpush2.msra.mxu0 0.0
      %5205 = vmatprep.subr.mxu0 0.0
      %5206 = vmatpush2.msra.mxu0 0.0
      %5207 = vmatprep.subr.mxu0 0.0
      %5208 = vmatpush2.msra.mxu0 0.0
      %5209 = vmatprep.subr.mxu0 0.0
      %5210 = vmatpush2.msra.mxu0 0.0
      %5211 = vmatprep.subr.mxu0 0.0
      %5212 = vmatpush2.msra.mxu0 0.0
      %5213 = vmatprep.subr.mxu0 0.0
      %5214 = vmatpush2.msra.mxu0 0.0
      %5215 = vmatprep.subr.mxu0 0.0
      %5216 = vmatpush2.msra.mxu0 0.0
      %5217 = vmatprep.mubr.f32.mxu0 0.0
      %5218 = vmatmul.mubr.f32.gmra.mxu0 %v5130
      %v5219 = vpop.f32.mrf.mxu0
      %v5220 = vadd.f32 0.0, %v5219
      %v5221 = vpop.f32.mrf.mxu0
      %5222 = vmatprep.mubr.f32.mxu0 0.0
      %5223 = vmatmul.mubr.f32.gmra.mxu0 %v5133
      %v5224 = vpop.f32.mrf.mxu0
      %v5225 = vadd.f32 0.0, %v5224
      %v5226 = vpop.f32.mrf.mxu0
      %5227 = vmatprep.mubr.f32.mxu0 0.0
      %5228 = vmatmul.mubr.f32.gmra.mxu0 %v5136
      %v5229 = vpop.f32.mrf.mxu0
      %v5230 = vadd.f32 0.0, %v5229
      %v5231 = vpop.f32.mrf.mxu0
      %5232 = vmatprep.mubr.f32.mxu0 0.0
      %5233 = vmatmul.mubr.f32.gmra.mxu0 %v5139
      %v5234 = vpop.f32.mrf.mxu0
      %v5235 = vadd.f32 0.0, %v5234
      %v5236 = vpop.f32.mrf.mxu0
      %5237 = vmatprep.mubr.f32.mxu0 0.0
      %5238 = vmatmul.mubr.f32.gmra.mxu0 %v5142
      %v5239 = vpop.f32.mrf.mxu0
      %v5240 = vadd.f32 0.0, %v5239
      %v5241 = vpop.f32.mrf.mxu0
      %5242 = vmatprep.mubr.f32.mxu0 0.0
      %5243 = vmatmul.mubr.f32.gmra.mxu0 %v5145
      %v5244 = vpop.f32.mrf.mxu0
      %v5245 = vadd.f32 0.0, %v5244
      %v5246 = vpop.f32.mrf.mxu0
      %5247 = vmatprep.mubr.f32.mxu0 0.0
      %5248 = vmatmul.mubr.f32.gmra.mxu0 %v5148
      %v5249 = vpop.f32.mrf.mxu0
      %v5250 = vadd.f32 0.0, %v5249
      %v5251 = vpop.f32.mrf.mxu0
      %5252 = vmatprep.mubr.f32.mxu0 0.0
      %5253 = vmatmul.mubr.f32.gmra.mxu0 %v5151
      %v5254 = vpop.f32.mrf.mxu0
      %v5255 = vadd.f32 0.0, %v5254
      %v5256 = vpop.f32.mrf.mxu0
      %5257 = vdwg.mxu0
      %v5259 = vsel %vm1335, %v4984, 0
      %v5262 = vsel %vm1335, %v4985, 0
      %v5265 = vsel %vm1335, %v4986, 0
      %v5268 = vsel %vm1335, %v4987, 0
      %v5271 = vsel %vm1335, %v4988, 0
      %v5274 = vsel %vm1335, %v4989, 0
      %v5277 = vsel %vm1335, %v4990, 0
      %v5280 = vsel %vm1335, %v4991, 0
      %5282 = vmatprep.subr.mxu0 0.0
      %5283 = vmatpush1.msra.mxu0 0.0
      %5284 = vmatprep.subr.mxu0 0.0
      %5285 = vmatpush1.msra.mxu0 0.0
      %5286 = vmatprep.subr.mxu0 0.0
      %5287 = vmatpush1.msra.mxu0 0.0
      %5288 = vmatprep.subr.mxu0 0.0
      %5289 = vmatpush1.msra.mxu0 0.0
      %5290 = vmatprep.subr.mxu0 0.0
      %5291 = vmatpush1.msra.mxu0 0.0
      %5292 = vmatprep.subr.mxu0 0.0
      %5293 = vmatpush1.msra.mxu0 0.0
      %5294 = vmatprep.subr.mxu0 0.0
      %5295 = vmatpush1.msra.mxu0 0.0
      %5296 = vmatprep.subr.mxu0 0.0
      %5297 = vmatpush1.msra.mxu0 0.0
      %5298 = vmatprep.subr.mxu0 0.0
      %5299 = vmatpush1.msra.mxu0 %v3995
      %5300 = vmatprep.subr.mxu0 0.0
      %5301 = vmatpush1.msra.mxu0 %v3994
      %5302 = vmatprep.subr.mxu0 0.0
      %5303 = vmatpush1.msra.mxu0 %v3993
      %5304 = vmatprep.subr.mxu0 0.0
      %5305 = vmatpush1.msra.mxu0 %v3992
      %5306 = vmatprep.subr.mxu0 0.0
      %5307 = vmatpush1.msra.mxu0 %v3991
      %5308 = vmatprep.subr.mxu0 0.0
      %5309 = vmatpush1.msra.mxu0 %v3990
      %5310 = vmatprep.subr.mxu0 0.0
      %5311 = vmatpush1.msra.mxu0 %v3989
      %5312 = vmatprep.subr.mxu0 0.0
      %5313 = vmatpush1.msra.mxu0 %v3988
      %5314 = vmatprep.subr.mxu0 0.0
      %5315 = vmatpush2.msra.mxu0 0.0
      %5316 = vmatprep.subr.mxu0 0.0
      %5317 = vmatpush2.msra.mxu0 0.0
      %5318 = vmatprep.subr.mxu0 0.0
      %5319 = vmatpush2.msra.mxu0 0.0
      %5320 = vmatprep.subr.mxu0 0.0
      %5321 = vmatpush2.msra.mxu0 0.0
      %5322 = vmatprep.subr.mxu0 0.0
      %5323 = vmatpush2.msra.mxu0 0.0
      %5324 = vmatprep.subr.mxu0 0.0
      %5325 = vmatpush2.msra.mxu0 0.0
      %5326 = vmatprep.subr.mxu0 0.0
      %5327 = vmatpush2.msra.mxu0 0.0
      %5328 = vmatprep.subr.mxu0 0.0
      %5329 = vmatpush2.msra.mxu0 0.0
      %5330 = vmatprep.subr.mxu0 0.0
      %5331 = vmatpush2.msra.mxu0 0.0
      %5332 = vmatprep.subr.mxu0 0.0
      %5333 = vmatpush2.msra.mxu0 0.0
      %5334 = vmatprep.subr.mxu0 0.0
      %5335 = vmatpush2.msra.mxu0 0.0
      %5336 = vmatprep.subr.mxu0 0.0
      %5337 = vmatpush2.msra.mxu0 0.0
      %5338 = vmatprep.subr.mxu0 0.0
      %5339 = vmatpush2.msra.mxu0 0.0
      %5340 = vmatprep.subr.mxu0 0.0
      %5341 = vmatpush2.msra.mxu0 0.0
      %5342 = vmatprep.subr.mxu0 0.0
      %5343 = vmatpush2.msra.mxu0 0.0
      %5344 = vmatprep.subr.mxu0 0.0
      %5345 = vmatpush2.msra.mxu0 0.0
      %5346 = vmatprep.mubr.f32.mxu0 0.0
      %5347 = vmatmul.mubr.f32.gmra.mxu0 %v5259
      %v5348 = vpop.f32.mrf.mxu0
      %v5349 = vadd.f32 0.0, %v5348
      %v5350 = vpop.f32.mrf.mxu0
      %5351 = vmatprep.mubr.f32.mxu0 0.0
      %5352 = vmatmul.mubr.f32.gmra.mxu0 %v5262
      %v5353 = vpop.f32.mrf.mxu0
      %v5354 = vadd.f32 0.0, %v5353
      %v5355 = vpop.f32.mrf.mxu0
      %5356 = vmatprep.mubr.f32.mxu0 0.0
      %5357 = vmatmul.mubr.f32.gmra.mxu0 %v5265
      %v5358 = vpop.f32.mrf.mxu0
      %v5359 = vadd.f32 0.0, %v5358
      %v5360 = vpop.f32.mrf.mxu0
      %5361 = vmatprep.mubr.f32.mxu0 0.0
      %5362 = vmatmul.mubr.f32.gmra.mxu0 %v5268
      %v5363 = vpop.f32.mrf.mxu0
      %v5364 = vadd.f32 0.0, %v5363
      %v5365 = vpop.f32.mrf.mxu0
      %5366 = vmatprep.mubr.f32.mxu0 0.0
      %5367 = vmatmul.mubr.f32.gmra.mxu0 %v5271
      %v5368 = vpop.f32.mrf.mxu0
      %v5369 = vadd.f32 0.0, %v5368
      %v5370 = vpop.f32.mrf.mxu0
      %5371 = vmatprep.mubr.f32.mxu0 0.0
      %5372 = vmatmul.mubr.f32.gmra.mxu0 %v5274
      %v5373 = vpop.f32.mrf.mxu0
      %v5374 = vadd.f32 0.0, %v5373
      %v5375 = vpop.f32.mrf.mxu0
      %5376 = vmatprep.mubr.f32.mxu0 0.0
      %5377 = vmatmul.mubr.f32.gmra.mxu0 %v5277
      %v5378 = vpop.f32.mrf.mxu0
      %v5379 = vadd.f32 0.0, %v5378
      %v5380 = vpop.f32.mrf.mxu0
      %5381 = vmatprep.mubr.f32.mxu0 0.0
      %5382 = vmatmul.mubr.f32.gmra.mxu0 %v5280
      %v5383 = vpop.f32.mrf.mxu0
      %v5384 = vadd.f32 0.0, %v5383
      %v5385 = vpop.f32.mrf.mxu0
      %5386 = vdwg.mxu0
      %v5388 = vsel %vm1335, %v4992, 0
      %v5391 = vsel %vm1335, %v4993, 0
      %v5394 = vsel %vm1335, %v4994, 0
      %v5397 = vsel %vm1335, %v4995, 0
      %v5400 = vsel %vm1335, %v4996, 0
      %v5403 = vsel %vm1335, %v4997, 0
      %v5406 = vsel %vm1335, %v4998, 0
      %v5409 = vsel %vm1335, %v4999, 0
      %5411 = vmatprep.subr.mxu0 0.0
      %5412 = vmatpush1.msra.mxu0 0.0
      %5413 = vmatprep.subr.mxu0 0.0
      %5414 = vmatpush1.msra.mxu0 0.0
      %5415 = vmatprep.subr.mxu0 0.0
      %5416 = vmatpush1.msra.mxu0 0.0
      %5417 = vmatprep.subr.mxu0 0.0
      %5418 = vmatpush1.msra.mxu0 0.0
      %5419 = vmatprep.subr.mxu0 0.0
      %5420 = vmatpush1.msra.mxu0 0.0
      %5421 = vmatprep.subr.mxu0 0.0
      %5422 = vmatpush1.msra.mxu0 0.0
      %5423 = vmatprep.subr.mxu0 0.0
      %5424 = vmatpush1.msra.mxu0 0.0
      %5425 = vmatprep.subr.mxu0 0.0
      %5426 = vmatpush1.msra.mxu0 0.0
      %5427 = vmatprep.subr.mxu0 0.0
      %5428 = vmatpush1.msra.mxu0 %v4003
      %5429 = vmatprep.subr.mxu0 0.0
      %5430 = vmatpush1.msra.mxu0 %v4002
      %5431 = vmatprep.subr.mxu0 0.0
      %5432 = vmatpush1.msra.mxu0 %v4001
      %5433 = vmatprep.subr.mxu0 0.0
      %5434 = vmatpush1.msra.mxu0 %v4000
      %5435 = vmatprep.subr.mxu0 0.0
      %5436 = vmatpush1.msra.mxu0 %v3999
      %5437 = vmatprep.subr.mxu0 0.0
      %5438 = vmatpush1.msra.mxu0 %v3998
      %5439 = vmatprep.subr.mxu0 0.0
      %5440 = vmatpush1.msra.mxu0 %v3997
      %5441 = vmatprep.subr.mxu0 0.0
      %5442 = vmatpush1.msra.mxu0 %v3996
      %5443 = vmatprep.subr.mxu0 0.0
      %5444 = vmatpush2.msra.mxu0 0.0
      %5445 = vmatprep.subr.mxu0 0.0
      %5446 = vmatpush2.msra.mxu0 0.0
      %5447 = vmatprep.subr.mxu0 0.0
      %5448 = vmatpush2.msra.mxu0 0.0
      %5449 = vmatprep.subr.mxu0 0.0
      %5450 = vmatpush2.msra.mxu0 0.0
      %5451 = vmatprep.subr.mxu0 0.0
      %5452 = vmatpush2.msra.mxu0 0.0
      %5453 = vmatprep.subr.mxu0 0.0
      %5454 = vmatpush2.msra.mxu0 0.0
      %5455 = vmatprep.subr.mxu0 0.0
      %5456 = vmatpush2.msra.mxu0 0.0
      %5457 = vmatprep.subr.mxu0 0.0
      %5458 = vmatpush2.msra.mxu0 0.0
      %5459 = vmatprep.subr.mxu0 0.0
      %5460 = vmatpush2.msra.mxu0 0.0
      %5461 = vmatprep.subr.mxu0 0.0
      %5462 = vmatpush2.msra.mxu0 0.0
      %5463 = vmatprep.subr.mxu0 0.0
      %5464 = vmatpush2.msra.mxu0 0.0
      %5465 = vmatprep.subr.mxu0 0.0
      %5466 = vmatpush2.msra.mxu0 0.0
      %5467 = vmatprep.subr.mxu0 0.0
      %5468 = vmatpush2.msra.mxu0 0.0
      %5469 = vmatprep.subr.mxu0 0.0
      %5470 = vmatpush2.msra.mxu0 0.0
      %5471 = vmatprep.subr.mxu0 0.0
      %5472 = vmatpush2.msra.mxu0 0.0
      %5473 = vmatprep.subr.mxu0 0.0
      %5474 = vmatpush2.msra.mxu0 0.0
      %5475 = vmatprep.mubr.f32.mxu0 0.0
      %5476 = vmatmul.mubr.f32.gmra.mxu0 %v5388
      %v5477 = vpop.f32.mrf.mxu0
      %v5478 = vadd.f32 0.0, %v5477
      %v5479 = vpop.f32.mrf.mxu0
      %5480 = vmatprep.mubr.f32.mxu0 0.0
      %5481 = vmatmul.mubr.f32.gmra.mxu0 %v5391
      %v5482 = vpop.f32.mrf.mxu0
      %v5483 = vadd.f32 0.0, %v5482
      %v5484 = vpop.f32.mrf.mxu0
      %5485 = vmatprep.mubr.f32.mxu0 0.0
      %5486 = vmatmul.mubr.f32.gmra.mxu0 %v5394
      %v5487 = vpop.f32.mrf.mxu0
      %v5488 = vadd.f32 0.0, %v5487
      %v5489 = vpop.f32.mrf.mxu0
      %5490 = vmatprep.mubr.f32.mxu0 0.0
      %5491 = vmatmul.mubr.f32.gmra.mxu0 %v5397
      %v5492 = vpop.f32.mrf.mxu0
      %v5493 = vadd.f32 0.0, %v5492
      %v5494 = vpop.f32.mrf.mxu0
      %5495 = vmatprep.mubr.f32.mxu0 0.0
      %5496 = vmatmul.mubr.f32.gmra.mxu0 %v5400
      %v5497 = vpop.f32.mrf.mxu0
      %v5498 = vadd.f32 0.0, %v5497
      %v5499 = vpop.f32.mrf.mxu0
      %5500 = vmatprep.mubr.f32.mxu0 0.0
      %5501 = vmatmul.mubr.f32.gmra.mxu0 %v5403
      %v5502 = vpop.f32.mrf.mxu0
      %v5503 = vadd.f32 0.0, %v5502
      %v5504 = vpop.f32.mrf.mxu0
      %5505 = vmatprep.mubr.f32.mxu0 0.0
      %5506 = vmatmul.mubr.f32.gmra.mxu0 %v5406
      %v5507 = vpop.f32.mrf.mxu0
      %v5508 = vadd.f32 0.0, %v5507
      %v5509 = vpop.f32.mrf.mxu0
      %5510 = vmatprep.mubr.f32.mxu0 0.0
      %5511 = vmatmul.mubr.f32.gmra.mxu0 %v5409
      %v5512 = vpop.f32.mrf.mxu0
      %v5513 = vadd.f32 0.0, %v5512
      %v5514 = vpop.f32.mrf.mxu0
      %5515 = vdwg.mxu0
      %5516 = vst.msk [vmem:[%s624] sm:$0xff] %vm722, %v5091
      %5517 = vst.msk [vmem:[%s624 + $0x8] sm:$0xff] %vm722, %v5096
      %5518 = vst.msk [vmem:[%s624 + $0x10] sm:$0xff] %vm722, %v5101
      %5519 = vst.msk [vmem:[%s624 + $0x18] sm:$0xff] %vm722, %v5106
      %5520 = vst.msk [vmem:[%s624 + $0x20] sm:$0xff] %vm722, %v5111
      %5521 = vst.msk [vmem:[%s624 + $0x28] sm:$0xff] %vm722, %v5116
      %5522 = vst.msk [vmem:[%s624 + $0x30] sm:$0xff] %vm722, %v5121
      %5523 = vst.msk [vmem:[%s624 + $0x38] sm:$0xff] %vm722, %v5126
      %5524 = vst.msk [vmem:[%s624 + $0x40] sm:$0xff] %vm722, %v5220
      %5525 = vst.msk [vmem:[%s624 + $0x48] sm:$0xff] %vm722, %v5225
      %5526 = vst.msk [vmem:[%s624 + $0x50] sm:$0xff] %vm722, %v5230
      %5527 = vst.msk [vmem:[%s624 + $0x58] sm:$0xff] %vm722, %v5235
      %5528 = vst.msk [vmem:[%s624 + $0x60] sm:$0xff] %vm722, %v5240
      %5529 = vst.msk [vmem:[%s624 + $0x68] sm:$0xff] %vm722, %v5245
      %5530 = vst.msk [vmem:[%s624 + $0x70] sm:$0xff] %vm722, %v5250
      %5531 = vst.msk [vmem:[%s624 + $0x78] sm:$0xff] %vm722, %v5255
      %5532 = vst.msk [vmem:[%s624 + $0x80] sm:$0xff] %vm722, %v5349
      %5533 = vst.msk [vmem:[%s624 + $0x88] sm:$0xff] %vm722, %v5354
      %5534 = vst.msk [vmem:[%s624 + $0x90] sm:$0xff] %vm722, %v5359
      %5535 = vst.msk [vmem:[%s624 + $0x98] sm:$0xff] %vm722, %v5364
      %5536 = vst.msk [vmem:[%s624 + $0xa0] sm:$0xff] %vm722, %v5369
      %5537 = vst.msk [vmem:[%s624 + $0xa8] sm:$0xff] %vm722, %v5374
      %5538 = vst.msk [vmem:[%s624 + $0xb0] sm:$0xff] %vm722, %v5379
      %5539 = vst.msk [vmem:[%s624 + $0xb8] sm:$0xff] %vm722, %v5384
      %5540 = vst.msk [vmem:[%s624 + $0xc0] sm:$0xff] %vm722, %v5478
      %5541 = vst.msk [vmem:[%s624 + $0xc8] sm:$0xff] %vm722, %v5483
      %5542 = vst.msk [vmem:[%s624 + $0xd0] sm:$0xff] %vm722, %v5488
      %5543 = vst.msk [vmem:[%s624 + $0xd8] sm:$0xff] %vm722, %v5493
      %5544 = vst.msk [vmem:[%s624 + $0xe0] sm:$0xff] %vm722, %v5498
      %5545 = vst.msk [vmem:[%s624 + $0xe8] sm:$0xff] %vm722, %v5503
      %5546 = vst.msk [vmem:[%s624 + $0xf0] sm:$0xff] %vm722, %v5508
      %5547 = vst.msk [vmem:[%s624 + $0xf8] sm:$0xff] %vm722, %v5513
      %s5548 = smul.u32 4, %s23
      %p5549 = scmp.lt.s32.totalorder %s5548, 7
      %s5550 = scalar_select %p5549, %s5548, 7
      %s5551 = smul.addr %s5550, 8
      %s5552 = smul.addr %s5551, 8
      %s5553 = scalar_lea.vmem %s9, %s5552
      %s5554 = smul.u32 4, %s23
      %p5555 = scmp.lt.s32.totalorder %s5554, 7
      %s5556 = scalar_select %p5555, %s5554, 7
      %s5557 = smul.addr %s5556, 8
      %s5558 = smul.addr %s5557, 8
      %s5559 = scalar_lea.vmem %s10, %s5558
      %s5560 = smul.u32 4, %s23
      %p5561 = scmp.lt.s32.totalorder %s5560, 7
      %s5562 = scalar_select %p5561, %s5560, 7
      %s5563 = smul.addr %s5562, 8
      %s5564 = smul.addr %s5563, 8
      %s5565 = scalar_lea.vmem %s11, %s5564
      // Predicated region
      $region57: #{axial_attention_3d.4} parent=55 // pred_check
        %p5566 = pneg %p275
      $region58: #{axial_attention_3d.4} parent=55 // pred_check_branch
        %5568 = sbr.rel (%p5566) target = $region60
      $region59: #{axial_attention_3d.4} parent=55 // pred_region
        %s5569 = smul.u32 4, %s23
      $region60: #{axial_attention_3d.4} parent=55 // pred_fallthru
        _
      // Predicated region
      $region61: #{axial_attention_3d.4} parent=55 // pred_check
        %p5570 = pneg %p301
      $region62: #{axial_attention_3d.4} parent=55 // pred_check_branch
        %5572 = sbr.rel (%p5570) target = $region64
      $region63: #{axial_attention_3d.4} parent=55 // pred_region
        %s5573 = smul.u32 4, %s23
      $region64: #{axial_attention_3d.4} parent=55 // pred_fallthru
        _
      // Predicated region
      $region65: #{axial_attention_3d.4} parent=55 // pred_check
        %p5574 = pneg %p327
      $region66: #{axial_attention_3d.4} parent=55 // pred_check_branch
        %5576 = sbr.rel (%p5574) target = $region68
      $region67: #{axial_attention_3d.4} parent=55 // pred_region
        %s5577 = smul.u32 4, %s23
      $region68: #{axial_attention_3d.4} parent=55 // pred_fallthru
        _
    $region56: #{axial_attention_3d.4} parent=5 // pred_fallthru
      _
    %p5578 = scmp.le.s32.totalorder 2, %s18
    // Predicated region
    $region69: #{axial_attention_3d.4} parent=5 // pred_check
      %p5579 = pneg %p5578
    $region70: #{axial_attention_3d.4} parent=5 // pred_check_branch
      %5581 = sbr.rel (%p5579) target = $region72
    $region71: #{axial_attention_3d.4} parent=5 // pred_region
      %s5582 = ssub.s32 %s18, 2
      // Predicated region
      $region73: #{axial_attention_3d.4} parent=71 // pred_check
        %p5583 = pneg %p281
      $region74: #{axial_attention_3d.4} parent=71 // pred_check_branch
        %5585 = sbr.rel (%p5583) target = $region76
      $region75: #{axial_attention_3d.4} parent=71 // pred_region
        %s5586 = smul.u32 4, %s24
        %p5587 = scmp.lt.s32.totalorder %s5586, 7
        %s5588 = scalar_select %p5587, %s5586, 7
        %s5589 = smul.addr %s5588, 8
        %s5590 = smul.addr %s5589, 8
        %s5591 = scalar_lea.vmem %s9, %s5590
      $region76: #{axial_attention_3d.4} parent=71 // pred_fallthru
        _
      // Predicated region
      $region77: #{axial_attention_3d.4} parent=71 // pred_check
        %p5592 = pneg %p307
      $region78: #{axial_attention_3d.4} parent=71 // pred_check_branch
        %5594 = sbr.rel (%p5592) target = $region80
      $region79: #{axial_attention_3d.4} parent=71 // pred_region
        %s5595 = smul.u32 4, %s24
        %p5596 = scmp.lt.s32.totalorder %s5595, 7
        %s5597 = scalar_select %p5596, %s5595, 7
        %s5598 = smul.addr %s5597, 8
        %s5599 = smul.addr %s5598, 8
        %s5600 = scalar_lea.vmem %s10, %s5599
      $region80: #{axial_attention_3d.4} parent=71 // pred_fallthru
        _
      // Predicated region
      $region81: #{axial_attention_3d.4} parent=71 // pred_check
        %p5601 = pneg %p333
      $region82: #{axial_attention_3d.4} parent=71 // pred_check_branch
        %5603 = sbr.rel (%p5601) target = $region84
      $region83: #{axial_attention_3d.4} parent=71 // pred_region
        %s5604 = smul.u32 4, %s24
        %p5605 = scmp.lt.s32.totalorder %s5604, 7
        %s5606 = scalar_select %p5605, %s5604, 7
        %s5607 = smul.addr %s5606, 8
        %s5608 = smul.addr %s5607, 8
        %s5609 = scalar_lea.vmem %s11, %s5608
      $region84: #{axial_attention_3d.4} parent=71 // pred_fallthru
        _
    $region72: #{axial_attention_3d.4} parent=5 // pred_fallthru
      _
  $region6: #{axial_attention_3d.4} parent=0 // loop_footer
    %s22 = sadd.s32 1, %s18
  $region7: #{axial_attention_3d.4} parent=0 // loop_footer_branch
    %17 = sbr.rel target = $region3
  $region8: #{axial_attention_3d.4} parent=0 // loop_exit
    _

</llo_original>
